<compile_context>
chip_gen: v7x
topology: tpu7x:2x2x1
jax: 0.10.0
libtpu: 0.0.40
codegen_flags: <defaults>
</compile_context>

<pallas_src>
import jax
import jax.numpy as jnp
from jax import lax
from jax.experimental import pallas as pl
from jax.experimental.pallas import tpu as pltpu


def _bn_fold(gamma, beta, mean, var, eps=1e-5):
    """Fold eval-mode BatchNorm2d into a per-channel scale/shift."""
    scale = gamma / jnp.sqrt(var + eps)
    shift = beta - mean * scale
    return scale, shift


def _shifted_rows(x_flat, w_dim):
    """Column-shifted, zero-padded copies of a flattened (H*W, Cin) feature map.

    Returns (left, center, right), each (H*W + 2*w_dim, Cin), such that for an
    output pixel r = y*w_dim + x and dy in {0, 1, 2}:
        left  [dy*w_dim + r] == in[y+dy-1, x-1]
        center[dy*w_dim + r] == in[y+dy-1, x  ]
        right [dy*w_dim + r] == in[y+dy-1, x+1]
    with zeros outside the image (SAME zero padding).  The caller's row-offset
    slices are then multiples of w_dim (8-aligned when w_dim % 8 == 0), so the
    only relayout work is the +/-1 column shift absorbed in these concats.
    """
    hw, cin = x_flat.shape
    dt = x_flat.dtype
    col = lax.broadcasted_iota(jnp.int32, (hw, 1), 0) % w_dim
    zero = jnp.zeros((), dt)
    x_l = jnp.where(col == w_dim - 1, zero, x_flat)   # kill wrap from previous row
    x_r = jnp.where(col == 0, zero, x_flat)           # kill wrap from next row
    z = lambda nrows: jnp.zeros((nrows, cin), dt)
    left = jnp.concatenate([z(w_dim + 1), x_l, z(w_dim - 1)], axis=0)
    center = jnp.concatenate([z(w_dim), x_flat, z(w_dim)], axis=0)
    right = jnp.concatenate([z(w_dim - 1), x_r, z(w_dim + 1)], axis=0)
    return left, center, right


def _conv3x3_mxu(x_flat, w_ref, w_dim):
    """SAME 3x3 conv, no bias: (H*W, Cin) x (3, 3*Cin, Cout) -> (H*W, Cout) f32.

    w_ref[dy] holds the dy-th kernel row with its 3 dx taps concatenated along
    the contraction axis (dx-major, Cin-minor), matching the im2col lane order.
    """
    hw = x_flat.shape[0]
    cout = w_ref.shape[-1]
    left, center, right = _shifted_rows(x_flat, w_dim)
    ic = jnp.concatenate([left, center, right], axis=-1).astype(jnp.bfloat16)
    acc = jnp.zeros((hw, cout), jnp.float32)
    for dy in range(3):                               # 3 aligned row taps, K = 3*Cin
        acc = acc + jnp.dot(ic[dy * w_dim:dy * w_dim + hw, :], w_ref[dy],
                            preferred_element_type=jnp.float32)
    return acc


def _make_kernel(h, w):
    hw = h * w

    def kernel(x_ref, w1_ref, w2_ref, aff_ref, wca1_ref, wca2_ref, wsa_ref,
               y_ref, ca_ref, sa_ref):
        # ---------------- conv1 + BN1 + PReLU ----------------
        x = x_ref[0]                                            # (HW, Cin) f32
        h1 = _conv3x3_mxu(x, w1_ref, w)                         # (HW, C) f32
        h1 = h1 * aff_ref[0:1, :] + aff_ref[1:2, :]             # folded BN1
        alpha = aff_ref[2:3, :]                                 # per-channel PReLU
        h1 = jnp.maximum(h1, 0.0) + alpha * jnp.minimum(h1, 0.0)

        # ---------------- conv2 + BN2 (no activation) --------
        y = _conv3x3_mxu(h1, w2_ref, w)                         # (HW, C) f32
        y = y * aff_ref[3:4, :] + aff_ref[4:5, :]               # folded BN2
        y_ref[0] = y.astype(y_ref.dtype)

        # ---------------- channel attention ------------------
        avg = jnp.mean(y, axis=0, keepdims=True)                # (1, C)
        mx = jnp.max(y, axis=0, keepdims=True)                  # (1, C)
        pooled = jnp.concatenate([avg, mx], axis=0)             # (2, C): one MLP pass
        t = jnp.maximum(jnp.dot(pooled, wca1_ref[...],
                                preferred_element_type=jnp.float32), 0.0)
        z2 = jnp.dot(t, wca2_ref[...], preferred_element_type=jnp.float32)
        z = z2[0:1, :] + z2[1:2, :]                             # (1, C)
        gate_ca = 1.0 / (1.0 + jnp.exp(-z))
        ca_ref[0] = (y * gate_ca).astype(ca_ref.dtype)

        # ---------------- spatial attention -------------------
        cm_avg = jnp.mean(y, axis=1, keepdims=True)             # (HW, 1)
        cm_max = jnp.max(y, axis=1, keepdims=True)              # (HW, 1)
        st = jnp.concatenate([cm_avg, cm_max], axis=-1)         # (HW, 2) f32
        parts = _shifted_rows(st, w)                            # dx = 0 / 1 / 2
        acc = jnp.zeros((hw, 2), jnp.float32)
        for dy in range(3):
            for dx in range(3):
                seg = parts[dx][dy * w:dy * w + hw, :]          # aligned slice
                acc = acc + seg * wsa_ref[dy * 3 + dx:dy * 3 + dx + 1, :]
        gate_sa = 1.0 / (1.0 + jnp.exp(-(acc[:, 0:1] + acc[:, 1:2])))
        sa_ref[0] = (y * gate_sa).astype(sa_ref.dtype)

    return kernel


def channel_spatial_attention_forward(x_nchw, params):
    """Pallas forward of Channel_Spatial_Attention.

    Returns (y, ca, sa) in NCHW.  `y` is the conv-stack output -- the value the
    PyTorch forward returns; ca/sa are the CAModule/SAModule outputs, which the
    original forward computes and then discards (returned here for verification).
    """
    n, c_in, h, w = x_nchw.shape
    hidden = params["w1"].shape[0]
    c_red = params["ca_w1"].shape[0]
    hw = h * w

    # NCHW -> (N, H*W, C): channels on lanes, flat spatial rows on sublanes.
    x = jnp.transpose(x_nchw, (0, 2, 3, 1)).reshape(n, hw, c_in)

    # Conv weights in (3, 3*Cin, Cout) tap-concatenated layout, bf16 MXU operands.
    w1 = jnp.transpose(params["w1"], (2, 3, 1, 0)).reshape(3, 3 * c_in, hidden)
    w2 = jnp.transpose(params["w2"], (2, 3, 1, 0)).reshape(3, 3 * hidden, hidden)
    w1 = w1.astype(jnp.bfloat16)
    w2 = w2.astype(jnp.bfloat16)

    # Folded BN affines + PReLU alpha packed into one (8, C) f32 operand:
    # rows = [scale1, shift1, alpha, scale2, shift2, 0, 0, 0].
    s1, b1 = _bn_fold(params["bn1_gamma"], params["bn1_beta"],
                      params["bn1_mean"], params["bn1_var"])
    s2, b2 = _bn_fold(params["bn2_gamma"], params["bn2_beta"],
                      params["bn2_mean"], params["bn2_var"])
    aff = jnp.stack([s1, b1, params["prelu_alpha"], s2, b2], axis=0)
    aff = jnp.pad(aff, ((0, 3), (0, 0))).astype(jnp.float32)

    w_ca1 = params["ca_w1"][:, :, 0, 0].T.astype(jnp.float32)   # (C, C//r)
    w_ca2 = params["ca_w2"][:, :, 0, 0].T.astype(jnp.float32)   # (C//r, C)
    # (9, 2) spatial filter: row = ky*3 + kx, col = (avg, max) channel.
    w_sa = jnp.transpose(params["sa_w"], (2, 3, 1, 0)).reshape(9, 2).astype(jnp.float32)

    kernel = _make_kernel(h, w)
    out_sds = jax.ShapeDtypeStruct((n, hw, hidden), jnp.float32)
    y, ca, sa = pl.pallas_call(
        kernel,
        out_shape=(out_sds, out_sds, out_sds),
        grid_spec=pltpu.PrefetchScalarGridSpec(
            num_scalar_prefetch=0,
            grid=(n,),
            in_specs=[
                pl.BlockSpec((1, hw, c_in), lambda i: (i, 0, 0)),
                pl.BlockSpec((3, 3 * c_in, hidden), lambda i: (0, 0, 0)),
                pl.BlockSpec((3, 3 * hidden, hidden), lambda i: (0, 0, 0)),
                pl.BlockSpec((8, hidden), lambda i: (0, 0)),
                pl.BlockSpec((hidden, c_red), lambda i: (0, 0)),
                pl.BlockSpec((c_red, hidden), lambda i: (0, 0)),
                pl.BlockSpec((9, 2), lambda i: (0, 0)),
            ],
            out_specs=(
                pl.BlockSpec((1, hw, hidden), lambda i: (i, 0, 0)),
                pl.BlockSpec((1, hw, hidden), lambda i: (i, 0, 0)),
                pl.BlockSpec((1, hw, hidden), lambda i: (i, 0, 0)),
            ),
        ),
        compiler_params=pltpu.CompilerParams(
            dimension_semantics=("parallel",)),
    )(x, w1, w2, aff, w_ca1, w_ca2, w_sa)

    def to_nchw(t):
        return jnp.transpose(t.reshape(n, h, w, hidden), (0, 3, 1, 2))

    return to_nchw(y), to_nchw(ca), to_nchw(sa)


def init_params(key, c_in, hidden, reduction):
    """Deterministic parameters in PyTorch layouts (Conv2d weight = (out,in,kh,kw))."""
    ks = jax.random.split(key, 14)

    def conv_w(k, c_out, c_inn, kh, kw):
        fan_in = c_inn * kh * kw
        return jax.random.normal(k, (c_out, c_inn, kh, kw), jnp.float32) / jnp.sqrt(
            jnp.float32(fan_in))

    return {
        "w1": conv_w(ks[0], hidden, c_in, 3, 3),
        "bn1_gamma": 1.0 + 0.1 * jax.random.normal(ks[1], (hidden,), jnp.float32),
        "bn1_beta": 0.1 * jax.random.normal(ks[2], (hidden,), jnp.float32),
        "bn1_mean": 0.1 * jax.random.normal(ks[3], (hidden,), jnp.float32),
        "bn1_var": jax.random.uniform(ks[4], (hidden,), jnp.float32, 0.5, 1.5),
        "prelu_alpha": 0.25 + 0.05 * jax.random.normal(ks[5], (hidden,), jnp.float32),
        "w2": conv_w(ks[6], hidden, hidden, 3, 3),
        "bn2_gamma": 1.0 + 0.1 * jax.random.normal(ks[7], (hidden,), jnp.float32),
        "bn2_beta": 0.1 * jax.random.normal(ks[8], (hidden,), jnp.float32),
        "bn2_mean": 0.1 * jax.random.normal(ks[9], (hidden,), jnp.float32),
        "bn2_var": jax.random.uniform(ks[10], (hidden,), jnp.float32, 0.5, 1.5),
        "ca_w1": conv_w(ks[11], hidden // reduction, hidden, 1, 1),
        "ca_w2": conv_w(ks[12], hidden, hidden // reduction, 1, 1),
        "sa_w": conv_w(ks[13], 1, 2, 3, 3),
    }


def reference_forward(x_nchw, params):
    """Pure JAX/XLA reference with the same bf16 operand rounding as the kernels."""
    f32 = jnp.float32
    q = lambda a: a.astype(jnp.bfloat16).astype(f32)
    dn = ("NHWC", "HWIO", "NHWC")
    conv = lambda a, wgt: lax.conv_general_dilated(
        a, wgt, (1, 1), "SAME", dimension_numbers=dn,
        precision=lax.Precision.HIGHEST)

    x = jnp.transpose(x_nchw, (0, 2, 3, 1))
    w1 = jnp.transpose(params["w1"], (2, 3, 1, 0))
    w2 = jnp.transpose(params["w2"], (2, 3, 1, 0))
    s1, b1 = _bn_fold(params["bn1_gamma"], params["bn1_beta"],
                      params["bn1_mean"], params["bn1_var"])
    s2, b2 = _bn_fold(params["bn2_gamma"], params["bn2_beta"],
                      params["bn2_mean"], params["bn2_var"])

    h1 = conv(q(x), q(w1)) * s1 + b1
    a1 = params["prelu_alpha"]
    h1 = jnp.maximum(h1, 0.0) + a1 * jnp.minimum(h1, 0.0)
    y = conv(q(h1), q(w2)) * s2 + b2

    # Channel attention
    w_ca1 = params["ca_w1"][:, :, 0, 0].T
    w_ca2 = params["ca_w2"][:, :, 0, 0].T

    def mlp(v):
        t = jnp.maximum(jnp.dot(v, w_ca1, precision=lax.Precision.HIGHEST), 0.0)
        return jnp.dot(t, w_ca2, precision=lax.Precision.HIGHEST)

    avg = jnp.mean(y, axis=(1, 2))
    mx = jnp.max(y, axis=(1, 2))
    gate_ca = jax.nn.sigmoid(mlp(avg) + mlp(mx))[:, None, None, :]
    ca = y * gate_ca

    # Spatial attention
    cm = jnp.concatenate([jnp.mean(y, axis=-1, keepdims=True),
                          jnp.max(y, axis=-1, keepdims=True)], axis=-1)
    w_sa = jnp.transpose(params["sa_w"], (2, 3, 1, 0))      # (3,3,2,1)
    gate_sa = jax.nn.sigmoid(conv(cm, w_sa))
    sa = y * gate_sa

    to_nchw = lambda t: jnp.transpose(t, (0, 3, 1, 2))
    return to_nchw(y), to_nchw(ca), to_nchw(sa)


if __name__ == "__main__":
    N, C_IN, HIDDEN, H, W = 2, 16, 128, 16, 16   # hidden=128 -> lane-dense channels
    REDUCTION = 16                               # CAModule(hidden, reduction=16)

    key = jax.random.PRNGKey(0)
    k_x, k_p = jax.random.split(key)
    x = jax.random.normal(k_x, (N, C_IN, H, W), jnp.float32)   # NCHW like PyTorch
    params = init_params(k_p, C_IN, HIDDEN, REDUCTION)

    fwd = jax.jit(channel_spatial_attention_forward)
    y, ca, sa = jax.block_until_ready(fwd(x, params))

    y_ref, ca_ref, sa_ref = reference_forward(x, params)

    assert y.shape == (N, HIDDEN, H, W)
    assert ca.shape == (N, HIDDEN, H, W) and sa.shape == (N, HIDDEN, H, W)
    for name, got, ref in (("conv", y, y_ref),
                           ("channel_attn", ca, ca_ref),
                           ("spatial_attn", sa, sa_ref)):
        err = float(jnp.max(jnp.abs(got - ref)))
        assert jnp.allclose(got, ref, rtol=5e-3, atol=5e-3), (
            f"{name} mismatch vs reference (max abs err {err:.3e})")

    print("KERNEL_OK")
</pallas_src>

<mosaic_0001>
module attributes {stable_mosaic.version = 11 : i64} {
  func.func @kernel(%arg0: i32, %arg1: memref<1x256x16xf32, #tpu.memory_space<vmem>>, %arg2: memref<3x48x128xbf16, #tpu.memory_space<vmem>>, %arg3: memref<3x384x128xbf16, #tpu.memory_space<vmem>>, %arg4: memref<8x128xf32, #tpu.memory_space<vmem>>, %arg5: memref<128x8xf32, #tpu.memory_space<vmem>>, %arg6: memref<8x128xf32, #tpu.memory_space<vmem>>, %arg7: memref<9x2xf32, #tpu.memory_space<vmem>>, %arg8: memref<1x256x128xf32, #tpu.memory_space<vmem>>, %arg9: memref<1x256x128xf32, #tpu.memory_space<vmem>>, %arg10: memref<1x256x128xf32, #tpu.memory_space<vmem>>) attributes {dimension_semantics = [#tpu.dimension_semantics<parallel>], iteration_bounds = array<i64: 2>, scalar_prefetch = 0 : i64, scratch_operands = 0 : i64, tpu.core_type = #tpu.core_type<tc>, window_params = [{transform_indices = @transform_0, window_bounds = array<i64: 1, 256, 16>}, {pipeline_mode = #tpu.pipeline_mode<synchronous>, transform_indices = @transform_1, window_bounds = array<i64: 3, 48, 128>}, {pipeline_mode = #tpu.pipeline_mode<synchronous>, transform_indices = @transform_2, window_bounds = array<i64: 3, 384, 128>}, {pipeline_mode = #tpu.pipeline_mode<synchronous>, transform_indices = @transform_3, window_bounds = array<i64: 8, 128>}, {pipeline_mode = #tpu.pipeline_mode<synchronous>, transform_indices = @transform_4, window_bounds = array<i64: 128, 8>}, {pipeline_mode = #tpu.pipeline_mode<synchronous>, transform_indices = @transform_5, window_bounds = array<i64: 8, 128>}, {pipeline_mode = #tpu.pipeline_mode<synchronous>, transform_indices = @transform_6, window_bounds = array<i64: 9, 2>}, {transform_indices = @transform_7, window_bounds = array<i64: 1, 256, 128>}, {transform_indices = @transform_8, window_bounds = array<i64: 1, 256, 128>}, {transform_indices = @transform_9, window_bounds = array<i64: 1, 256, 128>}]} {
    %c0 = arith.constant 0 : index
    %c0_0 = arith.constant 0 : index
    %c0_1 = arith.constant 0 : index
    %0 = vector.load %arg1[%c0, %c0_0, %c0_1] : memref<1x256x16xf32, #tpu.memory_space<vmem>>, vector<1x256x16xf32>
    %1 = vector.shape_cast %0 : vector<1x256x16xf32> to vector<256x16xf32>
    %2 = tpu.iota {dimensions = array<i32: 0>} : vector<256x1xi32>
    %c16_i32 = arith.constant 16 : i32
    %c0_i32 = arith.constant 0 : i32
    %3 = arith.cmpi eq, %c16_i32, %c0_i32 : i32
    %c1_i32 = arith.constant 1 : i32
    %4 = arith.select %3, %c1_i32, %c16_i32 : i32
    %5 = vector.broadcast %4 : i32 to vector<256x1xi32>
    %6 = arith.remsi %2, %5 : vector<256x1xi32>
    %c0_i32_2 = arith.constant 0 : i32
    %7 = vector.broadcast %c0_i32_2 : i32 to vector<256x1xi32>
    %8 = arith.cmpi ne, %6, %7 : vector<256x1xi32>
    %c0_i32_3 = arith.constant 0 : i32
    %9 = vector.broadcast %c0_i32_3 : i32 to vector<256x1xi32>
    %10 = arith.cmpi slt, %6, %9 : vector<256x1xi32>
    %c0_i32_4 = arith.constant 0 : i32
    %11 = arith.cmpi slt, %4, %c0_i32_4 : i32
    %12 = vector.broadcast %11 : i1 to vector<256x1xi1>
    %13 = vector.broadcast %12 : vector<256x1xi1> to vector<256x1xi1>
    %14 = arith.xori %10, %13 : vector<256x1xi1>
    %15 = arith.andi %14, %8 : vector<256x1xi1>
    %16 = vector.broadcast %4 : i32 to vector<256x1xi32>
    %17 = arith.addi %6, %16 : vector<256x1xi32>
    %18 = arith.select %15, %17, %6 : vector<256x1xi1>, vector<256x1xi32>
    %c15_i32 = arith.constant 15 : i32
    %19 = vector.broadcast %c15_i32 : i32 to vector<256x1xi32>
    %20 = arith.cmpi eq, %18, %19 : vector<256x1xi32>
    %cst = arith.constant 0.000000e+00 : f32
    %21 = vector.shape_cast %20 : vector<256x1xi1> to vector<256x1xi1>
    %22 = vector.broadcast %21 : vector<256x1xi1> to vector<256x16xi1>
    %23 = vector.broadcast %cst : f32 to vector<256x16xf32>
    %24 = arith.select %22, %23, %1 : vector<256x16xi1>, vector<256x16xf32>
    %c0_i32_5 = arith.constant 0 : i32
    %25 = vector.broadcast %c0_i32_5 : i32 to vector<256x1xi32>
    %26 = arith.cmpi eq, %18, %25 : vector<256x1xi32>
    %cst_6 = arith.constant 0.000000e+00 : f32
    %27 = vector.shape_cast %26 : vector<256x1xi1> to vector<256x1xi1>
    %28 = vector.broadcast %27 : vector<256x1xi1> to vector<256x16xi1>
    %29 = vector.broadcast %cst_6 : f32 to vector<256x16xf32>
    %30 = arith.select %28, %29, %1 : vector<256x16xi1>, vector<256x16xf32>
    %cst_7 = arith.constant 0.000000e+00 : f32
    %31 = vector.broadcast %cst_7 : f32 to vector<17x16xf32>
    %cst_8 = arith.constant 0.000000e+00 : f32
    %32 = vector.broadcast %cst_8 : f32 to vector<15x16xf32>
    %33 = tpu.concatenate %31, %24, %32 in 0 : vector<17x16xf32>, vector<256x16xf32>, vector<15x16xf32> -> vector<288x16xf32>
    %cst_9 = arith.constant 0.000000e+00 : f32
    %34 = vector.broadcast %cst_9 : f32 to vector<16x16xf32>
    %cst_10 = arith.constant 0.000000e+00 : f32
    %35 = vector.broadcast %cst_10 : f32 to vector<16x16xf32>
    %36 = tpu.concatenate %34, %1, %35 in 0 : vector<16x16xf32>, vector<256x16xf32>, vector<16x16xf32> -> vector<288x16xf32>
    %cst_11 = arith.constant 0.000000e+00 : f32
    %37 = vector.broadcast %cst_11 : f32 to vector<15x16xf32>
    %cst_12 = arith.constant 0.000000e+00 : f32
    %38 = vector.broadcast %cst_12 : f32 to vector<17x16xf32>
    %39 = tpu.concatenate %37, %30, %38 in 0 : vector<15x16xf32>, vector<256x16xf32>, vector<17x16xf32> -> vector<288x16xf32>
    %40 = tpu.concatenate %33, %36, %39 in 1 : vector<288x16xf32>, vector<288x16xf32>, vector<288x16xf32> -> vector<288x48xf32>
    %41 = arith.truncf %40 : vector<288x48xf32> to vector<288x48xbf16>
    %cst_13 = arith.constant 0.000000e+00 : f32
    %42 = vector.broadcast %cst_13 : f32 to vector<256x128xf32>
    %43 = vector.extract_strided_slice %41 {offsets = [0, 0], sizes = [256, 48], strides = [1, 1]} : vector<288x48xbf16> to vector<256x48xbf16>
    %c0_14 = arith.constant 0 : index
    %c0_15 = arith.constant 0 : index
    %c0_16 = arith.constant 0 : index
    %44 = vector.load %arg2[%c0_14, %c0_15, %c0_16] : memref<3x48x128xbf16, #tpu.memory_space<vmem>>, vector<1x48x128xbf16>
    %45 = vector.shape_cast %44 : vector<1x48x128xbf16> to vector<48x128xbf16>
    %cst_17 = arith.constant dense<0.000000e+00> : vector<256x128xf32>
    %46 = tpu.matmul %43, %45, %cst_17 {dimension_numbers = #tpu.dot_dimension_numbers<[1], [0], [0], [1], [0, 0, 1, 1], [], []>} : vector<256x48xbf16>, vector<48x128xbf16>, vector<256x128xf32> -> vector<256x128xf32>
    %47 = arith.addf %42, %46 : vector<256x128xf32>
    %48 = vector.extract_strided_slice %41 {offsets = [16, 0], sizes = [256, 48], strides = [1, 1]} : vector<288x48xbf16> to vector<256x48xbf16>
    %c1 = arith.constant 1 : index
    %c0_18 = arith.constant 0 : index
    %c0_19 = arith.constant 0 : index
    %49 = vector.load %arg2[%c1, %c0_18, %c0_19] : memref<3x48x128xbf16, #tpu.memory_space<vmem>>, vector<1x48x128xbf16>
    %50 = vector.shape_cast %49 : vector<1x48x128xbf16> to vector<48x128xbf16>
    %cst_20 = arith.constant dense<0.000000e+00> : vector<256x128xf32>
    %51 = tpu.matmul %48, %50, %cst_20 {dimension_numbers = #tpu.dot_dimension_numbers<[1], [0], [0], [1], [0, 0, 1, 1], [], []>} : vector<256x48xbf16>, vector<48x128xbf16>, vector<256x128xf32> -> vector<256x128xf32>
    %52 = arith.addf %47, %51 : vector<256x128xf32>
    %53 = vector.extract_strided_slice %41 {offsets = [32, 0], sizes = [256, 48], strides = [1, 1]} : vector<288x48xbf16> to vector<256x48xbf16>
    %c2 = arith.constant 2 : index
    %c0_21 = arith.constant 0 : index
    %c0_22 = arith.constant 0 : index
    %54 = vector.load %arg2[%c2, %c0_21, %c0_22] : memref<3x48x128xbf16, #tpu.memory_space<vmem>>, vector<1x48x128xbf16>
    %55 = vector.shape_cast %54 : vector<1x48x128xbf16> to vector<48x128xbf16>
    %cst_23 = arith.constant dense<0.000000e+00> : vector<256x128xf32>
    %56 = tpu.matmul %53, %55, %cst_23 {dimension_numbers = #tpu.dot_dimension_numbers<[1], [0], [0], [1], [0, 0, 1, 1], [], []>} : vector<256x48xbf16>, vector<48x128xbf16>, vector<256x128xf32> -> vector<256x128xf32>
    %57 = arith.addf %52, %56 : vector<256x128xf32>
    %c0_24 = arith.constant 0 : index
    %c0_25 = arith.constant 0 : index
    %58 = vector.load %arg4[%c0_24, %c0_25] : memref<8x128xf32, #tpu.memory_space<vmem>>, vector<1x128xf32>
    %59 = vector.broadcast %58 : vector<1x128xf32> to vector<256x128xf32>
    %60 = arith.mulf %57, %59 : vector<256x128xf32>
    %c1_26 = arith.constant 1 : index
    %c0_27 = arith.constant 0 : index
    %61 = vector.load %arg4[%c1_26, %c0_27] : memref<8x128xf32, #tpu.memory_space<vmem>>, vector<1x128xf32>
    %62 = vector.broadcast %61 : vector<1x128xf32> to vector<256x128xf32>
    %63 = arith.addf %60, %62 : vector<256x128xf32>
    %c2_28 = arith.constant 2 : index
    %c0_29 = arith.constant 0 : index
    %64 = vector.load %arg4[%c2_28, %c0_29] : memref<8x128xf32, #tpu.memory_space<vmem>>, vector<1x128xf32>
    %cst_30 = arith.constant 0.000000e+00 : f32
    %65 = vector.broadcast %cst_30 : f32 to vector<256x128xf32>
    %66 = arith.maximumf %63, %65 : vector<256x128xf32>
    %cst_31 = arith.constant 0.000000e+00 : f32
    %67 = vector.broadcast %cst_31 : f32 to vector<256x128xf32>
    %68 = arith.minimumf %63, %67 : vector<256x128xf32>
    %69 = vector.broadcast %64 : vector<1x128xf32> to vector<256x128xf32>
    %70 = arith.mulf %69, %68 : vector<256x128xf32>
    %71 = arith.addf %66, %70 : vector<256x128xf32>
    %72 = tpu.iota {dimensions = array<i32: 0>} : vector<256x1xi32>
    %c16_i32_32 = arith.constant 16 : i32
    %c0_i32_33 = arith.constant 0 : i32
    %73 = arith.cmpi eq, %c16_i32_32, %c0_i32_33 : i32
    %c1_i32_34 = arith.constant 1 : i32
    %74 = arith.select %73, %c1_i32_34, %c16_i32_32 : i32
    %75 = vector.broadcast %74 : i32 to vector<256x1xi32>
    %76 = arith.remsi %72, %75 : vector<256x1xi32>
    %c0_i32_35 = arith.constant 0 : i32
    %77 = vector.broadcast %c0_i32_35 : i32 to vector<256x1xi32>
    %78 = arith.cmpi ne, %76, %77 : vector<256x1xi32>
    %c0_i32_36 = arith.constant 0 : i32
    %79 = vector.broadcast %c0_i32_36 : i32 to vector<256x1xi32>
    %80 = arith.cmpi slt, %76, %79 : vector<256x1xi32>
    %c0_i32_37 = arith.constant 0 : i32
    %81 = arith.cmpi slt, %74, %c0_i32_37 : i32
    %82 = vector.broadcast %81 : i1 to vector<256x1xi1>
    %83 = vector.broadcast %82 : vector<256x1xi1> to vector<256x1xi1>
    %84 = arith.xori %80, %83 : vector<256x1xi1>
    %85 = arith.andi %84, %78 : vector<256x1xi1>
    %86 = vector.broadcast %74 : i32 to vector<256x1xi32>
    %87 = arith.addi %76, %86 : vector<256x1xi32>
    %88 = arith.select %85, %87, %76 : vector<256x1xi1>, vector<256x1xi32>
    %c15_i32_38 = arith.constant 15 : i32
    %89 = vector.broadcast %c15_i32_38 : i32 to vector<256x1xi32>
    %90 = arith.cmpi eq, %88, %89 : vector<256x1xi32>
    %cst_39 = arith.constant 0.000000e+00 : f32
    %91 = vector.shape_cast %90 : vector<256x1xi1> to vector<256x1xi1>
    %92 = vector.broadcast %91 : vector<256x1xi1> to vector<256x128xi1>
    %93 = vector.broadcast %cst_39 : f32 to vector<256x128xf32>
    %94 = arith.select %92, %93, %71 : vector<256x128xi1>, vector<256x128xf32>
    %c0_i32_40 = arith.constant 0 : i32
    %95 = vector.broadcast %c0_i32_40 : i32 to vector<256x1xi32>
    %96 = arith.cmpi eq, %88, %95 : vector<256x1xi32>
    %cst_41 = arith.constant 0.000000e+00 : f32
    %97 = vector.shape_cast %96 : vector<256x1xi1> to vector<256x1xi1>
    %98 = vector.broadcast %97 : vector<256x1xi1> to vector<256x128xi1>
    %99 = vector.broadcast %cst_41 : f32 to vector<256x128xf32>
    %100 = arith.select %98, %99, %71 : vector<256x128xi1>, vector<256x128xf32>
    %cst_42 = arith.constant 0.000000e+00 : f32
    %101 = vector.broadcast %cst_42 : f32 to vector<17x128xf32>
    %cst_43 = arith.constant 0.000000e+00 : f32
    %102 = vector.broadcast %cst_43 : f32 to vector<15x128xf32>
    %103 = tpu.concatenate %101, %94, %102 in 0 : vector<17x128xf32>, vector<256x128xf32>, vector<15x128xf32> -> vector<288x128xf32>
    %cst_44 = arith.constant 0.000000e+00 : f32
    %104 = vector.broadcast %cst_44 : f32 to vector<16x128xf32>
    %cst_45 = arith.constant 0.000000e+00 : f32
    %105 = vector.broadcast %cst_45 : f32 to vector<16x128xf32>
    %106 = tpu.concatenate %104, %71, %105 in 0 : vector<16x128xf32>, vector<256x128xf32>, vector<16x128xf32> -> vector<288x128xf32>
    %cst_46 = arith.constant 0.000000e+00 : f32
    %107 = vector.broadcast %cst_46 : f32 to vector<15x128xf32>
    %cst_47 = arith.constant 0.000000e+00 : f32
    %108 = vector.broadcast %cst_47 : f32 to vector<17x128xf32>
    %109 = tpu.concatenate %107, %100, %108 in 0 : vector<15x128xf32>, vector<256x128xf32>, vector<17x128xf32> -> vector<288x128xf32>
    %110 = tpu.concatenate %103, %106, %109 in 1 : vector<288x128xf32>, vector<288x128xf32>, vector<288x128xf32> -> vector<288x384xf32>
    %111 = arith.truncf %110 : vector<288x384xf32> to vector<288x384xbf16>
    %cst_48 = arith.constant 0.000000e+00 : f32
    %112 = vector.broadcast %cst_48 : f32 to vector<256x128xf32>
    %113 = vector.extract_strided_slice %111 {offsets = [0, 0], sizes = [256, 384], strides = [1, 1]} : vector<288x384xbf16> to vector<256x384xbf16>
    %c0_49 = arith.constant 0 : index
    %c0_50 = arith.constant 0 : index
    %c0_51 = arith.constant 0 : index
    %114 = vector.load %arg3[%c0_49, %c0_50, %c0_51] : memref<3x384x128xbf16, #tpu.memory_space<vmem>>, vector<1x384x128xbf16>
    %115 = vector.shape_cast %114 : vector<1x384x128xbf16> to vector<384x128xbf16>
    %cst_52 = arith.constant dense<0.000000e+00> : vector<256x128xf32>
    %116 = tpu.matmul %113, %115, %cst_52 {dimension_numbers = #tpu.dot_dimension_numbers<[1], [0], [0], [1], [0, 0, 1, 1], [], []>} : vector<256x384xbf16>, vector<384x128xbf16>, vector<256x128xf32> -> vector<256x128xf32>
    %117 = arith.addf %112, %116 : vector<256x128xf32>
    %118 = vector.extract_strided_slice %111 {offsets = [16, 0], sizes = [256, 384], strides = [1, 1]} : vector<288x384xbf16> to vector<256x384xbf16>
    %c1_53 = arith.constant 1 : index
    %c0_54 = arith.constant 0 : index
    %c0_55 = arith.constant 0 : index
    %119 = vector.load %arg3[%c1_53, %c0_54, %c0_55] : memref<3x384x128xbf16, #tpu.memory_space<vmem>>, vector<1x384x128xbf16>
    %120 = vector.shape_cast %119 : vector<1x384x128xbf16> to vector<384x128xbf16>
    %cst_56 = arith.constant dense<0.000000e+00> : vector<256x128xf32>
    %121 = tpu.matmul %118, %120, %cst_56 {dimension_numbers = #tpu.dot_dimension_numbers<[1], [0], [0], [1], [0, 0, 1, 1], [], []>} : vector<256x384xbf16>, vector<384x128xbf16>, vector<256x128xf32> -> vector<256x128xf32>
    %122 = arith.addf %117, %121 : vector<256x128xf32>
    %123 = vector.extract_strided_slice %111 {offsets = [32, 0], sizes = [256, 384], strides = [1, 1]} : vector<288x384xbf16> to vector<256x384xbf16>
    %c2_57 = arith.constant 2 : index
    %c0_58 = arith.constant 0 : index
    %c0_59 = arith.constant 0 : index
    %124 = vector.load %arg3[%c2_57, %c0_58, %c0_59] : memref<3x384x128xbf16, #tpu.memory_space<vmem>>, vector<1x384x128xbf16>
    %125 = vector.shape_cast %124 : vector<1x384x128xbf16> to vector<384x128xbf16>
    %cst_60 = arith.constant dense<0.000000e+00> : vector<256x128xf32>
    %126 = tpu.matmul %123, %125, %cst_60 {dimension_numbers = #tpu.dot_dimension_numbers<[1], [0], [0], [1], [0, 0, 1, 1], [], []>} : vector<256x384xbf16>, vector<384x128xbf16>, vector<256x128xf32> -> vector<256x128xf32>
    %127 = arith.addf %122, %126 : vector<256x128xf32>
    %c3 = arith.constant 3 : index
    %c0_61 = arith.constant 0 : index
    %128 = vector.load %arg4[%c3, %c0_61] : memref<8x128xf32, #tpu.memory_space<vmem>>, vector<1x128xf32>
    %129 = vector.broadcast %128 : vector<1x128xf32> to vector<256x128xf32>
    %130 = arith.mulf %127, %129 : vector<256x128xf32>
    %c4 = arith.constant 4 : index
    %c0_62 = arith.constant 0 : index
    %131 = vector.load %arg4[%c4, %c0_62] : memref<8x128xf32, #tpu.memory_space<vmem>>, vector<1x128xf32>
    %132 = vector.broadcast %131 : vector<1x128xf32> to vector<256x128xf32>
    %133 = arith.addf %130, %132 : vector<256x128xf32>
    %c0_63 = arith.constant 0 : index
    %c0_64 = arith.constant 0 : index
    %c0_65 = arith.constant 0 : index
    %134 = vector.load %arg8[%c0_63, %c0_64, %c0_65] : memref<1x256x128xf32, #tpu.memory_space<vmem>>, vector<1x256x128xf32>
    %135 = vector.shape_cast %134 : vector<1x256x128xf32> to vector<256x128xf32>
    %136 = vector.shape_cast %133 : vector<256x128xf32> to vector<1x256x128xf32>
    tpu.vector_store %arg8[%c0_63, %c0_64, %c0_65], %136 {strides = array<i32>} : memref<1x256x128xf32, #tpu.memory_space<vmem>>, vector<1x256x128xf32>,
    %cst_66 = arith.constant dense<0.000000e+00> : vector<128xf32>
    %137 = vector.multi_reduction <add>, %133, %cst_66 [0] : vector<256x128xf32> to vector<128xf32>
    %138 = vector.shape_cast %137 : vector<128xf32> to vector<1x128xf32>
    %cst_67 = arith.constant 2.560000e+02 : f32
    %139 = vector.broadcast %cst_67 : f32 to vector<1x128xf32>
    %140 = arith.divf %138, %139 : vector<1x128xf32>
    %cst_68 = arith.constant dense<0xFF800000> : vector<128xf32>
    %141 = vector.multi_reduction <maximumf>, %133, %cst_68 [0] : vector<256x128xf32> to vector<128xf32>
    %142 = vector.shape_cast %141 : vector<128xf32> to vector<1x128xf32>
    %143 = tpu.concatenate %140, %142 in 0 : vector<1x128xf32>, vector<1x128xf32> -> vector<2x128xf32>
    %c0_69 = arith.constant 0 : index
    %c0_70 = arith.constant 0 : index
    %144 = vector.load %arg5[%c0_69, %c0_70] : memref<128x8xf32, #tpu.memory_space<vmem>>, vector<128x8xf32>
    %cst_71 = arith.constant dense<0.000000e+00> : vector<2x8xf32>
    %145 = tpu.matmul %143, %144, %cst_71 {dimension_numbers = #tpu.dot_dimension_numbers<[1], [0], [0], [1], [0, 0, 1, 1], [], []>} : vector<2x128xf32>, vector<128x8xf32>, vector<2x8xf32> -> vector<2x8xf32>
    %cst_72 = arith.constant 0.000000e+00 : f32
    %146 = vector.broadcast %cst_72 : f32 to vector<2x8xf32>
    %147 = arith.maximumf %145, %146 : vector<2x8xf32>
    %c0_73 = arith.constant 0 : index
    %c0_74 = arith.constant 0 : index
    %148 = vector.load %arg6[%c0_73, %c0_74] : memref<8x128xf32, #tpu.memory_space<vmem>>, vector<8x128xf32>
    %cst_75 = arith.constant dense<0.000000e+00> : vector<2x128xf32>
    %149 = tpu.matmul %147, %148, %cst_75 {dimension_numbers = #tpu.dot_dimension_numbers<[1], [0], [0], [1], [0, 0, 1, 1], [], []>} : vector<2x8xf32>, vector<8x128xf32>, vector<2x128xf32> -> vector<2x128xf32>
    %150 = vector.extract_strided_slice %149 {offsets = [0, 0], sizes = [1, 128], strides = [1, 1]} : vector<2x128xf32> to vector<1x128xf32>
    %151 = vector.extract_strided_slice %149 {offsets = [1, 0], sizes = [1, 128], strides = [1, 1]} : vector<2x128xf32> to vector<1x128xf32>
    %152 = arith.addf %150, %151 : vector<1x128xf32>
    %cst_76 = arith.constant 0.000000e+00 : f32
    %153 = vector.broadcast %cst_76 : f32 to vector<1x128xf32>
    %154 = arith.subf %153, %152 : vector<1x128xf32>
    %155 = math.exp %154 : vector<1x128xf32>
    %cst_77 = arith.constant 1.000000e+00 : f32
    %156 = vector.broadcast %cst_77 : f32 to vector<1x128xf32>
    %157 = arith.addf %156, %155 : vector<1x128xf32>
    %cst_78 = arith.constant 1.000000e+00 : f32
    %158 = vector.broadcast %cst_78 : f32 to vector<1x128xf32>
    %159 = arith.divf %158, %157 : vector<1x128xf32>
    %160 = vector.broadcast %159 : vector<1x128xf32> to vector<256x128xf32>
    %161 = arith.mulf %133, %160 : vector<256x128xf32>
    %c0_79 = arith.constant 0 : index
    %c0_80 = arith.constant 0 : index
    %c0_81 = arith.constant 0 : index
    %162 = vector.load %arg9[%c0_79, %c0_80, %c0_81] : memref<1x256x128xf32, #tpu.memory_space<vmem>>, vector<1x256x128xf32>
    %163 = vector.shape_cast %162 : vector<1x256x128xf32> to vector<256x128xf32>
    %164 = vector.shape_cast %161 : vector<256x128xf32> to vector<1x256x128xf32>
    tpu.vector_store %arg9[%c0_79, %c0_80, %c0_81], %164 {strides = array<i32>} : memref<1x256x128xf32, #tpu.memory_space<vmem>>, vector<1x256x128xf32>,
    %cst_82 = arith.constant dense<0.000000e+00> : vector<256xf32>
    %165 = vector.multi_reduction <add>, %133, %cst_82 [1] : vector<256x128xf32> to vector<256xf32>
    %166 = vector.shape_cast %165 : vector<256xf32> to vector<256x1xf32>
    %cst_83 = arith.constant 1.280000e+02 : f32
    %167 = vector.broadcast %cst_83 : f32 to vector<256x1xf32>
    %168 = arith.divf %166, %167 : vector<256x1xf32>
    %cst_84 = arith.constant dense<0xFF800000> : vector<256xf32>
    %169 = vector.multi_reduction <maximumf>, %133, %cst_84 [1] : vector<256x128xf32> to vector<256xf32>
    %170 = vector.shape_cast %169 : vector<256xf32> to vector<256x1xf32>
    %171 = tpu.concatenate %168, %170 in 1 : vector<256x1xf32>, vector<256x1xf32> -> vector<256x2xf32>
    %172 = tpu.iota {dimensions = array<i32: 0>} : vector<256x1xi32>
    %c16_i32_85 = arith.constant 16 : i32
    %c0_i32_86 = arith.constant 0 : i32
    %173 = arith.cmpi eq, %c16_i32_85, %c0_i32_86 : i32
    %c1_i32_87 = arith.constant 1 : i32
    %174 = arith.select %173, %c1_i32_87, %c16_i32_85 : i32
    %175 = vector.broadcast %174 : i32 to vector<256x1xi32>
    %176 = arith.remsi %172, %175 : vector<256x1xi32>
    %c0_i32_88 = arith.constant 0 : i32
    %177 = vector.broadcast %c0_i32_88 : i32 to vector<256x1xi32>
    %178 = arith.cmpi ne, %176, %177 : vector<256x1xi32>
    %c0_i32_89 = arith.constant 0 : i32
    %179 = vector.broadcast %c0_i32_89 : i32 to vector<256x1xi32>
    %180 = arith.cmpi slt, %176, %179 : vector<256x1xi32>
    %c0_i32_90 = arith.constant 0 : i32
    %181 = arith.cmpi slt, %174, %c0_i32_90 : i32
    %182 = vector.broadcast %181 : i1 to vector<256x1xi1>
    %183 = vector.broadcast %182 : vector<256x1xi1> to vector<256x1xi1>
    %184 = arith.xori %180, %183 : vector<256x1xi1>
    %185 = arith.andi %184, %178 : vector<256x1xi1>
    %186 = vector.broadcast %174 : i32 to vector<256x1xi32>
    %187 = arith.addi %176, %186 : vector<256x1xi32>
    %188 = arith.select %185, %187, %176 : vector<256x1xi1>, vector<256x1xi32>
    %c15_i32_91 = arith.constant 15 : i32
    %189 = vector.broadcast %c15_i32_91 : i32 to vector<256x1xi32>
    %190 = arith.cmpi eq, %188, %189 : vector<256x1xi32>
    %cst_92 = arith.constant 0.000000e+00 : f32
    %191 = vector.shape_cast %190 : vector<256x1xi1> to vector<256x1xi1>
    %192 = vector.broadcast %191 : vector<256x1xi1> to vector<256x2xi1>
    %193 = vector.broadcast %cst_92 : f32 to vector<256x2xf32>
    %194 = arith.select %192, %193, %171 : vector<256x2xi1>, vector<256x2xf32>
    %c0_i32_93 = arith.constant 0 : i32
    %195 = vector.broadcast %c0_i32_93 : i32 to vector<256x1xi32>
    %196 = arith.cmpi eq, %188, %195 : vector<256x1xi32>
    %cst_94 = arith.constant 0.000000e+00 : f32
    %197 = vector.shape_cast %196 : vector<256x1xi1> to vector<256x1xi1>
    %198 = vector.broadcast %197 : vector<256x1xi1> to vector<256x2xi1>
    %199 = vector.broadcast %cst_94 : f32 to vector<256x2xf32>
    %200 = arith.select %198, %199, %171 : vector<256x2xi1>, vector<256x2xf32>
    %cst_95 = arith.constant 0.000000e+00 : f32
    %201 = vector.broadcast %cst_95 : f32 to vector<17x2xf32>
    %cst_96 = arith.constant 0.000000e+00 : f32
    %202 = vector.broadcast %cst_96 : f32 to vector<15x2xf32>
    %203 = tpu.concatenate %201, %194, %202 in 0 : vector<17x2xf32>, vector<256x2xf32>, vector<15x2xf32> -> vector<288x2xf32>
    %cst_97 = arith.constant 0.000000e+00 : f32
    %204 = vector.broadcast %cst_97 : f32 to vector<16x2xf32>
    %cst_98 = arith.constant 0.000000e+00 : f32
    %205 = vector.broadcast %cst_98 : f32 to vector<16x2xf32>
    %206 = tpu.concatenate %204, %171, %205 in 0 : vector<16x2xf32>, vector<256x2xf32>, vector<16x2xf32> -> vector<288x2xf32>
    %cst_99 = arith.constant 0.000000e+00 : f32
    %207 = vector.broadcast %cst_99 : f32 to vector<15x2xf32>
    %cst_100 = arith.constant 0.000000e+00 : f32
    %208 = vector.broadcast %cst_100 : f32 to vector<17x2xf32>
    %209 = tpu.concatenate %207, %200, %208 in 0 : vector<15x2xf32>, vector<256x2xf32>, vector<17x2xf32> -> vector<288x2xf32>
    %cst_101 = arith.constant 0.000000e+00 : f32
    %210 = vector.broadcast %cst_101 : f32 to vector<256x2xf32>
    %211 = vector.extract_strided_slice %203 {offsets = [0, 0], sizes = [256, 2], strides = [1, 1]} : vector<288x2xf32> to vector<256x2xf32>
    %c0_102 = arith.constant 0 : index
    %c0_103 = arith.constant 0 : index
    %212 = vector.load %arg7[%c0_102, %c0_103] : memref<9x2xf32, #tpu.memory_space<vmem>>, vector<1x2xf32>
    %213 = vector.broadcast %212 : vector<1x2xf32> to vector<256x2xf32>
    %214 = arith.mulf %211, %213 : vector<256x2xf32>
    %215 = arith.addf %210, %214 : vector<256x2xf32>
    %216 = vector.extract_strided_slice %206 {offsets = [0, 0], sizes = [256, 2], strides = [1, 1]} : vector<288x2xf32> to vector<256x2xf32>
    %c1_104 = arith.constant 1 : index
    %c0_105 = arith.constant 0 : index
    %217 = vector.load %arg7[%c1_104, %c0_105] : memref<9x2xf32, #tpu.memory_space<vmem>>, vector<1x2xf32>
    %218 = vector.broadcast %217 : vector<1x2xf32> to vector<256x2xf32>
    %219 = arith.mulf %216, %218 : vector<256x2xf32>
    %220 = arith.addf %215, %219 : vector<256x2xf32>
    %221 = vector.extract_strided_slice %209 {offsets = [0, 0], sizes = [256, 2], strides = [1, 1]} : vector<288x2xf32> to vector<256x2xf32>
    %c2_106 = arith.constant 2 : index
    %c0_107 = arith.constant 0 : index
    %222 = vector.load %arg7[%c2_106, %c0_107] : memref<9x2xf32, #tpu.memory_space<vmem>>, vector<1x2xf32>
    %223 = vector.broadcast %222 : vector<1x2xf32> to vector<256x2xf32>
    %224 = arith.mulf %221, %223 : vector<256x2xf32>
    %225 = arith.addf %220, %224 : vector<256x2xf32>
    %226 = vector.extract_strided_slice %203 {offsets = [16, 0], sizes = [256, 2], strides = [1, 1]} : vector<288x2xf32> to vector<256x2xf32>
    %c3_108 = arith.constant 3 : index
    %c0_109 = arith.constant 0 : index
    %227 = vector.load %arg7[%c3_108, %c0_109] : memref<9x2xf32, #tpu.memory_space<vmem>>, vector<1x2xf32>
    %228 = vector.broadcast %227 : vector<1x2xf32> to vector<256x2xf32>
    %229 = arith.mulf %226, %228 : vector<256x2xf32>
    %230 = arith.addf %225, %229 : vector<256x2xf32>
    %231 = vector.extract_strided_slice %206 {offsets = [16, 0], sizes = [256, 2], strides = [1, 1]} : vector<288x2xf32> to vector<256x2xf32>
    %c4_110 = arith.constant 4 : index
    %c0_111 = arith.constant 0 : index
    %232 = vector.load %arg7[%c4_110, %c0_111] : memref<9x2xf32, #tpu.memory_space<vmem>>, vector<1x2xf32>
    %233 = vector.broadcast %232 : vector<1x2xf32> to vector<256x2xf32>
    %234 = arith.mulf %231, %233 : vector<256x2xf32>
    %235 = arith.addf %230, %234 : vector<256x2xf32>
    %236 = vector.extract_strided_slice %209 {offsets = [16, 0], sizes = [256, 2], strides = [1, 1]} : vector<288x2xf32> to vector<256x2xf32>
    %c5 = arith.constant 5 : index
    %c0_112 = arith.constant 0 : index
    %237 = vector.load %arg7[%c5, %c0_112] : memref<9x2xf32, #tpu.memory_space<vmem>>, vector<1x2xf32>
    %238 = vector.broadcast %237 : vector<1x2xf32> to vector<256x2xf32>
    %239 = arith.mulf %236, %238 : vector<256x2xf32>
    %240 = arith.addf %235, %239 : vector<256x2xf32>
    %241 = vector.extract_strided_slice %203 {offsets = [32, 0], sizes = [256, 2], strides = [1, 1]} : vector<288x2xf32> to vector<256x2xf32>
    %c6 = arith.constant 6 : index
    %c0_113 = arith.constant 0 : index
    %242 = vector.load %arg7[%c6, %c0_113] : memref<9x2xf32, #tpu.memory_space<vmem>>, vector<1x2xf32>
    %243 = vector.broadcast %242 : vector<1x2xf32> to vector<256x2xf32>
    %244 = arith.mulf %241, %243 : vector<256x2xf32>
    %245 = arith.addf %240, %244 : vector<256x2xf32>
    %246 = vector.extract_strided_slice %206 {offsets = [32, 0], sizes = [256, 2], strides = [1, 1]} : vector<288x2xf32> to vector<256x2xf32>
    %c7 = arith.constant 7 : index
    %c0_114 = arith.constant 0 : index
    %247 = vector.load %arg7[%c7, %c0_114] : memref<9x2xf32, #tpu.memory_space<vmem>>, vector<1x2xf32>
    %248 = vector.broadcast %247 : vector<1x2xf32> to vector<256x2xf32>
    %249 = arith.mulf %246, %248 : vector<256x2xf32>
    %250 = arith.addf %245, %249 : vector<256x2xf32>
    %251 = vector.extract_strided_slice %209 {offsets = [32, 0], sizes = [256, 2], strides = [1, 1]} : vector<288x2xf32> to vector<256x2xf32>
    %c8 = arith.constant 8 : index
    %c0_115 = arith.constant 0 : index
    %252 = vector.load %arg7[%c8, %c0_115] : memref<9x2xf32, #tpu.memory_space<vmem>>, vector<1x2xf32>
    %253 = vector.broadcast %252 : vector<1x2xf32> to vector<256x2xf32>
    %254 = arith.mulf %251, %253 : vector<256x2xf32>
    %255 = arith.addf %250, %254 : vector<256x2xf32>
    %256 = vector.extract_strided_slice %255 {offsets = [0, 0], sizes = [256, 1], strides = [1, 1]} : vector<256x2xf32> to vector<256x1xf32>
    %257 = vector.extract_strided_slice %255 {offsets = [0, 1], sizes = [256, 1], strides = [1, 1]} : vector<256x2xf32> to vector<256x1xf32>
    %258 = arith.addf %256, %257 : vector<256x1xf32>
    %cst_116 = arith.constant 0.000000e+00 : f32
    %259 = vector.broadcast %cst_116 : f32 to vector<256x1xf32>
    %260 = arith.subf %259, %258 : vector<256x1xf32>
    %261 = math.exp %260 : vector<256x1xf32>
    %cst_117 = arith.constant 1.000000e+00 : f32
    %262 = vector.broadcast %cst_117 : f32 to vector<256x1xf32>
    %263 = arith.addf %262, %261 : vector<256x1xf32>
    %cst_118 = arith.constant 1.000000e+00 : f32
    %264 = vector.broadcast %cst_118 : f32 to vector<256x1xf32>
    %265 = arith.divf %264, %263 : vector<256x1xf32>
    %266 = vector.broadcast %265 : vector<256x1xf32> to vector<256x128xf32>
    %267 = arith.mulf %133, %266 : vector<256x128xf32>
    %c0_119 = arith.constant 0 : index
    %c0_120 = arith.constant 0 : index
    %c0_121 = arith.constant 0 : index
    %268 = vector.load %arg10[%c0_119, %c0_120, %c0_121] : memref<1x256x128xf32, #tpu.memory_space<vmem>>, vector<1x256x128xf32>
    %269 = vector.shape_cast %268 : vector<1x256x128xf32> to vector<256x128xf32>
    %270 = vector.shape_cast %267 : vector<256x128xf32> to vector<1x256x128xf32>
    tpu.vector_store %arg10[%c0_119, %c0_120, %c0_121], %270 {strides = array<i32>} : memref<1x256x128xf32, #tpu.memory_space<vmem>>, vector<1x256x128xf32>,
    return
  }
  func.func @transform_0(%arg0: i32) -> (i32, i32, i32) {
    %c0_i32 = arith.constant 0 : i32
    %c0_i32_0 = arith.constant 0 : i32
    %c0_i32_1 = arith.constant 0 : i32
    return %arg0, %c0_i32, %c0_i32_0 : i32, i32, i32
  }
  func.func @transform_1(%arg0: i32) -> (i32, i32, i32) {
    %c0_i32 = arith.constant 0 : i32
    %c0_i32_0 = arith.constant 0 : i32
    %c0_i32_1 = arith.constant 0 : i32
    %c0_i32_2 = arith.constant 0 : i32
    return %c0_i32, %c0_i32_0, %c0_i32_1 : i32, i32, i32
  }
  func.func @transform_2(%arg0: i32) -> (i32, i32, i32) {
    %c0_i32 = arith.constant 0 : i32
    %c0_i32_0 = arith.constant 0 : i32
    %c0_i32_1 = arith.constant 0 : i32
    %c0_i32_2 = arith.constant 0 : i32
    return %c0_i32, %c0_i32_0, %c0_i32_1 : i32, i32, i32
  }
  func.func @transform_3(%arg0: i32) -> (i32, i32) {
    %c0_i32 = arith.constant 0 : i32
    %c0_i32_0 = arith.constant 0 : i32
    %c0_i32_1 = arith.constant 0 : i32
    return %c0_i32, %c0_i32_0 : i32, i32
  }
  func.func @transform_4(%arg0: i32) -> (i32, i32) {
    %c0_i32 = arith.constant 0 : i32
    %c0_i32_0 = arith.constant 0 : i32
    %c0_i32_1 = arith.constant 0 : i32
    return %c0_i32, %c0_i32_0 : i32, i32
  }
  func.func @transform_5(%arg0: i32) -> (i32, i32) {
    %c0_i32 = arith.constant 0 : i32
    %c0_i32_0 = arith.constant 0 : i32
    %c0_i32_1 = arith.constant 0 : i32
    return %c0_i32, %c0_i32_0 : i32, i32
  }
  func.func @transform_6(%arg0: i32) -> (i32, i32) {
    %c0_i32 = arith.constant 0 : i32
    %c0_i32_0 = arith.constant 0 : i32
    %c0_i32_1 = arith.constant 0 : i32
    return %c0_i32, %c0_i32_0 : i32, i32
  }
  func.func @transform_7(%arg0: i32) -> (i32, i32, i32) {
    %c0_i32 = arith.constant 0 : i32
    %c0_i32_0 = arith.constant 0 : i32
    %c0_i32_1 = arith.constant 0 : i32
    return %arg0, %c0_i32, %c0_i32_0 : i32, i32, i32
  }
  func.func @transform_8(%arg0: i32) -> (i32, i32, i32) {
    %c0_i32 = arith.constant 0 : i32
    %c0_i32_0 = arith.constant 0 : i32
    %c0_i32_1 = arith.constant 0 : i32
    return %arg0, %c0_i32, %c0_i32_0 : i32, i32, i32
  }
  func.func @transform_9(%arg0: i32) -> (i32, i32, i32) {
    %c0_i32 = arith.constant 0 : i32
    %c0_i32_0 = arith.constant 0 : i32
    %c0_i32_1 = arith.constant 0 : i32
    return %arg0, %c0_i32, %c0_i32_0 : i32, i32, i32
  }
}

</mosaic_0001>

<llo_original>
// kernel: channel_spatial_attention_forward.1
$region0: #{channel_spatial_attention_forward.1}
  #allocation0 [shape = 'u32[]', space=smem, size = 0x4, offset = 0x4, fixed_abs, tag = 'smem constant byte address 0x4 - core index']
  #allocation1 [shape = 'u32[144,128]{1,0:T(1,128)}', space=vmem, size = 0x12000, scoped, tag = 'internal scratch']
  %s0 = inlined_call_operand.vmem [shape: f32[2,256,16], index: 0, kind: input, shape index: {}]
  %s1 = inlined_call_operand.vmem [shape: bf16[3,48,128], index: 1, kind: input, shape index: {}]
  %s2 = inlined_call_operand.vmem [shape: bf16[3,384,128], index: 2, kind: input, shape index: {}]
  %s3 = inlined_call_operand.vmem [shape: f32[8,128], index: 3, kind: input, shape index: {}]
  %s4 = inlined_call_operand.vmem [shape: f32[128,8], index: 4, kind: input, shape index: {}]
  %s5 = inlined_call_operand.vmem [shape: f32[8,128], index: 5, kind: input, shape index: {}]
  %s6 = inlined_call_operand.vmem [shape: f32[9,2], index: 6, kind: input, shape index: {}]
  %s7 = inlined_call_operand.hbm [shape: f32[2,256,128], index: 7, kind: output, shape index: {0}]
  %s8 = inlined_call_operand.hbm [shape: f32[2,256,128], index: 8, kind: output, shape index: {1}]
  %s9 = inlined_call_operand.hbm [shape: f32[2,256,128], index: 9, kind: output, shape index: {2}]
  %10 = xla_tuple %s7, %s8, %s9
  %s11 = sld [smem:[#allocation0]]
  $region77: #{channel_spatial_attention_forward.1} parent=0
    _
  %s13 = ssub.s32 1, %s11
  %s14 = scalar_select 0, %s13, %s11
  $region1: #{channel_spatial_attention_forward.1} parent=0
    #allocation2 [shape = 'u8[262144]{0}', space=vmem, size = 0x40000, scoped, tag = 'output window, operand 0']
    #allocation3 [shape = 's32[2]{0}', space=sflag, size = 0x8, scoped, tag = 'scoped memory for channel_spatial_attention_forward.1']
    #allocation4 [shape = 'u8[262144]{0}', space=vmem, size = 0x40000, scoped, tag = 'output window, operand 1']
    #allocation5 [shape = 's32[2]{0}', space=sflag, size = 0x8, scoped, tag = 'scoped memory for channel_spatial_attention_forward.1']
    #allocation6 [shape = 'u8[262144]{0}', space=vmem, size = 0x40000, scoped, tag = 'output window, operand 2']
    %15 = vsyncpa [#allocation3], 0
    %s16 = scalar_lea.sflag [#allocation3], 1
    %17 = vsyncpa %s16, 0
    %18 = vsyncpa [#allocation5], 0
    %s19 = scalar_lea.sflag [#allocation5], 1
    %20 = vsyncpa %s19, 0
    loop: start=0, step=1, limit=4
    $region2: #{channel_spatial_attention_forward.1} parent=1 // loop_pre_header
      _
    $region3: #{channel_spatial_attention_forward.1} parent=1 // loop_header
      %s22 = sphi 0, %s26
      %p23 = scmp.ge.s32.totalorder %s22, 4
      %s32 = sphi 0, %s34
      %s35 = sphi 0, %s32
      %s36 = sphi 0, %s35
      %s52 = sphi 0, %s36
      %s56 = sphi 0, %s56
      %s58 = sphi 0, %s56
      %s59 = sphi 0, %s58
      %s73 = sphi 0, %s59
      %s77 = sphi 0, %s77
      %s79 = sphi 0, %s77
      %s80 = sphi 0, %s79
      %s94 = sphi 0, %s80
      %s98 = sphi 0, %s98
      %s100 = sphi 0, %s98
      %s101 = sphi 0, %s100
      %s115 = sphi 0, %s101
      %s119 = sphi 0, %s119
      %s121 = sphi 0, %s119
      %s122 = sphi 0, %s121
      %s136 = sphi 0, %s122
      %s140 = sphi 0, %s140
      %s142 = sphi 0, %s140
      %s143 = sphi 0, %s142
      %s157 = sphi 0, %s143
      %s161 = sphi 0, %s161
      %s163 = sphi 0, %s161
      %s164 = sphi 0, %s163
      %s178 = sphi 0, %s164
      %s184 = sphi 0, %s186
      %s187 = sphi 0, %s184
      %s188 = sphi 0, %s187
      %s204 = sphi 0, %s188
      %s210 = sphi 0, %s212
      %s213 = sphi 0, %s210
      %s214 = sphi 0, %s213
      %s230 = sphi 0, %s214
      %s236 = sphi 0, %s238
      %s239 = sphi 0, %s236
      %s240 = sphi 0, %s239
      %s256 = sphi 0, %s240
    $region4: #{channel_spatial_attention_forward.1} parent=1 // loop_header_branch
      %25 = sbr.rel (%p23) target = $region8
    $region5: #{channel_spatial_attention_forward.1} parent=1 // loop_body
      %s27 = ssub.s32 %s22, 1
      %s28 = ssub.s32 %s22, 2
      %s29 = sadd.s32 %s22, 1
      %s30 = ssub.s32 %s22, %s29
      %p31 = scmp.eq.s32.totalorder %s30, 0
      %s33 = sadd.s32 %s32, 1
      %s34 = scalar_select %p31, %s32, %s33
      %p37 = pneg %p31
      %p38 = scmp.eq.s32.totalorder %s22, 1
      %p39 = por %p37, %p38
      %p40 = scmp.ne.s32.totalorder %s32, %s35
      %p41 = scmp.eq.s32.totalorder %s22, 0
      %p42 = por %p40, %p41
      %p43 = scmp.ne.s32.totalorder %s32, %s35
      %p44 = scmp.eq.s32.totalorder %s27, 1
      %p45 = por %p43, %p44
      %p46 = scmp.ne.s32.totalorder %s35, %s36
      %p47 = scmp.eq.s32.totalorder %s27, 0
      %p48 = por %p46, %p47
      %p49 = scmp.ne.s32.totalorder %s35, %s36
      %p50 = scmp.eq.s32.totalorder %s28, 1
      %p51 = por %p49, %p50
      %p53 = scmp.ne.s32.totalorder %s36, %s52
      %p54 = scmp.eq.s32.totalorder %s28, 0
      %p55 = por %p53, %p54
      %s57 = sadd.s32 %s56, 1
      %p60 = scmp.eq.s32.totalorder %s22, 1
      %p61 = scmp.ne.s32.totalorder %s56, %s58
      %p62 = scmp.eq.s32.totalorder %s22, 0
      %p63 = por %p61, %p62
      %p64 = scmp.ne.s32.totalorder %s56, %s58
      %p65 = scmp.eq.s32.totalorder %s27, 1
      %p66 = por %p64, %p65
      %p67 = scmp.ne.s32.totalorder %s58, %s59
      %p68 = scmp.eq.s32.totalorder %s27, 0
      %p69 = por %p67, %p68
      %p70 = scmp.ne.s32.totalorder %s58, %s59
      %p71 = scmp.eq.s32.totalorder %s28, 1
      %p72 = por %p70, %p71
      %p74 = scmp.ne.s32.totalorder %s59, %s73
      %p75 = scmp.eq.s32.totalorder %s28, 0
      %p76 = por %p74, %p75
      %s78 = sadd.s32 %s77, 1
      %p81 = scmp.eq.s32.totalorder %s22, 1
      %p82 = scmp.ne.s32.totalorder %s77, %s79
      %p83 = scmp.eq.s32.totalorder %s22, 0
      %p84 = por %p82, %p83
      %p85 = scmp.ne.s32.totalorder %s77, %s79
      %p86 = scmp.eq.s32.totalorder %s27, 1
      %p87 = por %p85, %p86
      %p88 = scmp.ne.s32.totalorder %s79, %s80
      %p89 = scmp.eq.s32.totalorder %s27, 0
      %p90 = por %p88, %p89
      %p91 = scmp.ne.s32.totalorder %s79, %s80
      %p92 = scmp.eq.s32.totalorder %s28, 1
      %p93 = por %p91, %p92
      %p95 = scmp.ne.s32.totalorder %s80, %s94
      %p96 = scmp.eq.s32.totalorder %s28, 0
      %p97 = por %p95, %p96
      %s99 = sadd.s32 %s98, 1
      %p102 = scmp.eq.s32.totalorder %s22, 1
      %p103 = scmp.ne.s32.totalorder %s98, %s100
      %p104 = scmp.eq.s32.totalorder %s22, 0
      %p105 = por %p103, %p104
      %p106 = scmp.ne.s32.totalorder %s98, %s100
      %p107 = scmp.eq.s32.totalorder %s27, 1
      %p108 = por %p106, %p107
      %p109 = scmp.ne.s32.totalorder %s100, %s101
      %p110 = scmp.eq.s32.totalorder %s27, 0
      %p111 = por %p109, %p110
      %p112 = scmp.ne.s32.totalorder %s100, %s101
      %p113 = scmp.eq.s32.totalorder %s28, 1
      %p114 = por %p112, %p113
      %p116 = scmp.ne.s32.totalorder %s101, %s115
      %p117 = scmp.eq.s32.totalorder %s28, 0
      %p118 = por %p116, %p117
      %s120 = sadd.s32 %s119, 1
      %p123 = scmp.eq.s32.totalorder %s22, 1
      %p124 = scmp.ne.s32.totalorder %s119, %s121
      %p125 = scmp.eq.s32.totalorder %s22, 0
      %p126 = por %p124, %p125
      %p127 = scmp.ne.s32.totalorder %s119, %s121
      %p128 = scmp.eq.s32.totalorder %s27, 1
      %p129 = por %p127, %p128
      %p130 = scmp.ne.s32.totalorder %s121, %s122
      %p131 = scmp.eq.s32.totalorder %s27, 0
      %p132 = por %p130, %p131
      %p133 = scmp.ne.s32.totalorder %s121, %s122
      %p134 = scmp.eq.s32.totalorder %s28, 1
      %p135 = por %p133, %p134
      %p137 = scmp.ne.s32.totalorder %s122, %s136
      %p138 = scmp.eq.s32.totalorder %s28, 0
      %p139 = por %p137, %p138
      %s141 = sadd.s32 %s140, 1
      %p144 = scmp.eq.s32.totalorder %s22, 1
      %p145 = scmp.ne.s32.totalorder %s140, %s142
      %p146 = scmp.eq.s32.totalorder %s22, 0
      %p147 = por %p145, %p146
      %p148 = scmp.ne.s32.totalorder %s140, %s142
      %p149 = scmp.eq.s32.totalorder %s27, 1
      %p150 = por %p148, %p149
      %p151 = scmp.ne.s32.totalorder %s142, %s143
      %p152 = scmp.eq.s32.totalorder %s27, 0
      %p153 = por %p151, %p152
      %p154 = scmp.ne.s32.totalorder %s142, %s143
      %p155 = scmp.eq.s32.totalorder %s28, 1
      %p156 = por %p154, %p155
      %p158 = scmp.ne.s32.totalorder %s143, %s157
      %p159 = scmp.eq.s32.totalorder %s28, 0
      %p160 = por %p158, %p159
      %s162 = sadd.s32 %s161, 1
      %p165 = scmp.eq.s32.totalorder %s22, 1
      %p166 = scmp.ne.s32.totalorder %s161, %s163
      %p167 = scmp.eq.s32.totalorder %s22, 0
      %p168 = por %p166, %p167
      %p169 = scmp.ne.s32.totalorder %s161, %s163
      %p170 = scmp.eq.s32.totalorder %s27, 1
      %p171 = por %p169, %p170
      %p172 = scmp.ne.s32.totalorder %s163, %s164
      %p173 = scmp.eq.s32.totalorder %s27, 0
      %p174 = por %p172, %p173
      %p175 = scmp.ne.s32.totalorder %s163, %s164
      %p176 = scmp.eq.s32.totalorder %s28, 1
      %p177 = por %p175, %p176
      %p179 = scmp.ne.s32.totalorder %s164, %s178
      %p180 = scmp.eq.s32.totalorder %s28, 0
      %p181 = por %p179, %p180
      %s182 = ssub.s32 %s22, %s29
      %p183 = scmp.eq.s32.totalorder %s182, 0
      %s185 = sadd.s32 %s184, 1
      %s186 = scalar_select %p183, %s184, %s185
      %p189 = pneg %p183
      %p190 = scmp.eq.s32.totalorder %s22, 1
      %p191 = por %p189, %p190
      %p192 = scmp.ne.s32.totalorder %s184, %s187
      %p193 = scmp.eq.s32.totalorder %s22, 0
      %p194 = por %p192, %p193
      %p195 = scmp.ne.s32.totalorder %s184, %s187
      %p196 = scmp.eq.s32.totalorder %s27, 1
      %p197 = por %p195, %p196
      %p198 = scmp.ne.s32.totalorder %s187, %s188
      %p199 = scmp.eq.s32.totalorder %s27, 0
      %p200 = por %p198, %p199
      %p201 = scmp.ne.s32.totalorder %s187, %s188
      %p202 = scmp.eq.s32.totalorder %s28, 1
      %p203 = por %p201, %p202
      %p205 = scmp.ne.s32.totalorder %s188, %s204
      %p206 = scmp.eq.s32.totalorder %s28, 0
      %p207 = por %p205, %p206
      %s208 = ssub.s32 %s22, %s29
      %p209 = scmp.eq.s32.totalorder %s208, 0
      %s211 = sadd.s32 %s210, 1
      %s212 = scalar_select %p209, %s210, %s211
      %p215 = pneg %p209
      %p216 = scmp.eq.s32.totalorder %s22, 1
      %p217 = por %p215, %p216
      %p218 = scmp.ne.s32.totalorder %s210, %s213
      %p219 = scmp.eq.s32.totalorder %s22, 0
      %p220 = por %p218, %p219
      %p221 = scmp.ne.s32.totalorder %s210, %s213
      %p222 = scmp.eq.s32.totalorder %s27, 1
      %p223 = por %p221, %p222
      %p224 = scmp.ne.s32.totalorder %s213, %s214
      %p225 = scmp.eq.s32.totalorder %s27, 0
      %p226 = por %p224, %p225
      %p227 = scmp.ne.s32.totalorder %s213, %s214
      %p228 = scmp.eq.s32.totalorder %s28, 1
      %p229 = por %p227, %p228
      %p231 = scmp.ne.s32.totalorder %s214, %s230
      %p232 = scmp.eq.s32.totalorder %s28, 0
      %p233 = por %p231, %p232
      %s234 = ssub.s32 %s22, %s29
      %p235 = scmp.eq.s32.totalorder %s234, 0
      %s237 = sadd.s32 %s236, 1
      %s238 = scalar_select %p235, %s236, %s237
      %p241 = pneg %p235
      %p242 = scmp.eq.s32.totalorder %s22, 1
      %p243 = por %p241, %p242
      %p244 = scmp.ne.s32.totalorder %s236, %s239
      %p245 = scmp.eq.s32.totalorder %s22, 0
      %p246 = por %p244, %p245
      %p247 = scmp.ne.s32.totalorder %s236, %s239
      %p248 = scmp.eq.s32.totalorder %s27, 1
      %p249 = por %p247, %p248
      %p250 = scmp.ne.s32.totalorder %s239, %s240
      %p251 = scmp.eq.s32.totalorder %s27, 0
      %p252 = por %p250, %p251
      %p253 = scmp.ne.s32.totalorder %s239, %s240
      %p254 = scmp.eq.s32.totalorder %s28, 1
      %p255 = por %p253, %p254
      %p257 = scmp.ne.s32.totalorder %s240, %s256
      %p258 = scmp.eq.s32.totalorder %s28, 0
      %p259 = por %p257, %p258
      %p260 = scmp.le.s32.totalorder 1, %s22
      %p261 = scmp.lt.s32.totalorder %s22, 3
      %p262 = pnand %p260, %p261
      %p263 = pneg %p262
      // Predicated region
      $region9: #{channel_spatial_attention_forward.1} parent=5 // pred_check
        _
      $region10: #{channel_spatial_attention_forward.1} parent=5 // pred_check_branch
        %265 = sbr.rel (%p262) target = $region12
      $region11: #{channel_spatial_attention_forward.1} parent=5 // pred_region
        %s266 = ssub.s32 %s22, 1
        // Predicated region
        $region13: #{channel_spatial_attention_forward.1} parent=11 // pred_check
          %p267 = pneg %p69
        $region14: #{channel_spatial_attention_forward.1} parent=11 // pred_check_branch
          %269 = sbr.rel (%p267) target = $region16
        $region15: #{channel_spatial_attention_forward.1} parent=11 // pred_region
          _
        $region16: #{channel_spatial_attention_forward.1} parent=11 // pred_fallthru
          _
        // Predicated region
        $region17: #{channel_spatial_attention_forward.1} parent=11 // pred_check
          %p270 = pneg %p90
        $region18: #{channel_spatial_attention_forward.1} parent=11 // pred_check_branch
          %272 = sbr.rel (%p270) target = $region20
        $region19: #{channel_spatial_attention_forward.1} parent=11 // pred_region
          _
        $region20: #{channel_spatial_attention_forward.1} parent=11 // pred_fallthru
          _
        // Predicated region
        $region21: #{channel_spatial_attention_forward.1} parent=11 // pred_check
          %p273 = pneg %p111
        $region22: #{channel_spatial_attention_forward.1} parent=11 // pred_check_branch
          %275 = sbr.rel (%p273) target = $region24
        $region23: #{channel_spatial_attention_forward.1} parent=11 // pred_region
          _
        $region24: #{channel_spatial_attention_forward.1} parent=11 // pred_fallthru
          _
        // Predicated region
        $region25: #{channel_spatial_attention_forward.1} parent=11 // pred_check
          %p276 = pneg %p132
        $region26: #{channel_spatial_attention_forward.1} parent=11 // pred_check_branch
          %278 = sbr.rel (%p276) target = $region28
        $region27: #{channel_spatial_attention_forward.1} parent=11 // pred_region
          _
        $region28: #{channel_spatial_attention_forward.1} parent=11 // pred_fallthru
          _
        // Predicated region
        $region29: #{channel_spatial_attention_forward.1} parent=11 // pred_check
          %p279 = pneg %p153
        $region30: #{channel_spatial_attention_forward.1} parent=11 // pred_check_branch
          %281 = sbr.rel (%p279) target = $region32
        $region31: #{channel_spatial_attention_forward.1} parent=11 // pred_region
          _
        $region32: #{channel_spatial_attention_forward.1} parent=11 // pred_fallthru
          _
        // Predicated region
        $region33: #{channel_spatial_attention_forward.1} parent=11 // pred_check
          %p282 = pneg %p174
        $region34: #{channel_spatial_attention_forward.1} parent=11 // pred_check_branch
          %284 = sbr.rel (%p282) target = $region36
        $region35: #{channel_spatial_attention_forward.1} parent=11 // pred_region
          _
        $region36: #{channel_spatial_attention_forward.1} parent=11 // pred_fallthru
          _
      $region12: #{channel_spatial_attention_forward.1} parent=5 // pred_fallthru
        _
      %p285 = scmp.lt.s32.totalorder %s22, 2
      // Predicated region
      $region37: #{channel_spatial_attention_forward.1} parent=5 // pred_check
        %p286 = pneg %p285
      $region38: #{channel_spatial_attention_forward.1} parent=5 // pred_check_branch
        %288 = sbr.rel (%p286) target = $region40
      $region39: #{channel_spatial_attention_forward.1} parent=5 // pred_region
        // Predicated region
        $region41: #{channel_spatial_attention_forward.1} parent=39 // pred_check
          %p289 = pneg %p42
        $region42: #{channel_spatial_attention_forward.1} parent=39 // pred_check_branch
          %291 = sbr.rel (%p289) target = $region44
        $region43: #{channel_spatial_attention_forward.1} parent=39 // pred_region
          %p292 = scmp.lt.s32.totalorder %s22, 1
          %s293 = scalar_select %p292, %s22, 1
          %s294 = smul.addr %s293, 32
          %s295 = smul.addr %s294, 8
          %s296 = scalar_lea.vmem %s0, %s295
        $region44: #{channel_spatial_attention_forward.1} parent=39 // pred_fallthru
          _
      $region40: #{channel_spatial_attention_forward.1} parent=5 // pred_fallthru
        _
      %p297 = scmp.le.s32.totalorder 1, %s22
      %p298 = scmp.lt.s32.totalorder %s22, 3
      %p299 = pnand %p297, %p298
      %p300 = pneg %p299
      // Predicated region
      $region45: #{channel_spatial_attention_forward.1} parent=5 // pred_check
        _
      $region46: #{channel_spatial_attention_forward.1} parent=5 // pred_check_branch
        %302 = sbr.rel (%p299) target = $region48
      $region47: #{channel_spatial_attention_forward.1} parent=5 // pred_region
        %s303 = ssub.s32 %s22, 1
        %p304 = scmp.lt.s32.totalorder %s27, 1
        %s305 = scalar_select %p304, %s27, 1
        %s306 = smul.addr %s305, 32
        %s307 = smul.addr %s306, 8
        %s308 = scalar_lea.vmem %s0, %s307
        %p309 = pneg %p48
        %p310 = pneg %p45
        %p311 = pneg %p69
        %p312 = pneg %p66
        %p313 = pneg %p90
        %p314 = pneg %p87
        %p315 = pneg %p111
        %p316 = pneg %p108
        %p317 = pneg %p132
        %p318 = pneg %p129
        %p319 = pneg %p153
        %p320 = pneg %p150
        %p321 = pneg %p174
        %p322 = pneg %p171
        %p323 = pneg %p200
        %p324 = pneg %p197
        %s325 = sand.u32 %s187, 1
        %s326 = scalar_lea.sflag [#allocation3], %s325
        %s327 = sand.u32 %s187, 1
        %s328 = smul.addr %s327, 256
        %s329 = scalar_lea.vmem [#allocation2], %s328
        %p330 = pneg %p226
        %p331 = pneg %p223
        %s332 = sand.u32 %s27, 1
        %s333 = scalar_lea.sflag [#allocation5], %s332
        %s334 = sand.u32 %s213, 1
        %s335 = smul.addr %s334, 256
        %s336 = scalar_lea.vmem [#allocation4], %s335
        %p337 = pneg %p252
        %p338 = pneg %p249
        %s339 = sand.u32 %s27, 1
        %s340 = scalar_lea.sflag [#allocation5], %s339
        %s341 = sand.u32 %s239, 1
        %s342 = smul.addr %s341, 256
        %s343 = scalar_lea.vmem [#allocation6], %s342
        %p344 = scmp.lt.s32.totalorder %s27, 1
        %s345 = scalar_select %p344, %s27, 1
        %s346 = smul.addr %s345, 32
        %s347 = smul.addr %s346, 8
        %s348 = scalar_lea.vmem %s0, %s347
        %v350 = vld [vmem:[%s348] sm:$0xff]
        %v351 = vld [vmem:[%s348 + $0x8] sm:$0xff]
        %v352 = vld [vmem:[%s348 + $0x10] sm:$0xff]
        %v353 = vld [vmem:[%s348 + $0x18] sm:$0xff]
        %v354 = vld [vmem:[%s348 + $0x20] sm:$0xff]
        %v355 = vld [vmem:[%s348 + $0x28] sm:$0xff]
        %v356 = vld [vmem:[%s348 + $0x30] sm:$0xff]
        %v357 = vld [vmem:[%s348 + $0x38] sm:$0xff]
        %v358 = vld [vmem:[%s348 + $0x40] sm:$0xff]
        %v359 = vld [vmem:[%s348 + $0x48] sm:$0xff]
        %v360 = vld [vmem:[%s348 + $0x50] sm:$0xff]
        %v361 = vld [vmem:[%s348 + $0x58] sm:$0xff]
        %v362 = vld [vmem:[%s348 + $0x60] sm:$0xff]
        %v363 = vld [vmem:[%s348 + $0x68] sm:$0xff]
        %v364 = vld [vmem:[%s348 + $0x70] sm:$0xff]
        %v365 = vld [vmem:[%s348 + $0x78] sm:$0xff]
        %v366 = vld [vmem:[%s348 + $0x80] sm:$0xff]
        %v367 = vld [vmem:[%s348 + $0x88] sm:$0xff]
        %v368 = vld [vmem:[%s348 + $0x90] sm:$0xff]
        %v369 = vld [vmem:[%s348 + $0x98] sm:$0xff]
        %v370 = vld [vmem:[%s348 + $0xa0] sm:$0xff]
        %v371 = vld [vmem:[%s348 + $0xa8] sm:$0xff]
        %v372 = vld [vmem:[%s348 + $0xb0] sm:$0xff]
        %v373 = vld [vmem:[%s348 + $0xb8] sm:$0xff]
        %v374 = vld [vmem:[%s348 + $0xc0] sm:$0xff]
        %v375 = vld [vmem:[%s348 + $0xc8] sm:$0xff]
        %v376 = vld [vmem:[%s348 + $0xd0] sm:$0xff]
        %v377 = vld [vmem:[%s348 + $0xd8] sm:$0xff]
        %v378 = vld [vmem:[%s348 + $0xe0] sm:$0xff]
        %v379 = vld [vmem:[%s348 + $0xe8] sm:$0xff]
        %v380 = vld [vmem:[%s348 + $0xf0] sm:$0xff]
        %v381 = vld [vmem:[%s348 + $0xf8] sm:$0xff]
        %v382 = vlaneseq
        %v383 = vshrl.u32 %v382, 7
        %v384 = vadd.s32 %v383, 8
        %v385 = vadd.s32 %v383, 16
        %v386 = vadd.s32 %v383, 24
        %v387 = vadd.s32 %v383, 32
        %v388 = vadd.s32 %v383, 40
        %v389 = vadd.s32 %v383, 48
        %v390 = vadd.s32 %v383, 56
        %v391 = vadd.s32 %v383, 64
        %v392 = vadd.s32 %v383, 72
        %v393 = vadd.s32 %v383, 80
        %v394 = vadd.s32 %v383, 88
        %v395 = vadd.s32 %v383, 96
        %v396 = vadd.s32 %v383, 104
        %v397 = vadd.s32 %v383, 112
        %v398 = vadd.s32 %v383, 120
        %v399 = vadd.s32 %v383, 128
        %v400 = vadd.s32 %v383, 136
        %v401 = vadd.s32 %v383, 144
        %v402 = vadd.s32 %v383, 152
        %v403 = vadd.s32 %v383, 160
        %v404 = vadd.s32 %v383, 168
        %v405 = vadd.s32 %v383, 176
        %v406 = vadd.s32 %v383, 184
        %v407 = vadd.s32 %v383, 192
        %v408 = vadd.s32 %v383, 200
        %v409 = vadd.s32 %v383, 208
        %v410 = vadd.s32 %v383, 216
        %v411 = vadd.s32 %v383, 224
        %v412 = vadd.s32 %v383, 232
        %v413 = vadd.s32 %v383, 240
        %v414 = vadd.s32 %v383, 248
        %vm415 = vcmp.lt.s32.totalorder %v383, 0
        %v416 = vsub.s32 0, %v383
        %v417 = vsel %vm415, %v416, %v383
        %v418 = vshrl.u32 %v417, 4
        %v419 = vand.u32 %v417, 15
        %v420 = vsub.s32 0, %v419
        %v421 = vsel %vm415, %v420, %v419
        %vm422 = vcmp.lt.s32.totalorder %v384, 0
        %v423 = vsub.s32 0, %v384
        %v424 = vsel %vm422, %v423, %v384
        %v425 = vshrl.u32 %v424, 4
        %v426 = vand.u32 %v424, 15
        %v427 = vsub.s32 0, %v426
        %v428 = vsel %vm422, %v427, %v426
        %vm429 = vcmp.lt.s32.totalorder %v385, 0
        %v430 = vsub.s32 0, %v385
        %v431 = vsel %vm429, %v430, %v385
        %v432 = vshrl.u32 %v431, 4
        %v433 = vand.u32 %v431, 15
        %v434 = vsub.s32 0, %v433
        %v435 = vsel %vm429, %v434, %v433
        %vm436 = vcmp.lt.s32.totalorder %v386, 0
        %v437 = vsub.s32 0, %v386
        %v438 = vsel %vm436, %v437, %v386
        %v439 = vshrl.u32 %v438, 4
        %v440 = vand.u32 %v438, 15
        %v441 = vsub.s32 0, %v440
        %v442 = vsel %vm436, %v441, %v440
        %vm443 = vcmp.lt.s32.totalorder %v387, 0
        %v444 = vsub.s32 0, %v387
        %v445 = vsel %vm443, %v444, %v387
        %v446 = vshrl.u32 %v445, 4
        %v447 = vand.u32 %v445, 15
        %v448 = vsub.s32 0, %v447
        %v449 = vsel %vm443, %v448, %v447
        %vm450 = vcmp.lt.s32.totalorder %v388, 0
        %v451 = vsub.s32 0, %v388
        %v452 = vsel %vm450, %v451, %v388
        %v453 = vshrl.u32 %v452, 4
        %v454 = vand.u32 %v452, 15
        %v455 = vsub.s32 0, %v454
        %v456 = vsel %vm450, %v455, %v454
        %vm457 = vcmp.lt.s32.totalorder %v389, 0
        %v458 = vsub.s32 0, %v389
        %v459 = vsel %vm457, %v458, %v389
        %v460 = vshrl.u32 %v459, 4
        %v461 = vand.u32 %v459, 15
        %v462 = vsub.s32 0, %v461
        %v463 = vsel %vm457, %v462, %v461
        %vm464 = vcmp.lt.s32.totalorder %v390, 0
        %v465 = vsub.s32 0, %v390
        %v466 = vsel %vm464, %v465, %v390
        %v467 = vshrl.u32 %v466, 4
        %v468 = vand.u32 %v466, 15
        %v469 = vsub.s32 0, %v468
        %v470 = vsel %vm464, %v469, %v468
        %vm471 = vcmp.lt.s32.totalorder %v391, 0
        %v472 = vsub.s32 0, %v391
        %v473 = vsel %vm471, %v472, %v391
        %v474 = vshrl.u32 %v473, 4
        %v475 = vand.u32 %v473, 15
        %v476 = vsub.s32 0, %v475
        %v477 = vsel %vm471, %v476, %v475
        %vm478 = vcmp.lt.s32.totalorder %v392, 0
        %v479 = vsub.s32 0, %v392
        %v480 = vsel %vm478, %v479, %v392
        %v481 = vshrl.u32 %v480, 4
        %v482 = vand.u32 %v480, 15
        %v483 = vsub.s32 0, %v482
        %v484 = vsel %vm478, %v483, %v482
        %vm485 = vcmp.lt.s32.totalorder %v393, 0
        %v486 = vsub.s32 0, %v393
        %v487 = vsel %vm485, %v486, %v393
        %v488 = vshrl.u32 %v487, 4
        %v489 = vand.u32 %v487, 15
        %v490 = vsub.s32 0, %v489
        %v491 = vsel %vm485, %v490, %v489
        %vm492 = vcmp.lt.s32.totalorder %v394, 0
        %v493 = vsub.s32 0, %v394
        %v494 = vsel %vm492, %v493, %v394
        %v495 = vshrl.u32 %v494, 4
        %v496 = vand.u32 %v494, 15
        %v497 = vsub.s32 0, %v496
        %v498 = vsel %vm492, %v497, %v496
        %vm499 = vcmp.lt.s32.totalorder %v395, 0
        %v500 = vsub.s32 0, %v395
        %v501 = vsel %vm499, %v500, %v395
        %v502 = vshrl.u32 %v501, 4
        %v503 = vand.u32 %v501, 15
        %v504 = vsub.s32 0, %v503
        %v505 = vsel %vm499, %v504, %v503
        %vm506 = vcmp.lt.s32.totalorder %v396, 0
        %v507 = vsub.s32 0, %v396
        %v508 = vsel %vm506, %v507, %v396
        %v509 = vshrl.u32 %v508, 4
        %v510 = vand.u32 %v508, 15
        %v511 = vsub.s32 0, %v510
        %v512 = vsel %vm506, %v511, %v510
        %vm513 = vcmp.lt.s32.totalorder %v397, 0
        %v514 = vsub.s32 0, %v397
        %v515 = vsel %vm513, %v514, %v397
        %v516 = vshrl.u32 %v515, 4
        %v517 = vand.u32 %v515, 15
        %v518 = vsub.s32 0, %v517
        %v519 = vsel %vm513, %v518, %v517
        %vm520 = vcmp.lt.s32.totalorder %v398, 0
        %v521 = vsub.s32 0, %v398
        %v522 = vsel %vm520, %v521, %v398
        %v523 = vshrl.u32 %v522, 4
        %v524 = vand.u32 %v522, 15
        %v525 = vsub.s32 0, %v524
        %v526 = vsel %vm520, %v525, %v524
        %vm527 = vcmp.lt.s32.totalorder %v399, 0
        %v528 = vsub.s32 0, %v399
        %v529 = vsel %vm527, %v528, %v399
        %v530 = vshrl.u32 %v529, 4
        %v531 = vand.u32 %v529, 15
        %v532 = vsub.s32 0, %v531
        %v533 = vsel %vm527, %v532, %v531
        %vm534 = vcmp.lt.s32.totalorder %v400, 0
        %v535 = vsub.s32 0, %v400
        %v536 = vsel %vm534, %v535, %v400
        %v537 = vshrl.u32 %v536, 4
        %v538 = vand.u32 %v536, 15
        %v539 = vsub.s32 0, %v538
        %v540 = vsel %vm534, %v539, %v538
        %vm541 = vcmp.lt.s32.totalorder %v401, 0
        %v542 = vsub.s32 0, %v401
        %v543 = vsel %vm541, %v542, %v401
        %v544 = vshrl.u32 %v543, 4
        %v545 = vand.u32 %v543, 15
        %v546 = vsub.s32 0, %v545
        %v547 = vsel %vm541, %v546, %v545
        %vm548 = vcmp.lt.s32.totalorder %v402, 0
        %v549 = vsub.s32 0, %v402
        %v550 = vsel %vm548, %v549, %v402
        %v551 = vshrl.u32 %v550, 4
        %v552 = vand.u32 %v550, 15
        %v553 = vsub.s32 0, %v552
        %v554 = vsel %vm548, %v553, %v552
        %vm555 = vcmp.lt.s32.totalorder %v403, 0
        %v556 = vsub.s32 0, %v403
        %v557 = vsel %vm555, %v556, %v403
        %v558 = vshrl.u32 %v557, 4
        %v559 = vand.u32 %v557, 15
        %v560 = vsub.s32 0, %v559
        %v561 = vsel %vm555, %v560, %v559
        %vm562 = vcmp.lt.s32.totalorder %v404, 0
        %v563 = vsub.s32 0, %v404
        %v564 = vsel %vm562, %v563, %v404
        %v565 = vshrl.u32 %v564, 4
        %v566 = vand.u32 %v564, 15
        %v567 = vsub.s32 0, %v566
        %v568 = vsel %vm562, %v567, %v566
        %vm569 = vcmp.lt.s32.totalorder %v405, 0
        %v570 = vsub.s32 0, %v405
        %v571 = vsel %vm569, %v570, %v405
        %v572 = vshrl.u32 %v571, 4
        %v573 = vand.u32 %v571, 15
        %v574 = vsub.s32 0, %v573
        %v575 = vsel %vm569, %v574, %v573
        %vm576 = vcmp.lt.s32.totalorder %v406, 0
        %v577 = vsub.s32 0, %v406
        %v578 = vsel %vm576, %v577, %v406
        %v579 = vshrl.u32 %v578, 4
        %v580 = vand.u32 %v578, 15
        %v581 = vsub.s32 0, %v580
        %v582 = vsel %vm576, %v581, %v580
        %vm583 = vcmp.lt.s32.totalorder %v407, 0
        %v584 = vsub.s32 0, %v407
        %v585 = vsel %vm583, %v584, %v407
        %v586 = vshrl.u32 %v585, 4
        %v587 = vand.u32 %v585, 15
        %v588 = vsub.s32 0, %v587
        %v589 = vsel %vm583, %v588, %v587
        %vm590 = vcmp.lt.s32.totalorder %v408, 0
        %v591 = vsub.s32 0, %v408
        %v592 = vsel %vm590, %v591, %v408
        %v593 = vshrl.u32 %v592, 4
        %v594 = vand.u32 %v592, 15
        %v595 = vsub.s32 0, %v594
        %v596 = vsel %vm590, %v595, %v594
        %vm597 = vcmp.lt.s32.totalorder %v409, 0
        %v598 = vsub.s32 0, %v409
        %v599 = vsel %vm597, %v598, %v409
        %v600 = vshrl.u32 %v599, 4
        %v601 = vand.u32 %v599, 15
        %v602 = vsub.s32 0, %v601
        %v603 = vsel %vm597, %v602, %v601
        %vm604 = vcmp.lt.s32.totalorder %v410, 0
        %v605 = vsub.s32 0, %v410
        %v606 = vsel %vm604, %v605, %v410
        %v607 = vshrl.u32 %v606, 4
        %v608 = vand.u32 %v606, 15
        %v609 = vsub.s32 0, %v608
        %v610 = vsel %vm604, %v609, %v608
        %vm611 = vcmp.lt.s32.totalorder %v411, 0
        %v612 = vsub.s32 0, %v411
        %v613 = vsel %vm611, %v612, %v411
        %v614 = vshrl.u32 %v613, 4
        %v615 = vand.u32 %v613, 15
        %v616 = vsub.s32 0, %v615
        %v617 = vsel %vm611, %v616, %v615
        %vm618 = vcmp.lt.s32.totalorder %v412, 0
        %v619 = vsub.s32 0, %v412
        %v620 = vsel %vm618, %v619, %v412
        %v621 = vshrl.u32 %v620, 4
        %v622 = vand.u32 %v620, 15
        %v623 = vsub.s32 0, %v622
        %v624 = vsel %vm618, %v623, %v622
        %vm625 = vcmp.lt.s32.totalorder %v413, 0
        %v626 = vsub.s32 0, %v413
        %v627 = vsel %vm625, %v626, %v413
        %v628 = vshrl.u32 %v627, 4
        %v629 = vand.u32 %v627, 15
        %v630 = vsub.s32 0, %v629
        %v631 = vsel %vm625, %v630, %v629
        %vm632 = vcmp.lt.s32.totalorder %v414, 0
        %v633 = vsub.s32 0, %v414
        %v634 = vsel %vm632, %v633, %v414
        %v635 = vshrl.u32 %v634, 4
        %v636 = vand.u32 %v634, 15
        %v637 = vsub.s32 0, %v636
        %v638 = vsel %vm632, %v637, %v636
        %vm639 = vcmp.ne.s32.totalorder %v421, 0
        %vm640 = vcmp.ne.s32.totalorder %v428, 0
        %vm641 = vcmp.ne.s32.totalorder %v435, 0
        %vm642 = vcmp.ne.s32.totalorder %v442, 0
        %vm643 = vcmp.ne.s32.totalorder %v449, 0
        %vm644 = vcmp.ne.s32.totalorder %v456, 0
        %vm645 = vcmp.ne.s32.totalorder %v463, 0
        %vm646 = vcmp.ne.s32.totalorder %v470, 0
        %vm647 = vcmp.ne.s32.totalorder %v477, 0
        %vm648 = vcmp.ne.s32.totalorder %v484, 0
        %vm649 = vcmp.ne.s32.totalorder %v491, 0
        %vm650 = vcmp.ne.s32.totalorder %v498, 0
        %vm651 = vcmp.ne.s32.totalorder %v505, 0
        %vm652 = vcmp.ne.s32.totalorder %v512, 0
        %vm653 = vcmp.ne.s32.totalorder %v519, 0
        %vm654 = vcmp.ne.s32.totalorder %v526, 0
        %vm655 = vcmp.ne.s32.totalorder %v533, 0
        %vm656 = vcmp.ne.s32.totalorder %v540, 0
        %vm657 = vcmp.ne.s32.totalorder %v547, 0
        %vm658 = vcmp.ne.s32.totalorder %v554, 0
        %vm659 = vcmp.ne.s32.totalorder %v561, 0
        %vm660 = vcmp.ne.s32.totalorder %v568, 0
        %vm661 = vcmp.ne.s32.totalorder %v575, 0
        %vm662 = vcmp.ne.s32.totalorder %v582, 0
        %vm663 = vcmp.ne.s32.totalorder %v589, 0
        %vm664 = vcmp.ne.s32.totalorder %v596, 0
        %vm665 = vcmp.ne.s32.totalorder %v603, 0
        %vm666 = vcmp.ne.s32.totalorder %v610, 0
        %vm667 = vcmp.ne.s32.totalorder %v617, 0
        %vm668 = vcmp.ne.s32.totalorder %v624, 0
        %vm669 = vcmp.ne.s32.totalorder %v631, 0
        %vm670 = vcmp.ne.s32.totalorder %v638, 0
        %vm671 = vcmp.lt.s32.totalorder %v421, 0
        %vm672 = vcmp.lt.s32.totalorder %v428, 0
        %vm673 = vcmp.lt.s32.totalorder %v435, 0
        %vm674 = vcmp.lt.s32.totalorder %v442, 0
        %vm675 = vcmp.lt.s32.totalorder %v449, 0
        %vm676 = vcmp.lt.s32.totalorder %v456, 0
        %vm677 = vcmp.lt.s32.totalorder %v463, 0
        %vm678 = vcmp.lt.s32.totalorder %v470, 0
        %vm679 = vcmp.lt.s32.totalorder %v477, 0
        %vm680 = vcmp.lt.s32.totalorder %v484, 0
        %vm681 = vcmp.lt.s32.totalorder %v491, 0
        %vm682 = vcmp.lt.s32.totalorder %v498, 0
        %vm683 = vcmp.lt.s32.totalorder %v505, 0
        %vm684 = vcmp.lt.s32.totalorder %v512, 0
        %vm685 = vcmp.lt.s32.totalorder %v519, 0
        %vm686 = vcmp.lt.s32.totalorder %v526, 0
        %vm687 = vcmp.lt.s32.totalorder %v533, 0
        %vm688 = vcmp.lt.s32.totalorder %v540, 0
        %vm689 = vcmp.lt.s32.totalorder %v547, 0
        %vm690 = vcmp.lt.s32.totalorder %v554, 0
        %vm691 = vcmp.lt.s32.totalorder %v561, 0
        %vm692 = vcmp.lt.s32.totalorder %v568, 0
        %vm693 = vcmp.lt.s32.totalorder %v575, 0
        %vm694 = vcmp.lt.s32.totalorder %v582, 0
        %vm695 = vcmp.lt.s32.totalorder %v589, 0
        %vm696 = vcmp.lt.s32.totalorder %v596, 0
        %vm697 = vcmp.lt.s32.totalorder %v603, 0
        %vm698 = vcmp.lt.s32.totalorder %v610, 0
        %vm699 = vcmp.lt.s32.totalorder %v617, 0
        %vm700 = vcmp.lt.s32.totalorder %v624, 0
        %vm701 = vcmp.lt.s32.totalorder %v631, 0
        %vm702 = vcmp.lt.s32.totalorder %v638, 0
        %vm703 = vmand %vm671, %vm639
        %vm704 = vmand %vm672, %vm640
        %vm705 = vmand %vm673, %vm641
        %vm706 = vmand %vm674, %vm642
        %vm707 = vmand %vm675, %vm643
        %vm708 = vmand %vm676, %vm644
        %vm709 = vmand %vm677, %vm645
        %vm710 = vmand %vm678, %vm646
        %vm711 = vmand %vm679, %vm647
        %vm712 = vmand %vm680, %vm648
        %vm713 = vmand %vm681, %vm649
        %vm714 = vmand %vm682, %vm650
        %vm715 = vmand %vm683, %vm651
        %vm716 = vmand %vm684, %vm652
        %vm717 = vmand %vm685, %vm653
        %vm718 = vmand %vm686, %vm654
        %vm719 = vmand %vm687, %vm655
        %vm720 = vmand %vm688, %vm656
        %vm721 = vmand %vm689, %vm657
        %vm722 = vmand %vm690, %vm658
        %vm723 = vmand %vm691, %vm659
        %vm724 = vmand %vm692, %vm660
        %vm725 = vmand %vm693, %vm661
        %vm726 = vmand %vm694, %vm662
        %vm727 = vmand %vm695, %vm663
        %vm728 = vmand %vm696, %vm664
        %vm729 = vmand %vm697, %vm665
        %vm730 = vmand %vm698, %vm666
        %vm731 = vmand %vm699, %vm667
        %vm732 = vmand %vm700, %vm668
        %vm733 = vmand %vm701, %vm669
        %vm734 = vmand %vm702, %vm670
        %v735 = vadd.s32 %v421, 16
        %v736 = vadd.s32 %v428, 16
        %v737 = vadd.s32 %v435, 16
        %v738 = vadd.s32 %v442, 16
        %v739 = vadd.s32 %v449, 16
        %v740 = vadd.s32 %v456, 16
        %v741 = vadd.s32 %v463, 16
        %v742 = vadd.s32 %v470, 16
        %v743 = vadd.s32 %v477, 16
        %v744 = vadd.s32 %v484, 16
        %v745 = vadd.s32 %v491, 16
        %v746 = vadd.s32 %v498, 16
        %v747 = vadd.s32 %v505, 16
        %v748 = vadd.s32 %v512, 16
        %v749 = vadd.s32 %v519, 16
        %v750 = vadd.s32 %v526, 16
        %v751 = vadd.s32 %v533, 16
        %v752 = vadd.s32 %v540, 16
        %v753 = vadd.s32 %v547, 16
        %v754 = vadd.s32 %v554, 16
        %v755 = vadd.s32 %v561, 16
        %v756 = vadd.s32 %v568, 16
        %v757 = vadd.s32 %v575, 16
        %v758 = vadd.s32 %v582, 16
        %v759 = vadd.s32 %v589, 16
        %v760 = vadd.s32 %v596, 16
        %v761 = vadd.s32 %v603, 16
        %v762 = vadd.s32 %v610, 16
        %v763 = vadd.s32 %v617, 16
        %v764 = vadd.s32 %v624, 16
        %v765 = vadd.s32 %v631, 16
        %v766 = vadd.s32 %v638, 16
        %v767 = vsel %vm703, %v735, %v421
        %v768 = vsel %vm704, %v736, %v428
        %v769 = vsel %vm705, %v737, %v435
        %v770 = vsel %vm706, %v738, %v442
        %v771 = vsel %vm707, %v739, %v449
        %v772 = vsel %vm708, %v740, %v456
        %v773 = vsel %vm709, %v741, %v463
        %v774 = vsel %vm710, %v742, %v470
        %v775 = vsel %vm711, %v743, %v477
        %v776 = vsel %vm712, %v744, %v484
        %v777 = vsel %vm713, %v745, %v491
        %v778 = vsel %vm714, %v746, %v498
        %v779 = vsel %vm715, %v747, %v505
        %v780 = vsel %vm716, %v748, %v512
        %v781 = vsel %vm717, %v749, %v519
        %v782 = vsel %vm718, %v750, %v526
        %v783 = vsel %vm719, %v751, %v533
        %v784 = vsel %vm720, %v752, %v540
        %v785 = vsel %vm721, %v753, %v547
        %v786 = vsel %vm722, %v754, %v554
        %v787 = vsel %vm723, %v755, %v561
        %v788 = vsel %vm724, %v756, %v568
        %v789 = vsel %vm725, %v757, %v575
        %v790 = vsel %vm726, %v758, %v582
        %v791 = vsel %vm727, %v759, %v589
        %v792 = vsel %vm728, %v760, %v596
        %v793 = vsel %vm729, %v761, %v603
        %v794 = vsel %vm730, %v762, %v610
        %v795 = vsel %vm731, %v763, %v617
        %v796 = vsel %vm732, %v764, %v624
        %v797 = vsel %vm733, %v765, %v631
        %v798 = vsel %vm734, %v766, %v638
        %vm799 = vcmp.eq.s32.totalorder %v767, 15
        %vm800 = vcmp.eq.s32.totalorder %v768, 15
        %vm801 = vcmp.eq.s32.totalorder %v769, 15
        %vm802 = vcmp.eq.s32.totalorder %v770, 15
        %vm803 = vcmp.eq.s32.totalorder %v771, 15
        %vm804 = vcmp.eq.s32.totalorder %v772, 15
        %vm805 = vcmp.eq.s32.totalorder %v773, 15
        %vm806 = vcmp.eq.s32.totalorder %v774, 15
        %vm807 = vcmp.eq.s32.totalorder %v775, 15
        %vm808 = vcmp.eq.s32.totalorder %v776, 15
        %vm809 = vcmp.eq.s32.totalorder %v777, 15
        %vm810 = vcmp.eq.s32.totalorder %v778, 15
        %vm811 = vcmp.eq.s32.totalorder %v779, 15
        %vm812 = vcmp.eq.s32.totalorder %v780, 15
        %vm813 = vcmp.eq.s32.totalorder %v781, 15
        %vm814 = vcmp.eq.s32.totalorder %v782, 15
        %vm815 = vcmp.eq.s32.totalorder %v783, 15
        %vm816 = vcmp.eq.s32.totalorder %v784, 15
        %vm817 = vcmp.eq.s32.totalorder %v785, 15
        %vm818 = vcmp.eq.s32.totalorder %v786, 15
        %vm819 = vcmp.eq.s32.totalorder %v787, 15
        %vm820 = vcmp.eq.s32.totalorder %v788, 15
        %vm821 = vcmp.eq.s32.totalorder %v789, 15
        %vm822 = vcmp.eq.s32.totalorder %v790, 15
        %vm823 = vcmp.eq.s32.totalorder %v791, 15
        %vm824 = vcmp.eq.s32.totalorder %v792, 15
        %vm825 = vcmp.eq.s32.totalorder %v793, 15
        %vm826 = vcmp.eq.s32.totalorder %v794, 15
        %vm827 = vcmp.eq.s32.totalorder %v795, 15
        %vm828 = vcmp.eq.s32.totalorder %v796, 15
        %vm829 = vcmp.eq.s32.totalorder %v797, 15
        %vm830 = vcmp.eq.s32.totalorder %v798, 15
        %v831 = vsel %vm799, 1, 0
        %v832 = vsel %vm800, 1, 0
        %v833 = vsel %vm801, 1, 0
        %v834 = vsel %vm802, 1, 0
        %v835 = vsel %vm803, 1, 0
        %v836 = vsel %vm804, 1, 0
        %v837 = vsel %vm805, 1, 0
        %v838 = vsel %vm806, 1, 0
        %v839 = vsel %vm807, 1, 0
        %v840 = vsel %vm808, 1, 0
        %v841 = vsel %vm809, 1, 0
        %v842 = vsel %vm810, 1, 0
        %v843 = vsel %vm811, 1, 0
        %v844 = vsel %vm812, 1, 0
        %v845 = vsel %vm813, 1, 0
        %v846 = vsel %vm814, 1, 0
        %v847 = vsel %vm815, 1, 0
        %v848 = vsel %vm816, 1, 0
        %v849 = vsel %vm817, 1, 0
        %v850 = vsel %vm818, 1, 0
        %v851 = vsel %vm819, 1, 0
        %v852 = vsel %vm820, 1, 0
        %v853 = vsel %vm821, 1, 0
        %v854 = vsel %vm822, 1, 0
        %v855 = vsel %vm823, 1, 0
        %v856 = vsel %vm824, 1, 0
        %v857 = vsel %vm825, 1, 0
        %v858 = vsel %vm826, 1, 0
        %v859 = vsel %vm827, 1, 0
        %v860 = vsel %vm828, 1, 0
        %v861 = vsel %vm829, 1, 0
        %v862 = vsel %vm830, 1, 0
        %vm863 = vcmp.eq.s32.totalorder %v831, 1
        %vm864 = vcmp.eq.s32.totalorder %v832, 1
        %vm865 = vcmp.eq.s32.totalorder %v833, 1
        %vm866 = vcmp.eq.s32.totalorder %v834, 1
        %vm867 = vcmp.eq.s32.totalorder %v835, 1
        %vm868 = vcmp.eq.s32.totalorder %v836, 1
        %vm869 = vcmp.eq.s32.totalorder %v837, 1
        %vm870 = vcmp.eq.s32.totalorder %v838, 1
        %vm871 = vcmp.eq.s32.totalorder %v839, 1
        %vm872 = vcmp.eq.s32.totalorder %v840, 1
        %vm873 = vcmp.eq.s32.totalorder %v841, 1
        %vm874 = vcmp.eq.s32.totalorder %v842, 1
        %vm875 = vcmp.eq.s32.totalorder %v843, 1
        %vm876 = vcmp.eq.s32.totalorder %v844, 1
        %vm877 = vcmp.eq.s32.totalorder %v845, 1
        %vm878 = vcmp.eq.s32.totalorder %v846, 1
        %vm879 = vcmp.eq.s32.totalorder %v847, 1
        %vm880 = vcmp.eq.s32.totalorder %v848, 1
        %vm881 = vcmp.eq.s32.totalorder %v849, 1
        %vm882 = vcmp.eq.s32.totalorder %v850, 1
        %vm883 = vcmp.eq.s32.totalorder %v851, 1
        %vm884 = vcmp.eq.s32.totalorder %v852, 1
        %vm885 = vcmp.eq.s32.totalorder %v853, 1
        %vm886 = vcmp.eq.s32.totalorder %v854, 1
        %vm887 = vcmp.eq.s32.totalorder %v855, 1
        %vm888 = vcmp.eq.s32.totalorder %v856, 1
        %vm889 = vcmp.eq.s32.totalorder %v857, 1
        %vm890 = vcmp.eq.s32.totalorder %v858, 1
        %vm891 = vcmp.eq.s32.totalorder %v859, 1
        %vm892 = vcmp.eq.s32.totalorder %v860, 1
        %vm893 = vcmp.eq.s32.totalorder %v861, 1
        %vm894 = vcmp.eq.s32.totalorder %v862, 1
        %v895 = vsel %vm863, 0.0, %v350
        %v896 = vsel %vm864, 0.0, %v351
        %v897 = vsel %vm865, 0.0, %v352
        %v898 = vsel %vm866, 0.0, %v353
        %v899 = vsel %vm867, 0.0, %v354
        %v900 = vsel %vm868, 0.0, %v355
        %v901 = vsel %vm869, 0.0, %v356
        %v902 = vsel %vm870, 0.0, %v357
        %v903 = vsel %vm871, 0.0, %v358
        %v904 = vsel %vm872, 0.0, %v359
        %v905 = vsel %vm873, 0.0, %v360
        %v906 = vsel %vm874, 0.0, %v361
        %v907 = vsel %vm875, 0.0, %v362
        %v908 = vsel %vm876, 0.0, %v363
        %v909 = vsel %vm877, 0.0, %v364
        %v910 = vsel %vm878, 0.0, %v365
        %v911 = vsel %vm879, 0.0, %v366
        %v912 = vsel %vm880, 0.0, %v367
        %v913 = vsel %vm881, 0.0, %v368
        %v914 = vsel %vm882, 0.0, %v369
        %v915 = vsel %vm883, 0.0, %v370
        %v916 = vsel %vm884, 0.0, %v371
        %v917 = vsel %vm885, 0.0, %v372
        %v918 = vsel %vm886, 0.0, %v373
        %v919 = vsel %vm887, 0.0, %v374
        %v920 = vsel %vm888, 0.0, %v375
        %v921 = vsel %vm889, 0.0, %v376
        %v922 = vsel %vm890, 0.0, %v377
        %v923 = vsel %vm891, 0.0, %v378
        %v924 = vsel %vm892, 0.0, %v379
        %v925 = vsel %vm893, 0.0, %v380
        %v926 = vsel %vm894, 0.0, %v381
        %vm927 = vcmp.eq.s32.totalorder %v767, 0
        %vm928 = vcmp.eq.s32.totalorder %v768, 0
        %vm929 = vcmp.eq.s32.totalorder %v769, 0
        %vm930 = vcmp.eq.s32.totalorder %v770, 0
        %vm931 = vcmp.eq.s32.totalorder %v771, 0
        %vm932 = vcmp.eq.s32.totalorder %v772, 0
        %vm933 = vcmp.eq.s32.totalorder %v773, 0
        %vm934 = vcmp.eq.s32.totalorder %v774, 0
        %vm935 = vcmp.eq.s32.totalorder %v775, 0
        %vm936 = vcmp.eq.s32.totalorder %v776, 0
        %vm937 = vcmp.eq.s32.totalorder %v777, 0
        %vm938 = vcmp.eq.s32.totalorder %v778, 0
        %vm939 = vcmp.eq.s32.totalorder %v779, 0
        %vm940 = vcmp.eq.s32.totalorder %v780, 0
        %vm941 = vcmp.eq.s32.totalorder %v781, 0
        %vm942 = vcmp.eq.s32.totalorder %v782, 0
        %vm943 = vcmp.eq.s32.totalorder %v783, 0
        %vm944 = vcmp.eq.s32.totalorder %v784, 0
        %vm945 = vcmp.eq.s32.totalorder %v785, 0
        %vm946 = vcmp.eq.s32.totalorder %v786, 0
        %vm947 = vcmp.eq.s32.totalorder %v787, 0
        %vm948 = vcmp.eq.s32.totalorder %v788, 0
        %vm949 = vcmp.eq.s32.totalorder %v789, 0
        %vm950 = vcmp.eq.s32.totalorder %v790, 0
        %vm951 = vcmp.eq.s32.totalorder %v791, 0
        %vm952 = vcmp.eq.s32.totalorder %v792, 0
        %vm953 = vcmp.eq.s32.totalorder %v793, 0
        %vm954 = vcmp.eq.s32.totalorder %v794, 0
        %vm955 = vcmp.eq.s32.totalorder %v795, 0
        %vm956 = vcmp.eq.s32.totalorder %v796, 0
        %vm957 = vcmp.eq.s32.totalorder %v797, 0
        %vm958 = vcmp.eq.s32.totalorder %v798, 0
        %v959 = vsel %vm927, 1, 0
        %v960 = vsel %vm928, 1, 0
        %v961 = vsel %vm929, 1, 0
        %v962 = vsel %vm930, 1, 0
        %v963 = vsel %vm931, 1, 0
        %v964 = vsel %vm932, 1, 0
        %v965 = vsel %vm933, 1, 0
        %v966 = vsel %vm934, 1, 0
        %v967 = vsel %vm935, 1, 0
        %v968 = vsel %vm936, 1, 0
        %v969 = vsel %vm937, 1, 0
        %v970 = vsel %vm938, 1, 0
        %v971 = vsel %vm939, 1, 0
        %v972 = vsel %vm940, 1, 0
        %v973 = vsel %vm941, 1, 0
        %v974 = vsel %vm942, 1, 0
        %v975 = vsel %vm943, 1, 0
        %v976 = vsel %vm944, 1, 0
        %v977 = vsel %vm945, 1, 0
        %v978 = vsel %vm946, 1, 0
        %v979 = vsel %vm947, 1, 0
        %v980 = vsel %vm948, 1, 0
        %v981 = vsel %vm949, 1, 0
        %v982 = vsel %vm950, 1, 0
        %v983 = vsel %vm951, 1, 0
        %v984 = vsel %vm952, 1, 0
        %v985 = vsel %vm953, 1, 0
        %v986 = vsel %vm954, 1, 0
        %v987 = vsel %vm955, 1, 0
        %v988 = vsel %vm956, 1, 0
        %v989 = vsel %vm957, 1, 0
        %v990 = vsel %vm958, 1, 0
        %vm991 = vcmp.eq.s32.totalorder %v959, 1
        %vm992 = vcmp.eq.s32.totalorder %v960, 1
        %vm993 = vcmp.eq.s32.totalorder %v961, 1
        %vm994 = vcmp.eq.s32.totalorder %v962, 1
        %vm995 = vcmp.eq.s32.totalorder %v963, 1
        %vm996 = vcmp.eq.s32.totalorder %v964, 1
        %vm997 = vcmp.eq.s32.totalorder %v965, 1
        %vm998 = vcmp.eq.s32.totalorder %v966, 1
        %vm999 = vcmp.eq.s32.totalorder %v967, 1
        %vm1000 = vcmp.eq.s32.totalorder %v968, 1
        %vm1001 = vcmp.eq.s32.totalorder %v969, 1
        %vm1002 = vcmp.eq.s32.totalorder %v970, 1
        %vm1003 = vcmp.eq.s32.totalorder %v971, 1
        %vm1004 = vcmp.eq.s32.totalorder %v972, 1
        %vm1005 = vcmp.eq.s32.totalorder %v973, 1
        %vm1006 = vcmp.eq.s32.totalorder %v974, 1
        %vm1007 = vcmp.eq.s32.totalorder %v975, 1
        %vm1008 = vcmp.eq.s32.totalorder %v976, 1
        %vm1009 = vcmp.eq.s32.totalorder %v977, 1
        %vm1010 = vcmp.eq.s32.totalorder %v978, 1
        %vm1011 = vcmp.eq.s32.totalorder %v979, 1
        %vm1012 = vcmp.eq.s32.totalorder %v980, 1
        %vm1013 = vcmp.eq.s32.totalorder %v981, 1
        %vm1014 = vcmp.eq.s32.totalorder %v982, 1
        %vm1015 = vcmp.eq.s32.totalorder %v983, 1
        %vm1016 = vcmp.eq.s32.totalorder %v984, 1
        %vm1017 = vcmp.eq.s32.totalorder %v985, 1
        %vm1018 = vcmp.eq.s32.totalorder %v986, 1
        %vm1019 = vcmp.eq.s32.totalorder %v987, 1
        %vm1020 = vcmp.eq.s32.totalorder %v988, 1
        %vm1021 = vcmp.eq.s32.totalorder %v989, 1
        %vm1022 = vcmp.eq.s32.totalorder %v990, 1
        %v1023 = vsel %vm991, 0.0, %v350
        %v1024 = vsel %vm992, 0.0, %v351
        %v1025 = vsel %vm993, 0.0, %v352
        %v1026 = vsel %vm994, 0.0, %v353
        %v1027 = vsel %vm995, 0.0, %v354
        %v1028 = vsel %vm996, 0.0, %v355
        %v1029 = vsel %vm997, 0.0, %v356
        %v1030 = vsel %vm998, 0.0, %v357
        %v1031 = vsel %vm999, 0.0, %v358
        %v1032 = vsel %vm1000, 0.0, %v359
        %v1033 = vsel %vm1001, 0.0, %v360
        %v1034 = vsel %vm1002, 0.0, %v361
        %v1035 = vsel %vm1003, 0.0, %v362
        %v1036 = vsel %vm1004, 0.0, %v363
        %v1037 = vsel %vm1005, 0.0, %v364
        %v1038 = vsel %vm1006, 0.0, %v365
        %v1039 = vsel %vm1007, 0.0, %v366
        %v1040 = vsel %vm1008, 0.0, %v367
        %v1041 = vsel %vm1009, 0.0, %v368
        %v1042 = vsel %vm1010, 0.0, %v369
        %v1043 = vsel %vm1011, 0.0, %v370
        %v1044 = vsel %vm1012, 0.0, %v371
        %v1045 = vsel %vm1013, 0.0, %v372
        %v1046 = vsel %vm1014, 0.0, %v373
        %v1047 = vsel %vm1015, 0.0, %v374
        %v1048 = vsel %vm1016, 0.0, %v375
        %v1049 = vsel %vm1017, 0.0, %v376
        %v1050 = vsel %vm1018, 0.0, %v377
        %v1051 = vsel %vm1019, 0.0, %v378
        %v1052 = vsel %vm1020, 0.0, %v379
        %v1053 = vsel %vm1021, 0.0, %v380
        %v1054 = vsel %vm1022, 0.0, %v381
        %vm1087 = vcmask 1040384
        %v1088 = vrot.slane %v895, 7
        %v1089 = vrot.slane %v896, 7
        %v1090 = vsel %vm1087, %v1088, %v1089
        %v1091 = vrot.slane %v897, 7
        %v1092 = vsel %vm1087, %v1089, %v1091
        %v1093 = vrot.slane %v898, 7
        %v1094 = vsel %vm1087, %v1091, %v1093
        %v1095 = vrot.slane %v899, 7
        %v1096 = vsel %vm1087, %v1093, %v1095
        %v1097 = vrot.slane %v900, 7
        %v1098 = vsel %vm1087, %v1095, %v1097
        %v1099 = vrot.slane %v901, 7
        %v1100 = vsel %vm1087, %v1097, %v1099
        %v1101 = vrot.slane %v902, 7
        %v1102 = vsel %vm1087, %v1099, %v1101
        %v1103 = vrot.slane %v903, 7
        %v1104 = vsel %vm1087, %v1101, %v1103
        %v1105 = vrot.slane %v904, 7
        %v1106 = vsel %vm1087, %v1103, %v1105
        %v1107 = vrot.slane %v905, 7
        %v1108 = vsel %vm1087, %v1105, %v1107
        %v1109 = vrot.slane %v906, 7
        %v1110 = vsel %vm1087, %v1107, %v1109
        %v1111 = vrot.slane %v907, 7
        %v1112 = vsel %vm1087, %v1109, %v1111
        %v1113 = vrot.slane %v908, 7
        %v1114 = vsel %vm1087, %v1111, %v1113
        %v1115 = vrot.slane %v909, 7
        %v1116 = vsel %vm1087, %v1113, %v1115
        %v1117 = vrot.slane %v910, 7
        %v1118 = vsel %vm1087, %v1115, %v1117
        %v1119 = vrot.slane %v911, 7
        %v1120 = vsel %vm1087, %v1117, %v1119
        %v1121 = vrot.slane %v912, 7
        %v1122 = vsel %vm1087, %v1119, %v1121
        %v1123 = vrot.slane %v913, 7
        %v1124 = vsel %vm1087, %v1121, %v1123
        %v1125 = vrot.slane %v914, 7
        %v1126 = vsel %vm1087, %v1123, %v1125
        %v1127 = vrot.slane %v915, 7
        %v1128 = vsel %vm1087, %v1125, %v1127
        %v1129 = vrot.slane %v916, 7
        %v1130 = vsel %vm1087, %v1127, %v1129
        %v1131 = vrot.slane %v917, 7
        %v1132 = vsel %vm1087, %v1129, %v1131
        %v1133 = vrot.slane %v918, 7
        %v1134 = vsel %vm1087, %v1131, %v1133
        %v1135 = vrot.slane %v919, 7
        %v1136 = vsel %vm1087, %v1133, %v1135
        %v1137 = vrot.slane %v920, 7
        %v1138 = vsel %vm1087, %v1135, %v1137
        %v1139 = vrot.slane %v921, 7
        %v1140 = vsel %vm1087, %v1137, %v1139
        %v1141 = vrot.slane %v922, 7
        %v1142 = vsel %vm1087, %v1139, %v1141
        %v1143 = vrot.slane %v923, 7
        %v1144 = vsel %vm1087, %v1141, %v1143
        %v1145 = vrot.slane %v924, 7
        %v1146 = vsel %vm1087, %v1143, %v1145
        %v1147 = vrot.slane %v925, 7
        %v1148 = vsel %vm1087, %v1145, %v1147
        %v1149 = vrot.slane %v926, 7
        %v1150 = vsel %vm1087, %v1147, %v1149
        %v1184 = vsel %vm1087, 0.0, %v1088
        %v1185 = vsel %vm1087, %v1149, 0.0
        %vm1218 = vcmask 1046528
        %v1219 = vrot.slane %v1023, 1
        %v1220 = vrot.slane %v1024, 1
        %v1221 = vsel %vm1218, %v1219, %v1220
        %v1222 = vrot.slane %v1025, 1
        %v1223 = vsel %vm1218, %v1220, %v1222
        %v1224 = vrot.slane %v1026, 1
        %v1225 = vsel %vm1218, %v1222, %v1224
        %v1226 = vrot.slane %v1027, 1
        %v1227 = vsel %vm1218, %v1224, %v1226
        %v1228 = vrot.slane %v1028, 1
        %v1229 = vsel %vm1218, %v1226, %v1228
        %v1230 = vrot.slane %v1029, 1
        %v1231 = vsel %vm1218, %v1228, %v1230
        %v1232 = vrot.slane %v1030, 1
        %v1233 = vsel %vm1218, %v1230, %v1232
        %v1234 = vrot.slane %v1031, 1
        %v1235 = vsel %vm1218, %v1232, %v1234
        %v1236 = vrot.slane %v1032, 1
        %v1237 = vsel %vm1218, %v1234, %v1236
        %v1238 = vrot.slane %v1033, 1
        %v1239 = vsel %vm1218, %v1236, %v1238
        %v1240 = vrot.slane %v1034, 1
        %v1241 = vsel %vm1218, %v1238, %v1240
        %v1242 = vrot.slane %v1035, 1
        %v1243 = vsel %vm1218, %v1240, %v1242
        %v1244 = vrot.slane %v1036, 1
        %v1245 = vsel %vm1218, %v1242, %v1244
        %v1246 = vrot.slane %v1037, 1
        %v1247 = vsel %vm1218, %v1244, %v1246
        %v1248 = vrot.slane %v1038, 1
        %v1249 = vsel %vm1218, %v1246, %v1248
        %v1250 = vrot.slane %v1039, 1
        %v1251 = vsel %vm1218, %v1248, %v1250
        %v1252 = vrot.slane %v1040, 1
        %v1253 = vsel %vm1218, %v1250, %v1252
        %v1254 = vrot.slane %v1041, 1
        %v1255 = vsel %vm1218, %v1252, %v1254
        %v1256 = vrot.slane %v1042, 1
        %v1257 = vsel %vm1218, %v1254, %v1256
        %v1258 = vrot.slane %v1043, 1
        %v1259 = vsel %vm1218, %v1256, %v1258
        %v1260 = vrot.slane %v1044, 1
        %v1261 = vsel %vm1218, %v1258, %v1260
        %v1262 = vrot.slane %v1045, 1
        %v1263 = vsel %vm1218, %v1260, %v1262
        %v1264 = vrot.slane %v1046, 1
        %v1265 = vsel %vm1218, %v1262, %v1264
        %v1266 = vrot.slane %v1047, 1
        %v1267 = vsel %vm1218, %v1264, %v1266
        %v1268 = vrot.slane %v1048, 1
        %v1269 = vsel %vm1218, %v1266, %v1268
        %v1270 = vrot.slane %v1049, 1
        %v1271 = vsel %vm1218, %v1268, %v1270
        %v1272 = vrot.slane %v1050, 1
        %v1273 = vsel %vm1218, %v1270, %v1272
        %v1274 = vrot.slane %v1051, 1
        %v1275 = vsel %vm1218, %v1272, %v1274
        %v1276 = vrot.slane %v1052, 1
        %v1277 = vsel %vm1218, %v1274, %v1276
        %v1278 = vrot.slane %v1053, 1
        %v1279 = vsel %vm1218, %v1276, %v1278
        %v1280 = vrot.slane %v1054, 1
        %v1281 = vsel %vm1218, %v1278, %v1280
        %v1284 = vsel %vm1218, 0.0, %v1219
        %v1285 = vsel %vm1218, %v1280, 0.0
        %1319 = vrot.lane.b32.xlu0 0.0, 16
        %v1320 = vpop.permute.xlu0 %1319
        %1321 = vrot.lane.b32.xlu0 %v350, 16
        %v1322 = vpop.permute.xlu0 %1321
        %1323 = vrot.lane.b32.xlu0 %v351, 16
        %v1324 = vpop.permute.xlu0 %1323
        %1325 = vrot.lane.b32.xlu0 %v352, 16
        %v1326 = vpop.permute.xlu0 %1325
        %1327 = vrot.lane.b32.xlu0 %v353, 16
        %v1328 = vpop.permute.xlu0 %1327
        %1329 = vrot.lane.b32.xlu0 %v354, 16
        %v1330 = vpop.permute.xlu0 %1329
        %1331 = vrot.lane.b32.xlu0 %v355, 16
        %v1332 = vpop.permute.xlu0 %1331
        %1333 = vrot.lane.b32.xlu0 %v356, 16
        %v1334 = vpop.permute.xlu0 %1333
        %1335 = vrot.lane.b32.xlu0 %v357, 16
        %v1336 = vpop.permute.xlu0 %1335
        %1337 = vrot.lane.b32.xlu0 %v358, 16
        %v1338 = vpop.permute.xlu0 %1337
        %1339 = vrot.lane.b32.xlu0 %v359, 16
        %v1340 = vpop.permute.xlu0 %1339
        %1341 = vrot.lane.b32.xlu0 %v360, 16
        %v1342 = vpop.permute.xlu0 %1341
        %1343 = vrot.lane.b32.xlu0 %v361, 16
        %v1344 = vpop.permute.xlu0 %1343
        %1345 = vrot.lane.b32.xlu0 %v362, 16
        %v1346 = vpop.permute.xlu0 %1345
        %1347 = vrot.lane.b32.xlu0 %v363, 16
        %v1348 = vpop.permute.xlu0 %1347
        %1349 = vrot.lane.b32.xlu0 %v364, 16
        %v1350 = vpop.permute.xlu0 %1349
        %1351 = vrot.lane.b32.xlu0 %v365, 16
        %v1352 = vpop.permute.xlu0 %1351
        %1353 = vrot.lane.b32.xlu0 %v366, 16
        %v1354 = vpop.permute.xlu0 %1353
        %1355 = vrot.lane.b32.xlu0 %v367, 16
        %v1356 = vpop.permute.xlu0 %1355
        %1357 = vrot.lane.b32.xlu0 %v368, 16
        %v1358 = vpop.permute.xlu0 %1357
        %1359 = vrot.lane.b32.xlu0 %v369, 16
        %v1360 = vpop.permute.xlu0 %1359
        %1361 = vrot.lane.b32.xlu0 %v370, 16
        %v1362 = vpop.permute.xlu0 %1361
        %1363 = vrot.lane.b32.xlu0 %v371, 16
        %v1364 = vpop.permute.xlu0 %1363
        %1365 = vrot.lane.b32.xlu0 %v372, 16
        %v1366 = vpop.permute.xlu0 %1365
        %1367 = vrot.lane.b32.xlu0 %v373, 16
        %v1368 = vpop.permute.xlu0 %1367
        %1369 = vrot.lane.b32.xlu0 %v374, 16
        %v1370 = vpop.permute.xlu0 %1369
        %1371 = vrot.lane.b32.xlu0 %v375, 16
        %v1372 = vpop.permute.xlu0 %1371
        %1373 = vrot.lane.b32.xlu0 %v376, 16
        %v1374 = vpop.permute.xlu0 %1373
        %1375 = vrot.lane.b32.xlu0 %v377, 16
        %v1376 = vpop.permute.xlu0 %1375
        %1377 = vrot.lane.b32.xlu0 %v378, 16
        %v1378 = vpop.permute.xlu0 %1377
        %1379 = vrot.lane.b32.xlu0 %v379, 16
        %v1380 = vpop.permute.xlu0 %1379
        %1381 = vrot.lane.b32.xlu0 %v380, 16
        %v1382 = vpop.permute.xlu0 %1381
        %1383 = vrot.lane.b32.xlu0 %v381, 16
        %v1384 = vpop.permute.xlu0 %1383
        %1420 = vrot.lane.b32.xlu0 0.0, 32
        %v1421 = vpop.permute.xlu0 %1420
        %1422 = vrot.lane.b32.xlu0 %v1284, 32
        %v1423 = vpop.permute.xlu0 %1422
        %1424 = vrot.lane.b32.xlu0 %v1221, 32
        %v1425 = vpop.permute.xlu0 %1424
        %1426 = vrot.lane.b32.xlu0 %v1223, 32
        %v1427 = vpop.permute.xlu0 %1426
        %1428 = vrot.lane.b32.xlu0 %v1225, 32
        %v1429 = vpop.permute.xlu0 %1428
        %1430 = vrot.lane.b32.xlu0 %v1227, 32
        %v1431 = vpop.permute.xlu0 %1430
        %1432 = vrot.lane.b32.xlu0 %v1229, 32
        %v1433 = vpop.permute.xlu0 %1432
        %1434 = vrot.lane.b32.xlu0 %v1231, 32
        %v1435 = vpop.permute.xlu0 %1434
        %1436 = vrot.lane.b32.xlu0 %v1233, 32
        %v1437 = vpop.permute.xlu0 %1436
        %1438 = vrot.lane.b32.xlu0 %v1235, 32
        %v1439 = vpop.permute.xlu0 %1438
        %1440 = vrot.lane.b32.xlu0 %v1237, 32
        %v1441 = vpop.permute.xlu0 %1440
        %1442 = vrot.lane.b32.xlu0 %v1239, 32
        %v1443 = vpop.permute.xlu0 %1442
        %1444 = vrot.lane.b32.xlu0 %v1241, 32
        %v1445 = vpop.permute.xlu0 %1444
        %1446 = vrot.lane.b32.xlu0 %v1243, 32
        %v1447 = vpop.permute.xlu0 %1446
        %1448 = vrot.lane.b32.xlu0 %v1245, 32
        %v1449 = vpop.permute.xlu0 %1448
        %1450 = vrot.lane.b32.xlu0 %v1247, 32
        %v1451 = vpop.permute.xlu0 %1450
        %1452 = vrot.lane.b32.xlu0 %v1249, 32
        %v1453 = vpop.permute.xlu0 %1452
        %1454 = vrot.lane.b32.xlu0 %v1251, 32
        %v1455 = vpop.permute.xlu0 %1454
        %1456 = vrot.lane.b32.xlu0 %v1253, 32
        %v1457 = vpop.permute.xlu0 %1456
        %1458 = vrot.lane.b32.xlu0 %v1255, 32
        %v1459 = vpop.permute.xlu0 %1458
        %1460 = vrot.lane.b32.xlu0 %v1257, 32
        %v1461 = vpop.permute.xlu0 %1460
        %1462 = vrot.lane.b32.xlu0 %v1259, 32
        %v1463 = vpop.permute.xlu0 %1462
        %1464 = vrot.lane.b32.xlu0 %v1261, 32
        %v1465 = vpop.permute.xlu0 %1464
        %1466 = vrot.lane.b32.xlu0 %v1263, 32
        %v1467 = vpop.permute.xlu0 %1466
        %1468 = vrot.lane.b32.xlu0 %v1265, 32
        %v1469 = vpop.permute.xlu0 %1468
        %1470 = vrot.lane.b32.xlu0 %v1267, 32
        %v1471 = vpop.permute.xlu0 %1470
        %1472 = vrot.lane.b32.xlu0 %v1269, 32
        %v1473 = vpop.permute.xlu0 %1472
        %1474 = vrot.lane.b32.xlu0 %v1271, 32
        %v1475 = vpop.permute.xlu0 %1474
        %1476 = vrot.lane.b32.xlu0 %v1273, 32
        %v1477 = vpop.permute.xlu0 %1476
        %1478 = vrot.lane.b32.xlu0 %v1275, 32
        %v1479 = vpop.permute.xlu0 %1478
        %1480 = vrot.lane.b32.xlu0 %v1277, 32
        %v1481 = vpop.permute.xlu0 %1480
        %1482 = vrot.lane.b32.xlu0 %v1279, 32
        %v1483 = vpop.permute.xlu0 %1482
        %1484 = vrot.lane.b32.xlu0 %v1281, 32
        %v1485 = vpop.permute.xlu0 %1484
        %1486 = vrot.lane.b32.xlu0 %v1285, 32
        %v1487 = vpop.permute.xlu0 %1486
        %vm1522 = vcmask 130048
        %v1523 = vsel %vm1522, 0.0, %v1320
        %v1524 = vsel %vm1522, %v1184, %v1322
        %v1525 = vsel %vm1522, %v1090, %v1324
        %v1526 = vsel %vm1522, %v1092, %v1326
        %v1527 = vsel %vm1522, %v1094, %v1328
        %v1528 = vsel %vm1522, %v1096, %v1330
        %v1529 = vsel %vm1522, %v1098, %v1332
        %v1530 = vsel %vm1522, %v1100, %v1334
        %v1531 = vsel %vm1522, %v1102, %v1336
        %v1532 = vsel %vm1522, %v1104, %v1338
        %v1533 = vsel %vm1522, %v1106, %v1340
        %v1534 = vsel %vm1522, %v1108, %v1342
        %v1535 = vsel %vm1522, %v1110, %v1344
        %v1536 = vsel %vm1522, %v1112, %v1346
        %v1537 = vsel %vm1522, %v1114, %v1348
        %v1538 = vsel %vm1522, %v1116, %v1350
        %v1539 = vsel %vm1522, %v1118, %v1352
        %v1540 = vsel %vm1522, %v1120, %v1354
        %v1541 = vsel %vm1522, %v1122, %v1356
        %v1542 = vsel %vm1522, %v1124, %v1358
        %v1543 = vsel %vm1522, %v1126, %v1360
        %v1544 = vsel %vm1522, %v1128, %v1362
        %v1545 = vsel %vm1522, %v1130, %v1364
        %v1546 = vsel %vm1522, %v1132, %v1366
        %v1547 = vsel %vm1522, %v1134, %v1368
        %v1548 = vsel %vm1522, %v1136, %v1370
        %v1549 = vsel %vm1522, %v1138, %v1372
        %v1550 = vsel %vm1522, %v1140, %v1374
        %v1551 = vsel %vm1522, %v1142, %v1376
        %v1552 = vsel %vm1522, %v1144, %v1378
        %v1553 = vsel %vm1522, %v1146, %v1380
        %v1554 = vsel %vm1522, %v1148, %v1382
        %v1555 = vsel %vm1522, %v1150, %v1384
        %v1556 = vsel %vm1522, %v1185, %v1320
        %vm1557 = vcmask 261120
        %v1558 = vsel %vm1557, %v1523, %v1421
        %v1559 = vsel %vm1557, %v1523, %v1423
        %v1560 = vsel %vm1557, %v1524, %v1425
        %v1561 = vsel %vm1557, %v1525, %v1427
        %v1562 = vsel %vm1557, %v1526, %v1429
        %v1563 = vsel %vm1557, %v1527, %v1431
        %v1564 = vsel %vm1557, %v1528, %v1433
        %v1565 = vsel %vm1557, %v1529, %v1435
        %v1566 = vsel %vm1557, %v1530, %v1437
        %v1567 = vsel %vm1557, %v1531, %v1439
        %v1568 = vsel %vm1557, %v1532, %v1441
        %v1569 = vsel %vm1557, %v1533, %v1443
        %v1570 = vsel %vm1557, %v1534, %v1445
        %v1571 = vsel %vm1557, %v1535, %v1447
        %v1572 = vsel %vm1557, %v1536, %v1449
        %v1573 = vsel %vm1557, %v1537, %v1451
        %v1574 = vsel %vm1557, %v1538, %v1453
        %v1575 = vsel %vm1557, %v1539, %v1455
        %v1576 = vsel %vm1557, %v1540, %v1457
        %v1577 = vsel %vm1557, %v1541, %v1459
        %v1578 = vsel %vm1557, %v1542, %v1461
        %v1579 = vsel %vm1557, %v1543, %v1463
        %v1580 = vsel %vm1557, %v1544, %v1465
        %v1581 = vsel %vm1557, %v1545, %v1467
        %v1582 = vsel %vm1557, %v1546, %v1469
        %v1583 = vsel %vm1557, %v1547, %v1471
        %v1584 = vsel %vm1557, %v1548, %v1473
        %v1585 = vsel %vm1557, %v1549, %v1475
        %v1586 = vsel %vm1557, %v1550, %v1477
        %v1587 = vsel %vm1557, %v1551, %v1479
        %v1588 = vsel %vm1557, %v1552, %v1481
        %v1589 = vsel %vm1557, %v1553, %v1483
        %v1590 = vsel %vm1557, %v1554, %v1485
        %v1591 = vsel %vm1557, %v1555, %v1487
        %v1592 = vsel %vm1557, %v1556, %v1421
        %v1593 = vpack.c.bf16 %v1559, %v1558
        %v1594 = vpack.c.bf16 %v1561, %v1560
        %v1595 = vpack.c.bf16 %v1563, %v1562
        %v1596 = vpack.c.bf16 %v1565, %v1564
        %v1597 = vpack.c.bf16 %v1567, %v1566
        %v1598 = vpack.c.bf16 %v1569, %v1568
        %v1599 = vpack.c.bf16 %v1571, %v1570
        %v1600 = vpack.c.bf16 %v1573, %v1572
        %v1601 = vpack.c.bf16 %v1575, %v1574
        %v1602 = vpack.c.bf16 %v1577, %v1576
        %v1603 = vpack.c.bf16 %v1579, %v1578
        %v1604 = vpack.c.bf16 %v1581, %v1580
        %v1605 = vpack.c.bf16 %v1583, %v1582
        %v1606 = vpack.c.bf16 %v1585, %v1584
        %v1607 = vpack.c.bf16 %v1587, %v1586
        %v1608 = vpack.c.bf16 %v1589, %v1588
        %v1609 = vpack.c.bf16 %v1591, %v1590
        %v1610 = vpack.c.bf16 %v1558, %v1592
        %v1611 = vld [vmem:[%s1] sm:$0xf]
        %v1612 = vld [vmem:[%s1 + $0x4] sm:$0xf]
        %v1613 = vld [vmem:[%s1 + $0x8] sm:$0xf]
        %v1614 = vld [vmem:[%s1 + $0xc] sm:$0xf]
        %v1615 = vld [vmem:[%s1 + $0x10] sm:$0xf]
        %v1616 = vld [vmem:[%s1 + $0x14] sm:$0xf]
        %s1617 = scalar_lea.vmem %s1, 24
        %v1618 = vld [vmem:[%s1617] sm:$0xf]
        %v1619 = vld [vmem:[%s1617 + $0x4] sm:$0xf]
        %v1620 = vld [vmem:[%s1617 + $0x8] sm:$0xf]
        %v1621 = vld [vmem:[%s1617 + $0xc] sm:$0xf]
        %v1622 = vld [vmem:[%s1617 + $0x10] sm:$0xf]
        %v1623 = vld [vmem:[%s1617 + $0x14] sm:$0xf]
        %v1630 = vunpack.c.l.b16 %v1618
        %v1631 = vunpack.c.l.b16 %v1619
        %v1632 = vunpack.c.l.b16 %v1620
        %v1633 = vunpack.c.l.b16 %v1621
        %v1634 = vunpack.c.l.b16 %v1622
        %v1635 = vunpack.c.l.b16 %v1623
        %v1636 = vpack.c.b16 %v1631, %v1630
        %v1637 = vpack.c.b16 %v1633, %v1632
        %v1638 = vpack.c.b16 %v1635, %v1634
        %vm1642 = vcmask 392192
        %v1644 = vsel %vm1642, %v1594, 0
        %v1647 = vsel %vm1642, %v1595, 0
        %v1650 = vsel %vm1642, %v1596, 0
        %v1653 = vsel %vm1642, %v1597, 0
        %v1656 = vsel %vm1642, %v1598, 0
        %v1659 = vsel %vm1642, %v1599, 0
        %v1662 = vsel %vm1642, %v1600, 0
        %v1665 = vsel %vm1642, %v1601, 0
        %v1668 = vsel %vm1642, %v1602, 0
        %v1671 = vsel %vm1642, %v1603, 0
        %v1674 = vsel %vm1642, %v1604, 0
        %v1677 = vsel %vm1642, %v1605, 0
        %v1680 = vsel %vm1642, %v1606, 0
        %v1683 = vsel %vm1642, %v1607, 0
        %v1686 = vsel %vm1642, %v1608, 0
        %v1689 = vsel %vm1642, %v1609, 0
        %1691 = vmatprep.subr.bf16.mxu0 0
        %1692 = vmatpush1.bf16.msra.mxu0 %v1636
        %1693 = vmatprep.subr.bf16.mxu0 0
        %1694 = vmatpush1.bf16.msra.mxu0 %v1637
        %1695 = vmatprep.subr.bf16.mxu0 0
        %1696 = vmatpush1.bf16.msra.mxu0 %v1638
        %1697 = vmatprep.subr.bf16.mxu0 0
        %1698 = vmatpush1.bf16.msra.mxu0 0
        %1699 = vmatprep.subr.bf16.mxu0 0
        %1700 = vmatpush1.bf16.msra.mxu0 0
        %1701 = vmatprep.subr.bf16.mxu0 0
        %1702 = vmatpush1.bf16.msra.mxu0 0
        %1703 = vmatprep.subr.bf16.mxu0 0
        %1704 = vmatpush1.bf16.msra.mxu0 0
        %1705 = vmatprep.subr.bf16.mxu0 0
        %1706 = vmatpush1.bf16.msra.mxu0 0
        %1707 = vmatprep.subr.bf16.mxu0 0
        %1708 = vmatpush1.bf16.msra.mxu0 0
        %1709 = vmatprep.subr.bf16.mxu0 0
        %1710 = vmatpush1.bf16.msra.mxu0 0
        %1711 = vmatprep.subr.bf16.mxu0 0
        %1712 = vmatpush1.bf16.msra.mxu0 0
        %1713 = vmatprep.subr.bf16.mxu0 0
        %1714 = vmatpush1.bf16.msra.mxu0 0
        %1715 = vmatprep.subr.bf16.mxu0 0
        %1716 = vmatpush1.bf16.msra.mxu0 0
        %1717 = vmatprep.subr.bf16.mxu0 0
        %1718 = vmatpush1.bf16.msra.mxu0 0
        %1719 = vmatprep.subr.bf16.mxu0 0
        %1720 = vmatpush1.bf16.msra.mxu0 0
        %1721 = vmatprep.subr.bf16.mxu0 0
        %1722 = vmatpush1.bf16.msra.mxu0 0
        %1723 = vmatprep.mubr.bf16.mxu0 0
        %1724 = vmatmul.mubr.bf16.gmra.mrb[0].mxu0 %v1644
        %v1725 = vpop.f32.mrb[0].mxu0
        %v1726 = vadd.f32 0.0, %v1725
        %v1727 = vpop.f32.mrb[0].mxu0
        %v1728 = vpop.f32.mrb[0].mxu0
        %v1729 = vadd.f32 0.0, %v1728
        %v1730 = vpop.f32.mrb[0].mxu0
        %1731 = vmatprep.mubr.bf16.mxu0 0
        %1732 = vmatmul.mubr.bf16.gmra.mrb[0].mxu0 %v1647
        %v1733 = vpop.f32.mrb[0].mxu0
        %v1734 = vadd.f32 0.0, %v1733
        %v1735 = vpop.f32.mrb[0].mxu0
        %v1736 = vpop.f32.mrb[0].mxu0
        %v1737 = vadd.f32 0.0, %v1736
        %v1738 = vpop.f32.mrb[0].mxu0
        %1739 = vmatprep.mubr.bf16.mxu0 0
        %1740 = vmatmul.mubr.bf16.gmra.mrb[0].mxu0 %v1650
        %v1741 = vpop.f32.mrb[0].mxu0
        %v1742 = vadd.f32 0.0, %v1741
        %v1743 = vpop.f32.mrb[0].mxu0
        %v1744 = vpop.f32.mrb[0].mxu0
        %v1745 = vadd.f32 0.0, %v1744
        %v1746 = vpop.f32.mrb[0].mxu0
        %1747 = vmatprep.mubr.bf16.mxu0 0
        %1748 = vmatmul.mubr.bf16.gmra.mrb[0].mxu0 %v1653
        %v1749 = vpop.f32.mrb[0].mxu0
        %v1750 = vadd.f32 0.0, %v1749
        %v1751 = vpop.f32.mrb[0].mxu0
        %v1752 = vpop.f32.mrb[0].mxu0
        %v1753 = vadd.f32 0.0, %v1752
        %v1754 = vpop.f32.mrb[0].mxu0
        %1755 = vmatprep.mubr.bf16.mxu0 0
        %1756 = vmatmul.mubr.bf16.gmra.mrb[0].mxu0 %v1656
        %v1757 = vpop.f32.mrb[0].mxu0
        %v1758 = vadd.f32 0.0, %v1757
        %v1759 = vpop.f32.mrb[0].mxu0
        %v1760 = vpop.f32.mrb[0].mxu0
        %v1761 = vadd.f32 0.0, %v1760
        %v1762 = vpop.f32.mrb[0].mxu0
        %1763 = vmatprep.mubr.bf16.mxu0 0
        %1764 = vmatmul.mubr.bf16.gmra.mrb[0].mxu0 %v1659
        %v1765 = vpop.f32.mrb[0].mxu0
        %v1766 = vadd.f32 0.0, %v1765
        %v1767 = vpop.f32.mrb[0].mxu0
        %v1768 = vpop.f32.mrb[0].mxu0
        %v1769 = vadd.f32 0.0, %v1768
        %v1770 = vpop.f32.mrb[0].mxu0
        %1771 = vmatprep.mubr.bf16.mxu0 0
        %1772 = vmatmul.mubr.bf16.gmra.mrb[0].mxu0 %v1662
        %v1773 = vpop.f32.mrb[0].mxu0
        %v1774 = vadd.f32 0.0, %v1773
        %v1775 = vpop.f32.mrb[0].mxu0
        %v1776 = vpop.f32.mrb[0].mxu0
        %v1777 = vadd.f32 0.0, %v1776
        %v1778 = vpop.f32.mrb[0].mxu0
        %1779 = vmatprep.mubr.bf16.mxu0 0
        %1780 = vmatmul.mubr.bf16.gmra.mrb[0].mxu0 %v1665
        %v1781 = vpop.f32.mrb[0].mxu0
        %v1782 = vadd.f32 0.0, %v1781
        %v1783 = vpop.f32.mrb[0].mxu0
        %v1784 = vpop.f32.mrb[0].mxu0
        %v1785 = vadd.f32 0.0, %v1784
        %v1786 = vpop.f32.mrb[0].mxu0
        %1787 = vmatprep.mubr.bf16.mxu0 0
        %1788 = vmatmul.mubr.bf16.gmra.mrb[0].mxu0 %v1668
        %v1789 = vpop.f32.mrb[0].mxu0
        %v1790 = vadd.f32 0.0, %v1789
        %v1791 = vpop.f32.mrb[0].mxu0
        %v1792 = vpop.f32.mrb[0].mxu0
        %v1793 = vadd.f32 0.0, %v1792
        %v1794 = vpop.f32.mrb[0].mxu0
        %1795 = vmatprep.mubr.bf16.mxu0 0
        %1796 = vmatmul.mubr.bf16.gmra.mrb[0].mxu0 %v1671
        %v1797 = vpop.f32.mrb[0].mxu0
        %v1798 = vadd.f32 0.0, %v1797
        %v1799 = vpop.f32.mrb[0].mxu0
        %v1800 = vpop.f32.mrb[0].mxu0
        %v1801 = vadd.f32 0.0, %v1800
        %v1802 = vpop.f32.mrb[0].mxu0
        %1803 = vmatprep.mubr.bf16.mxu0 0
        %1804 = vmatmul.mubr.bf16.gmra.mrb[0].mxu0 %v1674
        %v1805 = vpop.f32.mrb[0].mxu0
        %v1806 = vadd.f32 0.0, %v1805
        %v1807 = vpop.f32.mrb[0].mxu0
        %v1808 = vpop.f32.mrb[0].mxu0
        %v1809 = vadd.f32 0.0, %v1808
        %v1810 = vpop.f32.mrb[0].mxu0
        %1811 = vmatprep.mubr.bf16.mxu0 0
        %1812 = vmatmul.mubr.bf16.gmra.mrb[0].mxu0 %v1677
        %v1813 = vpop.f32.mrb[0].mxu0
        %v1814 = vadd.f32 0.0, %v1813
        %v1815 = vpop.f32.mrb[0].mxu0
        %v1816 = vpop.f32.mrb[0].mxu0
        %v1817 = vadd.f32 0.0, %v1816
        %v1818 = vpop.f32.mrb[0].mxu0
        %1819 = vmatprep.mubr.bf16.mxu0 0
        %1820 = vmatmul.mubr.bf16.gmra.mrb[0].mxu0 %v1680
        %v1821 = vpop.f32.mrb[0].mxu0
        %v1822 = vadd.f32 0.0, %v1821
        %v1823 = vpop.f32.mrb[0].mxu0
        %v1824 = vpop.f32.mrb[0].mxu0
        %v1825 = vadd.f32 0.0, %v1824
        %v1826 = vpop.f32.mrb[0].mxu0
        %1827 = vmatprep.mubr.bf16.mxu0 0
        %1828 = vmatmul.mubr.bf16.gmra.mrb[0].mxu0 %v1683
        %v1829 = vpop.f32.mrb[0].mxu0
        %v1830 = vadd.f32 0.0, %v1829
        %v1831 = vpop.f32.mrb[0].mxu0
        %v1832 = vpop.f32.mrb[0].mxu0
        %v1833 = vadd.f32 0.0, %v1832
        %v1834 = vpop.f32.mrb[0].mxu0
        %1835 = vmatprep.mubr.bf16.mxu0 0
        %1836 = vmatmul.mubr.bf16.gmra.mrb[0].mxu0 %v1686
        %v1837 = vpop.f32.mrb[0].mxu0
        %v1838 = vadd.f32 0.0, %v1837
        %v1839 = vpop.f32.mrb[0].mxu0
        %v1840 = vpop.f32.mrb[0].mxu0
        %v1841 = vadd.f32 0.0, %v1840
        %v1842 = vpop.f32.mrb[0].mxu0
        %1843 = vmatprep.mubr.bf16.mxu0 0
        %1844 = vmatmul.mubr.bf16.gmra.mrb[0].mxu0 %v1689
        %v1845 = vpop.f32.mrb[0].mxu0
        %v1846 = vadd.f32 0.0, %v1845
        %v1847 = vpop.f32.mrb[0].mxu0
        %v1848 = vpop.f32.mrb[0].mxu0
        %v1849 = vadd.f32 0.0, %v1848
        %v1850 = vpop.f32.mrb[0].mxu0
        %1851 = vdwg.mxu0
        %v1858 = vunpack.c.l.b16 %v1611
        %v1859 = vunpack.c.l.b16 %v1612
        %v1860 = vunpack.c.l.b16 %v1613
        %v1861 = vunpack.c.l.b16 %v1614
        %v1862 = vunpack.c.l.b16 %v1615
        %v1863 = vunpack.c.l.b16 %v1616
        %v1864 = vpack.c.b16 %v1859, %v1858
        %v1865 = vpack.c.b16 %v1861, %v1860
        %v1866 = vpack.c.b16 %v1863, %v1862
        %v1871 = vsel %vm1642, %v1593, 0
        %1873 = vmatprep.subr.bf16.mxu0 0
        %1874 = vmatpush1.bf16.msra.mxu0 %v1864
        %1875 = vmatprep.subr.bf16.mxu0 0
        %1876 = vmatpush1.bf16.msra.mxu0 %v1865
        %1877 = vmatprep.subr.bf16.mxu0 0
        %1878 = vmatpush1.bf16.msra.mxu0 %v1866
        %1879 = vmatprep.subr.bf16.mxu0 0
        %1880 = vmatpush1.bf16.msra.mxu0 0
        %1881 = vmatprep.subr.bf16.mxu0 0
        %1882 = vmatpush1.bf16.msra.mxu0 0
        %1883 = vmatprep.subr.bf16.mxu0 0
        %1884 = vmatpush1.bf16.msra.mxu0 0
        %1885 = vmatprep.subr.bf16.mxu0 0
        %1886 = vmatpush1.bf16.msra.mxu0 0
        %1887 = vmatprep.subr.bf16.mxu0 0
        %1888 = vmatpush1.bf16.msra.mxu0 0
        %1889 = vmatprep.subr.bf16.mxu0 0
        %1890 = vmatpush1.bf16.msra.mxu0 0
        %1891 = vmatprep.subr.bf16.mxu0 0
        %1892 = vmatpush1.bf16.msra.mxu0 0
        %1893 = vmatprep.subr.bf16.mxu0 0
        %1894 = vmatpush1.bf16.msra.mxu0 0
        %1895 = vmatprep.subr.bf16.mxu0 0
        %1896 = vmatpush1.bf16.msra.mxu0 0
        %1897 = vmatprep.subr.bf16.mxu0 0
        %1898 = vmatpush1.bf16.msra.mxu0 0
        %1899 = vmatprep.subr.bf16.mxu0 0
        %1900 = vmatpush1.bf16.msra.mxu0 0
        %1901 = vmatprep.subr.bf16.mxu0 0
        %1902 = vmatpush1.bf16.msra.mxu0 0
        %1903 = vmatprep.subr.bf16.mxu0 0
        %1904 = vmatpush1.bf16.msra.mxu0 0
        %1905 = vmatprep.mubr.bf16.mxu0 0
        %1906 = vmatmul.mubr.bf16.gmra.mrb[0].mxu0 %v1871
        %v1907 = vpop.f32.mrb[0].mxu0
        %v1908 = vadd.f32 %v1726, %v1907
        %v1909 = vpop.f32.mrb[0].mxu0
        %v1910 = vpop.f32.mrb[0].mxu0
        %v1911 = vadd.f32 %v1729, %v1910
        %v1912 = vpop.f32.mrb[0].mxu0
        %1913 = vmatprep.mubr.bf16.mxu0 0
        %1914 = vmatmul.mubr.bf16.gmra.mrb[0].mxu0 %v1644
        %v1915 = vpop.f32.mrb[0].mxu0
        %v1916 = vadd.f32 %v1734, %v1915
        %v1917 = vpop.f32.mrb[0].mxu0
        %v1918 = vpop.f32.mrb[0].mxu0
        %v1919 = vadd.f32 %v1737, %v1918
        %v1920 = vpop.f32.mrb[0].mxu0
        %1921 = vmatprep.mubr.bf16.mxu0 0
        %1922 = vmatmul.mubr.bf16.gmra.mrb[0].mxu0 %v1647
        %v1923 = vpop.f32.mrb[0].mxu0
        %v1924 = vadd.f32 %v1742, %v1923
        %v1925 = vpop.f32.mrb[0].mxu0
        %v1926 = vpop.f32.mrb[0].mxu0
        %v1927 = vadd.f32 %v1745, %v1926
        %v1928 = vpop.f32.mrb[0].mxu0
        %1929 = vmatprep.mubr.bf16.mxu0 0
        %1930 = vmatmul.mubr.bf16.gmra.mrb[0].mxu0 %v1650
        %v1931 = vpop.f32.mrb[0].mxu0
        %v1932 = vadd.f32 %v1750, %v1931
        %v1933 = vpop.f32.mrb[0].mxu0
        %v1934 = vpop.f32.mrb[0].mxu0
        %v1935 = vadd.f32 %v1753, %v1934
        %v1936 = vpop.f32.mrb[0].mxu0
        %1937 = vmatprep.mubr.bf16.mxu0 0
        %1938 = vmatmul.mubr.bf16.gmra.mrb[0].mxu0 %v1653
        %v1939 = vpop.f32.mrb[0].mxu0
        %v1940 = vadd.f32 %v1758, %v1939
        %v1941 = vpop.f32.mrb[0].mxu0
        %v1942 = vpop.f32.mrb[0].mxu0
        %v1943 = vadd.f32 %v1761, %v1942
        %v1944 = vpop.f32.mrb[0].mxu0
        %1945 = vmatprep.mubr.bf16.mxu0 0
        %1946 = vmatmul.mubr.bf16.gmra.mrb[0].mxu0 %v1656
        %v1947 = vpop.f32.mrb[0].mxu0
        %v1948 = vadd.f32 %v1766, %v1947
        %v1949 = vpop.f32.mrb[0].mxu0
        %v1950 = vpop.f32.mrb[0].mxu0
        %v1951 = vadd.f32 %v1769, %v1950
        %v1952 = vpop.f32.mrb[0].mxu0
        %1953 = vmatprep.mubr.bf16.mxu0 0
        %1954 = vmatmul.mubr.bf16.gmra.mrb[0].mxu0 %v1659
        %v1955 = vpop.f32.mrb[0].mxu0
        %v1956 = vadd.f32 %v1774, %v1955
        %v1957 = vpop.f32.mrb[0].mxu0
        %v1958 = vpop.f32.mrb[0].mxu0
        %v1959 = vadd.f32 %v1777, %v1958
        %v1960 = vpop.f32.mrb[0].mxu0
        %1961 = vmatprep.mubr.bf16.mxu0 0
        %1962 = vmatmul.mubr.bf16.gmra.mrb[0].mxu0 %v1662
        %v1963 = vpop.f32.mrb[0].mxu0
        %v1964 = vadd.f32 %v1782, %v1963
        %v1965 = vpop.f32.mrb[0].mxu0
        %v1966 = vpop.f32.mrb[0].mxu0
        %v1967 = vadd.f32 %v1785, %v1966
        %v1968 = vpop.f32.mrb[0].mxu0
        %1969 = vmatprep.mubr.bf16.mxu0 0
        %1970 = vmatmul.mubr.bf16.gmra.mrb[0].mxu0 %v1665
        %v1971 = vpop.f32.mrb[0].mxu0
        %v1972 = vadd.f32 %v1790, %v1971
        %v1973 = vpop.f32.mrb[0].mxu0
        %v1974 = vpop.f32.mrb[0].mxu0
        %v1975 = vadd.f32 %v1793, %v1974
        %v1976 = vpop.f32.mrb[0].mxu0
        %1977 = vmatprep.mubr.bf16.mxu0 0
        %1978 = vmatmul.mubr.bf16.gmra.mrb[0].mxu0 %v1668
        %v1979 = vpop.f32.mrb[0].mxu0
        %v1980 = vadd.f32 %v1798, %v1979
        %v1981 = vpop.f32.mrb[0].mxu0
        %v1982 = vpop.f32.mrb[0].mxu0
        %v1983 = vadd.f32 %v1801, %v1982
        %v1984 = vpop.f32.mrb[0].mxu0
        %1985 = vmatprep.mubr.bf16.mxu0 0
        %1986 = vmatmul.mubr.bf16.gmra.mrb[0].mxu0 %v1671
        %v1987 = vpop.f32.mrb[0].mxu0
        %v1988 = vadd.f32 %v1806, %v1987
        %v1989 = vpop.f32.mrb[0].mxu0
        %v1990 = vpop.f32.mrb[0].mxu0
        %v1991 = vadd.f32 %v1809, %v1990
        %v1992 = vpop.f32.mrb[0].mxu0
        %1993 = vmatprep.mubr.bf16.mxu0 0
        %1994 = vmatmul.mubr.bf16.gmra.mrb[0].mxu0 %v1674
        %v1995 = vpop.f32.mrb[0].mxu0
        %v1996 = vadd.f32 %v1814, %v1995
        %v1997 = vpop.f32.mrb[0].mxu0
        %v1998 = vpop.f32.mrb[0].mxu0
        %v1999 = vadd.f32 %v1817, %v1998
        %v2000 = vpop.f32.mrb[0].mxu0
        %2001 = vmatprep.mubr.bf16.mxu0 0
        %2002 = vmatmul.mubr.bf16.gmra.mrb[0].mxu0 %v1677
        %v2003 = vpop.f32.mrb[0].mxu0
        %v2004 = vadd.f32 %v1822, %v2003
        %v2005 = vpop.f32.mrb[0].mxu0
        %v2006 = vpop.f32.mrb[0].mxu0
        %v2007 = vadd.f32 %v1825, %v2006
        %v2008 = vpop.f32.mrb[0].mxu0
        %2009 = vmatprep.mubr.bf16.mxu0 0
        %2010 = vmatmul.mubr.bf16.gmra.mrb[0].mxu0 %v1680
        %v2011 = vpop.f32.mrb[0].mxu0
        %v2012 = vadd.f32 %v1830, %v2011
        %v2013 = vpop.f32.mrb[0].mxu0
        %v2014 = vpop.f32.mrb[0].mxu0
        %v2015 = vadd.f32 %v1833, %v2014
        %v2016 = vpop.f32.mrb[0].mxu0
        %2017 = vmatprep.mubr.bf16.mxu0 0
        %2018 = vmatmul.mubr.bf16.gmra.mrb[0].mxu0 %v1683
        %v2019 = vpop.f32.mrb[0].mxu0
        %v2020 = vadd.f32 %v1838, %v2019
        %v2021 = vpop.f32.mrb[0].mxu0
        %v2022 = vpop.f32.mrb[0].mxu0
        %v2023 = vadd.f32 %v1841, %v2022
        %v2024 = vpop.f32.mrb[0].mxu0
        %2025 = vmatprep.mubr.bf16.mxu0 0
        %2026 = vmatmul.mubr.bf16.gmra.mrb[0].mxu0 %v1686
        %v2027 = vpop.f32.mrb[0].mxu0
        %v2028 = vadd.f32 %v1846, %v2027
        %v2029 = vpop.f32.mrb[0].mxu0
        %v2030 = vpop.f32.mrb[0].mxu0
        %v2031 = vadd.f32 %v1849, %v2030
        %v2032 = vpop.f32.mrb[0].mxu0
        %2033 = vdwg.mxu0
        %s2034 = scalar_lea.vmem %s1, 48
        %v2035 = vld [vmem:[%s2034] sm:$0xf]
        %v2036 = vld [vmem:[%s2034 + $0x4] sm:$0xf]
        %v2037 = vld [vmem:[%s2034 + $0x8] sm:$0xf]
        %v2038 = vld [vmem:[%s2034 + $0xc] sm:$0xf]
        %v2039 = vld [vmem:[%s2034 + $0x10] sm:$0xf]
        %v2040 = vld [vmem:[%s2034 + $0x14] sm:$0xf]
        %v2047 = vunpack.c.l.b16 %v2035
        %v2048 = vunpack.c.l.b16 %v2036
        %v2049 = vunpack.c.l.b16 %v2037
        %v2050 = vunpack.c.l.b16 %v2038
        %v2051 = vunpack.c.l.b16 %v2039
        %v2052 = vunpack.c.l.b16 %v2040
        %v2053 = vpack.c.b16 %v2048, %v2047
        %v2054 = vpack.c.b16 %v2050, %v2049
        %v2055 = vpack.c.b16 %v2052, %v2051
        %v2060 = vsel %vm1642, %v1610, 0
        %2062 = vmatprep.subr.bf16.mxu0 0
        %2063 = vmatpush1.bf16.msra.mxu0 %v2053
        %2064 = vmatprep.subr.bf16.mxu0 0
        %2065 = vmatpush1.bf16.msra.mxu0 %v2054
        %2066 = vmatprep.subr.bf16.mxu0 0
        %2067 = vmatpush1.bf16.msra.mxu0 %v2055
        %2068 = vmatprep.subr.bf16.mxu0 0
        %2069 = vmatpush1.bf16.msra.mxu0 0
        %2070 = vmatprep.subr.bf16.mxu0 0
        %2071 = vmatpush1.bf16.msra.mxu0 0
        %2072 = vmatprep.subr.bf16.mxu0 0
        %2073 = vmatpush1.bf16.msra.mxu0 0
        %2074 = vmatprep.subr.bf16.mxu0 0
        %2075 = vmatpush1.bf16.msra.mxu0 0
        %2076 = vmatprep.subr.bf16.mxu0 0
        %2077 = vmatpush1.bf16.msra.mxu0 0
        %2078 = vmatprep.subr.bf16.mxu0 0
        %2079 = vmatpush1.bf16.msra.mxu0 0
        %2080 = vmatprep.subr.bf16.mxu0 0
        %2081 = vmatpush1.bf16.msra.mxu0 0
        %2082 = vmatprep.subr.bf16.mxu0 0
        %2083 = vmatpush1.bf16.msra.mxu0 0
        %2084 = vmatprep.subr.bf16.mxu0 0
        %2085 = vmatpush1.bf16.msra.mxu0 0
        %2086 = vmatprep.subr.bf16.mxu0 0
        %2087 = vmatpush1.bf16.msra.mxu0 0
        %2088 = vmatprep.subr.bf16.mxu0 0
        %2089 = vmatpush1.bf16.msra.mxu0 0
        %2090 = vmatprep.subr.bf16.mxu0 0
        %2091 = vmatpush1.bf16.msra.mxu0 0
        %2092 = vmatprep.subr.bf16.mxu0 0
        %2093 = vmatpush1.bf16.msra.mxu0 0
        %2094 = vmatprep.mubr.bf16.mxu0 0
        %2095 = vmatmul.mubr.bf16.gmra.mrb[0].mxu0 %v1647
        %v2096 = vpop.f32.mrb[0].mxu0
        %v2097 = vadd.f32 0.0, %v2096
        %v2098 = vpop.f32.mrb[0].mxu0
        %v2099 = vpop.f32.mrb[0].mxu0
        %v2100 = vadd.f32 0.0, %v2099
        %v2101 = vpop.f32.mrb[0].mxu0
        %2102 = vmatprep.mubr.bf16.mxu0 0
        %2103 = vmatmul.mubr.bf16.gmra.mrb[0].mxu0 %v1650
        %v2104 = vpop.f32.mrb[0].mxu0
        %v2105 = vadd.f32 0.0, %v2104
        %v2106 = vpop.f32.mrb[0].mxu0
        %v2107 = vpop.f32.mrb[0].mxu0
        %v2108 = vadd.f32 0.0, %v2107
        %v2109 = vpop.f32.mrb[0].mxu0
        %2110 = vmatprep.mubr.bf16.mxu0 0
        %2111 = vmatmul.mubr.bf16.gmra.mrb[0].mxu0 %v1653
        %v2112 = vpop.f32.mrb[0].mxu0
        %v2113 = vadd.f32 0.0, %v2112
        %v2114 = vpop.f32.mrb[0].mxu0
        %v2115 = vpop.f32.mrb[0].mxu0
        %v2116 = vadd.f32 0.0, %v2115
        %v2117 = vpop.f32.mrb[0].mxu0
        %2118 = vmatprep.mubr.bf16.mxu0 0
        %2119 = vmatmul.mubr.bf16.gmra.mrb[0].mxu0 %v1656
        %v2120 = vpop.f32.mrb[0].mxu0
        %v2121 = vadd.f32 0.0, %v2120
        %v2122 = vpop.f32.mrb[0].mxu0
        %v2123 = vpop.f32.mrb[0].mxu0
        %v2124 = vadd.f32 0.0, %v2123
        %v2125 = vpop.f32.mrb[0].mxu0
        %2126 = vmatprep.mubr.bf16.mxu0 0
        %2127 = vmatmul.mubr.bf16.gmra.mrb[0].mxu0 %v1659
        %v2128 = vpop.f32.mrb[0].mxu0
        %v2129 = vadd.f32 0.0, %v2128
        %v2130 = vpop.f32.mrb[0].mxu0
        %v2131 = vpop.f32.mrb[0].mxu0
        %v2132 = vadd.f32 0.0, %v2131
        %v2133 = vpop.f32.mrb[0].mxu0
        %2134 = vmatprep.mubr.bf16.mxu0 0
        %2135 = vmatmul.mubr.bf16.gmra.mrb[0].mxu0 %v1662
        %v2136 = vpop.f32.mrb[0].mxu0
        %v2137 = vadd.f32 0.0, %v2136
        %v2138 = vpop.f32.mrb[0].mxu0
        %v2139 = vpop.f32.mrb[0].mxu0
        %v2140 = vadd.f32 0.0, %v2139
        %v2141 = vpop.f32.mrb[0].mxu0
        %2142 = vmatprep.mubr.bf16.mxu0 0
        %2143 = vmatmul.mubr.bf16.gmra.mrb[0].mxu0 %v1665
        %v2144 = vpop.f32.mrb[0].mxu0
        %v2145 = vadd.f32 0.0, %v2144
        %v2146 = vpop.f32.mrb[0].mxu0
        %v2147 = vpop.f32.mrb[0].mxu0
        %v2148 = vadd.f32 0.0, %v2147
        %v2149 = vpop.f32.mrb[0].mxu0
        %2150 = vmatprep.mubr.bf16.mxu0 0
        %2151 = vmatmul.mubr.bf16.gmra.mrb[0].mxu0 %v1668
        %v2152 = vpop.f32.mrb[0].mxu0
        %v2153 = vadd.f32 0.0, %v2152
        %v2154 = vpop.f32.mrb[0].mxu0
        %v2155 = vpop.f32.mrb[0].mxu0
        %v2156 = vadd.f32 0.0, %v2155
        %v2157 = vpop.f32.mrb[0].mxu0
        %2158 = vmatprep.mubr.bf16.mxu0 0
        %2159 = vmatmul.mubr.bf16.gmra.mrb[0].mxu0 %v1671
        %v2160 = vpop.f32.mrb[0].mxu0
        %v2161 = vadd.f32 0.0, %v2160
        %v2162 = vpop.f32.mrb[0].mxu0
        %v2163 = vpop.f32.mrb[0].mxu0
        %v2164 = vadd.f32 0.0, %v2163
        %v2165 = vpop.f32.mrb[0].mxu0
        %2166 = vmatprep.mubr.bf16.mxu0 0
        %2167 = vmatmul.mubr.bf16.gmra.mrb[0].mxu0 %v1674
        %v2168 = vpop.f32.mrb[0].mxu0
        %v2169 = vadd.f32 0.0, %v2168
        %v2170 = vpop.f32.mrb[0].mxu0
        %v2171 = vpop.f32.mrb[0].mxu0
        %v2172 = vadd.f32 0.0, %v2171
        %v2173 = vpop.f32.mrb[0].mxu0
        %2174 = vmatprep.mubr.bf16.mxu0 0
        %2175 = vmatmul.mubr.bf16.gmra.mrb[0].mxu0 %v1677
        %v2176 = vpop.f32.mrb[0].mxu0
        %v2177 = vadd.f32 0.0, %v2176
        %v2178 = vpop.f32.mrb[0].mxu0
        %v2179 = vpop.f32.mrb[0].mxu0
        %v2180 = vadd.f32 0.0, %v2179
        %v2181 = vpop.f32.mrb[0].mxu0
        %2182 = vmatprep.mubr.bf16.mxu0 0
        %2183 = vmatmul.mubr.bf16.gmra.mrb[0].mxu0 %v1680
        %v2184 = vpop.f32.mrb[0].mxu0
        %v2185 = vadd.f32 0.0, %v2184
        %v2186 = vpop.f32.mrb[0].mxu0
        %v2187 = vpop.f32.mrb[0].mxu0
        %v2188 = vadd.f32 0.0, %v2187
        %v2189 = vpop.f32.mrb[0].mxu0
        %2190 = vmatprep.mubr.bf16.mxu0 0
        %2191 = vmatmul.mubr.bf16.gmra.mrb[0].mxu0 %v1683
        %v2192 = vpop.f32.mrb[0].mxu0
        %v2193 = vadd.f32 0.0, %v2192
        %v2194 = vpop.f32.mrb[0].mxu0
        %v2195 = vpop.f32.mrb[0].mxu0
        %v2196 = vadd.f32 0.0, %v2195
        %v2197 = vpop.f32.mrb[0].mxu0
        %2198 = vmatprep.mubr.bf16.mxu0 0
        %2199 = vmatmul.mubr.bf16.gmra.mrb[0].mxu0 %v1686
        %v2200 = vpop.f32.mrb[0].mxu0
        %v2201 = vadd.f32 0.0, %v2200
        %v2202 = vpop.f32.mrb[0].mxu0
        %v2203 = vpop.f32.mrb[0].mxu0
        %v2204 = vadd.f32 0.0, %v2203
        %v2205 = vpop.f32.mrb[0].mxu0
        %2206 = vmatprep.mubr.bf16.mxu0 0
        %2207 = vmatmul.mubr.bf16.gmra.mrb[0].mxu0 %v1689
        %v2208 = vpop.f32.mrb[0].mxu0
        %v2209 = vadd.f32 0.0, %v2208
        %v2210 = vpop.f32.mrb[0].mxu0
        %v2211 = vpop.f32.mrb[0].mxu0
        %v2212 = vadd.f32 0.0, %v2211
        %v2213 = vpop.f32.mrb[0].mxu0
        %2214 = vmatprep.mubr.bf16.mxu0 0
        %2215 = vmatmul.mubr.bf16.gmra.mrb[0].mxu0 %v2060
        %v2216 = vpop.f32.mrb[0].mxu0
        %v2217 = vadd.f32 0.0, %v2216
        %v2218 = vpop.f32.mrb[0].mxu0
        %v2219 = vpop.f32.mrb[0].mxu0
        %v2220 = vadd.f32 0.0, %v2219
        %v2221 = vpop.f32.mrb[0].mxu0
        %2222 = vdwg.mxu0
        %v2223 = vadd.f32 %v1908, %v2097
        %v2224 = vadd.f32 %v1911, %v2100
        %v2225 = vadd.f32 %v1916, %v2105
        %v2226 = vadd.f32 %v1919, %v2108
        %v2227 = vadd.f32 %v1924, %v2113
        %v2228 = vadd.f32 %v1927, %v2116
        %v2229 = vadd.f32 %v1932, %v2121
        %v2230 = vadd.f32 %v1935, %v2124
        %v2231 = vadd.f32 %v1940, %v2129
        %v2232 = vadd.f32 %v1943, %v2132
        %v2233 = vadd.f32 %v1948, %v2137
        %v2234 = vadd.f32 %v1951, %v2140
        %v2235 = vadd.f32 %v1956, %v2145
        %v2236 = vadd.f32 %v1959, %v2148
        %v2237 = vadd.f32 %v1964, %v2153
        %v2238 = vadd.f32 %v1967, %v2156
        %v2239 = vadd.f32 %v1972, %v2161
        %v2240 = vadd.f32 %v1975, %v2164
        %v2241 = vadd.f32 %v1980, %v2169
        %v2242 = vadd.f32 %v1983, %v2172
        %v2243 = vadd.f32 %v1988, %v2177
        %v2244 = vadd.f32 %v1991, %v2180
        %v2245 = vadd.f32 %v1996, %v2185
        %v2246 = vadd.f32 %v1999, %v2188
        %v2247 = vadd.f32 %v2004, %v2193
        %v2248 = vadd.f32 %v2007, %v2196
        %v2249 = vadd.f32 %v2012, %v2201
        %v2250 = vadd.f32 %v2015, %v2204
        %v2251 = vadd.f32 %v2020, %v2209
        %v2252 = vadd.f32 %v2023, %v2212
        %v2253 = vadd.f32 %v2028, %v2217
        %v2254 = vadd.f32 %v2031, %v2220
        %v2255 = vld [vmem:[%s3] sm:$0x1]
        %v2256 = vlaneseq
        %v2257 = vshrl.u32 %v2256, 7
        %v2258 = vsub.s32 0, %v2257
        %v2259 = vrot.slane %v2255, %v2258
        %v2260 = vmul.f32 %v2223, %v2259
        %v2261 = vmul.f32 %v2224, %v2259
        %v2262 = vmul.f32 %v2225, %v2259
        %v2263 = vmul.f32 %v2226, %v2259
        %v2264 = vmul.f32 %v2227, %v2259
        %v2265 = vmul.f32 %v2228, %v2259
        %v2266 = vmul.f32 %v2229, %v2259
        %v2267 = vmul.f32 %v2230, %v2259
        %v2268 = vmul.f32 %v2231, %v2259
        %v2269 = vmul.f32 %v2232, %v2259
        %v2270 = vmul.f32 %v2233, %v2259
        %v2271 = vmul.f32 %v2234, %v2259
        %v2272 = vmul.f32 %v2235, %v2259
        %v2273 = vmul.f32 %v2236, %v2259
        %v2274 = vmul.f32 %v2237, %v2259
        %v2275 = vmul.f32 %v2238, %v2259
        %v2276 = vmul.f32 %v2239, %v2259
        %v2277 = vmul.f32 %v2240, %v2259
        %v2278 = vmul.f32 %v2241, %v2259
        %v2279 = vmul.f32 %v2242, %v2259
        %v2280 = vmul.f32 %v2243, %v2259
        %v2281 = vmul.f32 %v2244, %v2259
        %v2282 = vmul.f32 %v2245, %v2259
        %v2283 = vmul.f32 %v2246, %v2259
        %v2284 = vmul.f32 %v2247, %v2259
        %v2285 = vmul.f32 %v2248, %v2259
        %v2286 = vmul.f32 %v2249, %v2259
        %v2287 = vmul.f32 %v2250, %v2259
        %v2288 = vmul.f32 %v2251, %v2259
        %v2289 = vmul.f32 %v2252, %v2259
        %v2290 = vmul.f32 %v2253, %v2259
        %v2291 = vmul.f32 %v2254, %v2259
        %v2292 = vld [vmem:[%s3 + $0x1] sm:$0x1]
        %v2293 = vlaneseq
        %v2294 = vshrl.u32 %v2293, 7
        %v2295 = vsub.s32 0, %v2294
        %v2296 = vrot.slane %v2292, %v2295
        %v2297 = vadd.f32 %v2260, %v2296
        %v2298 = vadd.f32 %v2261, %v2296
        %v2299 = vadd.f32 %v2262, %v2296
        %v2300 = vadd.f32 %v2263, %v2296
        %v2301 = vadd.f32 %v2264, %v2296
        %v2302 = vadd.f32 %v2265, %v2296
        %v2303 = vadd.f32 %v2266, %v2296
        %v2304 = vadd.f32 %v2267, %v2296
        %v2305 = vadd.f32 %v2268, %v2296
        %v2306 = vadd.f32 %v2269, %v2296
        %v2307 = vadd.f32 %v2270, %v2296
        %v2308 = vadd.f32 %v2271, %v2296
        %v2309 = vadd.f32 %v2272, %v2296
        %v2310 = vadd.f32 %v2273, %v2296
        %v2311 = vadd.f32 %v2274, %v2296
        %v2312 = vadd.f32 %v2275, %v2296
        %v2313 = vadd.f32 %v2276, %v2296
        %v2314 = vadd.f32 %v2277, %v2296
        %v2315 = vadd.f32 %v2278, %v2296
        %v2316 = vadd.f32 %v2279, %v2296
        %v2317 = vadd.f32 %v2280, %v2296
        %v2318 = vadd.f32 %v2281, %v2296
        %v2319 = vadd.f32 %v2282, %v2296
        %v2320 = vadd.f32 %v2283, %v2296
        %v2321 = vadd.f32 %v2284, %v2296
        %v2322 = vadd.f32 %v2285, %v2296
        %v2323 = vadd.f32 %v2286, %v2296
        %v2324 = vadd.f32 %v2287, %v2296
        %v2325 = vadd.f32 %v2288, %v2296
        %v2326 = vadd.f32 %v2289, %v2296
        %v2327 = vadd.f32 %v2290, %v2296
        %v2328 = vadd.f32 %v2291, %v2296
        %v2329 = vld [vmem:[%s3 + $0x2] sm:$0x1]
        %v2330 = vmax.f32 %v2297, 0.0
        %v2331 = vmax.f32 %v2298, 0.0
        %v2332 = vmax.f32 %v2299, 0.0
        %v2333 = vmax.f32 %v2300, 0.0
        %v2334 = vmax.f32 %v2301, 0.0
        %v2335 = vmax.f32 %v2302, 0.0
        %v2336 = vmax.f32 %v2303, 0.0
        %v2337 = vmax.f32 %v2304, 0.0
        %v2338 = vmax.f32 %v2305, 0.0
        %v2339 = vmax.f32 %v2306, 0.0
        %v2340 = vmax.f32 %v2307, 0.0
        %v2341 = vmax.f32 %v2308, 0.0
        %v2342 = vmax.f32 %v2309, 0.0
        %v2343 = vmax.f32 %v2310, 0.0
        %v2344 = vmax.f32 %v2311, 0.0
        %v2345 = vmax.f32 %v2312, 0.0
        %v2346 = vmax.f32 %v2313, 0.0
        %v2347 = vmax.f32 %v2314, 0.0
        %v2348 = vmax.f32 %v2315, 0.0
        %v2349 = vmax.f32 %v2316, 0.0
        %v2350 = vmax.f32 %v2317, 0.0
        %v2351 = vmax.f32 %v2318, 0.0
        %v2352 = vmax.f32 %v2319, 0.0
        %v2353 = vmax.f32 %v2320, 0.0
        %v2354 = vmax.f32 %v2321, 0.0
        %v2355 = vmax.f32 %v2322, 0.0
        %v2356 = vmax.f32 %v2323, 0.0
        %v2357 = vmax.f32 %v2324, 0.0
        %v2358 = vmax.f32 %v2325, 0.0
        %v2359 = vmax.f32 %v2326, 0.0
        %v2360 = vmax.f32 %v2327, 0.0
        %v2361 = vmax.f32 %v2328, 0.0
        %v2362 = vmin.f32 %v2297, 0.0
        %v2363 = vmin.f32 %v2298, 0.0
        %v2364 = vmin.f32 %v2299, 0.0
        %v2365 = vmin.f32 %v2300, 0.0
        %v2366 = vmin.f32 %v2301, 0.0
        %v2367 = vmin.f32 %v2302, 0.0
        %v2368 = vmin.f32 %v2303, 0.0
        %v2369 = vmin.f32 %v2304, 0.0
        %v2370 = vmin.f32 %v2305, 0.0
        %v2371 = vmin.f32 %v2306, 0.0
        %v2372 = vmin.f32 %v2307, 0.0
        %v2373 = vmin.f32 %v2308, 0.0
        %v2374 = vmin.f32 %v2309, 0.0
        %v2375 = vmin.f32 %v2310, 0.0
        %v2376 = vmin.f32 %v2311, 0.0
        %v2377 = vmin.f32 %v2312, 0.0
        %v2378 = vmin.f32 %v2313, 0.0
        %v2379 = vmin.f32 %v2314, 0.0
        %v2380 = vmin.f32 %v2315, 0.0
        %v2381 = vmin.f32 %v2316, 0.0
        %v2382 = vmin.f32 %v2317, 0.0
        %v2383 = vmin.f32 %v2318, 0.0
        %v2384 = vmin.f32 %v2319, 0.0
        %v2385 = vmin.f32 %v2320, 0.0
        %v2386 = vmin.f32 %v2321, 0.0
        %v2387 = vmin.f32 %v2322, 0.0
        %v2388 = vmin.f32 %v2323, 0.0
        %v2389 = vmin.f32 %v2324, 0.0
        %v2390 = vmin.f32 %v2325, 0.0
        %v2391 = vmin.f32 %v2326, 0.0
        %v2392 = vmin.f32 %v2327, 0.0
        %v2393 = vmin.f32 %v2328, 0.0
        %v2394 = vlaneseq
        %v2395 = vshrl.u32 %v2394, 7
        %v2396 = vsub.s32 0, %v2395
        %v2397 = vrot.slane %v2329, %v2396
        %v2398 = vmul.f32 %v2397, %v2362
        %v2399 = vmul.f32 %v2397, %v2363
        %v2400 = vmul.f32 %v2397, %v2364
        %v2401 = vmul.f32 %v2397, %v2365
        %v2402 = vmul.f32 %v2397, %v2366
        %v2403 = vmul.f32 %v2397, %v2367
        %v2404 = vmul.f32 %v2397, %v2368
        %v2405 = vmul.f32 %v2397, %v2369
        %v2406 = vmul.f32 %v2397, %v2370
        %v2407 = vmul.f32 %v2397, %v2371
        %v2408 = vmul.f32 %v2397, %v2372
        %v2409 = vmul.f32 %v2397, %v2373
        %v2410 = vmul.f32 %v2397, %v2374
        %v2411 = vmul.f32 %v2397, %v2375
        %v2412 = vmul.f32 %v2397, %v2376
        %v2413 = vmul.f32 %v2397, %v2377
        %v2414 = vmul.f32 %v2397, %v2378
        %v2415 = vmul.f32 %v2397, %v2379
        %v2416 = vmul.f32 %v2397, %v2380
        %v2417 = vmul.f32 %v2397, %v2381
        %v2418 = vmul.f32 %v2397, %v2382
        %v2419 = vmul.f32 %v2397, %v2383
        %v2420 = vmul.f32 %v2397, %v2384
        %v2421 = vmul.f32 %v2397, %v2385
        %v2422 = vmul.f32 %v2397, %v2386
        %v2423 = vmul.f32 %v2397, %v2387
        %v2424 = vmul.f32 %v2397, %v2388
        %v2425 = vmul.f32 %v2397, %v2389
        %v2426 = vmul.f32 %v2397, %v2390
        %v2427 = vmul.f32 %v2397, %v2391
        %v2428 = vmul.f32 %v2397, %v2392
        %v2429 = vmul.f32 %v2397, %v2393
        %v2430 = vadd.f32 %v2330, %v2398
        %v2431 = vadd.f32 %v2331, %v2399
        %v2432 = vadd.f32 %v2332, %v2400
        %v2433 = vadd.f32 %v2333, %v2401
        %v2434 = vadd.f32 %v2334, %v2402
        %v2435 = vadd.f32 %v2335, %v2403
        %v2436 = vadd.f32 %v2336, %v2404
        %v2437 = vadd.f32 %v2337, %v2405
        %v2438 = vadd.f32 %v2338, %v2406
        %v2439 = vadd.f32 %v2339, %v2407
        %v2440 = vadd.f32 %v2340, %v2408
        %v2441 = vadd.f32 %v2341, %v2409
        %v2442 = vadd.f32 %v2342, %v2410
        %v2443 = vadd.f32 %v2343, %v2411
        %v2444 = vadd.f32 %v2344, %v2412
        %v2445 = vadd.f32 %v2345, %v2413
        %v2446 = vadd.f32 %v2346, %v2414
        %v2447 = vadd.f32 %v2347, %v2415
        %v2448 = vadd.f32 %v2348, %v2416
        %v2449 = vadd.f32 %v2349, %v2417
        %v2450 = vadd.f32 %v2350, %v2418
        %v2451 = vadd.f32 %v2351, %v2419
        %v2452 = vadd.f32 %v2352, %v2420
        %v2453 = vadd.f32 %v2353, %v2421
        %v2454 = vadd.f32 %v2354, %v2422
        %v2455 = vadd.f32 %v2355, %v2423
        %v2456 = vadd.f32 %v2356, %v2424
        %v2457 = vadd.f32 %v2357, %v2425
        %v2458 = vadd.f32 %v2358, %v2426
        %v2459 = vadd.f32 %v2359, %v2427
        %v2460 = vadd.f32 %v2360, %v2428
        %v2461 = vadd.f32 %v2361, %v2429
        %v2462 = vsel %vm863, 0.0, %v2430
        %v2463 = vsel %vm864, 0.0, %v2431
        %v2464 = vsel %vm865, 0.0, %v2432
        %v2465 = vsel %vm866, 0.0, %v2433
        %v2466 = vsel %vm867, 0.0, %v2434
        %v2467 = vsel %vm868, 0.0, %v2435
        %v2468 = vsel %vm869, 0.0, %v2436
        %v2469 = vsel %vm870, 0.0, %v2437
        %v2470 = vsel %vm871, 0.0, %v2438
        %v2471 = vsel %vm872, 0.0, %v2439
        %v2472 = vsel %vm873, 0.0, %v2440
        %v2473 = vsel %vm874, 0.0, %v2441
        %v2474 = vsel %vm875, 0.0, %v2442
        %v2475 = vsel %vm876, 0.0, %v2443
        %v2476 = vsel %vm877, 0.0, %v2444
        %v2477 = vsel %vm878, 0.0, %v2445
        %v2478 = vsel %vm879, 0.0, %v2446
        %v2479 = vsel %vm880, 0.0, %v2447
        %v2480 = vsel %vm881, 0.0, %v2448
        %v2481 = vsel %vm882, 0.0, %v2449
        %v2482 = vsel %vm883, 0.0, %v2450
        %v2483 = vsel %vm884, 0.0, %v2451
        %v2484 = vsel %vm885, 0.0, %v2452
        %v2485 = vsel %vm886, 0.0, %v2453
        %v2486 = vsel %vm887, 0.0, %v2454
        %v2487 = vsel %vm888, 0.0, %v2455
        %v2488 = vsel %vm889, 0.0, %v2456
        %v2489 = vsel %vm890, 0.0, %v2457
        %v2490 = vsel %vm891, 0.0, %v2458
        %v2491 = vsel %vm892, 0.0, %v2459
        %v2492 = vsel %vm893, 0.0, %v2460
        %v2493 = vsel %vm894, 0.0, %v2461
        %v2494 = vsel %vm991, 0.0, %v2430
        %v2495 = vsel %vm992, 0.0, %v2431
        %v2496 = vsel %vm993, 0.0, %v2432
        %v2497 = vsel %vm994, 0.0, %v2433
        %v2498 = vsel %vm995, 0.0, %v2434
        %v2499 = vsel %vm996, 0.0, %v2435
        %v2500 = vsel %vm997, 0.0, %v2436
        %v2501 = vsel %vm998, 0.0, %v2437
        %v2502 = vsel %vm999, 0.0, %v2438
        %v2503 = vsel %vm1000, 0.0, %v2439
        %v2504 = vsel %vm1001, 0.0, %v2440
        %v2505 = vsel %vm1002, 0.0, %v2441
        %v2506 = vsel %vm1003, 0.0, %v2442
        %v2507 = vsel %vm1004, 0.0, %v2443
        %v2508 = vsel %vm1005, 0.0, %v2444
        %v2509 = vsel %vm1006, 0.0, %v2445
        %v2510 = vsel %vm1007, 0.0, %v2446
        %v2511 = vsel %vm1008, 0.0, %v2447
        %v2512 = vsel %vm1009, 0.0, %v2448
        %v2513 = vsel %vm1010, 0.0, %v2449
        %v2514 = vsel %vm1011, 0.0, %v2450
        %v2515 = vsel %vm1012, 0.0, %v2451
        %v2516 = vsel %vm1013, 0.0, %v2452
        %v2517 = vsel %vm1014, 0.0, %v2453
        %v2518 = vsel %vm1015, 0.0, %v2454
        %v2519 = vsel %vm1016, 0.0, %v2455
        %v2520 = vsel %vm1017, 0.0, %v2456
        %v2521 = vsel %vm1018, 0.0, %v2457
        %v2522 = vsel %vm1019, 0.0, %v2458
        %v2523 = vsel %vm1020, 0.0, %v2459
        %v2524 = vsel %vm1021, 0.0, %v2460
        %v2525 = vsel %vm1022, 0.0, %v2461
        %v2558 = vrot.slane %v2462, 7
        %v2559 = vrot.slane %v2463, 7
        %v2560 = vsel %vm1087, %v2558, %v2559
        %v2561 = vrot.slane %v2464, 7
        %v2562 = vsel %vm1087, %v2559, %v2561
        %v2563 = vrot.slane %v2465, 7
        %v2564 = vsel %vm1087, %v2561, %v2563
        %v2565 = vrot.slane %v2466, 7
        %v2566 = vsel %vm1087, %v2563, %v2565
        %v2567 = vrot.slane %v2467, 7
        %v2568 = vsel %vm1087, %v2565, %v2567
        %v2569 = vrot.slane %v2468, 7
        %v2570 = vsel %vm1087, %v2567, %v2569
        %v2571 = vrot.slane %v2469, 7
        %v2572 = vsel %vm1087, %v2569, %v2571
        %v2573 = vrot.slane %v2470, 7
        %v2574 = vsel %vm1087, %v2571, %v2573
        %v2575 = vrot.slane %v2471, 7
        %v2576 = vsel %vm1087, %v2573, %v2575
        %v2577 = vrot.slane %v2472, 7
        %v2578 = vsel %vm1087, %v2575, %v2577
        %v2579 = vrot.slane %v2473, 7
        %v2580 = vsel %vm1087, %v2577, %v2579
        %v2581 = vrot.slane %v2474, 7
        %v2582 = vsel %vm1087, %v2579, %v2581
        %v2583 = vrot.slane %v2475, 7
        %v2584 = vsel %vm1087, %v2581, %v2583
        %v2585 = vrot.slane %v2476, 7
        %v2586 = vsel %vm1087, %v2583, %v2585
        %v2587 = vrot.slane %v2477, 7
        %v2588 = vsel %vm1087, %v2585, %v2587
        %v2589 = vrot.slane %v2478, 7
        %v2590 = vsel %vm1087, %v2587, %v2589
        %v2591 = vrot.slane %v2479, 7
        %v2592 = vsel %vm1087, %v2589, %v2591
        %v2593 = vrot.slane %v2480, 7
        %v2594 = vsel %vm1087, %v2591, %v2593
        %v2595 = vrot.slane %v2481, 7
        %v2596 = vsel %vm1087, %v2593, %v2595
        %v2597 = vrot.slane %v2482, 7
        %v2598 = vsel %vm1087, %v2595, %v2597
        %v2599 = vrot.slane %v2483, 7
        %v2600 = vsel %vm1087, %v2597, %v2599
        %v2601 = vrot.slane %v2484, 7
        %v2602 = vsel %vm1087, %v2599, %v2601
        %v2603 = vrot.slane %v2485, 7
        %v2604 = vsel %vm1087, %v2601, %v2603
        %v2605 = vrot.slane %v2486, 7
        %v2606 = vsel %vm1087, %v2603, %v2605
        %v2607 = vrot.slane %v2487, 7
        %v2608 = vsel %vm1087, %v2605, %v2607
        %v2609 = vrot.slane %v2488, 7
        %v2610 = vsel %vm1087, %v2607, %v2609
        %v2611 = vrot.slane %v2489, 7
        %v2612 = vsel %vm1087, %v2609, %v2611
        %v2613 = vrot.slane %v2490, 7
        %v2614 = vsel %vm1087, %v2611, %v2613
        %v2615 = vrot.slane %v2491, 7
        %v2616 = vsel %vm1087, %v2613, %v2615
        %v2617 = vrot.slane %v2492, 7
        %v2618 = vsel %vm1087, %v2615, %v2617
        %v2619 = vrot.slane %v2493, 7
        %v2620 = vsel %vm1087, %v2617, %v2619
        %v2654 = vsel %vm1087, 0.0, %v2558
        %v2655 = vsel %vm1087, %v2619, 0.0
        %v2688 = vrot.slane %v2494, 1
        %v2689 = vrot.slane %v2495, 1
        %v2690 = vsel %vm1218, %v2688, %v2689
        %v2691 = vrot.slane %v2496, 1
        %v2692 = vsel %vm1218, %v2689, %v2691
        %v2693 = vrot.slane %v2497, 1
        %v2694 = vsel %vm1218, %v2691, %v2693
        %v2695 = vrot.slane %v2498, 1
        %v2696 = vsel %vm1218, %v2693, %v2695
        %v2697 = vrot.slane %v2499, 1
        %v2698 = vsel %vm1218, %v2695, %v2697
        %v2699 = vrot.slane %v2500, 1
        %v2700 = vsel %vm1218, %v2697, %v2699
        %v2701 = vrot.slane %v2501, 1
        %v2702 = vsel %vm1218, %v2699, %v2701
        %v2703 = vrot.slane %v2502, 1
        %v2704 = vsel %vm1218, %v2701, %v2703
        %v2705 = vrot.slane %v2503, 1
        %v2706 = vsel %vm1218, %v2703, %v2705
        %v2707 = vrot.slane %v2504, 1
        %v2708 = vsel %vm1218, %v2705, %v2707
        %v2709 = vrot.slane %v2505, 1
        %v2710 = vsel %vm1218, %v2707, %v2709
        %v2711 = vrot.slane %v2506, 1
        %v2712 = vsel %vm1218, %v2709, %v2711
        %v2713 = vrot.slane %v2507, 1
        %v2714 = vsel %vm1218, %v2711, %v2713
        %v2715 = vrot.slane %v2508, 1
        %v2716 = vsel %vm1218, %v2713, %v2715
        %v2717 = vrot.slane %v2509, 1
        %v2718 = vsel %vm1218, %v2715, %v2717
        %v2719 = vrot.slane %v2510, 1
        %v2720 = vsel %vm1218, %v2717, %v2719
        %v2721 = vrot.slane %v2511, 1
        %v2722 = vsel %vm1218, %v2719, %v2721
        %v2723 = vrot.slane %v2512, 1
        %v2724 = vsel %vm1218, %v2721, %v2723
        %v2725 = vrot.slane %v2513, 1
        %v2726 = vsel %vm1218, %v2723, %v2725
        %v2727 = vrot.slane %v2514, 1
        %v2728 = vsel %vm1218, %v2725, %v2727
        %v2729 = vrot.slane %v2515, 1
        %v2730 = vsel %vm1218, %v2727, %v2729
        %v2731 = vrot.slane %v2516, 1
        %v2732 = vsel %vm1218, %v2729, %v2731
        %v2733 = vrot.slane %v2517, 1
        %v2734 = vsel %vm1218, %v2731, %v2733
        %v2735 = vrot.slane %v2518, 1
        %v2736 = vsel %vm1218, %v2733, %v2735
        %v2737 = vrot.slane %v2519, 1
        %v2738 = vsel %vm1218, %v2735, %v2737
        %v2739 = vrot.slane %v2520, 1
        %v2740 = vsel %vm1218, %v2737, %v2739
        %v2741 = vrot.slane %v2521, 1
        %v2742 = vsel %vm1218, %v2739, %v2741
        %v2743 = vrot.slane %v2522, 1
        %v2744 = vsel %vm1218, %v2741, %v2743
        %v2745 = vrot.slane %v2523, 1
        %v2746 = vsel %vm1218, %v2743, %v2745
        %v2747 = vrot.slane %v2524, 1
        %v2748 = vsel %vm1218, %v2745, %v2747
        %v2749 = vrot.slane %v2525, 1
        %v2750 = vsel %vm1218, %v2747, %v2749
        %v2784 = vsel %vm1218, 0.0, %v2688
        %v2785 = vsel %vm1218, %v2749, 0.0
        %v2786 = vpack.c.bf16 0.0, 0.0
        %v2787 = vpack.c.bf16 %v2784, 0.0
        %v2788 = vpack.c.bf16 %v2560, %v2654
        %v2789 = vpack.c.bf16 %v2431, %v2430
        %v2790 = vpack.c.bf16 %v2692, %v2690
        %v2791 = vpack.c.bf16 %v2564, %v2562
        %v2792 = vpack.c.bf16 %v2433, %v2432
        %v2793 = vpack.c.bf16 %v2696, %v2694
        %v2794 = vpack.c.bf16 %v2568, %v2566
        %v2795 = vpack.c.bf16 %v2435, %v2434
        %v2796 = vpack.c.bf16 %v2700, %v2698
        %v2797 = vpack.c.bf16 %v2572, %v2570
        %v2798 = vpack.c.bf16 %v2437, %v2436
        %v2799 = vpack.c.bf16 %v2704, %v2702
        %v2800 = vpack.c.bf16 %v2576, %v2574
        %v2801 = vpack.c.bf16 %v2439, %v2438
        %v2802 = vpack.c.bf16 %v2708, %v2706
        %v2803 = vpack.c.bf16 %v2580, %v2578
        %v2804 = vpack.c.bf16 %v2441, %v2440
        %v2805 = vpack.c.bf16 %v2712, %v2710
        %v2806 = vpack.c.bf16 %v2584, %v2582
        %v2807 = vpack.c.bf16 %v2443, %v2442
        %v2808 = vpack.c.bf16 %v2716, %v2714
        %v2809 = vpack.c.bf16 %v2588, %v2586
        %v2810 = vpack.c.bf16 %v2445, %v2444
        %v2811 = vpack.c.bf16 %v2720, %v2718
        %v2812 = vpack.c.bf16 %v2592, %v2590
        %v2813 = vpack.c.bf16 %v2447, %v2446
        %v2814 = vpack.c.bf16 %v2724, %v2722
        %v2815 = vpack.c.bf16 %v2596, %v2594
        %v2816 = vpack.c.bf16 %v2449, %v2448
        %v2817 = vpack.c.bf16 %v2728, %v2726
        %v2818 = vpack.c.bf16 %v2600, %v2598
        %v2819 = vpack.c.bf16 %v2451, %v2450
        %v2820 = vpack.c.bf16 %v2732, %v2730
        %v2821 = vpack.c.bf16 %v2604, %v2602
        %v2822 = vpack.c.bf16 %v2453, %v2452
        %v2823 = vpack.c.bf16 %v2736, %v2734
        %v2824 = vpack.c.bf16 %v2608, %v2606
        %v2825 = vpack.c.bf16 %v2455, %v2454
        %v2826 = vpack.c.bf16 %v2740, %v2738
        %v2827 = vpack.c.bf16 %v2612, %v2610
        %v2828 = vpack.c.bf16 %v2457, %v2456
        %v2829 = vpack.c.bf16 %v2744, %v2742
        %v2830 = vpack.c.bf16 %v2616, %v2614
        %v2831 = vpack.c.bf16 %v2459, %v2458
        %v2832 = vpack.c.bf16 %v2748, %v2746
        %v2833 = vpack.c.bf16 %v2620, %v2618
        %v2834 = vpack.c.bf16 %v2461, %v2460
        %v2835 = vpack.c.bf16 %v2785, %v2750
        %v2836 = vpack.c.bf16 0.0, %v2655
        %v2837 = vld [vmem:[%s2] sm:$0xf]
        %v2838 = vld [vmem:[%s2 + $0x4] sm:$0xf]
        %v2839 = vld [vmem:[%s2 + $0x8] sm:$0xf]
        %v2840 = vld [vmem:[%s2 + $0xc] sm:$0xf]
        %v2841 = vld [vmem:[%s2 + $0x10] sm:$0xf]
        %v2842 = vld [vmem:[%s2 + $0x14] sm:$0xf]
        %v2843 = vld [vmem:[%s2 + $0x18] sm:$0xf]
        %v2844 = vld [vmem:[%s2 + $0x1c] sm:$0xf]
        %v2845 = vld [vmem:[%s2 + $0x20] sm:$0xf]
        %v2846 = vld [vmem:[%s2 + $0x24] sm:$0xf]
        %v2847 = vld [vmem:[%s2 + $0x28] sm:$0xf]
        %v2848 = vld [vmem:[%s2 + $0x2c] sm:$0xf]
        %v2849 = vld [vmem:[%s2 + $0x30] sm:$0xf]
        %v2850 = vld [vmem:[%s2 + $0x34] sm:$0xf]
        %v2851 = vld [vmem:[%s2 + $0x38] sm:$0xf]
        %v2852 = vld [vmem:[%s2 + $0x3c] sm:$0xf]
        %v2853 = vld [vmem:[%s2 + $0x40] sm:$0xf]
        %v2854 = vld [vmem:[%s2 + $0x44] sm:$0xf]
        %v2855 = vld [vmem:[%s2 + $0x48] sm:$0xf]
        %v2856 = vld [vmem:[%s2 + $0x4c] sm:$0xf]
        %v2857 = vld [vmem:[%s2 + $0x50] sm:$0xf]
        %v2858 = vld [vmem:[%s2 + $0x54] sm:$0xf]
        %v2859 = vld [vmem:[%s2 + $0x58] sm:$0xf]
        %v2860 = vld [vmem:[%s2 + $0x5c] sm:$0xf]
        %v2861 = vld [vmem:[%s2 + $0x60] sm:$0xf]
        %v2862 = vld [vmem:[%s2 + $0x64] sm:$0xf]
        %v2863 = vld [vmem:[%s2 + $0x68] sm:$0xf]
        %v2864 = vld [vmem:[%s2 + $0x6c] sm:$0xf]
        %v2865 = vld [vmem:[%s2 + $0x70] sm:$0xf]
        %v2866 = vld [vmem:[%s2 + $0x74] sm:$0xf]
        %v2867 = vld [vmem:[%s2 + $0x78] sm:$0xf]
        %v2868 = vld [vmem:[%s2 + $0x7c] sm:$0xf]
        %v2869 = vld [vmem:[%s2 + $0x80] sm:$0xf]
        %v2870 = vld [vmem:[%s2 + $0x84] sm:$0xf]
        %v2871 = vld [vmem:[%s2 + $0x88] sm:$0xf]
        %v2872 = vld [vmem:[%s2 + $0x8c] sm:$0xf]
        %v2873 = vld [vmem:[%s2 + $0x90] sm:$0xf]
        %v2874 = vld [vmem:[%s2 + $0x94] sm:$0xf]
        %v2875 = vld [vmem:[%s2 + $0x98] sm:$0xf]
        %v2876 = vld [vmem:[%s2 + $0x9c] sm:$0xf]
        %v2877 = vld [vmem:[%s2 + $0xa0] sm:$0xf]
        %v2878 = vld [vmem:[%s2 + $0xa4] sm:$0xf]
        %v2879 = vld [vmem:[%s2 + $0xa8] sm:$0xf]
        %v2880 = vld [vmem:[%s2 + $0xac] sm:$0xf]
        %v2881 = vld [vmem:[%s2 + $0xb0] sm:$0xf]
        %v2882 = vld [vmem:[%s2 + $0xb4] sm:$0xf]
        %v2883 = vld [vmem:[%s2 + $0xb8] sm:$0xf]
        %v2884 = vld [vmem:[%s2 + $0xbc] sm:$0xf]
        %s2885 = scalar_lea.vmem %s2, 192
        %v2886 = vld [vmem:[%s2885] sm:$0xf]
        %v2887 = vld [vmem:[%s2885 + $0x4] sm:$0xf]
        %v2888 = vld [vmem:[%s2885 + $0x8] sm:$0xf]
        %v2889 = vld [vmem:[%s2885 + $0xc] sm:$0xf]
        %v2890 = vld [vmem:[%s2885 + $0x10] sm:$0xf]
        %v2891 = vld [vmem:[%s2885 + $0x14] sm:$0xf]
        %v2892 = vld [vmem:[%s2885 + $0x18] sm:$0xf]
        %v2893 = vld [vmem:[%s2885 + $0x1c] sm:$0xf]
        %v2894 = vld [vmem:[%s2885 + $0x20] sm:$0xf]
        %v2895 = vld [vmem:[%s2885 + $0x24] sm:$0xf]
        %v2896 = vld [vmem:[%s2885 + $0x28] sm:$0xf]
        %v2897 = vld [vmem:[%s2885 + $0x2c] sm:$0xf]
        %v2898 = vld [vmem:[%s2885 + $0x30] sm:$0xf]
        %v2899 = vld [vmem:[%s2885 + $0x34] sm:$0xf]
        %v2900 = vld [vmem:[%s2885 + $0x38] sm:$0xf]
        %v2901 = vld [vmem:[%s2885 + $0x3c] sm:$0xf]
        %v2902 = vld [vmem:[%s2885 + $0x40] sm:$0xf]
        %v2903 = vld [vmem:[%s2885 + $0x44] sm:$0xf]
        %v2904 = vld [vmem:[%s2885 + $0x48] sm:$0xf]
        %v2905 = vld [vmem:[%s2885 + $0x4c] sm:$0xf]
        %v2906 = vld [vmem:[%s2885 + $0x50] sm:$0xf]
        %v2907 = vld [vmem:[%s2885 + $0x54] sm:$0xf]
        %v2908 = vld [vmem:[%s2885 + $0x58] sm:$0xf]
        %v2909 = vld [vmem:[%s2885 + $0x5c] sm:$0xf]
        %v2910 = vld [vmem:[%s2885 + $0x60] sm:$0xf]
        %v2911 = vld [vmem:[%s2885 + $0x64] sm:$0xf]
        %v2912 = vld [vmem:[%s2885 + $0x68] sm:$0xf]
        %v2913 = vld [vmem:[%s2885 + $0x6c] sm:$0xf]
        %v2914 = vld [vmem:[%s2885 + $0x70] sm:$0xf]
        %v2915 = vld [vmem:[%s2885 + $0x74] sm:$0xf]
        %v2916 = vld [vmem:[%s2885 + $0x78] sm:$0xf]
        %v2917 = vld [vmem:[%s2885 + $0x7c] sm:$0xf]
        %v2918 = vld [vmem:[%s2885 + $0x80] sm:$0xf]
        %v2919 = vld [vmem:[%s2885 + $0x84] sm:$0xf]
        %v2920 = vld [vmem:[%s2885 + $0x88] sm:$0xf]
        %v2921 = vld [vmem:[%s2885 + $0x8c] sm:$0xf]
        %v2922 = vld [vmem:[%s2885 + $0x90] sm:$0xf]
        %v2923 = vld [vmem:[%s2885 + $0x94] sm:$0xf]
        %v2924 = vld [vmem:[%s2885 + $0x98] sm:$0xf]
        %v2925 = vld [vmem:[%s2885 + $0x9c] sm:$0xf]
        %v2926 = vld [vmem:[%s2885 + $0xa0] sm:$0xf]
        %v2927 = vld [vmem:[%s2885 + $0xa4] sm:$0xf]
        %v2928 = vld [vmem:[%s2885 + $0xa8] sm:$0xf]
        %v2929 = vld [vmem:[%s2885 + $0xac] sm:$0xf]
        %v2930 = vld [vmem:[%s2885 + $0xb0] sm:$0xf]
        %v2931 = vld [vmem:[%s2885 + $0xb4] sm:$0xf]
        %v2932 = vld [vmem:[%s2885 + $0xb8] sm:$0xf]
        %v2933 = vld [vmem:[%s2885 + $0xbc] sm:$0xf]
        %v2982 = vunpack.c.l.b16 %v2886
        %v2983 = vunpack.c.l.b16 %v2887
        %v2984 = vunpack.c.l.b16 %v2888
        %v2985 = vunpack.c.l.b16 %v2889
        %v2986 = vunpack.c.l.b16 %v2890
        %v2987 = vunpack.c.l.b16 %v2891
        %v2988 = vunpack.c.l.b16 %v2892
        %v2989 = vunpack.c.l.b16 %v2893
        %v2990 = vunpack.c.l.b16 %v2894
        %v2991 = vunpack.c.l.b16 %v2895
        %v2992 = vunpack.c.l.b16 %v2896
        %v2993 = vunpack.c.l.b16 %v2897
        %v2994 = vunpack.c.l.b16 %v2898
        %v2995 = vunpack.c.l.b16 %v2899
        %v2996 = vunpack.c.l.b16 %v2900
        %v2997 = vunpack.c.l.b16 %v2901
        %v2998 = vunpack.c.l.b16 %v2902
        %v2999 = vunpack.c.l.b16 %v2903
        %v3000 = vunpack.c.l.b16 %v2904
        %v3001 = vunpack.c.l.b16 %v2905
        %v3002 = vunpack.c.l.b16 %v2906
        %v3003 = vunpack.c.l.b16 %v2907
        %v3004 = vunpack.c.l.b16 %v2908
        %v3005 = vunpack.c.l.b16 %v2909
        %v3006 = vunpack.c.l.b16 %v2910
        %v3007 = vunpack.c.l.b16 %v2911
        %v3008 = vunpack.c.l.b16 %v2912
        %v3009 = vunpack.c.l.b16 %v2913
        %v3010 = vunpack.c.l.b16 %v2914
        %v3011 = vunpack.c.l.b16 %v2915
        %v3012 = vunpack.c.l.b16 %v2916
        %v3013 = vunpack.c.l.b16 %v2917
        %v3014 = vunpack.c.l.b16 %v2918
        %v3015 = vunpack.c.l.b16 %v2919
        %v3016 = vunpack.c.l.b16 %v2920
        %v3017 = vunpack.c.l.b16 %v2921
        %v3018 = vunpack.c.l.b16 %v2922
        %v3019 = vunpack.c.l.b16 %v2923
        %v3020 = vunpack.c.l.b16 %v2924
        %v3021 = vunpack.c.l.b16 %v2925
        %v3022 = vunpack.c.l.b16 %v2926
        %v3023 = vunpack.c.l.b16 %v2927
        %v3024 = vunpack.c.l.b16 %v2928
        %v3025 = vunpack.c.l.b16 %v2929
        %v3026 = vunpack.c.l.b16 %v2930
        %v3027 = vunpack.c.l.b16 %v2931
        %v3028 = vunpack.c.l.b16 %v2932
        %v3029 = vunpack.c.l.b16 %v2933
        %v3030 = vpack.c.b16 %v2983, %v2982
        %v3031 = vpack.c.b16 %v2985, %v2984
        %v3032 = vpack.c.b16 %v2987, %v2986
        %v3033 = vpack.c.b16 %v2989, %v2988
        %v3034 = vpack.c.b16 %v2991, %v2990
        %v3035 = vpack.c.b16 %v2993, %v2992
        %v3036 = vpack.c.b16 %v2995, %v2994
        %v3037 = vpack.c.b16 %v2997, %v2996
        %v3038 = vpack.c.b16 %v2999, %v2998
        %v3039 = vpack.c.b16 %v3001, %v3000
        %v3040 = vpack.c.b16 %v3003, %v3002
        %v3041 = vpack.c.b16 %v3005, %v3004
        %v3042 = vpack.c.b16 %v3007, %v3006
        %v3043 = vpack.c.b16 %v3009, %v3008
        %v3044 = vpack.c.b16 %v3011, %v3010
        %v3045 = vpack.c.b16 %v3013, %v3012
        %v3046 = vpack.c.b16 %v3015, %v3014
        %v3047 = vpack.c.b16 %v3017, %v3016
        %v3048 = vpack.c.b16 %v3019, %v3018
        %v3049 = vpack.c.b16 %v3021, %v3020
        %v3050 = vpack.c.b16 %v3023, %v3022
        %v3051 = vpack.c.b16 %v3025, %v3024
        %v3052 = vpack.c.b16 %v3027, %v3026
        %v3053 = vpack.c.b16 %v3029, %v3028
        %3078 = vmatprep.subr.bf16.mxu0 0
        %3079 = vmatpush1.bf16.msra.mxu0 %v3030
        %3080 = vmatprep.subr.bf16.mxu0 0
        %3081 = vmatpush1.bf16.msra.mxu0 %v3031
        %3082 = vmatprep.subr.bf16.mxu0 0
        %3083 = vmatpush1.bf16.msra.mxu0 %v3032
        %3084 = vmatprep.subr.bf16.mxu0 0
        %3085 = vmatpush1.bf16.msra.mxu0 %v3033
        %3086 = vmatprep.subr.bf16.mxu0 0
        %3087 = vmatpush1.bf16.msra.mxu0 %v3034
        %3088 = vmatprep.subr.bf16.mxu0 0
        %3089 = vmatpush1.bf16.msra.mxu0 %v3035
        %3090 = vmatprep.subr.bf16.mxu0 0
        %3091 = vmatpush1.bf16.msra.mxu0 %v3036
        %3092 = vmatprep.subr.bf16.mxu0 0
        %3093 = vmatpush1.bf16.msra.mxu0 %v3037
        %3094 = vmatprep.subr.bf16.mxu0 0
        %3095 = vmatpush1.bf16.msra.mxu0 %v3038
        %3096 = vmatprep.subr.bf16.mxu0 0
        %3097 = vmatpush1.bf16.msra.mxu0 %v3039
        %3098 = vmatprep.subr.bf16.mxu0 0
        %3099 = vmatpush1.bf16.msra.mxu0 %v3040
        %3100 = vmatprep.subr.bf16.mxu0 0
        %3101 = vmatpush1.bf16.msra.mxu0 %v3041
        %3102 = vmatprep.subr.bf16.mxu0 0
        %3103 = vmatpush1.bf16.msra.mxu0 %v3042
        %3104 = vmatprep.subr.bf16.mxu0 0
        %3105 = vmatpush1.bf16.msra.mxu0 %v3043
        %3106 = vmatprep.subr.bf16.mxu0 0
        %3107 = vmatpush1.bf16.msra.mxu0 %v3044
        %3108 = vmatprep.subr.bf16.mxu0 0
        %3109 = vmatpush1.bf16.msra.mxu0 %v3045
        %3110 = vmatprep.mubr.bf16.mxu0 %v2789
        %3111 = vmatmul.mubr.bf16.gmra.mrb[0].mxu0 %v2788
        %v3112 = vpop.f32.mrb[0].mxu0
        %v3113 = vadd.f32 0.0, %v3112
        %v3114 = vpop.f32.mrb[0].mxu0
        %v3115 = vpop.f32.mrb[0].mxu0
        %v3116 = vadd.f32 0.0, %v3115
        %v3117 = vpop.f32.mrb[0].mxu0
        %3118 = vmatprep.mubr.bf16.mxu0 %v2792
        %3119 = vmatmul.mubr.bf16.gmra.mrb[0].mxu0 %v2791
        %v3120 = vpop.f32.mrb[0].mxu0
        %v3121 = vadd.f32 0.0, %v3120
        %v3122 = vpop.f32.mrb[0].mxu0
        %v3123 = vpop.f32.mrb[0].mxu0
        %v3124 = vadd.f32 0.0, %v3123
        %v3125 = vpop.f32.mrb[0].mxu0
        %3126 = vmatprep.mubr.bf16.mxu0 %v2795
        %3127 = vmatmul.mubr.bf16.gmra.mrb[0].mxu0 %v2794
        %v3128 = vpop.f32.mrb[0].mxu0
        %v3129 = vadd.f32 0.0, %v3128
        %v3130 = vpop.f32.mrb[0].mxu0
        %v3131 = vpop.f32.mrb[0].mxu0
        %v3132 = vadd.f32 0.0, %v3131
        %v3133 = vpop.f32.mrb[0].mxu0
        %3134 = vmatprep.mubr.bf16.mxu0 %v2798
        %3135 = vmatmul.mubr.bf16.gmra.mrb[0].mxu0 %v2797
        %v3136 = vpop.f32.mrb[0].mxu0
        %v3137 = vadd.f32 0.0, %v3136
        %v3138 = vpop.f32.mrb[0].mxu0
        %v3139 = vpop.f32.mrb[0].mxu0
        %v3140 = vadd.f32 0.0, %v3139
        %v3141 = vpop.f32.mrb[0].mxu0
        %3142 = vmatprep.mubr.bf16.mxu0 %v2801
        %3143 = vmatmul.mubr.bf16.gmra.mrb[0].mxu0 %v2800
        %v3144 = vpop.f32.mrb[0].mxu0
        %v3145 = vadd.f32 0.0, %v3144
        %v3146 = vpop.f32.mrb[0].mxu0
        %v3147 = vpop.f32.mrb[0].mxu0
        %v3148 = vadd.f32 0.0, %v3147
        %v3149 = vpop.f32.mrb[0].mxu0
        %3150 = vmatprep.mubr.bf16.mxu0 %v2804
        %3151 = vmatmul.mubr.bf16.gmra.mrb[0].mxu0 %v2803
        %v3152 = vpop.f32.mrb[0].mxu0
        %v3153 = vadd.f32 0.0, %v3152
        %v3154 = vpop.f32.mrb[0].mxu0
        %v3155 = vpop.f32.mrb[0].mxu0
        %v3156 = vadd.f32 0.0, %v3155
        %v3157 = vpop.f32.mrb[0].mxu0
        %3158 = vmatprep.mubr.bf16.mxu0 %v2807
        %3159 = vmatmul.mubr.bf16.gmra.mrb[0].mxu0 %v2806
        %v3160 = vpop.f32.mrb[0].mxu0
        %v3161 = vadd.f32 0.0, %v3160
        %v3162 = vpop.f32.mrb[0].mxu0
        %v3163 = vpop.f32.mrb[0].mxu0
        %v3164 = vadd.f32 0.0, %v3163
        %v3165 = vpop.f32.mrb[0].mxu0
        %3166 = vmatprep.mubr.bf16.mxu0 %v2810
        %3167 = vmatmul.mubr.bf16.gmra.mrb[0].mxu0 %v2809
        %v3168 = vpop.f32.mrb[0].mxu0
        %v3169 = vadd.f32 0.0, %v3168
        %v3170 = vpop.f32.mrb[0].mxu0
        %v3171 = vpop.f32.mrb[0].mxu0
        %v3172 = vadd.f32 0.0, %v3171
        %v3173 = vpop.f32.mrb[0].mxu0
        %3174 = vmatprep.mubr.bf16.mxu0 %v2813
        %3175 = vmatmul.mubr.bf16.gmra.mrb[0].mxu0 %v2812
        %v3176 = vpop.f32.mrb[0].mxu0
        %v3177 = vadd.f32 0.0, %v3176
        %v3178 = vpop.f32.mrb[0].mxu0
        %v3179 = vpop.f32.mrb[0].mxu0
        %v3180 = vadd.f32 0.0, %v3179
        %v3181 = vpop.f32.mrb[0].mxu0
        %3182 = vmatprep.mubr.bf16.mxu0 %v2816
        %3183 = vmatmul.mubr.bf16.gmra.mrb[0].mxu0 %v2815
        %v3184 = vpop.f32.mrb[0].mxu0
        %v3185 = vadd.f32 0.0, %v3184
        %v3186 = vpop.f32.mrb[0].mxu0
        %v3187 = vpop.f32.mrb[0].mxu0
        %v3188 = vadd.f32 0.0, %v3187
        %v3189 = vpop.f32.mrb[0].mxu0
        %3190 = vmatprep.mubr.bf16.mxu0 %v2819
        %3191 = vmatmul.mubr.bf16.gmra.mrb[0].mxu0 %v2818
        %v3192 = vpop.f32.mrb[0].mxu0
        %v3193 = vadd.f32 0.0, %v3192
        %v3194 = vpop.f32.mrb[0].mxu0
        %v3195 = vpop.f32.mrb[0].mxu0
        %v3196 = vadd.f32 0.0, %v3195
        %v3197 = vpop.f32.mrb[0].mxu0
        %3198 = vmatprep.mubr.bf16.mxu0 %v2822
        %3199 = vmatmul.mubr.bf16.gmra.mrb[0].mxu0 %v2821
        %v3200 = vpop.f32.mrb[0].mxu0
        %v3201 = vadd.f32 0.0, %v3200
        %v3202 = vpop.f32.mrb[0].mxu0
        %v3203 = vpop.f32.mrb[0].mxu0
        %v3204 = vadd.f32 0.0, %v3203
        %v3205 = vpop.f32.mrb[0].mxu0
        %3206 = vmatprep.mubr.bf16.mxu0 %v2825
        %3207 = vmatmul.mubr.bf16.gmra.mrb[0].mxu0 %v2824
        %v3208 = vpop.f32.mrb[0].mxu0
        %v3209 = vadd.f32 0.0, %v3208
        %v3210 = vpop.f32.mrb[0].mxu0
        %v3211 = vpop.f32.mrb[0].mxu0
        %v3212 = vadd.f32 0.0, %v3211
        %v3213 = vpop.f32.mrb[0].mxu0
        %3214 = vmatprep.mubr.bf16.mxu0 %v2828
        %3215 = vmatmul.mubr.bf16.gmra.mrb[0].mxu0 %v2827
        %v3216 = vpop.f32.mrb[0].mxu0
        %v3217 = vadd.f32 0.0, %v3216
        %v3218 = vpop.f32.mrb[0].mxu0
        %v3219 = vpop.f32.mrb[0].mxu0
        %v3220 = vadd.f32 0.0, %v3219
        %v3221 = vpop.f32.mrb[0].mxu0
        %3222 = vmatprep.mubr.bf16.mxu0 %v2831
        %3223 = vmatmul.mubr.bf16.gmra.mrb[0].mxu0 %v2830
        %v3224 = vpop.f32.mrb[0].mxu0
        %v3225 = vadd.f32 0.0, %v3224
        %v3226 = vpop.f32.mrb[0].mxu0
        %v3227 = vpop.f32.mrb[0].mxu0
        %v3228 = vadd.f32 0.0, %v3227
        %v3229 = vpop.f32.mrb[0].mxu0
        %3230 = vmatprep.mubr.bf16.mxu0 %v2834
        %3231 = vmatmul.mubr.bf16.gmra.mrb[0].mxu0 %v2833
        %v3232 = vpop.f32.mrb[0].mxu0
        %v3233 = vadd.f32 0.0, %v3232
        %v3234 = vpop.f32.mrb[0].mxu0
        %v3235 = vpop.f32.mrb[0].mxu0
        %v3236 = vadd.f32 0.0, %v3235
        %v3237 = vpop.f32.mrb[0].mxu0
        %3238 = vdwg.mxu0
        %3239 = vmatprep.subr.bf16.mxu0 0
        %3240 = vmatpush1.bf16.msra.mxu0 %v3046
        %3241 = vmatprep.subr.bf16.mxu0 0
        %3242 = vmatpush1.bf16.msra.mxu0 %v3047
        %3243 = vmatprep.subr.bf16.mxu0 0
        %3244 = vmatpush1.bf16.msra.mxu0 %v3048
        %3245 = vmatprep.subr.bf16.mxu0 0
        %3246 = vmatpush1.bf16.msra.mxu0 %v3049
        %3247 = vmatprep.subr.bf16.mxu0 0
        %3248 = vmatpush1.bf16.msra.mxu0 %v3050
        %3249 = vmatprep.subr.bf16.mxu0 0
        %3250 = vmatpush1.bf16.msra.mxu0 %v3051
        %3251 = vmatprep.subr.bf16.mxu0 0
        %3252 = vmatpush1.bf16.msra.mxu0 %v3052
        %3253 = vmatprep.subr.bf16.mxu0 0
        %3254 = vmatpush1.bf16.msra.mxu0 %v3053
        %3255 = vmatprep.subr.bf16.mxu0 0
        %3256 = vmatpush1.bf16.msra.mxu0 0
        %3257 = vmatprep.subr.bf16.mxu0 0
        %3258 = vmatpush1.bf16.msra.mxu0 0
        %3259 = vmatprep.subr.bf16.mxu0 0
        %3260 = vmatpush1.bf16.msra.mxu0 0
        %3261 = vmatprep.subr.bf16.mxu0 0
        %3262 = vmatpush1.bf16.msra.mxu0 0
        %3263 = vmatprep.subr.bf16.mxu0 0
        %3264 = vmatpush1.bf16.msra.mxu0 0
        %3265 = vmatprep.subr.bf16.mxu0 0
        %3266 = vmatpush1.bf16.msra.mxu0 0
        %3267 = vmatprep.subr.bf16.mxu0 0
        %3268 = vmatpush1.bf16.msra.mxu0 0
        %3269 = vmatprep.subr.bf16.mxu0 0
        %3270 = vmatpush1.bf16.msra.mxu0 0
        %3271 = vmatprep.mubr.bf16.mxu0 0
        %3272 = vmatmul.mubr.bf16.gmra.mrb[0].mxu0 %v2790
        %v3273 = vpop.f32.mrb[0].mxu0
        %v3274 = vadd.f32 %v3113, %v3273
        %v3275 = vpop.f32.mrb[0].mxu0
        %v3276 = vpop.f32.mrb[0].mxu0
        %v3277 = vadd.f32 %v3116, %v3276
        %v3278 = vpop.f32.mrb[0].mxu0
        %3279 = vmatprep.mubr.bf16.mxu0 0
        %3280 = vmatmul.mubr.bf16.gmra.mrb[0].mxu0 %v2793
        %v3281 = vpop.f32.mrb[0].mxu0
        %v3282 = vadd.f32 %v3121, %v3281
        %v3283 = vpop.f32.mrb[0].mxu0
        %v3284 = vpop.f32.mrb[0].mxu0
        %v3285 = vadd.f32 %v3124, %v3284
        %v3286 = vpop.f32.mrb[0].mxu0
        %3287 = vmatprep.mubr.bf16.mxu0 0
        %3288 = vmatmul.mubr.bf16.gmra.mrb[0].mxu0 %v2796
        %v3289 = vpop.f32.mrb[0].mxu0
        %v3290 = vadd.f32 %v3129, %v3289
        %v3291 = vpop.f32.mrb[0].mxu0
        %v3292 = vpop.f32.mrb[0].mxu0
        %v3293 = vadd.f32 %v3132, %v3292
        %v3294 = vpop.f32.mrb[0].mxu0
        %3295 = vmatprep.mubr.bf16.mxu0 0
        %3296 = vmatmul.mubr.bf16.gmra.mrb[0].mxu0 %v2799
        %v3297 = vpop.f32.mrb[0].mxu0
        %v3298 = vadd.f32 %v3137, %v3297
        %v3299 = vpop.f32.mrb[0].mxu0
        %v3300 = vpop.f32.mrb[0].mxu0
        %v3301 = vadd.f32 %v3140, %v3300
        %v3302 = vpop.f32.mrb[0].mxu0
        %3303 = vmatprep.mubr.bf16.mxu0 0
        %3304 = vmatmul.mubr.bf16.gmra.mrb[0].mxu0 %v2802
        %v3305 = vpop.f32.mrb[0].mxu0
        %v3306 = vadd.f32 %v3145, %v3305
        %v3307 = vpop.f32.mrb[0].mxu0
        %v3308 = vpop.f32.mrb[0].mxu0
        %v3309 = vadd.f32 %v3148, %v3308
        %v3310 = vpop.f32.mrb[0].mxu0
        %3311 = vmatprep.mubr.bf16.mxu0 0
        %3312 = vmatmul.mubr.bf16.gmra.mrb[0].mxu0 %v2805
        %v3313 = vpop.f32.mrb[0].mxu0
        %v3314 = vadd.f32 %v3153, %v3313
        %v3315 = vpop.f32.mrb[0].mxu0
        %v3316 = vpop.f32.mrb[0].mxu0
        %v3317 = vadd.f32 %v3156, %v3316
        %v3318 = vpop.f32.mrb[0].mxu0
        %3319 = vmatprep.mubr.bf16.mxu0 0
        %3320 = vmatmul.mubr.bf16.gmra.mrb[0].mxu0 %v2808
        %v3321 = vpop.f32.mrb[0].mxu0
        %v3322 = vadd.f32 %v3161, %v3321
        %v3323 = vpop.f32.mrb[0].mxu0
        %v3324 = vpop.f32.mrb[0].mxu0
        %v3325 = vadd.f32 %v3164, %v3324
        %v3326 = vpop.f32.mrb[0].mxu0
        %3327 = vmatprep.mubr.bf16.mxu0 0
        %3328 = vmatmul.mubr.bf16.gmra.mrb[0].mxu0 %v2811
        %v3329 = vpop.f32.mrb[0].mxu0
        %v3330 = vadd.f32 %v3169, %v3329
        %v3331 = vpop.f32.mrb[0].mxu0
        %v3332 = vpop.f32.mrb[0].mxu0
        %v3333 = vadd.f32 %v3172, %v3332
        %v3334 = vpop.f32.mrb[0].mxu0
        %3335 = vmatprep.mubr.bf16.mxu0 0
        %3336 = vmatmul.mubr.bf16.gmra.mrb[0].mxu0 %v2814
        %v3337 = vpop.f32.mrb[0].mxu0
        %v3338 = vadd.f32 %v3177, %v3337
        %v3339 = vpop.f32.mrb[0].mxu0
        %v3340 = vpop.f32.mrb[0].mxu0
        %v3341 = vadd.f32 %v3180, %v3340
        %v3342 = vpop.f32.mrb[0].mxu0
        %3343 = vmatprep.mubr.bf16.mxu0 0
        %3344 = vmatmul.mubr.bf16.gmra.mrb[0].mxu0 %v2817
        %v3345 = vpop.f32.mrb[0].mxu0
        %v3346 = vadd.f32 %v3185, %v3345
        %v3347 = vpop.f32.mrb[0].mxu0
        %v3348 = vpop.f32.mrb[0].mxu0
        %v3349 = vadd.f32 %v3188, %v3348
        %v3350 = vpop.f32.mrb[0].mxu0
        %3351 = vmatprep.mubr.bf16.mxu0 0
        %3352 = vmatmul.mubr.bf16.gmra.mrb[0].mxu0 %v2820
        %v3353 = vpop.f32.mrb[0].mxu0
        %v3354 = vadd.f32 %v3193, %v3353
        %v3355 = vpop.f32.mrb[0].mxu0
        %v3356 = vpop.f32.mrb[0].mxu0
        %v3357 = vadd.f32 %v3196, %v3356
        %v3358 = vpop.f32.mrb[0].mxu0
        %3359 = vmatprep.mubr.bf16.mxu0 0
        %3360 = vmatmul.mubr.bf16.gmra.mrb[0].mxu0 %v2823
        %v3361 = vpop.f32.mrb[0].mxu0
        %v3362 = vadd.f32 %v3201, %v3361
        %v3363 = vpop.f32.mrb[0].mxu0
        %v3364 = vpop.f32.mrb[0].mxu0
        %v3365 = vadd.f32 %v3204, %v3364
        %v3366 = vpop.f32.mrb[0].mxu0
        %3367 = vmatprep.mubr.bf16.mxu0 0
        %3368 = vmatmul.mubr.bf16.gmra.mrb[0].mxu0 %v2826
        %v3369 = vpop.f32.mrb[0].mxu0
        %v3370 = vadd.f32 %v3209, %v3369
        %v3371 = vpop.f32.mrb[0].mxu0
        %v3372 = vpop.f32.mrb[0].mxu0
        %v3373 = vadd.f32 %v3212, %v3372
        %v3374 = vpop.f32.mrb[0].mxu0
        %3375 = vmatprep.mubr.bf16.mxu0 0
        %3376 = vmatmul.mubr.bf16.gmra.mrb[0].mxu0 %v2829
        %v3377 = vpop.f32.mrb[0].mxu0
        %v3378 = vadd.f32 %v3217, %v3377
        %v3379 = vpop.f32.mrb[0].mxu0
        %v3380 = vpop.f32.mrb[0].mxu0
        %v3381 = vadd.f32 %v3220, %v3380
        %v3382 = vpop.f32.mrb[0].mxu0
        %3383 = vmatprep.mubr.bf16.mxu0 0
        %3384 = vmatmul.mubr.bf16.gmra.mrb[0].mxu0 %v2832
        %v3385 = vpop.f32.mrb[0].mxu0
        %v3386 = vadd.f32 %v3225, %v3385
        %v3387 = vpop.f32.mrb[0].mxu0
        %v3388 = vpop.f32.mrb[0].mxu0
        %v3389 = vadd.f32 %v3228, %v3388
        %v3390 = vpop.f32.mrb[0].mxu0
        %3391 = vmatprep.mubr.bf16.mxu0 0
        %3392 = vmatmul.mubr.bf16.gmra.mrb[0].mxu0 %v2835
        %v3393 = vpop.f32.mrb[0].mxu0
        %v3394 = vadd.f32 %v3233, %v3393
        %v3395 = vpop.f32.mrb[0].mxu0
        %v3396 = vpop.f32.mrb[0].mxu0
        %v3397 = vadd.f32 %v3236, %v3396
        %v3398 = vpop.f32.mrb[0].mxu0
        %3399 = vdwg.mxu0
        %v3448 = vunpack.c.l.b16 %v2837
        %v3449 = vunpack.c.l.b16 %v2838
        %v3450 = vunpack.c.l.b16 %v2839
        %v3451 = vunpack.c.l.b16 %v2840
        %v3452 = vunpack.c.l.b16 %v2841
        %v3453 = vunpack.c.l.b16 %v2842
        %v3454 = vunpack.c.l.b16 %v2843
        %v3455 = vunpack.c.l.b16 %v2844
        %v3456 = vunpack.c.l.b16 %v2845
        %v3457 = vunpack.c.l.b16 %v2846
        %v3458 = vunpack.c.l.b16 %v2847
        %v3459 = vunpack.c.l.b16 %v2848
        %v3460 = vunpack.c.l.b16 %v2849
        %v3461 = vunpack.c.l.b16 %v2850
        %v3462 = vunpack.c.l.b16 %v2851
        %v3463 = vunpack.c.l.b16 %v2852
        %v3464 = vunpack.c.l.b16 %v2853
        %v3465 = vunpack.c.l.b16 %v2854
        %v3466 = vunpack.c.l.b16 %v2855
        %v3467 = vunpack.c.l.b16 %v2856
        %v3468 = vunpack.c.l.b16 %v2857
        %v3469 = vunpack.c.l.b16 %v2858
        %v3470 = vunpack.c.l.b16 %v2859
        %v3471 = vunpack.c.l.b16 %v2860
        %v3472 = vunpack.c.l.b16 %v2861
        %v3473 = vunpack.c.l.b16 %v2862
        %v3474 = vunpack.c.l.b16 %v2863
        %v3475 = vunpack.c.l.b16 %v2864
        %v3476 = vunpack.c.l.b16 %v2865
        %v3477 = vunpack.c.l.b16 %v2866
        %v3478 = vunpack.c.l.b16 %v2867
        %v3479 = vunpack.c.l.b16 %v2868
        %v3480 = vunpack.c.l.b16 %v2869
        %v3481 = vunpack.c.l.b16 %v2870
        %v3482 = vunpack.c.l.b16 %v2871
        %v3483 = vunpack.c.l.b16 %v2872
        %v3484 = vunpack.c.l.b16 %v2873
        %v3485 = vunpack.c.l.b16 %v2874
        %v3486 = vunpack.c.l.b16 %v2875
        %v3487 = vunpack.c.l.b16 %v2876
        %v3488 = vunpack.c.l.b16 %v2877
        %v3489 = vunpack.c.l.b16 %v2878
        %v3490 = vunpack.c.l.b16 %v2879
        %v3491 = vunpack.c.l.b16 %v2880
        %v3492 = vunpack.c.l.b16 %v2881
        %v3493 = vunpack.c.l.b16 %v2882
        %v3494 = vunpack.c.l.b16 %v2883
        %v3495 = vunpack.c.l.b16 %v2884
        %v3496 = vpack.c.b16 %v3449, %v3448
        %v3497 = vpack.c.b16 %v3451, %v3450
        %v3498 = vpack.c.b16 %v3453, %v3452
        %v3499 = vpack.c.b16 %v3455, %v3454
        %v3500 = vpack.c.b16 %v3457, %v3456
        %v3501 = vpack.c.b16 %v3459, %v3458
        %v3502 = vpack.c.b16 %v3461, %v3460
        %v3503 = vpack.c.b16 %v3463, %v3462
        %v3504 = vpack.c.b16 %v3465, %v3464
        %v3505 = vpack.c.b16 %v3467, %v3466
        %v3506 = vpack.c.b16 %v3469, %v3468
        %v3507 = vpack.c.b16 %v3471, %v3470
        %v3508 = vpack.c.b16 %v3473, %v3472
        %v3509 = vpack.c.b16 %v3475, %v3474
        %v3510 = vpack.c.b16 %v3477, %v3476
        %v3511 = vpack.c.b16 %v3479, %v3478
        %v3512 = vpack.c.b16 %v3481, %v3480
        %v3513 = vpack.c.b16 %v3483, %v3482
        %v3514 = vpack.c.b16 %v3485, %v3484
        %v3515 = vpack.c.b16 %v3487, %v3486
        %v3516 = vpack.c.b16 %v3489, %v3488
        %v3517 = vpack.c.b16 %v3491, %v3490
        %v3518 = vpack.c.b16 %v3493, %v3492
        %v3519 = vpack.c.b16 %v3495, %v3494
        %3544 = vmatprep.subr.bf16.mxu0 0
        %3545 = vmatpush1.bf16.msra.mxu0 %v3496
        %3546 = vmatprep.subr.bf16.mxu0 0
        %3547 = vmatpush1.bf16.msra.mxu0 %v3497
        %3548 = vmatprep.subr.bf16.mxu0 0
        %3549 = vmatpush1.bf16.msra.mxu0 %v3498
        %3550 = vmatprep.subr.bf16.mxu0 0
        %3551 = vmatpush1.bf16.msra.mxu0 %v3499
        %3552 = vmatprep.subr.bf16.mxu0 0
        %3553 = vmatpush1.bf16.msra.mxu0 %v3500
        %3554 = vmatprep.subr.bf16.mxu0 0
        %3555 = vmatpush1.bf16.msra.mxu0 %v3501
        %3556 = vmatprep.subr.bf16.mxu0 0
        %3557 = vmatpush1.bf16.msra.mxu0 %v3502
        %3558 = vmatprep.subr.bf16.mxu0 0
        %3559 = vmatpush1.bf16.msra.mxu0 %v3503
        %3560 = vmatprep.subr.bf16.mxu0 0
        %3561 = vmatpush1.bf16.msra.mxu0 %v3504
        %3562 = vmatprep.subr.bf16.mxu0 0
        %3563 = vmatpush1.bf16.msra.mxu0 %v3505
        %3564 = vmatprep.subr.bf16.mxu0 0
        %3565 = vmatpush1.bf16.msra.mxu0 %v3506
        %3566 = vmatprep.subr.bf16.mxu0 0
        %3567 = vmatpush1.bf16.msra.mxu0 %v3507
        %3568 = vmatprep.subr.bf16.mxu0 0
        %3569 = vmatpush1.bf16.msra.mxu0 %v3508
        %3570 = vmatprep.subr.bf16.mxu0 0
        %3571 = vmatpush1.bf16.msra.mxu0 %v3509
        %3572 = vmatprep.subr.bf16.mxu0 0
        %3573 = vmatpush1.bf16.msra.mxu0 %v3510
        %3574 = vmatprep.subr.bf16.mxu0 0
        %3575 = vmatpush1.bf16.msra.mxu0 %v3511
        %3576 = vmatprep.mubr.bf16.mxu0 %v2786
        %3577 = vmatmul.mubr.bf16.gmra.mrb[0].mxu0 %v2786
        %v3578 = vpop.f32.mrb[0].mxu0
        %v3579 = vadd.f32 %v3274, %v3578
        %v3580 = vpop.f32.mrb[0].mxu0
        %v3581 = vpop.f32.mrb[0].mxu0
        %v3582 = vadd.f32 %v3277, %v3581
        %v3583 = vpop.f32.mrb[0].mxu0
        %3584 = vmatprep.mubr.bf16.mxu0 %v2789
        %3585 = vmatmul.mubr.bf16.gmra.mrb[0].mxu0 %v2788
        %v3586 = vpop.f32.mrb[0].mxu0
        %v3587 = vadd.f32 %v3282, %v3586
        %v3588 = vpop.f32.mrb[0].mxu0
        %v3589 = vpop.f32.mrb[0].mxu0
        %v3590 = vadd.f32 %v3285, %v3589
        %v3591 = vpop.f32.mrb[0].mxu0
        %3592 = vmatprep.mubr.bf16.mxu0 %v2792
        %3593 = vmatmul.mubr.bf16.gmra.mrb[0].mxu0 %v2791
        %v3594 = vpop.f32.mrb[0].mxu0
        %v3595 = vadd.f32 %v3290, %v3594
        %v3596 = vpop.f32.mrb[0].mxu0
        %v3597 = vpop.f32.mrb[0].mxu0
        %v3598 = vadd.f32 %v3293, %v3597
        %v3599 = vpop.f32.mrb[0].mxu0
        %3600 = vmatprep.mubr.bf16.mxu0 %v2795
        %3601 = vmatmul.mubr.bf16.gmra.mrb[0].mxu0 %v2794
        %v3602 = vpop.f32.mrb[0].mxu0
        %v3603 = vadd.f32 %v3298, %v3602
        %v3604 = vpop.f32.mrb[0].mxu0
        %v3605 = vpop.f32.mrb[0].mxu0
        %v3606 = vadd.f32 %v3301, %v3605
        %v3607 = vpop.f32.mrb[0].mxu0
        %3608 = vmatprep.mubr.bf16.mxu0 %v2798
        %3609 = vmatmul.mubr.bf16.gmra.mrb[0].mxu0 %v2797
        %v3610 = vpop.f32.mrb[0].mxu0
        %v3611 = vadd.f32 %v3306, %v3610
        %v3612 = vpop.f32.mrb[0].mxu0
        %v3613 = vpop.f32.mrb[0].mxu0
        %v3614 = vadd.f32 %v3309, %v3613
        %v3615 = vpop.f32.mrb[0].mxu0
        %3616 = vmatprep.mubr.bf16.mxu0 %v2801
        %3617 = vmatmul.mubr.bf16.gmra.mrb[0].mxu0 %v2800
        %v3618 = vpop.f32.mrb[0].mxu0
        %v3619 = vadd.f32 %v3314, %v3618
        %v3620 = vpop.f32.mrb[0].mxu0
        %v3621 = vpop.f32.mrb[0].mxu0
        %v3622 = vadd.f32 %v3317, %v3621
        %v3623 = vpop.f32.mrb[0].mxu0
        %3624 = vmatprep.mubr.bf16.mxu0 %v2804
        %3625 = vmatmul.mubr.bf16.gmra.mrb[0].mxu0 %v2803
        %v3626 = vpop.f32.mrb[0].mxu0
        %v3627 = vadd.f32 %v3322, %v3626
        %v3628 = vpop.f32.mrb[0].mxu0
        %v3629 = vpop.f32.mrb[0].mxu0
        %v3630 = vadd.f32 %v3325, %v3629
        %v3631 = vpop.f32.mrb[0].mxu0
        %3632 = vmatprep.mubr.bf16.mxu0 %v2807
        %3633 = vmatmul.mubr.bf16.gmra.mrb[0].mxu0 %v2806
        %v3634 = vpop.f32.mrb[0].mxu0
        %v3635 = vadd.f32 %v3330, %v3634
        %v3636 = vpop.f32.mrb[0].mxu0
        %v3637 = vpop.f32.mrb[0].mxu0
        %v3638 = vadd.f32 %v3333, %v3637
        %v3639 = vpop.f32.mrb[0].mxu0
        %3640 = vmatprep.mubr.bf16.mxu0 %v2810
        %3641 = vmatmul.mubr.bf16.gmra.mrb[0].mxu0 %v2809
        %v3642 = vpop.f32.mrb[0].mxu0
        %v3643 = vadd.f32 %v3338, %v3642
        %v3644 = vpop.f32.mrb[0].mxu0
        %v3645 = vpop.f32.mrb[0].mxu0
        %v3646 = vadd.f32 %v3341, %v3645
        %v3647 = vpop.f32.mrb[0].mxu0
        %3648 = vmatprep.mubr.bf16.mxu0 %v2813
        %3649 = vmatmul.mubr.bf16.gmra.mrb[0].mxu0 %v2812
        %v3650 = vpop.f32.mrb[0].mxu0
        %v3651 = vadd.f32 %v3346, %v3650
        %v3652 = vpop.f32.mrb[0].mxu0
        %v3653 = vpop.f32.mrb[0].mxu0
        %v3654 = vadd.f32 %v3349, %v3653
        %v3655 = vpop.f32.mrb[0].mxu0
        %3656 = vmatprep.mubr.bf16.mxu0 %v2816
        %3657 = vmatmul.mubr.bf16.gmra.mrb[0].mxu0 %v2815
        %v3658 = vpop.f32.mrb[0].mxu0
        %v3659 = vadd.f32 %v3354, %v3658
        %v3660 = vpop.f32.mrb[0].mxu0
        %v3661 = vpop.f32.mrb[0].mxu0
        %v3662 = vadd.f32 %v3357, %v3661
        %v3663 = vpop.f32.mrb[0].mxu0
        %3664 = vmatprep.mubr.bf16.mxu0 %v2819
        %3665 = vmatmul.mubr.bf16.gmra.mrb[0].mxu0 %v2818
        %v3666 = vpop.f32.mrb[0].mxu0
        %v3667 = vadd.f32 %v3362, %v3666
        %v3668 = vpop.f32.mrb[0].mxu0
        %v3669 = vpop.f32.mrb[0].mxu0
        %v3670 = vadd.f32 %v3365, %v3669
        %v3671 = vpop.f32.mrb[0].mxu0
        %3672 = vmatprep.mubr.bf16.mxu0 %v2822
        %3673 = vmatmul.mubr.bf16.gmra.mrb[0].mxu0 %v2821
        %v3674 = vpop.f32.mrb[0].mxu0
        %v3675 = vadd.f32 %v3370, %v3674
        %v3676 = vpop.f32.mrb[0].mxu0
        %v3677 = vpop.f32.mrb[0].mxu0
        %v3678 = vadd.f32 %v3373, %v3677
        %v3679 = vpop.f32.mrb[0].mxu0
        %3680 = vmatprep.mubr.bf16.mxu0 %v2825
        %3681 = vmatmul.mubr.bf16.gmra.mrb[0].mxu0 %v2824
        %v3682 = vpop.f32.mrb[0].mxu0
        %v3683 = vadd.f32 %v3378, %v3682
        %v3684 = vpop.f32.mrb[0].mxu0
        %v3685 = vpop.f32.mrb[0].mxu0
        %v3686 = vadd.f32 %v3381, %v3685
        %v3687 = vpop.f32.mrb[0].mxu0
        %3688 = vmatprep.mubr.bf16.mxu0 %v2828
        %3689 = vmatmul.mubr.bf16.gmra.mrb[0].mxu0 %v2827
        %v3690 = vpop.f32.mrb[0].mxu0
        %v3691 = vadd.f32 %v3386, %v3690
        %v3692 = vpop.f32.mrb[0].mxu0
        %v3693 = vpop.f32.mrb[0].mxu0
        %v3694 = vadd.f32 %v3389, %v3693
        %v3695 = vpop.f32.mrb[0].mxu0
        %3696 = vmatprep.mubr.bf16.mxu0 %v2831
        %3697 = vmatmul.mubr.bf16.gmra.mrb[0].mxu0 %v2830
        %v3698 = vpop.f32.mrb[0].mxu0
        %v3699 = vadd.f32 %v3394, %v3698
        %v3700 = vpop.f32.mrb[0].mxu0
        %v3701 = vpop.f32.mrb[0].mxu0
        %v3702 = vadd.f32 %v3397, %v3701
        %v3703 = vpop.f32.mrb[0].mxu0
        %3704 = vdwg.mxu0
        %3705 = vmatprep.subr.bf16.mxu0 0
        %3706 = vmatpush1.bf16.msra.mxu0 %v3512
        %3707 = vmatprep.subr.bf16.mxu0 0
        %3708 = vmatpush1.bf16.msra.mxu0 %v3513
        %3709 = vmatprep.subr.bf16.mxu0 0
        %3710 = vmatpush1.bf16.msra.mxu0 %v3514
        %3711 = vmatprep.subr.bf16.mxu0 0
        %3712 = vmatpush1.bf16.msra.mxu0 %v3515
        %3713 = vmatprep.subr.bf16.mxu0 0
        %3714 = vmatpush1.bf16.msra.mxu0 %v3516
        %3715 = vmatprep.subr.bf16.mxu0 0
        %3716 = vmatpush1.bf16.msra.mxu0 %v3517
        %3717 = vmatprep.subr.bf16.mxu0 0
        %3718 = vmatpush1.bf16.msra.mxu0 %v3518
        %3719 = vmatprep.subr.bf16.mxu0 0
        %3720 = vmatpush1.bf16.msra.mxu0 %v3519
        %3721 = vmatprep.subr.bf16.mxu0 0
        %3722 = vmatpush1.bf16.msra.mxu0 0
        %3723 = vmatprep.subr.bf16.mxu0 0
        %3724 = vmatpush1.bf16.msra.mxu0 0
        %3725 = vmatprep.subr.bf16.mxu0 0
        %3726 = vmatpush1.bf16.msra.mxu0 0
        %3727 = vmatprep.subr.bf16.mxu0 0
        %3728 = vmatpush1.bf16.msra.mxu0 0
        %3729 = vmatprep.subr.bf16.mxu0 0
        %3730 = vmatpush1.bf16.msra.mxu0 0
        %3731 = vmatprep.subr.bf16.mxu0 0
        %3732 = vmatpush1.bf16.msra.mxu0 0
        %3733 = vmatprep.subr.bf16.mxu0 0
        %3734 = vmatpush1.bf16.msra.mxu0 0
        %3735 = vmatprep.subr.bf16.mxu0 0
        %3736 = vmatpush1.bf16.msra.mxu0 0
        %3737 = vmatprep.mubr.bf16.mxu0 0
        %3738 = vmatmul.mubr.bf16.gmra.mrb[0].mxu0 %v2787
        %v3739 = vpop.f32.mrb[0].mxu0
        %v3740 = vadd.f32 %v3579, %v3739
        %v3741 = vpop.f32.mrb[0].mxu0
        %v3742 = vpop.f32.mrb[0].mxu0
        %v3743 = vadd.f32 %v3582, %v3742
        %v3744 = vpop.f32.mrb[0].mxu0
        %3745 = vmatprep.mubr.bf16.mxu0 0
        %3746 = vmatmul.mubr.bf16.gmra.mrb[0].mxu0 %v2790
        %v3747 = vpop.f32.mrb[0].mxu0
        %v3748 = vadd.f32 %v3587, %v3747
        %v3749 = vpop.f32.mrb[0].mxu0
        %v3750 = vpop.f32.mrb[0].mxu0
        %v3751 = vadd.f32 %v3590, %v3750
        %v3752 = vpop.f32.mrb[0].mxu0
        %3753 = vmatprep.mubr.bf16.mxu0 0
        %3754 = vmatmul.mubr.bf16.gmra.mrb[0].mxu0 %v2793
        %v3755 = vpop.f32.mrb[0].mxu0
        %v3756 = vadd.f32 %v3595, %v3755
        %v3757 = vpop.f32.mrb[0].mxu0
        %v3758 = vpop.f32.mrb[0].mxu0
        %v3759 = vadd.f32 %v3598, %v3758
        %v3760 = vpop.f32.mrb[0].mxu0
        %3761 = vmatprep.mubr.bf16.mxu0 0
        %3762 = vmatmul.mubr.bf16.gmra.mrb[0].mxu0 %v2796
        %v3763 = vpop.f32.mrb[0].mxu0
        %v3764 = vadd.f32 %v3603, %v3763
        %v3765 = vpop.f32.mrb[0].mxu0
        %v3766 = vpop.f32.mrb[0].mxu0
        %v3767 = vadd.f32 %v3606, %v3766
        %v3768 = vpop.f32.mrb[0].mxu0
        %3769 = vmatprep.mubr.bf16.mxu0 0
        %3770 = vmatmul.mubr.bf16.gmra.mrb[0].mxu0 %v2799
        %v3771 = vpop.f32.mrb[0].mxu0
        %v3772 = vadd.f32 %v3611, %v3771
        %v3773 = vpop.f32.mrb[0].mxu0
        %v3774 = vpop.f32.mrb[0].mxu0
        %v3775 = vadd.f32 %v3614, %v3774
        %v3776 = vpop.f32.mrb[0].mxu0
        %3777 = vmatprep.mubr.bf16.mxu0 0
        %3778 = vmatmul.mubr.bf16.gmra.mrb[0].mxu0 %v2802
        %v3779 = vpop.f32.mrb[0].mxu0
        %v3780 = vadd.f32 %v3619, %v3779
        %v3781 = vpop.f32.mrb[0].mxu0
        %v3782 = vpop.f32.mrb[0].mxu0
        %v3783 = vadd.f32 %v3622, %v3782
        %v3784 = vpop.f32.mrb[0].mxu0
        %3785 = vmatprep.mubr.bf16.mxu0 0
        %3786 = vmatmul.mubr.bf16.gmra.mrb[0].mxu0 %v2805
        %v3787 = vpop.f32.mrb[0].mxu0
        %v3788 = vadd.f32 %v3627, %v3787
        %v3789 = vpop.f32.mrb[0].mxu0
        %v3790 = vpop.f32.mrb[0].mxu0
        %v3791 = vadd.f32 %v3630, %v3790
        %v3792 = vpop.f32.mrb[0].mxu0
        %3793 = vmatprep.mubr.bf16.mxu0 0
        %3794 = vmatmul.mubr.bf16.gmra.mrb[0].mxu0 %v2808
        %v3795 = vpop.f32.mrb[0].mxu0
        %v3796 = vadd.f32 %v3635, %v3795
        %v3797 = vpop.f32.mrb[0].mxu0
        %v3798 = vpop.f32.mrb[0].mxu0
        %v3799 = vadd.f32 %v3638, %v3798
        %v3800 = vpop.f32.mrb[0].mxu0
        %3801 = vmatprep.mubr.bf16.mxu0 0
        %3802 = vmatmul.mubr.bf16.gmra.mrb[0].mxu0 %v2811
        %v3803 = vpop.f32.mrb[0].mxu0
        %v3804 = vadd.f32 %v3643, %v3803
        %v3805 = vpop.f32.mrb[0].mxu0
        %v3806 = vpop.f32.mrb[0].mxu0
        %v3807 = vadd.f32 %v3646, %v3806
        %v3808 = vpop.f32.mrb[0].mxu0
        %3809 = vmatprep.mubr.bf16.mxu0 0
        %3810 = vmatmul.mubr.bf16.gmra.mrb[0].mxu0 %v2814
        %v3811 = vpop.f32.mrb[0].mxu0
        %v3812 = vadd.f32 %v3651, %v3811
        %v3813 = vpop.f32.mrb[0].mxu0
        %v3814 = vpop.f32.mrb[0].mxu0
        %v3815 = vadd.f32 %v3654, %v3814
        %v3816 = vpop.f32.mrb[0].mxu0
        %3817 = vmatprep.mubr.bf16.mxu0 0
        %3818 = vmatmul.mubr.bf16.gmra.mrb[0].mxu0 %v2817
        %v3819 = vpop.f32.mrb[0].mxu0
        %v3820 = vadd.f32 %v3659, %v3819
        %v3821 = vpop.f32.mrb[0].mxu0
        %v3822 = vpop.f32.mrb[0].mxu0
        %v3823 = vadd.f32 %v3662, %v3822
        %v3824 = vpop.f32.mrb[0].mxu0
        %3825 = vmatprep.mubr.bf16.mxu0 0
        %3826 = vmatmul.mubr.bf16.gmra.mrb[0].mxu0 %v2820
        %v3827 = vpop.f32.mrb[0].mxu0
        %v3828 = vadd.f32 %v3667, %v3827
        %v3829 = vpop.f32.mrb[0].mxu0
        %v3830 = vpop.f32.mrb[0].mxu0
        %v3831 = vadd.f32 %v3670, %v3830
        %v3832 = vpop.f32.mrb[0].mxu0
        %3833 = vmatprep.mubr.bf16.mxu0 0
        %3834 = vmatmul.mubr.bf16.gmra.mrb[0].mxu0 %v2823
        %v3835 = vpop.f32.mrb[0].mxu0
        %v3836 = vadd.f32 %v3675, %v3835
        %v3837 = vpop.f32.mrb[0].mxu0
        %v3838 = vpop.f32.mrb[0].mxu0
        %v3839 = vadd.f32 %v3678, %v3838
        %v3840 = vpop.f32.mrb[0].mxu0
        %3841 = vmatprep.mubr.bf16.mxu0 0
        %3842 = vmatmul.mubr.bf16.gmra.mrb[0].mxu0 %v2826
        %v3843 = vpop.f32.mrb[0].mxu0
        %v3844 = vadd.f32 %v3683, %v3843
        %v3845 = vpop.f32.mrb[0].mxu0
        %v3846 = vpop.f32.mrb[0].mxu0
        %v3847 = vadd.f32 %v3686, %v3846
        %v3848 = vpop.f32.mrb[0].mxu0
        %3849 = vmatprep.mubr.bf16.mxu0 0
        %3850 = vmatmul.mubr.bf16.gmra.mrb[0].mxu0 %v2829
        %v3851 = vpop.f32.mrb[0].mxu0
        %v3852 = vadd.f32 %v3691, %v3851
        %v3853 = vpop.f32.mrb[0].mxu0
        %v3854 = vpop.f32.mrb[0].mxu0
        %v3855 = vadd.f32 %v3694, %v3854
        %v3856 = vpop.f32.mrb[0].mxu0
        %3857 = vmatprep.mubr.bf16.mxu0 0
        %3858 = vmatmul.mubr.bf16.gmra.mrb[0].mxu0 %v2832
        %v3859 = vpop.f32.mrb[0].mxu0
        %v3860 = vadd.f32 %v3699, %v3859
        %v3861 = vpop.f32.mrb[0].mxu0
        %v3862 = vpop.f32.mrb[0].mxu0
        %v3863 = vadd.f32 %v3702, %v3862
        %v3864 = vpop.f32.mrb[0].mxu0
        %3865 = vdwg.mxu0
        %s3866 = scalar_lea.vmem %s2, 384
        %v3867 = vld [vmem:[%s3866] sm:$0xf]
        %v3868 = vld [vmem:[%s3866 + $0x4] sm:$0xf]
        %v3869 = vld [vmem:[%s3866 + $0x8] sm:$0xf]
        %v3870 = vld [vmem:[%s3866 + $0xc] sm:$0xf]
        %v3871 = vld [vmem:[%s3866 + $0x10] sm:$0xf]
        %v3872 = vld [vmem:[%s3866 + $0x14] sm:$0xf]
        %v3873 = vld [vmem:[%s3866 + $0x18] sm:$0xf]
        %v3874 = vld [vmem:[%s3866 + $0x1c] sm:$0xf]
        %v3875 = vld [vmem:[%s3866 + $0x20] sm:$0xf]
        %v3876 = vld [vmem:[%s3866 + $0x24] sm:$0xf]
        %v3877 = vld [vmem:[%s3866 + $0x28] sm:$0xf]
        %v3878 = vld [vmem:[%s3866 + $0x2c] sm:$0xf]
        %v3879 = vld [vmem:[%s3866 + $0x30] sm:$0xf]
        %v3880 = vld [vmem:[%s3866 + $0x34] sm:$0xf]
        %v3881 = vld [vmem:[%s3866 + $0x38] sm:$0xf]
        %v3882 = vld [vmem:[%s3866 + $0x3c] sm:$0xf]
        %v3883 = vld [vmem:[%s3866 + $0x40] sm:$0xf]
        %v3884 = vld [vmem:[%s3866 + $0x44] sm:$0xf]
        %v3885 = vld [vmem:[%s3866 + $0x48] sm:$0xf]
        %v3886 = vld [vmem:[%s3866 + $0x4c] sm:$0xf]
        %v3887 = vld [vmem:[%s3866 + $0x50] sm:$0xf]
        %v3888 = vld [vmem:[%s3866 + $0x54] sm:$0xf]
        %v3889 = vld [vmem:[%s3866 + $0x58] sm:$0xf]
        %v3890 = vld [vmem:[%s3866 + $0x5c] sm:$0xf]
        %v3891 = vld [vmem:[%s3866 + $0x60] sm:$0xf]
        %v3892 = vld [vmem:[%s3866 + $0x64] sm:$0xf]
        %v3893 = vld [vmem:[%s3866 + $0x68] sm:$0xf]
        %v3894 = vld [vmem:[%s3866 + $0x6c] sm:$0xf]
        %v3895 = vld [vmem:[%s3866 + $0x70] sm:$0xf]
        %v3896 = vld [vmem:[%s3866 + $0x74] sm:$0xf]
        %v3897 = vld [vmem:[%s3866 + $0x78] sm:$0xf]
        %v3898 = vld [vmem:[%s3866 + $0x7c] sm:$0xf]
        %v3899 = vld [vmem:[%s3866 + $0x80] sm:$0xf]
        %v3900 = vld [vmem:[%s3866 + $0x84] sm:$0xf]
        %v3901 = vld [vmem:[%s3866 + $0x88] sm:$0xf]
        %v3902 = vld [vmem:[%s3866 + $0x8c] sm:$0xf]
        %v3903 = vld [vmem:[%s3866 + $0x90] sm:$0xf]
        %v3904 = vld [vmem:[%s3866 + $0x94] sm:$0xf]
        %v3905 = vld [vmem:[%s3866 + $0x98] sm:$0xf]
        %v3906 = vld [vmem:[%s3866 + $0x9c] sm:$0xf]
        %v3907 = vld [vmem:[%s3866 + $0xa0] sm:$0xf]
        %v3908 = vld [vmem:[%s3866 + $0xa4] sm:$0xf]
        %v3909 = vld [vmem:[%s3866 + $0xa8] sm:$0xf]
        %v3910 = vld [vmem:[%s3866 + $0xac] sm:$0xf]
        %v3911 = vld [vmem:[%s3866 + $0xb0] sm:$0xf]
        %v3912 = vld [vmem:[%s3866 + $0xb4] sm:$0xf]
        %v3913 = vld [vmem:[%s3866 + $0xb8] sm:$0xf]
        %v3914 = vld [vmem:[%s3866 + $0xbc] sm:$0xf]
        %v3963 = vunpack.c.l.b16 %v3867
        %v3964 = vunpack.c.l.b16 %v3868
        %v3965 = vunpack.c.l.b16 %v3869
        %v3966 = vunpack.c.l.b16 %v3870
        %v3967 = vunpack.c.l.b16 %v3871
        %v3968 = vunpack.c.l.b16 %v3872
        %v3969 = vunpack.c.l.b16 %v3873
        %v3970 = vunpack.c.l.b16 %v3874
        %v3971 = vunpack.c.l.b16 %v3875
        %v3972 = vunpack.c.l.b16 %v3876
        %v3973 = vunpack.c.l.b16 %v3877
        %v3974 = vunpack.c.l.b16 %v3878
        %v3975 = vunpack.c.l.b16 %v3879
        %v3976 = vunpack.c.l.b16 %v3880
        %v3977 = vunpack.c.l.b16 %v3881
        %v3978 = vunpack.c.l.b16 %v3882
        %v3979 = vunpack.c.l.b16 %v3883
        %v3980 = vunpack.c.l.b16 %v3884
        %v3981 = vunpack.c.l.b16 %v3885
        %v3982 = vunpack.c.l.b16 %v3886
        %v3983 = vunpack.c.l.b16 %v3887
        %v3984 = vunpack.c.l.b16 %v3888
        %v3985 = vunpack.c.l.b16 %v3889
        %v3986 = vunpack.c.l.b16 %v3890
        %v3987 = vunpack.c.l.b16 %v3891
        %v3988 = vunpack.c.l.b16 %v3892
        %v3989 = vunpack.c.l.b16 %v3893
        %v3990 = vunpack.c.l.b16 %v3894
        %v3991 = vunpack.c.l.b16 %v3895
        %v3992 = vunpack.c.l.b16 %v3896
        %v3993 = vunpack.c.l.b16 %v3897
        %v3994 = vunpack.c.l.b16 %v3898
        %v3995 = vunpack.c.l.b16 %v3899
        %v3996 = vunpack.c.l.b16 %v3900
        %v3997 = vunpack.c.l.b16 %v3901
        %v3998 = vunpack.c.l.b16 %v3902
        %v3999 = vunpack.c.l.b16 %v3903
        %v4000 = vunpack.c.l.b16 %v3904
        %v4001 = vunpack.c.l.b16 %v3905
        %v4002 = vunpack.c.l.b16 %v3906
        %v4003 = vunpack.c.l.b16 %v3907
        %v4004 = vunpack.c.l.b16 %v3908
        %v4005 = vunpack.c.l.b16 %v3909
        %v4006 = vunpack.c.l.b16 %v3910
        %v4007 = vunpack.c.l.b16 %v3911
        %v4008 = vunpack.c.l.b16 %v3912
        %v4009 = vunpack.c.l.b16 %v3913
        %v4010 = vunpack.c.l.b16 %v3914
        %v4011 = vpack.c.b16 %v3964, %v3963
        %v4012 = vpack.c.b16 %v3966, %v3965
        %v4013 = vpack.c.b16 %v3968, %v3967
        %v4014 = vpack.c.b16 %v3970, %v3969
        %v4015 = vpack.c.b16 %v3972, %v3971
        %v4016 = vpack.c.b16 %v3974, %v3973
        %v4017 = vpack.c.b16 %v3976, %v3975
        %v4018 = vpack.c.b16 %v3978, %v3977
        %v4019 = vpack.c.b16 %v3980, %v3979
        %v4020 = vpack.c.b16 %v3982, %v3981
        %v4021 = vpack.c.b16 %v3984, %v3983
        %v4022 = vpack.c.b16 %v3986, %v3985
        %v4023 = vpack.c.b16 %v3988, %v3987
        %v4024 = vpack.c.b16 %v3990, %v3989
        %v4025 = vpack.c.b16 %v3992, %v3991
        %v4026 = vpack.c.b16 %v3994, %v3993
        %v4027 = vpack.c.b16 %v3996, %v3995
        %v4028 = vpack.c.b16 %v3998, %v3997
        %v4029 = vpack.c.b16 %v4000, %v3999
        %v4030 = vpack.c.b16 %v4002, %v4001
        %v4031 = vpack.c.b16 %v4004, %v4003
        %v4032 = vpack.c.b16 %v4006, %v4005
        %v4033 = vpack.c.b16 %v4008, %v4007
        %v4034 = vpack.c.b16 %v4010, %v4009
        %4059 = vmatprep.subr.bf16.mxu0 0
        %4060 = vmatpush1.bf16.msra.mxu0 %v4011
        %4061 = vmatprep.subr.bf16.mxu0 0
        %4062 = vmatpush1.bf16.msra.mxu0 %v4012
        %4063 = vmatprep.subr.bf16.mxu0 0
        %4064 = vmatpush1.bf16.msra.mxu0 %v4013
        %4065 = vmatprep.subr.bf16.mxu0 0
        %4066 = vmatpush1.bf16.msra.mxu0 %v4014
        %4067 = vmatprep.subr.bf16.mxu0 0
        %4068 = vmatpush1.bf16.msra.mxu0 %v4015
        %4069 = vmatprep.subr.bf16.mxu0 0
        %4070 = vmatpush1.bf16.msra.mxu0 %v4016
        %4071 = vmatprep.subr.bf16.mxu0 0
        %4072 = vmatpush1.bf16.msra.mxu0 %v4017
        %4073 = vmatprep.subr.bf16.mxu0 0
        %4074 = vmatpush1.bf16.msra.mxu0 %v4018
        %4075 = vmatprep.subr.bf16.mxu0 0
        %4076 = vmatpush1.bf16.msra.mxu0 %v4019
        %4077 = vmatprep.subr.bf16.mxu0 0
        %4078 = vmatpush1.bf16.msra.mxu0 %v4020
        %4079 = vmatprep.subr.bf16.mxu0 0
        %4080 = vmatpush1.bf16.msra.mxu0 %v4021
        %4081 = vmatprep.subr.bf16.mxu0 0
        %4082 = vmatpush1.bf16.msra.mxu0 %v4022
        %4083 = vmatprep.subr.bf16.mxu0 0
        %4084 = vmatpush1.bf16.msra.mxu0 %v4023
        %4085 = vmatprep.subr.bf16.mxu0 0
        %4086 = vmatpush1.bf16.msra.mxu0 %v4024
        %4087 = vmatprep.subr.bf16.mxu0 0
        %4088 = vmatpush1.bf16.msra.mxu0 %v4025
        %4089 = vmatprep.subr.bf16.mxu0 0
        %4090 = vmatpush1.bf16.msra.mxu0 %v4026
        %4091 = vmatprep.mubr.bf16.mxu0 %v2792
        %4092 = vmatmul.mubr.bf16.gmra.mrb[0].mxu0 %v2791
        %v4093 = vpop.f32.mrb[0].mxu0
        %v4094 = vadd.f32 0.0, %v4093
        %v4095 = vpop.f32.mrb[0].mxu0
        %v4096 = vpop.f32.mrb[0].mxu0
        %v4097 = vadd.f32 0.0, %v4096
        %v4098 = vpop.f32.mrb[0].mxu0
        %4099 = vmatprep.mubr.bf16.mxu0 %v2795
        %4100 = vmatmul.mubr.bf16.gmra.mrb[0].mxu0 %v2794
        %v4101 = vpop.f32.mrb[0].mxu0
        %v4102 = vadd.f32 0.0, %v4101
        %v4103 = vpop.f32.mrb[0].mxu0
        %v4104 = vpop.f32.mrb[0].mxu0
        %v4105 = vadd.f32 0.0, %v4104
        %v4106 = vpop.f32.mrb[0].mxu0
        %4107 = vmatprep.mubr.bf16.mxu0 %v2798
        %4108 = vmatmul.mubr.bf16.gmra.mrb[0].mxu0 %v2797
        %v4109 = vpop.f32.mrb[0].mxu0
        %v4110 = vadd.f32 0.0, %v4109
        %v4111 = vpop.f32.mrb[0].mxu0
        %v4112 = vpop.f32.mrb[0].mxu0
        %v4113 = vadd.f32 0.0, %v4112
        %v4114 = vpop.f32.mrb[0].mxu0
        %4115 = vmatprep.mubr.bf16.mxu0 %v2801
        %4116 = vmatmul.mubr.bf16.gmra.mrb[0].mxu0 %v2800
        %v4117 = vpop.f32.mrb[0].mxu0
        %v4118 = vadd.f32 0.0, %v4117
        %v4119 = vpop.f32.mrb[0].mxu0
        %v4120 = vpop.f32.mrb[0].mxu0
        %v4121 = vadd.f32 0.0, %v4120
        %v4122 = vpop.f32.mrb[0].mxu0
        %4123 = vmatprep.mubr.bf16.mxu0 %v2804
        %4124 = vmatmul.mubr.bf16.gmra.mrb[0].mxu0 %v2803
        %v4125 = vpop.f32.mrb[0].mxu0
        %v4126 = vadd.f32 0.0, %v4125
        %v4127 = vpop.f32.mrb[0].mxu0
        %v4128 = vpop.f32.mrb[0].mxu0
        %v4129 = vadd.f32 0.0, %v4128
        %v4130 = vpop.f32.mrb[0].mxu0
        %4131 = vmatprep.mubr.bf16.mxu0 %v2807
        %4132 = vmatmul.mubr.bf16.gmra.mrb[0].mxu0 %v2806
        %v4133 = vpop.f32.mrb[0].mxu0
        %v4134 = vadd.f32 0.0, %v4133
        %v4135 = vpop.f32.mrb[0].mxu0
        %v4136 = vpop.f32.mrb[0].mxu0
        %v4137 = vadd.f32 0.0, %v4136
        %v4138 = vpop.f32.mrb[0].mxu0
        %4139 = vmatprep.mubr.bf16.mxu0 %v2810
        %4140 = vmatmul.mubr.bf16.gmra.mrb[0].mxu0 %v2809
        %v4141 = vpop.f32.mrb[0].mxu0
        %v4142 = vadd.f32 0.0, %v4141
        %v4143 = vpop.f32.mrb[0].mxu0
        %v4144 = vpop.f32.mrb[0].mxu0
        %v4145 = vadd.f32 0.0, %v4144
        %v4146 = vpop.f32.mrb[0].mxu0
        %4147 = vmatprep.mubr.bf16.mxu0 %v2813
        %4148 = vmatmul.mubr.bf16.gmra.mrb[0].mxu0 %v2812
        %v4149 = vpop.f32.mrb[0].mxu0
        %v4150 = vadd.f32 0.0, %v4149
        %v4151 = vpop.f32.mrb[0].mxu0
        %v4152 = vpop.f32.mrb[0].mxu0
        %v4153 = vadd.f32 0.0, %v4152
        %v4154 = vpop.f32.mrb[0].mxu0
        %4155 = vmatprep.mubr.bf16.mxu0 %v2816
        %4156 = vmatmul.mubr.bf16.gmra.mrb[0].mxu0 %v2815
        %v4157 = vpop.f32.mrb[0].mxu0
        %v4158 = vadd.f32 0.0, %v4157
        %v4159 = vpop.f32.mrb[0].mxu0
        %v4160 = vpop.f32.mrb[0].mxu0
        %v4161 = vadd.f32 0.0, %v4160
        %v4162 = vpop.f32.mrb[0].mxu0
        %4163 = vmatprep.mubr.bf16.mxu0 %v2819
        %4164 = vmatmul.mubr.bf16.gmra.mrb[0].mxu0 %v2818
        %v4165 = vpop.f32.mrb[0].mxu0
        %v4166 = vadd.f32 0.0, %v4165
        %v4167 = vpop.f32.mrb[0].mxu0
        %v4168 = vpop.f32.mrb[0].mxu0
        %v4169 = vadd.f32 0.0, %v4168
        %v4170 = vpop.f32.mrb[0].mxu0
        %4171 = vmatprep.mubr.bf16.mxu0 %v2822
        %4172 = vmatmul.mubr.bf16.gmra.mrb[0].mxu0 %v2821
        %v4173 = vpop.f32.mrb[0].mxu0
        %v4174 = vadd.f32 0.0, %v4173
        %v4175 = vpop.f32.mrb[0].mxu0
        %v4176 = vpop.f32.mrb[0].mxu0
        %v4177 = vadd.f32 0.0, %v4176
        %v4178 = vpop.f32.mrb[0].mxu0
        %4179 = vmatprep.mubr.bf16.mxu0 %v2825
        %4180 = vmatmul.mubr.bf16.gmra.mrb[0].mxu0 %v2824
        %v4181 = vpop.f32.mrb[0].mxu0
        %v4182 = vadd.f32 0.0, %v4181
        %v4183 = vpop.f32.mrb[0].mxu0
        %v4184 = vpop.f32.mrb[0].mxu0
        %v4185 = vadd.f32 0.0, %v4184
        %v4186 = vpop.f32.mrb[0].mxu0
        %4187 = vmatprep.mubr.bf16.mxu0 %v2828
        %4188 = vmatmul.mubr.bf16.gmra.mrb[0].mxu0 %v2827
        %v4189 = vpop.f32.mrb[0].mxu0
        %v4190 = vadd.f32 0.0, %v4189
        %v4191 = vpop.f32.mrb[0].mxu0
        %v4192 = vpop.f32.mrb[0].mxu0
        %v4193 = vadd.f32 0.0, %v4192
        %v4194 = vpop.f32.mrb[0].mxu0
        %4195 = vmatprep.mubr.bf16.mxu0 %v2831
        %4196 = vmatmul.mubr.bf16.gmra.mrb[0].mxu0 %v2830
        %v4197 = vpop.f32.mrb[0].mxu0
        %v4198 = vadd.f32 0.0, %v4197
        %v4199 = vpop.f32.mrb[0].mxu0
        %v4200 = vpop.f32.mrb[0].mxu0
        %v4201 = vadd.f32 0.0, %v4200
        %v4202 = vpop.f32.mrb[0].mxu0
        %4203 = vmatprep.mubr.bf16.mxu0 %v2834
        %4204 = vmatmul.mubr.bf16.gmra.mrb[0].mxu0 %v2833
        %v4205 = vpop.f32.mrb[0].mxu0
        %v4206 = vadd.f32 0.0, %v4205
        %v4207 = vpop.f32.mrb[0].mxu0
        %v4208 = vpop.f32.mrb[0].mxu0
        %v4209 = vadd.f32 0.0, %v4208
        %v4210 = vpop.f32.mrb[0].mxu0
        %4211 = vmatprep.mubr.bf16.mxu0 %v2786
        %4212 = vmatmul.mubr.bf16.gmra.mrb[0].mxu0 %v2836
        %v4213 = vpop.f32.mrb[0].mxu0
        %v4214 = vadd.f32 0.0, %v4213
        %v4215 = vpop.f32.mrb[0].mxu0
        %v4216 = vpop.f32.mrb[0].mxu0
        %v4217 = vadd.f32 0.0, %v4216
        %v4218 = vpop.f32.mrb[0].mxu0
        %4219 = vdwg.mxu0
        %4220 = vmatprep.subr.bf16.mxu0 0
        %4221 = vmatpush1.bf16.msra.mxu0 %v4027
        %4222 = vmatprep.subr.bf16.mxu0 0
        %4223 = vmatpush1.bf16.msra.mxu0 %v4028
        %4224 = vmatprep.subr.bf16.mxu0 0
        %4225 = vmatpush1.bf16.msra.mxu0 %v4029
        %4226 = vmatprep.subr.bf16.mxu0 0
        %4227 = vmatpush1.bf16.msra.mxu0 %v4030
        %4228 = vmatprep.subr.bf16.mxu0 0
        %4229 = vmatpush1.bf16.msra.mxu0 %v4031
        %4230 = vmatprep.subr.bf16.mxu0 0
        %4231 = vmatpush1.bf16.msra.mxu0 %v4032
        %4232 = vmatprep.subr.bf16.mxu0 0
        %4233 = vmatpush1.bf16.msra.mxu0 %v4033
        %4234 = vmatprep.subr.bf16.mxu0 0
        %4235 = vmatpush1.bf16.msra.mxu0 %v4034
        %4236 = vmatprep.subr.bf16.mxu0 0
        %4237 = vmatpush1.bf16.msra.mxu0 0
        %4238 = vmatprep.subr.bf16.mxu0 0
        %4239 = vmatpush1.bf16.msra.mxu0 0
        %4240 = vmatprep.subr.bf16.mxu0 0
        %4241 = vmatpush1.bf16.msra.mxu0 0
        %4242 = vmatprep.subr.bf16.mxu0 0
        %4243 = vmatpush1.bf16.msra.mxu0 0
        %4244 = vmatprep.subr.bf16.mxu0 0
        %4245 = vmatpush1.bf16.msra.mxu0 0
        %4246 = vmatprep.subr.bf16.mxu0 0
        %4247 = vmatpush1.bf16.msra.mxu0 0
        %4248 = vmatprep.subr.bf16.mxu0 0
        %4249 = vmatpush1.bf16.msra.mxu0 0
        %4250 = vmatprep.subr.bf16.mxu0 0
        %4251 = vmatpush1.bf16.msra.mxu0 0
        %4252 = vmatprep.mubr.bf16.mxu0 0
        %4253 = vmatmul.mubr.bf16.gmra.mrb[0].mxu0 %v2793
        %v4254 = vpop.f32.mrb[0].mxu0
        %v4255 = vadd.f32 %v4094, %v4254
        %v4256 = vpop.f32.mrb[0].mxu0
        %v4257 = vpop.f32.mrb[0].mxu0
        %v4258 = vadd.f32 %v4097, %v4257
        %v4259 = vpop.f32.mrb[0].mxu0
        %4260 = vmatprep.mubr.bf16.mxu0 0
        %4261 = vmatmul.mubr.bf16.gmra.mrb[0].mxu0 %v2796
        %v4262 = vpop.f32.mrb[0].mxu0
        %v4263 = vadd.f32 %v4102, %v4262
        %v4264 = vpop.f32.mrb[0].mxu0
        %v4265 = vpop.f32.mrb[0].mxu0
        %v4266 = vadd.f32 %v4105, %v4265
        %v4267 = vpop.f32.mrb[0].mxu0
        %4268 = vmatprep.mubr.bf16.mxu0 0
        %4269 = vmatmul.mubr.bf16.gmra.mrb[0].mxu0 %v2799
        %v4270 = vpop.f32.mrb[0].mxu0
        %v4271 = vadd.f32 %v4110, %v4270
        %v4272 = vpop.f32.mrb[0].mxu0
        %v4273 = vpop.f32.mrb[0].mxu0
        %v4274 = vadd.f32 %v4113, %v4273
        %v4275 = vpop.f32.mrb[0].mxu0
        %4276 = vmatprep.mubr.bf16.mxu0 0
        %4277 = vmatmul.mubr.bf16.gmra.mrb[0].mxu0 %v2802
        %v4278 = vpop.f32.mrb[0].mxu0
        %v4279 = vadd.f32 %v4118, %v4278
        %v4280 = vpop.f32.mrb[0].mxu0
        %v4281 = vpop.f32.mrb[0].mxu0
        %v4282 = vadd.f32 %v4121, %v4281
        %v4283 = vpop.f32.mrb[0].mxu0
        %4284 = vmatprep.mubr.bf16.mxu0 0
        %4285 = vmatmul.mubr.bf16.gmra.mrb[0].mxu0 %v2805
        %v4286 = vpop.f32.mrb[0].mxu0
        %v4287 = vadd.f32 %v4126, %v4286
        %v4288 = vpop.f32.mrb[0].mxu0
        %v4289 = vpop.f32.mrb[0].mxu0
        %v4290 = vadd.f32 %v4129, %v4289
        %v4291 = vpop.f32.mrb[0].mxu0
        %4292 = vmatprep.mubr.bf16.mxu0 0
        %4293 = vmatmul.mubr.bf16.gmra.mrb[0].mxu0 %v2808
        %v4294 = vpop.f32.mrb[0].mxu0
        %v4295 = vadd.f32 %v4134, %v4294
        %v4296 = vpop.f32.mrb[0].mxu0
        %v4297 = vpop.f32.mrb[0].mxu0
        %v4298 = vadd.f32 %v4137, %v4297
        %v4299 = vpop.f32.mrb[0].mxu0
        %4300 = vmatprep.mubr.bf16.mxu0 0
        %4301 = vmatmul.mubr.bf16.gmra.mrb[0].mxu0 %v2811
        %v4302 = vpop.f32.mrb[0].mxu0
        %v4303 = vadd.f32 %v4142, %v4302
        %v4304 = vpop.f32.mrb[0].mxu0
        %v4305 = vpop.f32.mrb[0].mxu0
        %v4306 = vadd.f32 %v4145, %v4305
        %v4307 = vpop.f32.mrb[0].mxu0
        %4308 = vmatprep.mubr.bf16.mxu0 0
        %4309 = vmatmul.mubr.bf16.gmra.mrb[0].mxu0 %v2814
        %v4310 = vpop.f32.mrb[0].mxu0
        %v4311 = vadd.f32 %v4150, %v4310
        %v4312 = vpop.f32.mrb[0].mxu0
        %v4313 = vpop.f32.mrb[0].mxu0
        %v4314 = vadd.f32 %v4153, %v4313
        %v4315 = vpop.f32.mrb[0].mxu0
        %4316 = vmatprep.mubr.bf16.mxu0 0
        %4317 = vmatmul.mubr.bf16.gmra.mrb[0].mxu0 %v2817
        %v4318 = vpop.f32.mrb[0].mxu0
        %v4319 = vadd.f32 %v4158, %v4318
        %v4320 = vpop.f32.mrb[0].mxu0
        %v4321 = vpop.f32.mrb[0].mxu0
        %v4322 = vadd.f32 %v4161, %v4321
        %v4323 = vpop.f32.mrb[0].mxu0
        %4324 = vmatprep.mubr.bf16.mxu0 0
        %4325 = vmatmul.mubr.bf16.gmra.mrb[0].mxu0 %v2820
        %v4326 = vpop.f32.mrb[0].mxu0
        %v4327 = vadd.f32 %v4166, %v4326
        %v4328 = vpop.f32.mrb[0].mxu0
        %v4329 = vpop.f32.mrb[0].mxu0
        %v4330 = vadd.f32 %v4169, %v4329
        %v4331 = vpop.f32.mrb[0].mxu0
        %4332 = vmatprep.mubr.bf16.mxu0 0
        %4333 = vmatmul.mubr.bf16.gmra.mrb[0].mxu0 %v2823
        %v4334 = vpop.f32.mrb[0].mxu0
        %v4335 = vadd.f32 %v4174, %v4334
        %v4336 = vpop.f32.mrb[0].mxu0
        %v4337 = vpop.f32.mrb[0].mxu0
        %v4338 = vadd.f32 %v4177, %v4337
        %v4339 = vpop.f32.mrb[0].mxu0
        %4340 = vmatprep.mubr.bf16.mxu0 0
        %4341 = vmatmul.mubr.bf16.gmra.mrb[0].mxu0 %v2826
        %v4342 = vpop.f32.mrb[0].mxu0
        %v4343 = vadd.f32 %v4182, %v4342
        %v4344 = vpop.f32.mrb[0].mxu0
        %v4345 = vpop.f32.mrb[0].mxu0
        %v4346 = vadd.f32 %v4185, %v4345
        %v4347 = vpop.f32.mrb[0].mxu0
        %4348 = vmatprep.mubr.bf16.mxu0 0
        %4349 = vmatmul.mubr.bf16.gmra.mrb[0].mxu0 %v2829
        %v4350 = vpop.f32.mrb[0].mxu0
        %v4351 = vadd.f32 %v4190, %v4350
        %v4352 = vpop.f32.mrb[0].mxu0
        %v4353 = vpop.f32.mrb[0].mxu0
        %v4354 = vadd.f32 %v4193, %v4353
        %v4355 = vpop.f32.mrb[0].mxu0
        %4356 = vmatprep.mubr.bf16.mxu0 0
        %4357 = vmatmul.mubr.bf16.gmra.mrb[0].mxu0 %v2832
        %v4358 = vpop.f32.mrb[0].mxu0
        %v4359 = vadd.f32 %v4198, %v4358
        %v4360 = vpop.f32.mrb[0].mxu0
        %v4361 = vpop.f32.mrb[0].mxu0
        %v4362 = vadd.f32 %v4201, %v4361
        %v4363 = vpop.f32.mrb[0].mxu0
        %4364 = vmatprep.mubr.bf16.mxu0 0
        %4365 = vmatmul.mubr.bf16.gmra.mrb[0].mxu0 %v2835
        %v4366 = vpop.f32.mrb[0].mxu0
        %v4367 = vadd.f32 %v4206, %v4366
        %v4368 = vpop.f32.mrb[0].mxu0
        %v4369 = vpop.f32.mrb[0].mxu0
        %v4370 = vadd.f32 %v4209, %v4369
        %v4371 = vpop.f32.mrb[0].mxu0
        %4372 = vmatprep.mubr.bf16.mxu0 0
        %4373 = vmatmul.mubr.bf16.gmra.mrb[0].mxu0 %v2786
        %v4374 = vpop.f32.mrb[0].mxu0
        %v4375 = vadd.f32 %v4214, %v4374
        %v4376 = vpop.f32.mrb[0].mxu0
        %v4377 = vpop.f32.mrb[0].mxu0
        %v4378 = vadd.f32 %v4217, %v4377
        %v4379 = vpop.f32.mrb[0].mxu0
        %4380 = vdwg.mxu0
        %v4381 = vadd.f32 %v3740, %v4255
        %v4382 = vadd.f32 %v3743, %v4258
        %v4383 = vadd.f32 %v3748, %v4263
        %v4384 = vadd.f32 %v3751, %v4266
        %v4385 = vadd.f32 %v3756, %v4271
        %v4386 = vadd.f32 %v3759, %v4274
        %v4387 = vadd.f32 %v3764, %v4279
        %v4388 = vadd.f32 %v3767, %v4282
        %v4389 = vadd.f32 %v3772, %v4287
        %v4390 = vadd.f32 %v3775, %v4290
        %v4391 = vadd.f32 %v3780, %v4295
        %v4392 = vadd.f32 %v3783, %v4298
        %v4393 = vadd.f32 %v3788, %v4303
        %v4394 = vadd.f32 %v3791, %v4306
        %v4395 = vadd.f32 %v3796, %v4311
        %v4396 = vadd.f32 %v3799, %v4314
        %v4397 = vadd.f32 %v3804, %v4319
        %v4398 = vadd.f32 %v3807, %v4322
        %v4399 = vadd.f32 %v3812, %v4327
        %v4400 = vadd.f32 %v3815, %v4330
        %v4401 = vadd.f32 %v3820, %v4335
        %v4402 = vadd.f32 %v3823, %v4338
        %v4403 = vadd.f32 %v3828, %v4343
        %v4404 = vadd.f32 %v3831, %v4346
        %v4405 = vadd.f32 %v3836, %v4351
        %v4406 = vadd.f32 %v3839, %v4354
        %v4407 = vadd.f32 %v3844, %v4359
        %v4408 = vadd.f32 %v3847, %v4362
        %v4409 = vadd.f32 %v3852, %v4367
        %v4410 = vadd.f32 %v3855, %v4370
        %v4411 = vadd.f32 %v3860, %v4375
        %v4412 = vadd.f32 %v3863, %v4378
        %v4413 = vld [vmem:[%s3 + $0x3] sm:$0x1]
        %v4414 = vlaneseq
        %v4415 = vshrl.u32 %v4414, 7
        %v4416 = vsub.s32 0, %v4415
        %v4417 = vrot.slane %v4413, %v4416
        %v4418 = vmul.f32 %v4381, %v4417
        %v4419 = vmul.f32 %v4382, %v4417
        %v4420 = vmul.f32 %v4383, %v4417
        %v4421 = vmul.f32 %v4384, %v4417
        %v4422 = vmul.f32 %v4385, %v4417
        %v4423 = vmul.f32 %v4386, %v4417
        %v4424 = vmul.f32 %v4387, %v4417
        %v4425 = vmul.f32 %v4388, %v4417
        %v4426 = vmul.f32 %v4389, %v4417
        %v4427 = vmul.f32 %v4390, %v4417
        %v4428 = vmul.f32 %v4391, %v4417
        %v4429 = vmul.f32 %v4392, %v4417
        %v4430 = vmul.f32 %v4393, %v4417
        %v4431 = vmul.f32 %v4394, %v4417
        %v4432 = vmul.f32 %v4395, %v4417
        %v4433 = vmul.f32 %v4396, %v4417
        %v4434 = vmul.f32 %v4397, %v4417
        %v4435 = vmul.f32 %v4398, %v4417
        %v4436 = vmul.f32 %v4399, %v4417
        %v4437 = vmul.f32 %v4400, %v4417
        %v4438 = vmul.f32 %v4401, %v4417
        %v4439 = vmul.f32 %v4402, %v4417
        %v4440 = vmul.f32 %v4403, %v4417
        %v4441 = vmul.f32 %v4404, %v4417
        %v4442 = vmul.f32 %v4405, %v4417
        %v4443 = vmul.f32 %v4406, %v4417
        %v4444 = vmul.f32 %v4407, %v4417
        %v4445 = vmul.f32 %v4408, %v4417
        %v4446 = vmul.f32 %v4409, %v4417
        %v4447 = vmul.f32 %v4410, %v4417
        %v4448 = vmul.f32 %v4411, %v4417
        %v4449 = vmul.f32 %v4412, %v4417
        %v4450 = vld [vmem:[%s3 + $0x4] sm:$0x1]
        %v4451 = vlaneseq
        %v4452 = vshrl.u32 %v4451, 7
        %v4453 = vsub.s32 0, %v4452
        %v4454 = vrot.slane %v4450, %v4453
        %v4455 = vadd.f32 %v4418, %v4454
        %v4456 = vadd.f32 %v4419, %v4454
        %v4457 = vadd.f32 %v4420, %v4454
        %v4458 = vadd.f32 %v4421, %v4454
        %v4459 = vadd.f32 %v4422, %v4454
        %v4460 = vadd.f32 %v4423, %v4454
        %v4461 = vadd.f32 %v4424, %v4454
        %v4462 = vadd.f32 %v4425, %v4454
        %v4463 = vadd.f32 %v4426, %v4454
        %v4464 = vadd.f32 %v4427, %v4454
        %v4465 = vadd.f32 %v4428, %v4454
        %v4466 = vadd.f32 %v4429, %v4454
        %v4467 = vadd.f32 %v4430, %v4454
        %v4468 = vadd.f32 %v4431, %v4454
        %v4469 = vadd.f32 %v4432, %v4454
        %v4470 = vadd.f32 %v4433, %v4454
        %v4471 = vadd.f32 %v4434, %v4454
        %v4472 = vadd.f32 %v4435, %v4454
        %v4473 = vadd.f32 %v4436, %v4454
        %v4474 = vadd.f32 %v4437, %v4454
        %v4475 = vadd.f32 %v4438, %v4454
        %v4476 = vadd.f32 %v4439, %v4454
        %v4477 = vadd.f32 %v4440, %v4454
        %v4478 = vadd.f32 %v4441, %v4454
        %v4479 = vadd.f32 %v4442, %v4454
        %v4480 = vadd.f32 %v4443, %v4454
        %v4481 = vadd.f32 %v4444, %v4454
        %v4482 = vadd.f32 %v4445, %v4454
        %v4483 = vadd.f32 %v4446, %v4454
        %v4484 = vadd.f32 %v4447, %v4454
        %v4485 = vadd.f32 %v4448, %v4454
        %v4486 = vadd.f32 %v4449, %v4454
        %4487 = vst [vmem:[%s329] sm:$0xff] %v4455
        %4488 = vst [vmem:[%s329 + $0x8] sm:$0xff] %v4456
        %4489 = vst [vmem:[%s329 + $0x10] sm:$0xff] %v4457
        %4490 = vst [vmem:[%s329 + $0x18] sm:$0xff] %v4458
        %4491 = vst [vmem:[%s329 + $0x20] sm:$0xff] %v4459
        %4492 = vst [vmem:[%s329 + $0x28] sm:$0xff] %v4460
        %4493 = vst [vmem:[%s329 + $0x30] sm:$0xff] %v4461
        %4494 = vst [vmem:[%s329 + $0x38] sm:$0xff] %v4462
        %4495 = vst [vmem:[%s329 + $0x40] sm:$0xff] %v4463
        %4496 = vst [vmem:[%s329 + $0x48] sm:$0xff] %v4464
        %4497 = vst [vmem:[%s329 + $0x50] sm:$0xff] %v4465
        %4498 = vst [vmem:[%s329 + $0x58] sm:$0xff] %v4466
        %4499 = vst [vmem:[%s329 + $0x60] sm:$0xff] %v4467
        %4500 = vst [vmem:[%s329 + $0x68] sm:$0xff] %v4468
        %4501 = vst [vmem:[%s329 + $0x70] sm:$0xff] %v4469
        %4502 = vst [vmem:[%s329 + $0x78] sm:$0xff] %v4470
        %4503 = vst [vmem:[%s329 + $0x80] sm:$0xff] %v4471
        %4504 = vst [vmem:[%s329 + $0x88] sm:$0xff] %v4472
        %4505 = vst [vmem:[%s329 + $0x90] sm:$0xff] %v4473
        %4506 = vst [vmem:[%s329 + $0x98] sm:$0xff] %v4474
        %4507 = vst [vmem:[%s329 + $0xa0] sm:$0xff] %v4475
        %4508 = vst [vmem:[%s329 + $0xa8] sm:$0xff] %v4476
        %4509 = vst [vmem:[%s329 + $0xb0] sm:$0xff] %v4477
        %4510 = vst [vmem:[%s329 + $0xb8] sm:$0xff] %v4478
        %4511 = vst [vmem:[%s329 + $0xc0] sm:$0xff] %v4479
        %4512 = vst [vmem:[%s329 + $0xc8] sm:$0xff] %v4480
        %4513 = vst [vmem:[%s329 + $0xd0] sm:$0xff] %v4481
        %4514 = vst [vmem:[%s329 + $0xd8] sm:$0xff] %v4482
        %4515 = vst [vmem:[%s329 + $0xe0] sm:$0xff] %v4483
        %4516 = vst [vmem:[%s329 + $0xe8] sm:$0xff] %v4484
        %4517 = vst [vmem:[%s329 + $0xf0] sm:$0xff] %v4485
        %4518 = vst [vmem:[%s329 + $0xf8] sm:$0xff] %v4486
        %v4519 = vadd.f32 %v4455, %v4456
        %v4520 = vadd.f32 %v4519, %v4457
        %v4521 = vadd.f32 %v4520, %v4458
        %v4522 = vadd.f32 %v4521, %v4459
        %v4523 = vadd.f32 %v4522, %v4460
        %v4524 = vadd.f32 %v4523, %v4461
        %v4525 = vadd.f32 %v4524, %v4462
        %v4526 = vadd.f32 %v4525, %v4463
        %v4527 = vadd.f32 %v4526, %v4464
        %v4528 = vadd.f32 %v4527, %v4465
        %v4529 = vadd.f32 %v4528, %v4466
        %v4530 = vadd.f32 %v4529, %v4467
        %v4531 = vadd.f32 %v4530, %v4468
        %v4532 = vadd.f32 %v4531, %v4469
        %v4533 = vadd.f32 %v4532, %v4470
        %v4534 = vadd.f32 %v4533, %v4471
        %v4535 = vadd.f32 %v4534, %v4472
        %v4536 = vadd.f32 %v4535, %v4473
        %v4537 = vadd.f32 %v4536, %v4474
        %v4538 = vadd.f32 %v4537, %v4475
        %v4539 = vadd.f32 %v4538, %v4476
        %v4540 = vadd.f32 %v4539, %v4477
        %v4541 = vadd.f32 %v4540, %v4478
        %v4542 = vadd.f32 %v4541, %v4479
        %v4543 = vadd.f32 %v4542, %v4480
        %v4544 = vadd.f32 %v4543, %v4481
        %v4545 = vadd.f32 %v4544, %v4482
        %v4546 = vadd.f32 %v4545, %v4483
        %v4547 = vadd.f32 %v4546, %v4484
        %v4548 = vadd.f32 %v4547, %v4485
        %v4549 = vadd.f32 %v4548, %v4486
        %v4550 = vrot.slane %v4549, 4
        %v4551 = vadd.f32 %v4549, %v4550
        %v4552 = vrot.slane %v4551, 2
        %v4553 = vadd.f32 %v4551, %v4552
        %v4554 = vrot.slane %v4553, 1
        %v4555 = vadd.f32 %v4553, %v4554
        %v4556 = vrcp.pop 256.0
        %v4557 = vmul.f32 %v4555, %v4556
        %v4558 = vmax.f32 %v4455, %v4459
        %v4559 = vmax.f32 %v4456, %v4460
        %v4560 = vmax.f32 %v4457, %v4461
        %v4561 = vmax.f32 %v4458, %v4462
        %v4562 = vmax.f32 %v4558, %v4463
        %v4563 = vmax.f32 %v4559, %v4464
        %v4564 = vmax.f32 %v4560, %v4465
        %v4565 = vmax.f32 %v4561, %v4466
        %v4566 = vmax.f32 %v4562, %v4467
        %v4567 = vmax.f32 %v4563, %v4468
        %v4568 = vmax.f32 %v4564, %v4469
        %v4569 = vmax.f32 %v4565, %v4470
        %v4570 = vmax.f32 %v4566, %v4471
        %v4571 = vmax.f32 %v4567, %v4472
        %v4572 = vmax.f32 %v4568, %v4473
        %v4573 = vmax.f32 %v4569, %v4474
        %v4574 = vmax.f32 %v4570, %v4475
        %v4575 = vmax.f32 %v4571, %v4476
        %v4576 = vmax.f32 %v4572, %v4477
        %v4577 = vmax.f32 %v4573, %v4478
        %v4578 = vmax.f32 %v4574, %v4479
        %v4579 = vmax.f32 %v4575, %v4480
        %v4580 = vmax.f32 %v4576, %v4481
        %v4581 = vmax.f32 %v4577, %v4482
        %v4582 = vmax.f32 %v4578, %v4483
        %v4583 = vmax.f32 %v4579, %v4484
        %v4584 = vmax.f32 %v4580, %v4485
        %v4585 = vmax.f32 %v4581, %v4486
        %v4586 = vmax.f32 %v4582, %v4583
        %v4587 = vmax.f32 %v4584, %v4585
        %v4588 = vmax.f32 %v4586, %v4587
        %v4589 = vrot.slane %v4588, 4
        %v4590 = vmax.f32 %v4588, %v4589
        %v4591 = vrot.slane %v4590, 2
        %v4592 = vmax.f32 %v4590, %v4591
        %v4593 = vrot.slane %v4592, 1
        %v4594 = vmax.f32 %v4592, %v4593
        %v4595 = vsel %vm1087, %v4557, %v4594
        %v4596 = vld [vmem:[%s4] sm:$0xff]
        %v4597 = vld [vmem:[%s4 + $0x8] sm:$0xff]
        %v4598 = vld [vmem:[%s4 + $0x10] sm:$0xff]
        %v4599 = vld [vmem:[%s4 + $0x18] sm:$0xff]
        %v4600 = vld [vmem:[%s4 + $0x20] sm:$0xff]
        %v4601 = vld [vmem:[%s4 + $0x28] sm:$0xff]
        %v4602 = vld [vmem:[%s4 + $0x30] sm:$0xff]
        %v4603 = vld [vmem:[%s4 + $0x38] sm:$0xff]
        %v4604 = vld [vmem:[%s4 + $0x40] sm:$0xff]
        %v4605 = vld [vmem:[%s4 + $0x48] sm:$0xff]
        %v4606 = vld [vmem:[%s4 + $0x50] sm:$0xff]
        %v4607 = vld [vmem:[%s4 + $0x58] sm:$0xff]
        %v4608 = vld [vmem:[%s4 + $0x60] sm:$0xff]
        %v4609 = vld [vmem:[%s4 + $0x68] sm:$0xff]
        %v4610 = vld [vmem:[%s4 + $0x70] sm:$0xff]
        %v4611 = vld [vmem:[%s4 + $0x78] sm:$0xff]
        %4612 = vmatprep.subr.mxu0 0.0
        %4613 = vmatpush1.msra.mxu0 %v4596
        %4614 = vmatprep.subr.mxu0 0.0
        %4615 = vmatpush1.msra.mxu0 %v4597
        %4616 = vmatprep.subr.mxu0 0.0
        %4617 = vmatpush1.msra.mxu0 %v4598
        %4618 = vmatprep.subr.mxu0 0.0
        %4619 = vmatpush1.msra.mxu0 %v4599
        %4620 = vmatprep.subr.mxu0 0.0
        %4621 = vmatpush1.msra.mxu0 %v4600
        %4622 = vmatprep.subr.mxu0 0.0
        %4623 = vmatpush1.msra.mxu0 %v4601
        %4624 = vmatprep.subr.mxu0 0.0
        %4625 = vmatpush1.msra.mxu0 %v4602
        %4626 = vmatprep.subr.mxu0 0.0
        %4627 = vmatpush1.msra.mxu0 %v4603
        %4628 = vmatprep.subr.mxu0 0.0
        %4629 = vmatpush1.msra.mxu0 %v4604
        %4630 = vmatprep.subr.mxu0 0.0
        %4631 = vmatpush1.msra.mxu0 %v4605
        %4632 = vmatprep.subr.mxu0 0.0
        %4633 = vmatpush1.msra.mxu0 %v4606
        %4634 = vmatprep.subr.mxu0 0.0
        %4635 = vmatpush1.msra.mxu0 %v4607
        %4636 = vmatprep.subr.mxu0 0.0
        %4637 = vmatpush1.msra.mxu0 %v4608
        %4638 = vmatprep.subr.mxu0 0.0
        %4639 = vmatpush1.msra.mxu0 %v4609
        %4640 = vmatprep.subr.mxu0 0.0
        %4641 = vmatpush1.msra.mxu0 %v4610
        %4642 = vmatprep.subr.mxu0 0.0
        %4643 = vmatpush1.msra.mxu0 %v4611
        %4644 = vmatprep.subr.mxu0 0.0
        %4645 = vmatpush1.msra.mxu0 0.0
        %4646 = vmatprep.subr.mxu0 0.0
        %4647 = vmatpush1.msra.mxu0 0.0
        %4648 = vmatprep.subr.mxu0 0.0
        %4649 = vmatpush1.msra.mxu0 0.0
        %4650 = vmatprep.subr.mxu0 0.0
        %4651 = vmatpush1.msra.mxu0 0.0
        %4652 = vmatprep.subr.mxu0 0.0
        %4653 = vmatpush1.msra.mxu0 0.0
        %4654 = vmatprep.subr.mxu0 0.0
        %4655 = vmatpush1.msra.mxu0 0.0
        %4656 = vmatprep.subr.mxu0 0.0
        %4657 = vmatpush1.msra.mxu0 0.0
        %4658 = vmatprep.subr.mxu0 0.0
        %4659 = vmatpush1.msra.mxu0 0.0
        %4660 = vmatprep.subr.mxu0 0.0
        %4661 = vmatpush1.msra.mxu0 0.0
        %4662 = vmatprep.subr.mxu0 0.0
        %4663 = vmatpush1.msra.mxu0 0.0
        %4664 = vmatprep.subr.mxu0 0.0
        %4665 = vmatpush1.msra.mxu0 0.0
        %4666 = vmatprep.subr.mxu0 0.0
        %4667 = vmatpush1.msra.mxu0 0.0
        %4668 = vmatprep.subr.mxu0 0.0
        %4669 = vmatpush1.msra.mxu0 0.0
        %4670 = vmatprep.subr.mxu0 0.0
        %4671 = vmatpush1.msra.mxu0 0.0
        %4672 = vmatprep.subr.mxu0 0.0
        %4673 = vmatpush1.msra.mxu0 0.0
        %4674 = vmatprep.subr.mxu0 0.0
        %4675 = vmatpush1.msra.mxu0 0.0
        %4676 = vmatprep.mubr.f32.mxu0 0.0
        %4677 = vmatmul.mubr.f32.gmra.mrb[0].mxu0 %v4595
        %v4678 = vpop.f32.mrb[0].mxu0
        %v4679 = vadd.f32 0.0, %v4678
        %v4680 = vpop.f32.mrb[0].mxu0
        %4681 = vdwg.mxu0
        %v4682 = vmax.f32 %v4679, 0.0
        %v4683 = vld [vmem:[%s5] sm:$0xff]
        %vm4684 = vcmask 64512
        %v4686 = vsel %vm4684, %v4682, 0
        %4688 = vmatprep.subr.mxu0 0.0
        %4689 = vmatpush1.msra.mxu0 %v4683
        %4690 = vmatprep.subr.mxu0 0.0
        %4691 = vmatpush1.msra.mxu0 0.0
        %4692 = vmatprep.subr.mxu0 0.0
        %4693 = vmatpush1.msra.mxu0 0.0
        %4694 = vmatprep.subr.mxu0 0.0
        %4695 = vmatpush1.msra.mxu0 0.0
        %4696 = vmatprep.subr.mxu0 0.0
        %4697 = vmatpush1.msra.mxu0 0.0
        %4698 = vmatprep.subr.mxu0 0.0
        %4699 = vmatpush1.msra.mxu0 0.0
        %4700 = vmatprep.subr.mxu0 0.0
        %4701 = vmatpush1.msra.mxu0 0.0
        %4702 = vmatprep.subr.mxu0 0.0
        %4703 = vmatpush1.msra.mxu0 0.0
        %4704 = vmatprep.subr.mxu0 0.0
        %4705 = vmatpush1.msra.mxu0 0.0
        %4706 = vmatprep.subr.mxu0 0.0
        %4707 = vmatpush1.msra.mxu0 0.0
        %4708 = vmatprep.subr.mxu0 0.0
        %4709 = vmatpush1.msra.mxu0 0.0
        %4710 = vmatprep.subr.mxu0 0.0
        %4711 = vmatpush1.msra.mxu0 0.0
        %4712 = vmatprep.subr.mxu0 0.0
        %4713 = vmatpush1.msra.mxu0 0.0
        %4714 = vmatprep.subr.mxu0 0.0
        %4715 = vmatpush1.msra.mxu0 0.0
        %4716 = vmatprep.subr.mxu0 0.0
        %4717 = vmatpush1.msra.mxu0 0.0
        %4718 = vmatprep.subr.mxu0 0.0
        %4719 = vmatpush1.msra.mxu0 0.0
        %4720 = vmatprep.subr.mxu0 0.0
        %4721 = vmatpush1.msra.mxu0 0.0
        %4722 = vmatprep.subr.mxu0 0.0
        %4723 = vmatpush1.msra.mxu0 0.0
        %4724 = vmatprep.subr.mxu0 0.0
        %4725 = vmatpush1.msra.mxu0 0.0
        %4726 = vmatprep.subr.mxu0 0.0
        %4727 = vmatpush1.msra.mxu0 0.0
        %4728 = vmatprep.subr.mxu0 0.0
        %4729 = vmatpush1.msra.mxu0 0.0
        %4730 = vmatprep.subr.mxu0 0.0
        %4731 = vmatpush1.msra.mxu0 0.0
        %4732 = vmatprep.subr.mxu0 0.0
        %4733 = vmatpush1.msra.mxu0 0.0
        %4734 = vmatprep.subr.mxu0 0.0
        %4735 = vmatpush1.msra.mxu0 0.0
        %4736 = vmatprep.subr.mxu0 0.0
        %4737 = vmatpush1.msra.mxu0 0.0
        %4738 = vmatprep.subr.mxu0 0.0
        %4739 = vmatpush1.msra.mxu0 0.0
        %4740 = vmatprep.subr.mxu0 0.0
        %4741 = vmatpush1.msra.mxu0 0.0
        %4742 = vmatprep.subr.mxu0 0.0
        %4743 = vmatpush1.msra.mxu0 0.0
        %4744 = vmatprep.subr.mxu0 0.0
        %4745 = vmatpush1.msra.mxu0 0.0
        %4746 = vmatprep.subr.mxu0 0.0
        %4747 = vmatpush1.msra.mxu0 0.0
        %4748 = vmatprep.subr.mxu0 0.0
        %4749 = vmatpush1.msra.mxu0 0.0
        %4750 = vmatprep.subr.mxu0 0.0
        %4751 = vmatpush1.msra.mxu0 0.0
        %4752 = vmatprep.mubr.f32.mxu0 0.0
        %4753 = vmatmul.mubr.f32.gmra.mrb[0].mxu0 %v4686
        %v4754 = vpop.f32.mrb[0].mxu0
        %v4755 = vadd.f32 0.0, %v4754
        %v4756 = vpop.f32.mrb[0].mxu0
        %4757 = vdwg.mxu0
        %v4759 = vrot.slane %v4755, 1
        %v4761 = vadd.f32 %v4755, %v4759
        %v4762 = vsub.f32 0.0, %v4761
        %v4763 = vmul.f32 %v4762, 1.442695
        %v4764 = vpow.pop %v4763
        %v4765 = vadd.f32 %v4764, 1.0
        %v4766 = vrcp.pop %v4765
        %v4767 = vmul.f32 1.0, %v4766
        %v4768 = vlaneseq
        %v4769 = vshrl.u32 %v4768, 7
        %v4770 = vsub.s32 0, %v4769
        %v4771 = vrot.slane %v4767, %v4770
        %v4772 = vmul.f32 %v4455, %v4771
        %v4773 = vmul.f32 %v4456, %v4771
        %v4774 = vmul.f32 %v4457, %v4771
        %v4775 = vmul.f32 %v4458, %v4771
        %v4776 = vmul.f32 %v4459, %v4771
        %v4777 = vmul.f32 %v4460, %v4771
        %v4778 = vmul.f32 %v4461, %v4771
        %v4779 = vmul.f32 %v4462, %v4771
        %v4780 = vmul.f32 %v4463, %v4771
        %v4781 = vmul.f32 %v4464, %v4771
        %v4782 = vmul.f32 %v4465, %v4771
        %v4783 = vmul.f32 %v4466, %v4771
        %v4784 = vmul.f32 %v4467, %v4771
        %v4785 = vmul.f32 %v4468, %v4771
        %v4786 = vmul.f32 %v4469, %v4771
        %v4787 = vmul.f32 %v4470, %v4771
        %v4788 = vmul.f32 %v4471, %v4771
        %v4789 = vmul.f32 %v4472, %v4771
        %v4790 = vmul.f32 %v4473, %v4771
        %v4791 = vmul.f32 %v4474, %v4771
        %v4792 = vmul.f32 %v4475, %v4771
        %v4793 = vmul.f32 %v4476, %v4771
        %v4794 = vmul.f32 %v4477, %v4771
        %v4795 = vmul.f32 %v4478, %v4771
        %v4796 = vmul.f32 %v4479, %v4771
        %v4797 = vmul.f32 %v4480, %v4771
        %v4798 = vmul.f32 %v4481, %v4771
        %v4799 = vmul.f32 %v4482, %v4771
        %v4800 = vmul.f32 %v4483, %v4771
        %v4801 = vmul.f32 %v4484, %v4771
        %v4802 = vmul.f32 %v4485, %v4771
        %v4803 = vmul.f32 %v4486, %v4771
        %4804 = vst [vmem:[%s336] sm:$0xff] %v4772
        %4805 = vst [vmem:[%s336 + $0x8] sm:$0xff] %v4773
        %4806 = vst [vmem:[%s336 + $0x10] sm:$0xff] %v4774
        %4807 = vst [vmem:[%s336 + $0x18] sm:$0xff] %v4775
        %4808 = vst [vmem:[%s336 + $0x20] sm:$0xff] %v4776
        %4809 = vst [vmem:[%s336 + $0x28] sm:$0xff] %v4777
        %4810 = vst [vmem:[%s336 + $0x30] sm:$0xff] %v4778
        %4811 = vst [vmem:[%s336 + $0x38] sm:$0xff] %v4779
        %4812 = vst [vmem:[%s336 + $0x40] sm:$0xff] %v4780
        %4813 = vst [vmem:[%s336 + $0x48] sm:$0xff] %v4781
        %4814 = vst [vmem:[%s336 + $0x50] sm:$0xff] %v4782
        %4815 = vst [vmem:[%s336 + $0x58] sm:$0xff] %v4783
        %4816 = vst [vmem:[%s336 + $0x60] sm:$0xff] %v4784
        %4817 = vst [vmem:[%s336 + $0x68] sm:$0xff] %v4785
        %4818 = vst [vmem:[%s336 + $0x70] sm:$0xff] %v4786
        %4819 = vst [vmem:[%s336 + $0x78] sm:$0xff] %v4787
        %4820 = vst [vmem:[%s336 + $0x80] sm:$0xff] %v4788
        %4821 = vst [vmem:[%s336 + $0x88] sm:$0xff] %v4789
        %4822 = vst [vmem:[%s336 + $0x90] sm:$0xff] %v4790
        %4823 = vst [vmem:[%s336 + $0x98] sm:$0xff] %v4791
        %4824 = vst [vmem:[%s336 + $0xa0] sm:$0xff] %v4792
        %4825 = vst [vmem:[%s336 + $0xa8] sm:$0xff] %v4793
        %4826 = vst [vmem:[%s336 + $0xb0] sm:$0xff] %v4794
        %4827 = vst [vmem:[%s336 + $0xb8] sm:$0xff] %v4795
        %4828 = vst [vmem:[%s336 + $0xc0] sm:$0xff] %v4796
        %4829 = vst [vmem:[%s336 + $0xc8] sm:$0xff] %v4797
        %4830 = vst [vmem:[%s336 + $0xd0] sm:$0xff] %v4798
        %4831 = vst [vmem:[%s336 + $0xd8] sm:$0xff] %v4799
        %4832 = vst [vmem:[%s336 + $0xe0] sm:$0xff] %v4800
        %4833 = vst [vmem:[%s336 + $0xe8] sm:$0xff] %v4801
        %4834 = vst [vmem:[%s336 + $0xf0] sm:$0xff] %v4802
        %4835 = vst [vmem:[%s336 + $0xf8] sm:$0xff] %v4803
        %4836 = vadd.xlane.f32.xlu0 %v4455
        %v4837 = vpop.xlane.xlu0 %4836
        %4838 = vadd.xlane.f32.xlu0 %v4456
        %v4839 = vpop.xlane.xlu0 %4838
        %4840 = vadd.xlane.f32.xlu0 %v4457
        %v4841 = vpop.xlane.xlu0 %4840
        %4842 = vadd.xlane.f32.xlu0 %v4458
        %v4843 = vpop.xlane.xlu0 %4842
        %4844 = vadd.xlane.f32.xlu0 %v4459
        %v4845 = vpop.xlane.xlu0 %4844
        %4846 = vadd.xlane.f32.xlu0 %v4460
        %v4847 = vpop.xlane.xlu0 %4846
        %4848 = vadd.xlane.f32.xlu0 %v4461
        %v4849 = vpop.xlane.xlu0 %4848
        %4850 = vadd.xlane.f32.xlu0 %v4462
        %v4851 = vpop.xlane.xlu0 %4850
        %4852 = vadd.xlane.f32.xlu0 %v4463
        %v4853 = vpop.xlane.xlu0 %4852
        %4854 = vadd.xlane.f32.xlu0 %v4464
        %v4855 = vpop.xlane.xlu0 %4854
        %4856 = vadd.xlane.f32.xlu0 %v4465
        %v4857 = vpop.xlane.xlu0 %4856
        %4858 = vadd.xlane.f32.xlu0 %v4466
        %v4859 = vpop.xlane.xlu0 %4858
        %4860 = vadd.xlane.f32.xlu0 %v4467
        %v4861 = vpop.xlane.xlu0 %4860
        %4862 = vadd.xlane.f32.xlu0 %v4468
        %v4863 = vpop.xlane.xlu0 %4862
        %4864 = vadd.xlane.f32.xlu0 %v4469
        %v4865 = vpop.xlane.xlu0 %4864
        %4866 = vadd.xlane.f32.xlu0 %v4470
        %v4867 = vpop.xlane.xlu0 %4866
        %4868 = vadd.xlane.f32.xlu0 %v4471
        %v4869 = vpop.xlane.xlu0 %4868
        %4870 = vadd.xlane.f32.xlu0 %v4472
        %v4871 = vpop.xlane.xlu0 %4870
        %4872 = vadd.xlane.f32.xlu0 %v4473
        %v4873 = vpop.xlane.xlu0 %4872
        %4874 = vadd.xlane.f32.xlu0 %v4474
        %v4875 = vpop.xlane.xlu0 %4874
        %4876 = vadd.xlane.f32.xlu0 %v4475
        %v4877 = vpop.xlane.xlu0 %4876
        %4878 = vadd.xlane.f32.xlu0 %v4476
        %v4879 = vpop.xlane.xlu0 %4878
        %4880 = vadd.xlane.f32.xlu0 %v4477
        %v4881 = vpop.xlane.xlu0 %4880
        %4882 = vadd.xlane.f32.xlu0 %v4478
        %v4883 = vpop.xlane.xlu0 %4882
        %4884 = vadd.xlane.f32.xlu0 %v4479
        %v4885 = vpop.xlane.xlu0 %4884
        %4886 = vadd.xlane.f32.xlu0 %v4480
        %v4887 = vpop.xlane.xlu0 %4886
        %4888 = vadd.xlane.f32.xlu0 %v4481
        %v4889 = vpop.xlane.xlu0 %4888
        %4890 = vadd.xlane.f32.xlu0 %v4482
        %v4891 = vpop.xlane.xlu0 %4890
        %4892 = vadd.xlane.f32.xlu0 %v4483
        %v4893 = vpop.xlane.xlu0 %4892
        %4894 = vadd.xlane.f32.xlu0 %v4484
        %v4895 = vpop.xlane.xlu0 %4894
        %4896 = vadd.xlane.f32.xlu0 %v4485
        %v4897 = vpop.xlane.xlu0 %4896
        %4898 = vadd.xlane.f32.xlu0 %v4486
        %v4899 = vpop.xlane.xlu0 %4898
        %v4900 = vrcp.pop 128.0
        %v4901 = vmul.f32 %v4837, %v4900
        %v4902 = vmul.f32 %v4839, %v4900
        %v4903 = vmul.f32 %v4841, %v4900
        %v4904 = vmul.f32 %v4843, %v4900
        %v4905 = vmul.f32 %v4845, %v4900
        %v4906 = vmul.f32 %v4847, %v4900
        %v4907 = vmul.f32 %v4849, %v4900
        %v4908 = vmul.f32 %v4851, %v4900
        %v4909 = vmul.f32 %v4853, %v4900
        %v4910 = vmul.f32 %v4855, %v4900
        %v4911 = vmul.f32 %v4857, %v4900
        %v4912 = vmul.f32 %v4859, %v4900
        %v4913 = vmul.f32 %v4861, %v4900
        %v4914 = vmul.f32 %v4863, %v4900
        %v4915 = vmul.f32 %v4865, %v4900
        %v4916 = vmul.f32 %v4867, %v4900
        %v4917 = vmul.f32 %v4869, %v4900
        %v4918 = vmul.f32 %v4871, %v4900
        %v4919 = vmul.f32 %v4873, %v4900
        %v4920 = vmul.f32 %v4875, %v4900
        %v4921 = vmul.f32 %v4877, %v4900
        %v4922 = vmul.f32 %v4879, %v4900
        %v4923 = vmul.f32 %v4881, %v4900
        %v4924 = vmul.f32 %v4883, %v4900
        %v4925 = vmul.f32 %v4885, %v4900
        %v4926 = vmul.f32 %v4887, %v4900
        %v4927 = vmul.f32 %v4889, %v4900
        %v4928 = vmul.f32 %v4891, %v4900
        %v4929 = vmul.f32 %v4893, %v4900
        %v4930 = vmul.f32 %v4895, %v4900
        %v4931 = vmul.f32 %v4897, %v4900
        %v4932 = vmul.f32 %v4899, %v4900
        %4933 = vmax.xlane.f32.xlu0 %v4455
        %v4934 = vpop.xlane.xlu0 %4933
        %4935 = vmax.xlane.f32.xlu0 %v4456
        %v4936 = vpop.xlane.xlu0 %4935
        %4937 = vmax.xlane.f32.xlu0 %v4457
        %v4938 = vpop.xlane.xlu0 %4937
        %4939 = vmax.xlane.f32.xlu0 %v4458
        %v4940 = vpop.xlane.xlu0 %4939
        %4941 = vmax.xlane.f32.xlu0 %v4459
        %v4942 = vpop.xlane.xlu0 %4941
        %4943 = vmax.xlane.f32.xlu0 %v4460
        %v4944 = vpop.xlane.xlu0 %4943
        %4945 = vmax.xlane.f32.xlu0 %v4461
        %v4946 = vpop.xlane.xlu0 %4945
        %4947 = vmax.xlane.f32.xlu0 %v4462
        %v4948 = vpop.xlane.xlu0 %4947
        %4949 = vmax.xlane.f32.xlu0 %v4463
        %v4950 = vpop.xlane.xlu0 %4949
        %4951 = vmax.xlane.f32.xlu0 %v4464
        %v4952 = vpop.xlane.xlu0 %4951
        %4953 = vmax.xlane.f32.xlu0 %v4465
        %v4954 = vpop.xlane.xlu0 %4953
        %4955 = vmax.xlane.f32.xlu0 %v4466
        %v4956 = vpop.xlane.xlu0 %4955
        %4957 = vmax.xlane.f32.xlu0 %v4467
        %v4958 = vpop.xlane.xlu0 %4957
        %4959 = vmax.xlane.f32.xlu0 %v4468
        %v4960 = vpop.xlane.xlu0 %4959
        %4961 = vmax.xlane.f32.xlu0 %v4469
        %v4962 = vpop.xlane.xlu0 %4961
        %4963 = vmax.xlane.f32.xlu0 %v4470
        %v4964 = vpop.xlane.xlu0 %4963
        %4965 = vmax.xlane.f32.xlu0 %v4471
        %v4966 = vpop.xlane.xlu0 %4965
        %4967 = vmax.xlane.f32.xlu0 %v4472
        %v4968 = vpop.xlane.xlu0 %4967
        %4969 = vmax.xlane.f32.xlu0 %v4473
        %v4970 = vpop.xlane.xlu0 %4969
        %4971 = vmax.xlane.f32.xlu0 %v4474
        %v4972 = vpop.xlane.xlu0 %4971
        %4973 = vmax.xlane.f32.xlu0 %v4475
        %v4974 = vpop.xlane.xlu0 %4973
        %4975 = vmax.xlane.f32.xlu0 %v4476
        %v4976 = vpop.xlane.xlu0 %4975
        %4977 = vmax.xlane.f32.xlu0 %v4477
        %v4978 = vpop.xlane.xlu0 %4977
        %4979 = vmax.xlane.f32.xlu0 %v4478
        %v4980 = vpop.xlane.xlu0 %4979
        %4981 = vmax.xlane.f32.xlu0 %v4479
        %v4982 = vpop.xlane.xlu0 %4981
        %4983 = vmax.xlane.f32.xlu0 %v4480
        %v4984 = vpop.xlane.xlu0 %4983
        %4985 = vmax.xlane.f32.xlu0 %v4481
        %v4986 = vpop.xlane.xlu0 %4985
        %4987 = vmax.xlane.f32.xlu0 %v4482
        %v4988 = vpop.xlane.xlu0 %4987
        %4989 = vmax.xlane.f32.xlu0 %v4483
        %v4990 = vpop.xlane.xlu0 %4989
        %4991 = vmax.xlane.f32.xlu0 %v4484
        %v4992 = vpop.xlane.xlu0 %4991
        %4993 = vmax.xlane.f32.xlu0 %v4485
        %v4994 = vpop.xlane.xlu0 %4993
        %4995 = vmax.xlane.f32.xlu0 %v4486
        %v4996 = vpop.xlane.xlu0 %4995
        %vm4997 = vcmask 7168
        %v4998 = vsel %vm4997, %v4901, %v4934
        %v4999 = vsel %vm4997, %v4902, %v4936
        %v5000 = vsel %vm4997, %v4903, %v4938
        %v5001 = vsel %vm4997, %v4904, %v4940
        %v5002 = vsel %vm4997, %v4905, %v4942
        %v5003 = vsel %vm4997, %v4906, %v4944
        %v5004 = vsel %vm4997, %v4907, %v4946
        %v5005 = vsel %vm4997, %v4908, %v4948
        %v5006 = vsel %vm4997, %v4909, %v4950
        %v5007 = vsel %vm4997, %v4910, %v4952
        %v5008 = vsel %vm4997, %v4911, %v4954
        %v5009 = vsel %vm4997, %v4912, %v4956
        %v5010 = vsel %vm4997, %v4913, %v4958
        %v5011 = vsel %vm4997, %v4914, %v4960
        %v5012 = vsel %vm4997, %v4915, %v4962
        %v5013 = vsel %vm4997, %v4916, %v4964
        %v5014 = vsel %vm4997, %v4917, %v4966
        %v5015 = vsel %vm4997, %v4918, %v4968
        %v5016 = vsel %vm4997, %v4919, %v4970
        %v5017 = vsel %vm4997, %v4920, %v4972
        %v5018 = vsel %vm4997, %v4921, %v4974
        %v5019 = vsel %vm4997, %v4922, %v4976
        %v5020 = vsel %vm4997, %v4923, %v4978
        %v5021 = vsel %vm4997, %v4924, %v4980
        %v5022 = vsel %vm4997, %v4925, %v4982
        %v5023 = vsel %vm4997, %v4926, %v4984
        %v5024 = vsel %vm4997, %v4927, %v4986
        %v5025 = vsel %vm4997, %v4928, %v4988
        %v5026 = vsel %vm4997, %v4929, %v4990
        %v5027 = vsel %vm4997, %v4930, %v4992
        %v5028 = vsel %vm4997, %v4931, %v4994
        %v5029 = vsel %vm4997, %v4932, %v4996
        %v5030 = vsel %vm863, 0.0, %v4998
        %v5031 = vsel %vm864, 0.0, %v4999
        %v5032 = vsel %vm865, 0.0, %v5000
        %v5033 = vsel %vm866, 0.0, %v5001
        %v5034 = vsel %vm867, 0.0, %v5002
        %v5035 = vsel %vm868, 0.0, %v5003
        %v5036 = vsel %vm869, 0.0, %v5004
        %v5037 = vsel %vm870, 0.0, %v5005
        %v5038 = vsel %vm871, 0.0, %v5006
        %v5039 = vsel %vm872, 0.0, %v5007
        %v5040 = vsel %vm873, 0.0, %v5008
        %v5041 = vsel %vm874, 0.0, %v5009
        %v5042 = vsel %vm875, 0.0, %v5010
        %v5043 = vsel %vm876, 0.0, %v5011
        %v5044 = vsel %vm877, 0.0, %v5012
        %v5045 = vsel %vm878, 0.0, %v5013
        %v5046 = vsel %vm879, 0.0, %v5014
        %v5047 = vsel %vm880, 0.0, %v5015
        %v5048 = vsel %vm881, 0.0, %v5016
        %v5049 = vsel %vm882, 0.0, %v5017
        %v5050 = vsel %vm883, 0.0, %v5018
        %v5051 = vsel %vm884, 0.0, %v5019
        %v5052 = vsel %vm885, 0.0, %v5020
        %v5053 = vsel %vm886, 0.0, %v5021
        %v5054 = vsel %vm887, 0.0, %v5022
        %v5055 = vsel %vm888, 0.0, %v5023
        %v5056 = vsel %vm889, 0.0, %v5024
        %v5057 = vsel %vm890, 0.0, %v5025
        %v5058 = vsel %vm891, 0.0, %v5026
        %v5059 = vsel %vm892, 0.0, %v5027
        %v5060 = vsel %vm893, 0.0, %v5028
        %v5061 = vsel %vm894, 0.0, %v5029
        %v5062 = vsel %vm991, 0.0, %v4998
        %v5063 = vsel %vm992, 0.0, %v4999
        %v5064 = vsel %vm993, 0.0, %v5000
        %v5065 = vsel %vm994, 0.0, %v5001
        %v5066 = vsel %vm995, 0.0, %v5002
        %v5067 = vsel %vm996, 0.0, %v5003
        %v5068 = vsel %vm997, 0.0, %v5004
        %v5069 = vsel %vm998, 0.0, %v5005
        %v5070 = vsel %vm999, 0.0, %v5006
        %v5071 = vsel %vm1000, 0.0, %v5007
        %v5072 = vsel %vm1001, 0.0, %v5008
        %v5073 = vsel %vm1002, 0.0, %v5009
        %v5074 = vsel %vm1003, 0.0, %v5010
        %v5075 = vsel %vm1004, 0.0, %v5011
        %v5076 = vsel %vm1005, 0.0, %v5012
        %v5077 = vsel %vm1006, 0.0, %v5013
        %v5078 = vsel %vm1007, 0.0, %v5014
        %v5079 = vsel %vm1008, 0.0, %v5015
        %v5080 = vsel %vm1009, 0.0, %v5016
        %v5081 = vsel %vm1010, 0.0, %v5017
        %v5082 = vsel %vm1011, 0.0, %v5018
        %v5083 = vsel %vm1012, 0.0, %v5019
        %v5084 = vsel %vm1013, 0.0, %v5020
        %v5085 = vsel %vm1014, 0.0, %v5021
        %v5086 = vsel %vm1015, 0.0, %v5022
        %v5087 = vsel %vm1016, 0.0, %v5023
        %v5088 = vsel %vm1017, 0.0, %v5024
        %v5089 = vsel %vm1018, 0.0, %v5025
        %v5090 = vsel %vm1019, 0.0, %v5026
        %v5091 = vsel %vm1020, 0.0, %v5027
        %v5092 = vsel %vm1021, 0.0, %v5028
        %v5093 = vsel %vm1022, 0.0, %v5029
        %v5126 = vrot.slane %v5030, 7
        %v5127 = vrot.slane %v5031, 7
        %v5128 = vsel %vm1087, %v5126, %v5127
        %v5129 = vrot.slane %v5032, 7
        %v5130 = vsel %vm1087, %v5127, %v5129
        %v5131 = vrot.slane %v5033, 7
        %v5132 = vsel %vm1087, %v5129, %v5131
        %v5133 = vrot.slane %v5034, 7
        %v5134 = vsel %vm1087, %v5131, %v5133
        %v5135 = vrot.slane %v5035, 7
        %v5136 = vsel %vm1087, %v5133, %v5135
        %v5137 = vrot.slane %v5036, 7
        %v5138 = vsel %vm1087, %v5135, %v5137
        %v5139 = vrot.slane %v5037, 7
        %v5140 = vsel %vm1087, %v5137, %v5139
        %v5141 = vrot.slane %v5038, 7
        %v5142 = vsel %vm1087, %v5139, %v5141
        %v5143 = vrot.slane %v5039, 7
        %v5144 = vsel %vm1087, %v5141, %v5143
        %v5145 = vrot.slane %v5040, 7
        %v5146 = vsel %vm1087, %v5143, %v5145
        %v5147 = vrot.slane %v5041, 7
        %v5148 = vsel %vm1087, %v5145, %v5147
        %v5149 = vrot.slane %v5042, 7
        %v5150 = vsel %vm1087, %v5147, %v5149
        %v5151 = vrot.slane %v5043, 7
        %v5152 = vsel %vm1087, %v5149, %v5151
        %v5153 = vrot.slane %v5044, 7
        %v5154 = vsel %vm1087, %v5151, %v5153
        %v5155 = vrot.slane %v5045, 7
        %v5156 = vsel %vm1087, %v5153, %v5155
        %v5157 = vrot.slane %v5046, 7
        %v5158 = vsel %vm1087, %v5155, %v5157
        %v5159 = vrot.slane %v5047, 7
        %v5160 = vsel %vm1087, %v5157, %v5159
        %v5161 = vrot.slane %v5048, 7
        %v5162 = vsel %vm1087, %v5159, %v5161
        %v5163 = vrot.slane %v5049, 7
        %v5164 = vsel %vm1087, %v5161, %v5163
        %v5165 = vrot.slane %v5050, 7
        %v5166 = vsel %vm1087, %v5163, %v5165
        %v5167 = vrot.slane %v5051, 7
        %v5168 = vsel %vm1087, %v5165, %v5167
        %v5169 = vrot.slane %v5052, 7
        %v5170 = vsel %vm1087, %v5167, %v5169
        %v5171 = vrot.slane %v5053, 7
        %v5172 = vsel %vm1087, %v5169, %v5171
        %v5173 = vrot.slane %v5054, 7
        %v5174 = vsel %vm1087, %v5171, %v5173
        %v5175 = vrot.slane %v5055, 7
        %v5176 = vsel %vm1087, %v5173, %v5175
        %v5177 = vrot.slane %v5056, 7
        %v5178 = vsel %vm1087, %v5175, %v5177
        %v5179 = vrot.slane %v5057, 7
        %v5180 = vsel %vm1087, %v5177, %v5179
        %v5181 = vrot.slane %v5058, 7
        %v5182 = vsel %vm1087, %v5179, %v5181
        %v5183 = vrot.slane %v5059, 7
        %v5184 = vsel %vm1087, %v5181, %v5183
        %v5185 = vrot.slane %v5060, 7
        %v5186 = vsel %vm1087, %v5183, %v5185
        %v5187 = vrot.slane %v5061, 7
        %v5188 = vsel %vm1087, %v5185, %v5187
        %v5222 = vsel %vm1087, 0.0, %v5126
        %v5223 = vsel %vm1087, %v5187, 0.0
        %v5256 = vrot.slane %v5062, 1
        %v5257 = vrot.slane %v5063, 1
        %v5258 = vsel %vm1218, %v5256, %v5257
        %v5259 = vrot.slane %v5064, 1
        %v5260 = vsel %vm1218, %v5257, %v5259
        %v5261 = vrot.slane %v5065, 1
        %v5262 = vsel %vm1218, %v5259, %v5261
        %v5263 = vrot.slane %v5066, 1
        %v5264 = vsel %vm1218, %v5261, %v5263
        %v5265 = vrot.slane %v5067, 1
        %v5266 = vsel %vm1218, %v5263, %v5265
        %v5267 = vrot.slane %v5068, 1
        %v5268 = vsel %vm1218, %v5265, %v5267
        %v5269 = vrot.slane %v5069, 1
        %v5270 = vsel %vm1218, %v5267, %v5269
        %v5271 = vrot.slane %v5070, 1
        %v5272 = vsel %vm1218, %v5269, %v5271
        %v5273 = vrot.slane %v5071, 1
        %v5274 = vsel %vm1218, %v5271, %v5273
        %v5275 = vrot.slane %v5072, 1
        %v5276 = vsel %vm1218, %v5273, %v5275
        %v5277 = vrot.slane %v5073, 1
        %v5278 = vsel %vm1218, %v5275, %v5277
        %v5279 = vrot.slane %v5074, 1
        %v5280 = vsel %vm1218, %v5277, %v5279
        %v5281 = vrot.slane %v5075, 1
        %v5282 = vsel %vm1218, %v5279, %v5281
        %v5283 = vrot.slane %v5076, 1
        %v5284 = vsel %vm1218, %v5281, %v5283
        %v5285 = vrot.slane %v5077, 1
        %v5286 = vsel %vm1218, %v5283, %v5285
        %v5287 = vrot.slane %v5078, 1
        %v5288 = vsel %vm1218, %v5285, %v5287
        %v5289 = vrot.slane %v5079, 1
        %v5290 = vsel %vm1218, %v5287, %v5289
        %v5291 = vrot.slane %v5080, 1
        %v5292 = vsel %vm1218, %v5289, %v5291
        %v5293 = vrot.slane %v5081, 1
        %v5294 = vsel %vm1218, %v5291, %v5293
        %v5295 = vrot.slane %v5082, 1
        %v5296 = vsel %vm1218, %v5293, %v5295
        %v5297 = vrot.slane %v5083, 1
        %v5298 = vsel %vm1218, %v5295, %v5297
        %v5299 = vrot.slane %v5084, 1
        %v5300 = vsel %vm1218, %v5297, %v5299
        %v5301 = vrot.slane %v5085, 1
        %v5302 = vsel %vm1218, %v5299, %v5301
        %v5303 = vrot.slane %v5086, 1
        %v5304 = vsel %vm1218, %v5301, %v5303
        %v5305 = vrot.slane %v5087, 1
        %v5306 = vsel %vm1218, %v5303, %v5305
        %v5307 = vrot.slane %v5088, 1
        %v5308 = vsel %vm1218, %v5305, %v5307
        %v5309 = vrot.slane %v5089, 1
        %v5310 = vsel %vm1218, %v5307, %v5309
        %v5311 = vrot.slane %v5090, 1
        %v5312 = vsel %vm1218, %v5309, %v5311
        %v5313 = vrot.slane %v5091, 1
        %v5314 = vsel %vm1218, %v5311, %v5313
        %v5315 = vrot.slane %v5092, 1
        %v5316 = vsel %vm1218, %v5313, %v5315
        %v5317 = vrot.slane %v5093, 1
        %v5318 = vsel %vm1218, %v5315, %v5317
        %v5352 = vsel %vm1218, 0.0, %v5256
        %v5353 = vsel %vm1218, %v5317, 0.0
        %v5354 = vld [vmem:[%s6] sm:$0x1]
        %v5355 = vlaneseq
        %v5356 = vshrl.u32 %v5355, 7
        %v5357 = vsub.s32 0, %v5356
        %v5358 = vrot.slane %v5354, %v5357
        %v5359 = vmul.f32 %v5358, 0.0
        %v5360 = vmul.f32 %v5222, %v5358
        %v5361 = vmul.f32 %v5128, %v5358
        %v5362 = vmul.f32 %v5130, %v5358
        %v5363 = vmul.f32 %v5132, %v5358
        %v5364 = vmul.f32 %v5134, %v5358
        %v5365 = vmul.f32 %v5136, %v5358
        %v5366 = vmul.f32 %v5138, %v5358
        %v5367 = vmul.f32 %v5140, %v5358
        %v5368 = vmul.f32 %v5142, %v5358
        %v5369 = vmul.f32 %v5144, %v5358
        %v5370 = vmul.f32 %v5146, %v5358
        %v5371 = vmul.f32 %v5148, %v5358
        %v5372 = vmul.f32 %v5150, %v5358
        %v5373 = vmul.f32 %v5152, %v5358
        %v5374 = vmul.f32 %v5154, %v5358
        %v5375 = vmul.f32 %v5156, %v5358
        %v5376 = vmul.f32 %v5158, %v5358
        %v5377 = vmul.f32 %v5160, %v5358
        %v5378 = vmul.f32 %v5162, %v5358
        %v5379 = vmul.f32 %v5164, %v5358
        %v5380 = vmul.f32 %v5166, %v5358
        %v5381 = vmul.f32 %v5168, %v5358
        %v5382 = vmul.f32 %v5170, %v5358
        %v5383 = vmul.f32 %v5172, %v5358
        %v5384 = vmul.f32 %v5174, %v5358
        %v5385 = vmul.f32 %v5176, %v5358
        %v5386 = vmul.f32 %v5178, %v5358
        %v5387 = vmul.f32 %v5180, %v5358
        %v5388 = vmul.f32 %v5182, %v5358
        %v5389 = vmul.f32 %v5184, %v5358
        %v5390 = vadd.f32 %v5359, 0.0
        %v5391 = vadd.f32 %v5360, 0.0
        %v5392 = vadd.f32 %v5361, 0.0
        %v5393 = vadd.f32 %v5362, 0.0
        %v5394 = vadd.f32 %v5363, 0.0
        %v5395 = vadd.f32 %v5364, 0.0
        %v5396 = vadd.f32 %v5365, 0.0
        %v5397 = vadd.f32 %v5366, 0.0
        %v5398 = vadd.f32 %v5367, 0.0
        %v5399 = vadd.f32 %v5368, 0.0
        %v5400 = vadd.f32 %v5369, 0.0
        %v5401 = vadd.f32 %v5370, 0.0
        %v5402 = vadd.f32 %v5371, 0.0
        %v5403 = vadd.f32 %v5372, 0.0
        %v5404 = vadd.f32 %v5373, 0.0
        %v5405 = vadd.f32 %v5374, 0.0
        %v5406 = vadd.f32 %v5375, 0.0
        %v5407 = vadd.f32 %v5376, 0.0
        %v5408 = vadd.f32 %v5377, 0.0
        %v5409 = vadd.f32 %v5378, 0.0
        %v5410 = vadd.f32 %v5379, 0.0
        %v5411 = vadd.f32 %v5380, 0.0
        %v5412 = vadd.f32 %v5381, 0.0
        %v5413 = vadd.f32 %v5382, 0.0
        %v5414 = vadd.f32 %v5383, 0.0
        %v5415 = vadd.f32 %v5384, 0.0
        %v5416 = vadd.f32 %v5385, 0.0
        %v5417 = vadd.f32 %v5386, 0.0
        %v5418 = vadd.f32 %v5387, 0.0
        %v5419 = vadd.f32 %v5388, 0.0
        %v5420 = vadd.f32 %v5389, 0.0
        %v5421 = vld [vmem:[%s6 + $0x1] sm:$0x1]
        %v5422 = vlaneseq
        %v5423 = vshrl.u32 %v5422, 7
        %v5424 = vsub.s32 0, %v5423
        %v5425 = vrot.slane %v5421, %v5424
        %v5426 = vmul.f32 %v5425, 0.0
        %v5427 = vmul.f32 %v4998, %v5425
        %v5428 = vmul.f32 %v4999, %v5425
        %v5429 = vmul.f32 %v5000, %v5425
        %v5430 = vmul.f32 %v5001, %v5425
        %v5431 = vmul.f32 %v5002, %v5425
        %v5432 = vmul.f32 %v5003, %v5425
        %v5433 = vmul.f32 %v5004, %v5425
        %v5434 = vmul.f32 %v5005, %v5425
        %v5435 = vmul.f32 %v5006, %v5425
        %v5436 = vmul.f32 %v5007, %v5425
        %v5437 = vmul.f32 %v5008, %v5425
        %v5438 = vmul.f32 %v5009, %v5425
        %v5439 = vmul.f32 %v5010, %v5425
        %v5440 = vmul.f32 %v5011, %v5425
        %v5441 = vmul.f32 %v5012, %v5425
        %v5442 = vmul.f32 %v5013, %v5425
        %v5443 = vmul.f32 %v5014, %v5425
        %v5444 = vmul.f32 %v5015, %v5425
        %v5445 = vmul.f32 %v5016, %v5425
        %v5446 = vmul.f32 %v5017, %v5425
        %v5447 = vmul.f32 %v5018, %v5425
        %v5448 = vmul.f32 %v5019, %v5425
        %v5449 = vmul.f32 %v5020, %v5425
        %v5450 = vmul.f32 %v5021, %v5425
        %v5451 = vmul.f32 %v5022, %v5425
        %v5452 = vmul.f32 %v5023, %v5425
        %v5453 = vmul.f32 %v5024, %v5425
        %v5454 = vmul.f32 %v5025, %v5425
        %v5455 = vmul.f32 %v5026, %v5425
        %v5456 = vmul.f32 %v5027, %v5425
        %v5457 = vadd.f32 %v5390, %v5426
        %v5458 = vadd.f32 %v5391, %v5427
        %v5459 = vadd.f32 %v5392, %v5428
        %v5460 = vadd.f32 %v5393, %v5429
        %v5461 = vadd.f32 %v5394, %v5430
        %v5462 = vadd.f32 %v5395, %v5431
        %v5463 = vadd.f32 %v5396, %v5432
        %v5464 = vadd.f32 %v5397, %v5433
        %v5465 = vadd.f32 %v5398, %v5434
        %v5466 = vadd.f32 %v5399, %v5435
        %v5467 = vadd.f32 %v5400, %v5436
        %v5468 = vadd.f32 %v5401, %v5437
        %v5469 = vadd.f32 %v5402, %v5438
        %v5470 = vadd.f32 %v5403, %v5439
        %v5471 = vadd.f32 %v5404, %v5440
        %v5472 = vadd.f32 %v5405, %v5441
        %v5473 = vadd.f32 %v5406, %v5442
        %v5474 = vadd.f32 %v5407, %v5443
        %v5475 = vadd.f32 %v5408, %v5444
        %v5476 = vadd.f32 %v5409, %v5445
        %v5477 = vadd.f32 %v5410, %v5446
        %v5478 = vadd.f32 %v5411, %v5447
        %v5479 = vadd.f32 %v5412, %v5448
        %v5480 = vadd.f32 %v5413, %v5449
        %v5481 = vadd.f32 %v5414, %v5450
        %v5482 = vadd.f32 %v5415, %v5451
        %v5483 = vadd.f32 %v5416, %v5452
        %v5484 = vadd.f32 %v5417, %v5453
        %v5485 = vadd.f32 %v5418, %v5454
        %v5486 = vadd.f32 %v5419, %v5455
        %v5487 = vadd.f32 %v5420, %v5456
        %v5488 = vld [vmem:[%s6 + $0x2] sm:$0x1]
        %v5489 = vlaneseq
        %v5490 = vshrl.u32 %v5489, 7
        %v5491 = vsub.s32 0, %v5490
        %v5492 = vrot.slane %v5488, %v5491
        %v5493 = vmul.f32 %v5492, 0.0
        %v5494 = vmul.f32 %v5352, %v5492
        %v5495 = vmul.f32 %v5258, %v5492
        %v5496 = vmul.f32 %v5260, %v5492
        %v5497 = vmul.f32 %v5262, %v5492
        %v5498 = vmul.f32 %v5264, %v5492
        %v5499 = vmul.f32 %v5266, %v5492
        %v5500 = vmul.f32 %v5268, %v5492
        %v5501 = vmul.f32 %v5270, %v5492
        %v5502 = vmul.f32 %v5272, %v5492
        %v5503 = vmul.f32 %v5274, %v5492
        %v5504 = vmul.f32 %v5276, %v5492
        %v5505 = vmul.f32 %v5278, %v5492
        %v5506 = vmul.f32 %v5280, %v5492
        %v5507 = vmul.f32 %v5282, %v5492
        %v5508 = vmul.f32 %v5284, %v5492
        %v5509 = vmul.f32 %v5286, %v5492
        %v5510 = vmul.f32 %v5288, %v5492
        %v5511 = vmul.f32 %v5290, %v5492
        %v5512 = vmul.f32 %v5292, %v5492
        %v5513 = vmul.f32 %v5294, %v5492
        %v5514 = vmul.f32 %v5296, %v5492
        %v5515 = vmul.f32 %v5298, %v5492
        %v5516 = vmul.f32 %v5300, %v5492
        %v5517 = vmul.f32 %v5302, %v5492
        %v5518 = vmul.f32 %v5304, %v5492
        %v5519 = vmul.f32 %v5306, %v5492
        %v5520 = vmul.f32 %v5308, %v5492
        %v5521 = vmul.f32 %v5310, %v5492
        %v5522 = vmul.f32 %v5312, %v5492
        %v5523 = vmul.f32 %v5314, %v5492
        %v5524 = vmul.f32 %v5316, %v5492
        %v5525 = vadd.f32 %v5457, %v5493
        %v5526 = vadd.f32 %v5457, %v5494
        %v5527 = vadd.f32 %v5458, %v5495
        %v5528 = vadd.f32 %v5459, %v5496
        %v5529 = vadd.f32 %v5460, %v5497
        %v5530 = vadd.f32 %v5461, %v5498
        %v5531 = vadd.f32 %v5462, %v5499
        %v5532 = vadd.f32 %v5463, %v5500
        %v5533 = vadd.f32 %v5464, %v5501
        %v5534 = vadd.f32 %v5465, %v5502
        %v5535 = vadd.f32 %v5466, %v5503
        %v5536 = vadd.f32 %v5467, %v5504
        %v5537 = vadd.f32 %v5468, %v5505
        %v5538 = vadd.f32 %v5469, %v5506
        %v5539 = vadd.f32 %v5470, %v5507
        %v5540 = vadd.f32 %v5471, %v5508
        %v5541 = vadd.f32 %v5472, %v5509
        %v5542 = vadd.f32 %v5473, %v5510
        %v5543 = vadd.f32 %v5474, %v5511
        %v5544 = vadd.f32 %v5475, %v5512
        %v5545 = vadd.f32 %v5476, %v5513
        %v5546 = vadd.f32 %v5477, %v5514
        %v5547 = vadd.f32 %v5478, %v5515
        %v5548 = vadd.f32 %v5479, %v5516
        %v5549 = vadd.f32 %v5480, %v5517
        %v5550 = vadd.f32 %v5481, %v5518
        %v5551 = vadd.f32 %v5482, %v5519
        %v5552 = vadd.f32 %v5483, %v5520
        %v5553 = vadd.f32 %v5484, %v5521
        %v5554 = vadd.f32 %v5485, %v5522
        %v5555 = vadd.f32 %v5486, %v5523
        %v5556 = vadd.f32 %v5487, %v5524
        %v5557 = vld [vmem:[%s6 + $0x3] sm:$0x1]
        %v5558 = vlaneseq
        %v5559 = vshrl.u32 %v5558, 7
        %v5560 = vsub.s32 0, %v5559
        %v5561 = vrot.slane %v5557, %v5560
        %v5562 = vmul.f32 %v5222, %v5561
        %v5563 = vmul.f32 %v5128, %v5561
        %v5564 = vmul.f32 %v5130, %v5561
        %v5565 = vmul.f32 %v5132, %v5561
        %v5566 = vmul.f32 %v5134, %v5561
        %v5567 = vmul.f32 %v5136, %v5561
        %v5568 = vmul.f32 %v5138, %v5561
        %v5569 = vmul.f32 %v5140, %v5561
        %v5570 = vmul.f32 %v5142, %v5561
        %v5571 = vmul.f32 %v5144, %v5561
        %v5572 = vmul.f32 %v5146, %v5561
        %v5573 = vmul.f32 %v5148, %v5561
        %v5574 = vmul.f32 %v5150, %v5561
        %v5575 = vmul.f32 %v5152, %v5561
        %v5576 = vmul.f32 %v5154, %v5561
        %v5577 = vmul.f32 %v5156, %v5561
        %v5578 = vmul.f32 %v5158, %v5561
        %v5579 = vmul.f32 %v5160, %v5561
        %v5580 = vmul.f32 %v5162, %v5561
        %v5581 = vmul.f32 %v5164, %v5561
        %v5582 = vmul.f32 %v5166, %v5561
        %v5583 = vmul.f32 %v5168, %v5561
        %v5584 = vmul.f32 %v5170, %v5561
        %v5585 = vmul.f32 %v5172, %v5561
        %v5586 = vmul.f32 %v5174, %v5561
        %v5587 = vmul.f32 %v5176, %v5561
        %v5588 = vmul.f32 %v5178, %v5561
        %v5589 = vmul.f32 %v5180, %v5561
        %v5590 = vmul.f32 %v5182, %v5561
        %v5591 = vmul.f32 %v5184, %v5561
        %v5592 = vmul.f32 %v5186, %v5561
        %v5593 = vmul.f32 %v5188, %v5561
        %v5594 = vadd.f32 %v5525, %v5562
        %v5595 = vadd.f32 %v5526, %v5563
        %v5596 = vadd.f32 %v5527, %v5564
        %v5597 = vadd.f32 %v5528, %v5565
        %v5598 = vadd.f32 %v5529, %v5566
        %v5599 = vadd.f32 %v5530, %v5567
        %v5600 = vadd.f32 %v5531, %v5568
        %v5601 = vadd.f32 %v5532, %v5569
        %v5602 = vadd.f32 %v5533, %v5570
        %v5603 = vadd.f32 %v5534, %v5571
        %v5604 = vadd.f32 %v5535, %v5572
        %v5605 = vadd.f32 %v5536, %v5573
        %v5606 = vadd.f32 %v5537, %v5574
        %v5607 = vadd.f32 %v5538, %v5575
        %v5608 = vadd.f32 %v5539, %v5576
        %v5609 = vadd.f32 %v5540, %v5577
        %v5610 = vadd.f32 %v5541, %v5578
        %v5611 = vadd.f32 %v5542, %v5579
        %v5612 = vadd.f32 %v5543, %v5580
        %v5613 = vadd.f32 %v5544, %v5581
        %v5614 = vadd.f32 %v5545, %v5582
        %v5615 = vadd.f32 %v5546, %v5583
        %v5616 = vadd.f32 %v5547, %v5584
        %v5617 = vadd.f32 %v5548, %v5585
        %v5618 = vadd.f32 %v5549, %v5586
        %v5619 = vadd.f32 %v5550, %v5587
        %v5620 = vadd.f32 %v5551, %v5588
        %v5621 = vadd.f32 %v5552, %v5589
        %v5622 = vadd.f32 %v5553, %v5590
        %v5623 = vadd.f32 %v5554, %v5591
        %v5624 = vadd.f32 %v5555, %v5592
        %v5625 = vadd.f32 %v5556, %v5593
        %v5626 = vld [vmem:[%s6 + $0x4] sm:$0x1]
        %v5627 = vlaneseq
        %v5628 = vshrl.u32 %v5627, 7
        %v5629 = vsub.s32 0, %v5628
        %v5630 = vrot.slane %v5626, %v5629
        %v5631 = vmul.f32 %v4998, %v5630
        %v5632 = vmul.f32 %v4999, %v5630
        %v5633 = vmul.f32 %v5000, %v5630
        %v5634 = vmul.f32 %v5001, %v5630
        %v5635 = vmul.f32 %v5002, %v5630
        %v5636 = vmul.f32 %v5003, %v5630
        %v5637 = vmul.f32 %v5004, %v5630
        %v5638 = vmul.f32 %v5005, %v5630
        %v5639 = vmul.f32 %v5006, %v5630
        %v5640 = vmul.f32 %v5007, %v5630
        %v5641 = vmul.f32 %v5008, %v5630
        %v5642 = vmul.f32 %v5009, %v5630
        %v5643 = vmul.f32 %v5010, %v5630
        %v5644 = vmul.f32 %v5011, %v5630
        %v5645 = vmul.f32 %v5012, %v5630
        %v5646 = vmul.f32 %v5013, %v5630
        %v5647 = vmul.f32 %v5014, %v5630
        %v5648 = vmul.f32 %v5015, %v5630
        %v5649 = vmul.f32 %v5016, %v5630
        %v5650 = vmul.f32 %v5017, %v5630
        %v5651 = vmul.f32 %v5018, %v5630
        %v5652 = vmul.f32 %v5019, %v5630
        %v5653 = vmul.f32 %v5020, %v5630
        %v5654 = vmul.f32 %v5021, %v5630
        %v5655 = vmul.f32 %v5022, %v5630
        %v5656 = vmul.f32 %v5023, %v5630
        %v5657 = vmul.f32 %v5024, %v5630
        %v5658 = vmul.f32 %v5025, %v5630
        %v5659 = vmul.f32 %v5026, %v5630
        %v5660 = vmul.f32 %v5027, %v5630
        %v5661 = vmul.f32 %v5028, %v5630
        %v5662 = vmul.f32 %v5029, %v5630
        %v5663 = vadd.f32 %v5594, %v5631
        %v5664 = vadd.f32 %v5595, %v5632
        %v5665 = vadd.f32 %v5596, %v5633
        %v5666 = vadd.f32 %v5597, %v5634
        %v5667 = vadd.f32 %v5598, %v5635
        %v5668 = vadd.f32 %v5599, %v5636
        %v5669 = vadd.f32 %v5600, %v5637
        %v5670 = vadd.f32 %v5601, %v5638
        %v5671 = vadd.f32 %v5602, %v5639
        %v5672 = vadd.f32 %v5603, %v5640
        %v5673 = vadd.f32 %v5604, %v5641
        %v5674 = vadd.f32 %v5605, %v5642
        %v5675 = vadd.f32 %v5606, %v5643
        %v5676 = vadd.f32 %v5607, %v5644
        %v5677 = vadd.f32 %v5608, %v5645
        %v5678 = vadd.f32 %v5609, %v5646
        %v5679 = vadd.f32 %v5610, %v5647
        %v5680 = vadd.f32 %v5611, %v5648
        %v5681 = vadd.f32 %v5612, %v5649
        %v5682 = vadd.f32 %v5613, %v5650
        %v5683 = vadd.f32 %v5614, %v5651
        %v5684 = vadd.f32 %v5615, %v5652
        %v5685 = vadd.f32 %v5616, %v5653
        %v5686 = vadd.f32 %v5617, %v5654
        %v5687 = vadd.f32 %v5618, %v5655
        %v5688 = vadd.f32 %v5619, %v5656
        %v5689 = vadd.f32 %v5620, %v5657
        %v5690 = vadd.f32 %v5621, %v5658
        %v5691 = vadd.f32 %v5622, %v5659
        %v5692 = vadd.f32 %v5623, %v5660
        %v5693 = vadd.f32 %v5624, %v5661
        %v5694 = vadd.f32 %v5625, %v5662
        %v5695 = vld [vmem:[%s6 + $0x5] sm:$0x1]
        %v5696 = vlaneseq
        %v5697 = vshrl.u32 %v5696, 7
        %v5698 = vsub.s32 0, %v5697
        %v5699 = vrot.slane %v5695, %v5698
        %v5700 = vmul.f32 %v5258, %v5699
        %v5701 = vmul.f32 %v5260, %v5699
        %v5702 = vmul.f32 %v5262, %v5699
        %v5703 = vmul.f32 %v5264, %v5699
        %v5704 = vmul.f32 %v5266, %v5699
        %v5705 = vmul.f32 %v5268, %v5699
        %v5706 = vmul.f32 %v5270, %v5699
        %v5707 = vmul.f32 %v5272, %v5699
        %v5708 = vmul.f32 %v5274, %v5699
        %v5709 = vmul.f32 %v5276, %v5699
        %v5710 = vmul.f32 %v5278, %v5699
        %v5711 = vmul.f32 %v5280, %v5699
        %v5712 = vmul.f32 %v5282, %v5699
        %v5713 = vmul.f32 %v5284, %v5699
        %v5714 = vmul.f32 %v5286, %v5699
        %v5715 = vmul.f32 %v5288, %v5699
        %v5716 = vmul.f32 %v5290, %v5699
        %v5717 = vmul.f32 %v5292, %v5699
        %v5718 = vmul.f32 %v5294, %v5699
        %v5719 = vmul.f32 %v5296, %v5699
        %v5720 = vmul.f32 %v5298, %v5699
        %v5721 = vmul.f32 %v5300, %v5699
        %v5722 = vmul.f32 %v5302, %v5699
        %v5723 = vmul.f32 %v5304, %v5699
        %v5724 = vmul.f32 %v5306, %v5699
        %v5725 = vmul.f32 %v5308, %v5699
        %v5726 = vmul.f32 %v5310, %v5699
        %v5727 = vmul.f32 %v5312, %v5699
        %v5728 = vmul.f32 %v5314, %v5699
        %v5729 = vmul.f32 %v5316, %v5699
        %v5730 = vmul.f32 %v5318, %v5699
        %v5731 = vmul.f32 %v5353, %v5699
        %v5732 = vadd.f32 %v5663, %v5700
        %v5733 = vadd.f32 %v5664, %v5701
        %v5734 = vadd.f32 %v5665, %v5702
        %v5735 = vadd.f32 %v5666, %v5703
        %v5736 = vadd.f32 %v5667, %v5704
        %v5737 = vadd.f32 %v5668, %v5705
        %v5738 = vadd.f32 %v5669, %v5706
        %v5739 = vadd.f32 %v5670, %v5707
        %v5740 = vadd.f32 %v5671, %v5708
        %v5741 = vadd.f32 %v5672, %v5709
        %v5742 = vadd.f32 %v5673, %v5710
        %v5743 = vadd.f32 %v5674, %v5711
        %v5744 = vadd.f32 %v5675, %v5712
        %v5745 = vadd.f32 %v5676, %v5713
        %v5746 = vadd.f32 %v5677, %v5714
        %v5747 = vadd.f32 %v5678, %v5715
        %v5748 = vadd.f32 %v5679, %v5716
        %v5749 = vadd.f32 %v5680, %v5717
        %v5750 = vadd.f32 %v5681, %v5718
        %v5751 = vadd.f32 %v5682, %v5719
        %v5752 = vadd.f32 %v5683, %v5720
        %v5753 = vadd.f32 %v5684, %v5721
        %v5754 = vadd.f32 %v5685, %v5722
        %v5755 = vadd.f32 %v5686, %v5723
        %v5756 = vadd.f32 %v5687, %v5724
        %v5757 = vadd.f32 %v5688, %v5725
        %v5758 = vadd.f32 %v5689, %v5726
        %v5759 = vadd.f32 %v5690, %v5727
        %v5760 = vadd.f32 %v5691, %v5728
        %v5761 = vadd.f32 %v5692, %v5729
        %v5762 = vadd.f32 %v5693, %v5730
        %v5763 = vadd.f32 %v5694, %v5731
        %v5764 = vld [vmem:[%s6 + $0x6] sm:$0x1]
        %v5765 = vlaneseq
        %v5766 = vshrl.u32 %v5765, 7
        %v5767 = vsub.s32 0, %v5766
        %v5768 = vrot.slane %v5764, %v5767
        %v5769 = vmul.f32 %v5130, %v5768
        %v5770 = vmul.f32 %v5132, %v5768
        %v5771 = vmul.f32 %v5134, %v5768
        %v5772 = vmul.f32 %v5136, %v5768
        %v5773 = vmul.f32 %v5138, %v5768
        %v5774 = vmul.f32 %v5140, %v5768
        %v5775 = vmul.f32 %v5142, %v5768
        %v5776 = vmul.f32 %v5144, %v5768
        %v5777 = vmul.f32 %v5146, %v5768
        %v5778 = vmul.f32 %v5148, %v5768
        %v5779 = vmul.f32 %v5150, %v5768
        %v5780 = vmul.f32 %v5152, %v5768
        %v5781 = vmul.f32 %v5154, %v5768
        %v5782 = vmul.f32 %v5156, %v5768
        %v5783 = vmul.f32 %v5158, %v5768
        %v5784 = vmul.f32 %v5160, %v5768
        %v5785 = vmul.f32 %v5162, %v5768
        %v5786 = vmul.f32 %v5164, %v5768
        %v5787 = vmul.f32 %v5166, %v5768
        %v5788 = vmul.f32 %v5168, %v5768
        %v5789 = vmul.f32 %v5170, %v5768
        %v5790 = vmul.f32 %v5172, %v5768
        %v5791 = vmul.f32 %v5174, %v5768
        %v5792 = vmul.f32 %v5176, %v5768
        %v5793 = vmul.f32 %v5178, %v5768
        %v5794 = vmul.f32 %v5180, %v5768
        %v5795 = vmul.f32 %v5182, %v5768
        %v5796 = vmul.f32 %v5184, %v5768
        %v5797 = vmul.f32 %v5186, %v5768
        %v5798 = vmul.f32 %v5188, %v5768
        %v5799 = vmul.f32 %v5223, %v5768
        %v5800 = vmul.f32 %v5768, 0.0
        %v5801 = vadd.f32 %v5732, %v5769
        %v5802 = vadd.f32 %v5733, %v5770
        %v5803 = vadd.f32 %v5734, %v5771
        %v5804 = vadd.f32 %v5735, %v5772
        %v5805 = vadd.f32 %v5736, %v5773
        %v5806 = vadd.f32 %v5737, %v5774
        %v5807 = vadd.f32 %v5738, %v5775
        %v5808 = vadd.f32 %v5739, %v5776
        %v5809 = vadd.f32 %v5740, %v5777
        %v5810 = vadd.f32 %v5741, %v5778
        %v5811 = vadd.f32 %v5742, %v5779
        %v5812 = vadd.f32 %v5743, %v5780
        %v5813 = vadd.f32 %v5744, %v5781
        %v5814 = vadd.f32 %v5745, %v5782
        %v5815 = vadd.f32 %v5746, %v5783
        %v5816 = vadd.f32 %v5747, %v5784
        %v5817 = vadd.f32 %v5748, %v5785
        %v5818 = vadd.f32 %v5749, %v5786
        %v5819 = vadd.f32 %v5750, %v5787
        %v5820 = vadd.f32 %v5751, %v5788
        %v5821 = vadd.f32 %v5752, %v5789
        %v5822 = vadd.f32 %v5753, %v5790
        %v5823 = vadd.f32 %v5754, %v5791
        %v5824 = vadd.f32 %v5755, %v5792
        %v5825 = vadd.f32 %v5756, %v5793
        %v5826 = vadd.f32 %v5757, %v5794
        %v5827 = vadd.f32 %v5758, %v5795
        %v5828 = vadd.f32 %v5759, %v5796
        %v5829 = vadd.f32 %v5760, %v5797
        %v5830 = vadd.f32 %v5761, %v5798
        %v5831 = vadd.f32 %v5762, %v5799
        %v5832 = vadd.f32 %v5763, %v5800
        %v5833 = vld [vmem:[%s6 + $0x7] sm:$0x1]
        %v5834 = vlaneseq
        %v5835 = vshrl.u32 %v5834, 7
        %v5836 = vsub.s32 0, %v5835
        %v5837 = vrot.slane %v5833, %v5836
        %v5838 = vmul.f32 %v5000, %v5837
        %v5839 = vmul.f32 %v5001, %v5837
        %v5840 = vmul.f32 %v5002, %v5837
        %v5841 = vmul.f32 %v5003, %v5837
        %v5842 = vmul.f32 %v5004, %v5837
        %v5843 = vmul.f32 %v5005, %v5837
        %v5844 = vmul.f32 %v5006, %v5837
        %v5845 = vmul.f32 %v5007, %v5837
        %v5846 = vmul.f32 %v5008, %v5837
        %v5847 = vmul.f32 %v5009, %v5837
        %v5848 = vmul.f32 %v5010, %v5837
        %v5849 = vmul.f32 %v5011, %v5837
        %v5850 = vmul.f32 %v5012, %v5837
        %v5851 = vmul.f32 %v5013, %v5837
        %v5852 = vmul.f32 %v5014, %v5837
        %v5853 = vmul.f32 %v5015, %v5837
        %v5854 = vmul.f32 %v5016, %v5837
        %v5855 = vmul.f32 %v5017, %v5837
        %v5856 = vmul.f32 %v5018, %v5837
        %v5857 = vmul.f32 %v5019, %v5837
        %v5858 = vmul.f32 %v5020, %v5837
        %v5859 = vmul.f32 %v5021, %v5837
        %v5860 = vmul.f32 %v5022, %v5837
        %v5861 = vmul.f32 %v5023, %v5837
        %v5862 = vmul.f32 %v5024, %v5837
        %v5863 = vmul.f32 %v5025, %v5837
        %v5864 = vmul.f32 %v5026, %v5837
        %v5865 = vmul.f32 %v5027, %v5837
        %v5866 = vmul.f32 %v5028, %v5837
        %v5867 = vmul.f32 %v5029, %v5837
        %v5868 = vmul.f32 %v5837, 0.0
        %v5869 = vadd.f32 %v5801, %v5838
        %v5870 = vadd.f32 %v5802, %v5839
        %v5871 = vadd.f32 %v5803, %v5840
        %v5872 = vadd.f32 %v5804, %v5841
        %v5873 = vadd.f32 %v5805, %v5842
        %v5874 = vadd.f32 %v5806, %v5843
        %v5875 = vadd.f32 %v5807, %v5844
        %v5876 = vadd.f32 %v5808, %v5845
        %v5877 = vadd.f32 %v5809, %v5846
        %v5878 = vadd.f32 %v5810, %v5847
        %v5879 = vadd.f32 %v5811, %v5848
        %v5880 = vadd.f32 %v5812, %v5849
        %v5881 = vadd.f32 %v5813, %v5850
        %v5882 = vadd.f32 %v5814, %v5851
        %v5883 = vadd.f32 %v5815, %v5852
        %v5884 = vadd.f32 %v5816, %v5853
        %v5885 = vadd.f32 %v5817, %v5854
        %v5886 = vadd.f32 %v5818, %v5855
        %v5887 = vadd.f32 %v5819, %v5856
        %v5888 = vadd.f32 %v5820, %v5857
        %v5889 = vadd.f32 %v5821, %v5858
        %v5890 = vadd.f32 %v5822, %v5859
        %v5891 = vadd.f32 %v5823, %v5860
        %v5892 = vadd.f32 %v5824, %v5861
        %v5893 = vadd.f32 %v5825, %v5862
        %v5894 = vadd.f32 %v5826, %v5863
        %v5895 = vadd.f32 %v5827, %v5864
        %v5896 = vadd.f32 %v5828, %v5865
        %v5897 = vadd.f32 %v5829, %v5866
        %v5898 = vadd.f32 %v5830, %v5867
        %v5899 = vadd.f32 %v5831, %v5868
        %v5900 = vadd.f32 %v5832, %v5868
        %v5901 = vld [vmem:[%s6 + $0x8] sm:$0x1]
        %v5902 = vlaneseq
        %v5903 = vshrl.u32 %v5902, 7
        %v5904 = vsub.s32 0, %v5903
        %v5905 = vrot.slane %v5901, %v5904
        %v5906 = vmul.f32 %v5262, %v5905
        %v5907 = vmul.f32 %v5264, %v5905
        %v5908 = vmul.f32 %v5266, %v5905
        %v5909 = vmul.f32 %v5268, %v5905
        %v5910 = vmul.f32 %v5270, %v5905
        %v5911 = vmul.f32 %v5272, %v5905
        %v5912 = vmul.f32 %v5274, %v5905
        %v5913 = vmul.f32 %v5276, %v5905
        %v5914 = vmul.f32 %v5278, %v5905
        %v5915 = vmul.f32 %v5280, %v5905
        %v5916 = vmul.f32 %v5282, %v5905
        %v5917 = vmul.f32 %v5284, %v5905
        %v5918 = vmul.f32 %v5286, %v5905
        %v5919 = vmul.f32 %v5288, %v5905
        %v5920 = vmul.f32 %v5290, %v5905
        %v5921 = vmul.f32 %v5292, %v5905
        %v5922 = vmul.f32 %v5294, %v5905
        %v5923 = vmul.f32 %v5296, %v5905
        %v5924 = vmul.f32 %v5298, %v5905
        %v5925 = vmul.f32 %v5300, %v5905
        %v5926 = vmul.f32 %v5302, %v5905
        %v5927 = vmul.f32 %v5304, %v5905
        %v5928 = vmul.f32 %v5306, %v5905
        %v5929 = vmul.f32 %v5308, %v5905
        %v5930 = vmul.f32 %v5310, %v5905
        %v5931 = vmul.f32 %v5312, %v5905
        %v5932 = vmul.f32 %v5314, %v5905
        %v5933 = vmul.f32 %v5316, %v5905
        %v5934 = vmul.f32 %v5318, %v5905
        %v5935 = vmul.f32 %v5353, %v5905
        %v5936 = vmul.f32 %v5905, 0.0
        %v5937 = vadd.f32 %v5869, %v5906
        %v5938 = vadd.f32 %v5870, %v5907
        %v5939 = vadd.f32 %v5871, %v5908
        %v5940 = vadd.f32 %v5872, %v5909
        %v5941 = vadd.f32 %v5873, %v5910
        %v5942 = vadd.f32 %v5874, %v5911
        %v5943 = vadd.f32 %v5875, %v5912
        %v5944 = vadd.f32 %v5876, %v5913
        %v5945 = vadd.f32 %v5877, %v5914
        %v5946 = vadd.f32 %v5878, %v5915
        %v5947 = vadd.f32 %v5879, %v5916
        %v5948 = vadd.f32 %v5880, %v5917
        %v5949 = vadd.f32 %v5881, %v5918
        %v5950 = vadd.f32 %v5882, %v5919
        %v5951 = vadd.f32 %v5883, %v5920
        %v5952 = vadd.f32 %v5884, %v5921
        %v5953 = vadd.f32 %v5885, %v5922
        %v5954 = vadd.f32 %v5886, %v5923
        %v5955 = vadd.f32 %v5887, %v5924
        %v5956 = vadd.f32 %v5888, %v5925
        %v5957 = vadd.f32 %v5889, %v5926
        %v5958 = vadd.f32 %v5890, %v5927
        %v5959 = vadd.f32 %v5891, %v5928
        %v5960 = vadd.f32 %v5892, %v5929
        %v5961 = vadd.f32 %v5893, %v5930
        %v5962 = vadd.f32 %v5894, %v5931
        %v5963 = vadd.f32 %v5895, %v5932
        %v5964 = vadd.f32 %v5896, %v5933
        %v5965 = vadd.f32 %v5897, %v5934
        %v5966 = vadd.f32 %v5898, %v5935
        %v5967 = vadd.f32 %v5899, %v5936
        %v5968 = vadd.f32 %v5900, %v5936
        %6001 = vrot.lane.b32.xlu0 %v5937, 127
        %v6002 = vpop.permute.xlu0 %6001
        %6003 = vrot.lane.b32.xlu0 %v5938, 127
        %v6004 = vpop.permute.xlu0 %6003
        %6005 = vrot.lane.b32.xlu0 %v5939, 127
        %v6006 = vpop.permute.xlu0 %6005
        %6007 = vrot.lane.b32.xlu0 %v5940, 127
        %v6008 = vpop.permute.xlu0 %6007
        %6009 = vrot.lane.b32.xlu0 %v5941, 127
        %v6010 = vpop.permute.xlu0 %6009
        %6011 = vrot.lane.b32.xlu0 %v5942, 127
        %v6012 = vpop.permute.xlu0 %6011
        %6013 = vrot.lane.b32.xlu0 %v5943, 127
        %v6014 = vpop.permute.xlu0 %6013
        %6015 = vrot.lane.b32.xlu0 %v5944, 127
        %v6016 = vpop.permute.xlu0 %6015
        %6017 = vrot.lane.b32.xlu0 %v5945, 127
        %v6018 = vpop.permute.xlu0 %6017
        %6019 = vrot.lane.b32.xlu0 %v5946, 127
        %v6020 = vpop.permute.xlu0 %6019
        %6021 = vrot.lane.b32.xlu0 %v5947, 127
        %v6022 = vpop.permute.xlu0 %6021
        %6023 = vrot.lane.b32.xlu0 %v5948, 127
        %v6024 = vpop.permute.xlu0 %6023
        %6025 = vrot.lane.b32.xlu0 %v5949, 127
        %v6026 = vpop.permute.xlu0 %6025
        %6027 = vrot.lane.b32.xlu0 %v5950, 127
        %v6028 = vpop.permute.xlu0 %6027
        %6029 = vrot.lane.b32.xlu0 %v5951, 127
        %v6030 = vpop.permute.xlu0 %6029
        %6031 = vrot.lane.b32.xlu0 %v5952, 127
        %v6032 = vpop.permute.xlu0 %6031
        %6033 = vrot.lane.b32.xlu0 %v5953, 127
        %v6034 = vpop.permute.xlu0 %6033
        %6035 = vrot.lane.b32.xlu0 %v5954, 127
        %v6036 = vpop.permute.xlu0 %6035
        %6037 = vrot.lane.b32.xlu0 %v5955, 127
        %v6038 = vpop.permute.xlu0 %6037
        %6039 = vrot.lane.b32.xlu0 %v5956, 127
        %v6040 = vpop.permute.xlu0 %6039
        %6041 = vrot.lane.b32.xlu0 %v5957, 127
        %v6042 = vpop.permute.xlu0 %6041
        %6043 = vrot.lane.b32.xlu0 %v5958, 127
        %v6044 = vpop.permute.xlu0 %6043
        %6045 = vrot.lane.b32.xlu0 %v5959, 127
        %v6046 = vpop.permute.xlu0 %6045
        %6047 = vrot.lane.b32.xlu0 %v5960, 127
        %v6048 = vpop.permute.xlu0 %6047
        %6049 = vrot.lane.b32.xlu0 %v5961, 127
        %v6050 = vpop.permute.xlu0 %6049
        %6051 = vrot.lane.b32.xlu0 %v5962, 127
        %v6052 = vpop.permute.xlu0 %6051
        %6053 = vrot.lane.b32.xlu0 %v5963, 127
        %v6054 = vpop.permute.xlu0 %6053
        %6055 = vrot.lane.b32.xlu0 %v5964, 127
        %v6056 = vpop.permute.xlu0 %6055
        %6057 = vrot.lane.b32.xlu0 %v5965, 127
        %v6058 = vpop.permute.xlu0 %6057
        %6059 = vrot.lane.b32.xlu0 %v5966, 127
        %v6060 = vpop.permute.xlu0 %6059
        %6061 = vrot.lane.b32.xlu0 %v5967, 127
        %v6062 = vpop.permute.xlu0 %6061
        %6063 = vrot.lane.b32.xlu0 %v5968, 127
        %v6064 = vpop.permute.xlu0 %6063
        %v6097 = vadd.f32 %v5937, %v6002
        %v6098 = vadd.f32 %v5938, %v6004
        %v6099 = vadd.f32 %v5939, %v6006
        %v6100 = vadd.f32 %v5940, %v6008
        %v6101 = vadd.f32 %v5941, %v6010
        %v6102 = vadd.f32 %v5942, %v6012
        %v6103 = vadd.f32 %v5943, %v6014
        %v6104 = vadd.f32 %v5944, %v6016
        %v6105 = vadd.f32 %v5945, %v6018
        %v6106 = vadd.f32 %v5946, %v6020
        %v6107 = vadd.f32 %v5947, %v6022
        %v6108 = vadd.f32 %v5948, %v6024
        %v6109 = vadd.f32 %v5949, %v6026
        %v6110 = vadd.f32 %v5950, %v6028
        %v6111 = vadd.f32 %v5951, %v6030
        %v6112 = vadd.f32 %v5952, %v6032
        %v6113 = vadd.f32 %v5953, %v6034
        %v6114 = vadd.f32 %v5954, %v6036
        %v6115 = vadd.f32 %v5955, %v6038
        %v6116 = vadd.f32 %v5956, %v6040
        %v6117 = vadd.f32 %v5957, %v6042
        %v6118 = vadd.f32 %v5958, %v6044
        %v6119 = vadd.f32 %v5959, %v6046
        %v6120 = vadd.f32 %v5960, %v6048
        %v6121 = vadd.f32 %v5961, %v6050
        %v6122 = vadd.f32 %v5962, %v6052
        %v6123 = vadd.f32 %v5963, %v6054
        %v6124 = vadd.f32 %v5964, %v6056
        %v6125 = vadd.f32 %v5965, %v6058
        %v6126 = vadd.f32 %v5966, %v6060
        %v6127 = vadd.f32 %v5967, %v6062
        %v6128 = vadd.f32 %v5968, %v6064
        %v6129 = vsub.f32 0.0, %v6097
        %v6130 = vsub.f32 0.0, %v6098
        %v6131 = vsub.f32 0.0, %v6099
        %v6132 = vsub.f32 0.0, %v6100
        %v6133 = vsub.f32 0.0, %v6101
        %v6134 = vsub.f32 0.0, %v6102
        %v6135 = vsub.f32 0.0, %v6103
        %v6136 = vsub.f32 0.0, %v6104
        %v6137 = vsub.f32 0.0, %v6105
        %v6138 = vsub.f32 0.0, %v6106
        %v6139 = vsub.f32 0.0, %v6107
        %v6140 = vsub.f32 0.0, %v6108
        %v6141 = vsub.f32 0.0, %v6109
        %v6142 = vsub.f32 0.0, %v6110
        %v6143 = vsub.f32 0.0, %v6111
        %v6144 = vsub.f32 0.0, %v6112
        %v6145 = vsub.f32 0.0, %v6113
        %v6146 = vsub.f32 0.0, %v6114
        %v6147 = vsub.f32 0.0, %v6115
        %v6148 = vsub.f32 0.0, %v6116
        %v6149 = vsub.f32 0.0, %v6117
        %v6150 = vsub.f32 0.0, %v6118
        %v6151 = vsub.f32 0.0, %v6119
        %v6152 = vsub.f32 0.0, %v6120
        %v6153 = vsub.f32 0.0, %v6121
        %v6154 = vsub.f32 0.0, %v6122
        %v6155 = vsub.f32 0.0, %v6123
        %v6156 = vsub.f32 0.0, %v6124
        %v6157 = vsub.f32 0.0, %v6125
        %v6158 = vsub.f32 0.0, %v6126
        %v6159 = vsub.f32 0.0, %v6127
        %v6160 = vsub.f32 0.0, %v6128
        %v6161 = vmul.f32 %v6129, 1.442695
        %v6162 = vpow.pop %v6161
        %v6163 = vmul.f32 %v6130, 1.442695
        %v6164 = vpow.pop %v6163
        %v6165 = vmul.f32 %v6131, 1.442695
        %v6166 = vpow.pop %v6165
        %v6167 = vmul.f32 %v6132, 1.442695
        %v6168 = vpow.pop %v6167
        %v6169 = vmul.f32 %v6133, 1.442695
        %v6170 = vpow.pop %v6169
        %v6171 = vmul.f32 %v6134, 1.442695
        %v6172 = vpow.pop %v6171
        %v6173 = vmul.f32 %v6135, 1.442695
        %v6174 = vpow.pop %v6173
        %v6175 = vmul.f32 %v6136, 1.442695
        %v6176 = vpow.pop %v6175
        %v6177 = vmul.f32 %v6137, 1.442695
        %v6178 = vpow.pop %v6177
        %v6179 = vmul.f32 %v6138, 1.442695
        %v6180 = vpow.pop %v6179
        %v6181 = vmul.f32 %v6139, 1.442695
        %v6182 = vpow.pop %v6181
        %v6183 = vmul.f32 %v6140, 1.442695
        %v6184 = vpow.pop %v6183
        %v6185 = vmul.f32 %v6141, 1.442695
        %v6186 = vpow.pop %v6185
        %v6187 = vmul.f32 %v6142, 1.442695
        %v6188 = vpow.pop %v6187
        %v6189 = vmul.f32 %v6143, 1.442695
        %v6190 = vpow.pop %v6189
        %v6191 = vmul.f32 %v6144, 1.442695
        %v6192 = vpow.pop %v6191
        %v6193 = vmul.f32 %v6145, 1.442695
        %v6194 = vpow.pop %v6193
        %v6195 = vmul.f32 %v6146, 1.442695
        %v6196 = vpow.pop %v6195
        %v6197 = vmul.f32 %v6147, 1.442695
        %v6198 = vpow.pop %v6197
        %v6199 = vmul.f32 %v6148, 1.442695
        %v6200 = vpow.pop %v6199
        %v6201 = vmul.f32 %v6149, 1.442695
        %v6202 = vpow.pop %v6201
        %v6203 = vmul.f32 %v6150, 1.442695
        %v6204 = vpow.pop %v6203
        %v6205 = vmul.f32 %v6151, 1.442695
        %v6206 = vpow.pop %v6205
        %v6207 = vmul.f32 %v6152, 1.442695
        %v6208 = vpow.pop %v6207
        %v6209 = vmul.f32 %v6153, 1.442695
        %v6210 = vpow.pop %v6209
        %v6211 = vmul.f32 %v6154, 1.442695
        %v6212 = vpow.pop %v6211
        %v6213 = vmul.f32 %v6155, 1.442695
        %v6214 = vpow.pop %v6213
        %v6215 = vmul.f32 %v6156, 1.442695
        %v6216 = vpow.pop %v6215
        %v6217 = vmul.f32 %v6157, 1.442695
        %v6218 = vpow.pop %v6217
        %v6219 = vmul.f32 %v6158, 1.442695
        %v6220 = vpow.pop %v6219
        %v6221 = vmul.f32 %v6159, 1.442695
        %v6222 = vpow.pop %v6221
        %v6223 = vmul.f32 %v6160, 1.442695
        %v6224 = vpow.pop %v6223
        %v6225 = vadd.f32 %v6162, 1.0
        %v6226 = vadd.f32 %v6164, 1.0
        %v6227 = vadd.f32 %v6166, 1.0
        %v6228 = vadd.f32 %v6168, 1.0
        %v6229 = vadd.f32 %v6170, 1.0
        %v6230 = vadd.f32 %v6172, 1.0
        %v6231 = vadd.f32 %v6174, 1.0
        %v6232 = vadd.f32 %v6176, 1.0
        %v6233 = vadd.f32 %v6178, 1.0
        %v6234 = vadd.f32 %v6180, 1.0
        %v6235 = vadd.f32 %v6182, 1.0
        %v6236 = vadd.f32 %v6184, 1.0
        %v6237 = vadd.f32 %v6186, 1.0
        %v6238 = vadd.f32 %v6188, 1.0
        %v6239 = vadd.f32 %v6190, 1.0
        %v6240 = vadd.f32 %v6192, 1.0
        %v6241 = vadd.f32 %v6194, 1.0
        %v6242 = vadd.f32 %v6196, 1.0
        %v6243 = vadd.f32 %v6198, 1.0
        %v6244 = vadd.f32 %v6200, 1.0
        %v6245 = vadd.f32 %v6202, 1.0
        %v6246 = vadd.f32 %v6204, 1.0
        %v6247 = vadd.f32 %v6206, 1.0
        %v6248 = vadd.f32 %v6208, 1.0
        %v6249 = vadd.f32 %v6210, 1.0
        %v6250 = vadd.f32 %v6212, 1.0
        %v6251 = vadd.f32 %v6214, 1.0
        %v6252 = vadd.f32 %v6216, 1.0
        %v6253 = vadd.f32 %v6218, 1.0
        %v6254 = vadd.f32 %v6220, 1.0
        %v6255 = vadd.f32 %v6222, 1.0
        %v6256 = vadd.f32 %v6224, 1.0
        %v6257 = vrcp.pop %v6225
        %v6258 = vmul.f32 1.0, %v6257
        %v6259 = vrcp.pop %v6226
        %v6260 = vmul.f32 1.0, %v6259
        %v6261 = vrcp.pop %v6227
        %v6262 = vmul.f32 1.0, %v6261
        %v6263 = vrcp.pop %v6228
        %v6264 = vmul.f32 1.0, %v6263
        %v6265 = vrcp.pop %v6229
        %v6266 = vmul.f32 1.0, %v6265
        %v6267 = vrcp.pop %v6230
        %v6268 = vmul.f32 1.0, %v6267
        %v6269 = vrcp.pop %v6231
        %v6270 = vmul.f32 1.0, %v6269
        %v6271 = vrcp.pop %v6232
        %v6272 = vmul.f32 1.0, %v6271
        %v6273 = vrcp.pop %v6233
        %v6274 = vmul.f32 1.0, %v6273
        %v6275 = vrcp.pop %v6234
        %v6276 = vmul.f32 1.0, %v6275
        %v6277 = vrcp.pop %v6235
        %v6278 = vmul.f32 1.0, %v6277
        %v6279 = vrcp.pop %v6236
        %v6280 = vmul.f32 1.0, %v6279
        %v6281 = vrcp.pop %v6237
        %v6282 = vmul.f32 1.0, %v6281
        %v6283 = vrcp.pop %v6238
        %v6284 = vmul.f32 1.0, %v6283
        %v6285 = vrcp.pop %v6239
        %v6286 = vmul.f32 1.0, %v6285
        %v6287 = vrcp.pop %v6240
        %v6288 = vmul.f32 1.0, %v6287
        %v6289 = vrcp.pop %v6241
        %v6290 = vmul.f32 1.0, %v6289
        %v6291 = vrcp.pop %v6242
        %v6292 = vmul.f32 1.0, %v6291
        %v6293 = vrcp.pop %v6243
        %v6294 = vmul.f32 1.0, %v6293
        %v6295 = vrcp.pop %v6244
        %v6296 = vmul.f32 1.0, %v6295
        %v6297 = vrcp.pop %v6245
        %v6298 = vmul.f32 1.0, %v6297
        %v6299 = vrcp.pop %v6246
        %v6300 = vmul.f32 1.0, %v6299
        %v6301 = vrcp.pop %v6247
        %v6302 = vmul.f32 1.0, %v6301
        %v6303 = vrcp.pop %v6248
        %v6304 = vmul.f32 1.0, %v6303
        %v6305 = vrcp.pop %v6249
        %v6306 = vmul.f32 1.0, %v6305
        %v6307 = vrcp.pop %v6250
        %v6308 = vmul.f32 1.0, %v6307
        %v6309 = vrcp.pop %v6251
        %v6310 = vmul.f32 1.0, %v6309
        %v6311 = vrcp.pop %v6252
        %v6312 = vmul.f32 1.0, %v6311
        %v6313 = vrcp.pop %v6253
        %v6314 = vmul.f32 1.0, %v6313
        %v6315 = vrcp.pop %v6254
        %v6316 = vmul.f32 1.0, %v6315
        %v6317 = vrcp.pop %v6255
        %v6318 = vmul.f32 1.0, %v6317
        %v6319 = vrcp.pop %v6256
        %v6320 = vmul.f32 1.0, %v6319
        %6322 = vset.pattern.permute.xlu0 0
        %6323 = vperm.xlu0 %6322, %v6258
        %v6324 = vpop.permute.xlu0 %6323
        %6327 = vset.pattern.permute.xlu0 0
        %6328 = vperm.xlu0 %6327, %v6260
        %v6329 = vpop.permute.xlu0 %6328
        %6332 = vset.pattern.permute.xlu0 0
        %6333 = vperm.xlu0 %6332, %v6262
        %v6334 = vpop.permute.xlu0 %6333
        %6337 = vset.pattern.permute.xlu0 0
        %6338 = vperm.xlu0 %6337, %v6264
        %v6339 = vpop.permute.xlu0 %6338
        %6342 = vset.pattern.permute.xlu0 0
        %6343 = vperm.xlu0 %6342, %v6266
        %v6344 = vpop.permute.xlu0 %6343
        %6347 = vset.pattern.permute.xlu0 0
        %6348 = vperm.xlu0 %6347, %v6268
        %v6349 = vpop.permute.xlu0 %6348
        %6352 = vset.pattern.permute.xlu0 0
        %6353 = vperm.xlu0 %6352, %v6270
        %v6354 = vpop.permute.xlu0 %6353
        %6357 = vset.pattern.permute.xlu0 0
        %6358 = vperm.xlu0 %6357, %v6272
        %v6359 = vpop.permute.xlu0 %6358
        %6362 = vset.pattern.permute.xlu0 0
        %6363 = vperm.xlu0 %6362, %v6274
        %v6364 = vpop.permute.xlu0 %6363
        %6367 = vset.pattern.permute.xlu0 0
        %6368 = vperm.xlu0 %6367, %v6276
        %v6369 = vpop.permute.xlu0 %6368
        %6372 = vset.pattern.permute.xlu0 0
        %6373 = vperm.xlu0 %6372, %v6278
        %v6374 = vpop.permute.xlu0 %6373
        %6377 = vset.pattern.permute.xlu0 0
        %6378 = vperm.xlu0 %6377, %v6280
        %v6379 = vpop.permute.xlu0 %6378
        %6382 = vset.pattern.permute.xlu0 0
        %6383 = vperm.xlu0 %6382, %v6282
        %v6384 = vpop.permute.xlu0 %6383
        %6387 = vset.pattern.permute.xlu0 0
        %6388 = vperm.xlu0 %6387, %v6284
        %v6389 = vpop.permute.xlu0 %6388
        %6392 = vset.pattern.permute.xlu0 0
        %6393 = vperm.xlu0 %6392, %v6286
        %v6394 = vpop.permute.xlu0 %6393
        %6397 = vset.pattern.permute.xlu0 0
        %6398 = vperm.xlu0 %6397, %v6288
        %v6399 = vpop.permute.xlu0 %6398
        %6402 = vset.pattern.permute.xlu0 0
        %6403 = vperm.xlu0 %6402, %v6290
        %v6404 = vpop.permute.xlu0 %6403
        %6407 = vset.pattern.permute.xlu0 0
        %6408 = vperm.xlu0 %6407, %v6292
        %v6409 = vpop.permute.xlu0 %6408
        %6412 = vset.pattern.permute.xlu0 0
        %6413 = vperm.xlu0 %6412, %v6294
        %v6414 = vpop.permute.xlu0 %6413
        %6417 = vset.pattern.permute.xlu0 0
        %6418 = vperm.xlu0 %6417, %v6296
        %v6419 = vpop.permute.xlu0 %6418
        %6422 = vset.pattern.permute.xlu0 0
        %6423 = vperm.xlu0 %6422, %v6298
        %v6424 = vpop.permute.xlu0 %6423
        %6427 = vset.pattern.permute.xlu0 0
        %6428 = vperm.xlu0 %6427, %v6300
        %v6429 = vpop.permute.xlu0 %6428
        %6432 = vset.pattern.permute.xlu0 0
        %6433 = vperm.xlu0 %6432, %v6302
        %v6434 = vpop.permute.xlu0 %6433
        %6437 = vset.pattern.permute.xlu0 0
        %6438 = vperm.xlu0 %6437, %v6304
        %v6439 = vpop.permute.xlu0 %6438
        %6442 = vset.pattern.permute.xlu0 0
        %6443 = vperm.xlu0 %6442, %v6306
        %v6444 = vpop.permute.xlu0 %6443
        %6447 = vset.pattern.permute.xlu0 0
        %6448 = vperm.xlu0 %6447, %v6308
        %v6449 = vpop.permute.xlu0 %6448
        %6452 = vset.pattern.permute.xlu0 0
        %6453 = vperm.xlu0 %6452, %v6310
        %v6454 = vpop.permute.xlu0 %6453
        %6457 = vset.pattern.permute.xlu0 0
        %6458 = vperm.xlu0 %6457, %v6312
        %v6459 = vpop.permute.xlu0 %6458
        %6462 = vset.pattern.permute.xlu0 0
        %6463 = vperm.xlu0 %6462, %v6314
        %v6464 = vpop.permute.xlu0 %6463
        %6467 = vset.pattern.permute.xlu0 0
        %6468 = vperm.xlu0 %6467, %v6316
        %v6469 = vpop.permute.xlu0 %6468
        %6472 = vset.pattern.permute.xlu0 0
        %6473 = vperm.xlu0 %6472, %v6318
        %v6474 = vpop.permute.xlu0 %6473
        %6477 = vset.pattern.permute.xlu0 0
        %6478 = vperm.xlu0 %6477, %v6320
        %v6479 = vpop.permute.xlu0 %6478
        %v6481 = vmul.f32 %v4455, %v6324
        %v6482 = vmul.f32 %v4456, %v6329
        %v6483 = vmul.f32 %v4457, %v6334
        %v6484 = vmul.f32 %v4458, %v6339
        %v6485 = vmul.f32 %v4459, %v6344
        %v6486 = vmul.f32 %v4460, %v6349
        %v6487 = vmul.f32 %v4461, %v6354
        %v6488 = vmul.f32 %v4462, %v6359
        %v6489 = vmul.f32 %v4463, %v6364
        %v6490 = vmul.f32 %v4464, %v6369
        %v6491 = vmul.f32 %v4465, %v6374
        %v6492 = vmul.f32 %v4466, %v6379
        %v6493 = vmul.f32 %v4467, %v6384
        %v6494 = vmul.f32 %v4468, %v6389
        %v6495 = vmul.f32 %v4469, %v6394
        %v6496 = vmul.f32 %v4470, %v6399
        %v6497 = vmul.f32 %v4471, %v6404
        %v6498 = vmul.f32 %v4472, %v6409
        %v6499 = vmul.f32 %v4473, %v6414
        %v6500 = vmul.f32 %v4474, %v6419
        %v6501 = vmul.f32 %v4475, %v6424
        %v6502 = vmul.f32 %v4476, %v6429
        %v6503 = vmul.f32 %v4477, %v6434
        %v6504 = vmul.f32 %v4478, %v6439
        %v6505 = vmul.f32 %v4479, %v6444
        %v6506 = vmul.f32 %v4480, %v6449
        %v6507 = vmul.f32 %v4481, %v6454
        %v6508 = vmul.f32 %v4482, %v6459
        %v6509 = vmul.f32 %v4483, %v6464
        %v6510 = vmul.f32 %v4484, %v6469
        %v6511 = vmul.f32 %v4485, %v6474
        %v6512 = vmul.f32 %v4486, %v6479
        %6513 = vst [vmem:[%s343] sm:$0xff] %v6481
        %6514 = vst [vmem:[%s343 + $0x8] sm:$0xff] %v6482
        %6515 = vst [vmem:[%s343 + $0x10] sm:$0xff] %v6483
        %6516 = vst [vmem:[%s343 + $0x18] sm:$0xff] %v6484
        %6517 = vst [vmem:[%s343 + $0x20] sm:$0xff] %v6485
        %6518 = vst [vmem:[%s343 + $0x28] sm:$0xff] %v6486
        %6519 = vst [vmem:[%s343 + $0x30] sm:$0xff] %v6487
        %6520 = vst [vmem:[%s343 + $0x38] sm:$0xff] %v6488
        %6521 = vst [vmem:[%s343 + $0x40] sm:$0xff] %v6489
        %6522 = vst [vmem:[%s343 + $0x48] sm:$0xff] %v6490
        %6523 = vst [vmem:[%s343 + $0x50] sm:$0xff] %v6491
        %6524 = vst [vmem:[%s343 + $0x58] sm:$0xff] %v6492
        %6525 = vst [vmem:[%s343 + $0x60] sm:$0xff] %v6493
        %6526 = vst [vmem:[%s343 + $0x68] sm:$0xff] %v6494
        %6527 = vst [vmem:[%s343 + $0x70] sm:$0xff] %v6495
        %6528 = vst [vmem:[%s343 + $0x78] sm:$0xff] %v6496
        %6529 = vst [vmem:[%s343 + $0x80] sm:$0xff] %v6497
        %6530 = vst [vmem:[%s343 + $0x88] sm:$0xff] %v6498
        %6531 = vst [vmem:[%s343 + $0x90] sm:$0xff] %v6499
        %6532 = vst [vmem:[%s343 + $0x98] sm:$0xff] %v6500
        %6533 = vst [vmem:[%s343 + $0xa0] sm:$0xff] %v6501
        %6534 = vst [vmem:[%s343 + $0xa8] sm:$0xff] %v6502
        %6535 = vst [vmem:[%s343 + $0xb0] sm:$0xff] %v6503
        %6536 = vst [vmem:[%s343 + $0xb8] sm:$0xff] %v6504
        %6537 = vst [vmem:[%s343 + $0xc0] sm:$0xff] %v6505
        %6538 = vst [vmem:[%s343 + $0xc8] sm:$0xff] %v6506
        %6539 = vst [vmem:[%s343 + $0xd0] sm:$0xff] %v6507
        %6540 = vst [vmem:[%s343 + $0xd8] sm:$0xff] %v6508
        %6541 = vst [vmem:[%s343 + $0xe0] sm:$0xff] %v6509
        %6542 = vst [vmem:[%s343 + $0xe8] sm:$0xff] %v6510
        %6543 = vst [vmem:[%s343 + $0xf0] sm:$0xff] %v6511
        %6544 = vst [vmem:[%s343 + $0xf8] sm:$0xff] %v6512
        %s6545 = sand.u32 %s187, 1
        %s6546 = scalar_lea.sflag [#allocation3], %s6545
        %s6547 = sand.u32 %s187, 1
        %s6548 = smul.addr %s6547, 256
        %s6549 = scalar_lea.vmem [#allocation2], %s6548
        %s6550 = sand.u32 %s27, 1
        %s6551 = scalar_lea.sflag [#allocation5], %s6550
        %s6552 = sand.u32 %s213, 1
        %s6553 = smul.addr %s6552, 256
        %s6554 = scalar_lea.vmem [#allocation4], %s6553
        %s6555 = sand.u32 %s27, 1
        %s6556 = scalar_lea.sflag [#allocation5], %s6555
        %s6557 = sand.u32 %s239, 1
        %s6558 = smul.addr %s6557, 256
        %s6559 = scalar_lea.vmem [#allocation6], %s6558
        // Predicated region
        $region49: #{channel_spatial_attention_forward.1} parent=47 // pred_check
          %p6560 = pneg %p197
        $region50: #{channel_spatial_attention_forward.1} parent=47 // pred_check_branch
          %6562 = sbr.rel (%p6560) target = $region52
        $region51: #{channel_spatial_attention_forward.1} parent=47 // pred_region
          %s6564 = ssub.s32 4096, 4096
          %6565 = vsyncadd %s6546, %s6564
          %s6566 = smul.addr %s27, 32
          %s6567 = smul.addr %s6566, 128
          %s6568 = scalar_lea.hbm %s7, %s6567
          %s6569 = sshll.u32 %s6549, 4
          %s6570 = int_to_ptr.vmem [resolvable:$true] %s6569
          %6575 = dma.vmem_to_hbm [thread:$0]  %s6570, 4096, %s6568, %s6546, 128, 128, 8
        $region52: #{channel_spatial_attention_forward.1} parent=47 // pred_fallthru
          _
        // Predicated region
        $region53: #{channel_spatial_attention_forward.1} parent=47 // pred_check
          %p6576 = pneg %p223
        $region54: #{channel_spatial_attention_forward.1} parent=47 // pred_check_branch
          %6578 = sbr.rel (%p6576) target = $region56
        $region55: #{channel_spatial_attention_forward.1} parent=47 // pred_region
          %s6580 = ssub.s32 4096, 4096
          %6581 = vsyncadd %s6551, %s6580
          %s6582 = smul.addr %s27, 32
          %s6583 = smul.addr %s6582, 128
          %s6584 = scalar_lea.hbm %s8, %s6583
          %s6585 = sshll.u32 %s6554, 4
          %s6586 = int_to_ptr.vmem [resolvable:$true] %s6585
          %6591 = dma.vmem_to_hbm [thread:$0]  %s6586, 4096, %s6584, %s6551, 128, 128, 8
        $region56: #{channel_spatial_attention_forward.1} parent=47 // pred_fallthru
          _
        // Predicated region
        $region57: #{channel_spatial_attention_forward.1} parent=47 // pred_check
          %p6592 = pneg %p249
        $region58: #{channel_spatial_attention_forward.1} parent=47 // pred_check_branch
          %6594 = sbr.rel (%p6592) target = $region60
        $region59: #{channel_spatial_attention_forward.1} parent=47 // pred_region
          %s6596 = ssub.s32 4096, 4096
          %6597 = vsyncadd %s6556, %s6596
          %s6598 = smul.addr %s27, 32
          %s6599 = smul.addr %s6598, 128
          %s6600 = scalar_lea.hbm %s9, %s6599
          %s6601 = sshll.u32 %s6559, 4
          %s6602 = int_to_ptr.vmem [resolvable:$true] %s6601
          %6607 = dma.vmem_to_hbm [thread:$0]  %s6602, 4096, %s6600, %s6556, 128, 128, 8
        $region60: #{channel_spatial_attention_forward.1} parent=47 // pred_fallthru
          _
      $region48: #{channel_spatial_attention_forward.1} parent=5 // pred_fallthru
        _
      %p6608 = scmp.le.s32.totalorder 2, %s22
      // Predicated region
      $region61: #{channel_spatial_attention_forward.1} parent=5 // pred_check
        %p6609 = pneg %p6608
      $region62: #{channel_spatial_attention_forward.1} parent=5 // pred_check_branch
        %6611 = sbr.rel (%p6609) target = $region64
      $region63: #{channel_spatial_attention_forward.1} parent=5 // pred_region
        %s6612 = ssub.s32 %s22, 2
        // Predicated region
        $region65: #{channel_spatial_attention_forward.1} parent=63 // pred_check
          %p6613 = pneg %p203
        $region66: #{channel_spatial_attention_forward.1} parent=63 // pred_check_branch
          %6615 = sbr.rel (%p6613) target = $region68
        $region67: #{channel_spatial_attention_forward.1} parent=63 // pred_region
          %s6616 = sand.u32 %s188, 1
          %s6617 = scalar_lea.sflag [#allocation3], %s6616
          %s6618 = sand.u32 %s188, 1
          %s6619 = smul.addr %s6618, 256
          %s6620 = scalar_lea.vmem [#allocation2], %s6619
          %6621 = dma.done %s6617, 4096
        $region68: #{channel_spatial_attention_forward.1} parent=63 // pred_fallthru
          _
        // Predicated region
        $region69: #{channel_spatial_attention_forward.1} parent=63 // pred_check
          %p6622 = pneg %p229
        $region70: #{channel_spatial_attention_forward.1} parent=63 // pred_check_branch
          %6624 = sbr.rel (%p6622) target = $region72
        $region71: #{channel_spatial_attention_forward.1} parent=63 // pred_region
          %s6625 = sand.u32 %s28, 1
          %s6626 = scalar_lea.sflag [#allocation5], %s6625
          %s6627 = sand.u32 %s214, 1
          %s6628 = smul.addr %s6627, 256
          %s6629 = scalar_lea.vmem [#allocation4], %s6628
          %6630 = dma.done %s6626, 4096
        $region72: #{channel_spatial_attention_forward.1} parent=63 // pred_fallthru
          _
        // Predicated region
        $region73: #{channel_spatial_attention_forward.1} parent=63 // pred_check
          %p6631 = pneg %p255
        $region74: #{channel_spatial_attention_forward.1} parent=63 // pred_check_branch
          %6633 = sbr.rel (%p6631) target = $region76
        $region75: #{channel_spatial_attention_forward.1} parent=63 // pred_region
          %s6634 = sand.u32 %s28, 1
          %s6635 = scalar_lea.sflag [#allocation5], %s6634
          %s6636 = sand.u32 %s240, 1
          %s6637 = smul.addr %s6636, 256
          %s6638 = scalar_lea.vmem [#allocation6], %s6637
          %6639 = dma.done %s6635, 4096
        $region76: #{channel_spatial_attention_forward.1} parent=63 // pred_fallthru
          _
      $region64: #{channel_spatial_attention_forward.1} parent=5 // pred_fallthru
        _
    $region6: #{channel_spatial_attention_forward.1} parent=1 // loop_footer
      %s26 = sadd.s32 1, %s22
    $region7: #{channel_spatial_attention_forward.1} parent=1 // loop_footer_branch
      %21 = sbr.rel target = $region3
    $region8: #{channel_spatial_attention_forward.1} parent=1 // loop_exit
      _
    %6640 = vsyncpa [#allocation3], 1
    %s6641 = scalar_lea.sflag [#allocation3], 1
    %6642 = vsyncpa %s6641, 1
    %6643 = vsyncpa [#allocation5], 1
    %s6644 = scalar_lea.sflag [#allocation5], 1
    %6645 = vsyncpa %s6644, 1

</llo_original>
